<compile_context>
chip_gen: v7x
topology: tpu7x:2x2x1
jax: 0.10.0
libtpu: 0.0.40
codegen_flags: <defaults>
</compile_context>

<pallas_src>
import functools

import jax
import jax.numpy as jnp
from jax.experimental import pallas as pl
from jax.experimental.pallas import tpu as pltpu


LANE = 128                      # pad channel dims to a multiple of the lane width
MATMUL_DTYPE = jnp.bfloat16     # MXU operand dtype (accumulation stays f32)


def _round_up(x, m):
    return (x + m - 1) // m * m


# ----------------------------------------------------------------------------- kernel


def _shake_block_kernel(x_ref, w1_ref, b1_ref, w2_ref, b2_ref, out_ref,
                        y1_scr, p1_scr, p2_scr, *, H, W):
    """Fused ShakeShakeBlock forward for one batch element.

    x_ref  : (1, H+2, W+2, CP)  zero-padded input (spatial + channel pad), f32
    w1_ref : (9*CP, C1)         im2col layer-1 weights [s_a1*W_a1 | s_b1*W_b1 | 0], bf16
    b1_ref : (1, C1)            folded BN1 bias, f32
    w2_ref : (9*C1, CP)         im2col dense layer-2 weights 0.5*[s_a2*W_a2 ; s_b2*W_b2], bf16
    b2_ref : (1, CP)            0.5*(t_a2 + t_b2) folded bias, f32
    out_ref: (1, H, W, CP)      x + 0.5*a + 0.5*b  (lane-dense; padded channels are 0)
    y1_scr : VMEM (H+2, W+2, C1) bf16 persistent scratch: relu(BN1(conv1)) with zero halo
    p1_scr : VMEM (H*W, 9*CP)   bf16 im2col scratch for layer 1
    p2_scr : VMEM (H*W, 9*C1)   bf16 im2col scratch for layer 2
    """
    CP = x_ref.shape[-1]
    C1 = y1_scr.shape[-1]
    M = H * W

    # Zero only the 1-element halo of the persistent y1 scratch (cheap perimeter stores);
    # the interior is fully overwritten below before it is read.  Done every step so it is
    # correct no matter how the parallel batch axis is split across TensorCores.
    zero_row = jnp.zeros((1, W + 2, C1), y1_scr.dtype)
    zero_col = jnp.zeros((H + 2, 1, C1), y1_scr.dtype)
    y1_scr[pl.ds(0, 1), :, :] = zero_row
    y1_scr[pl.ds(H + 1, 1), :, :] = zero_row
    y1_scr[:, pl.ds(0, 1), :] = zero_col
    y1_scr[:, pl.ds(W + 1, 1), :] = zero_col

    # ---- layer 1: relu(x) -> im2col -> one big-K matmul -> folded BN bias -> relu -------
    xr = jnp.maximum(x_ref[0], 0.0).astype(MATMUL_DTYPE)      # relu(0-padding) == 0
    for k in range(9):                                         # one-time patch build
        kh, kw = divmod(k, 3)
        p1_scr[:, pl.ds(k * CP, CP)] = xr[kh:kh + H, kw:kw + W, :].reshape(M, CP)
    acc1 = jnp.dot(p1_scr[...], w1_ref[...], preferred_element_type=jnp.float32)
    y1 = jnp.maximum(acc1 + b1_ref[...], 0.0)                  # folded BN1 bias + relu, f32
    y1_scr[pl.ds(1, H), pl.ds(1, W), :] = y1.reshape(H, W, C1).astype(y1_scr.dtype)

    # ---- layer 2: im2col -> one dense matmul (branches + 0.5 gate folded) ---------------
    for k in range(9):
        kh, kw = divmod(k, 3)
        p2_scr[:, pl.ds(k * C1, C1)] = y1_scr[pl.ds(kh, H), pl.ds(kw, W), :].reshape(M, C1)
    acc2 = jnp.dot(p2_scr[...], w2_ref[...], preferred_element_type=jnp.float32)

    # ---- residual add (lane-dense; padded channels of both terms are zero) --------------
    residual = x_ref[0, pl.ds(1, H), pl.ds(1, W), :].reshape(M, CP)
    out = residual + acc2 + b2_ref[...]
    out_ref[...] = out.reshape(1, H, W, CP).astype(out_ref.dtype)


# ------------------------------------------------------------------------ param fusion


def _fold_bn(gamma, beta, mean, var, eps=1e-5):
    scale = gamma / jnp.sqrt(var + eps)
    return scale, beta - mean * scale


def _fuse_layer1(wa, wb, bn_a, bn_b, cin_pad, c1):
    """[s_a1*W_a1 | s_b1*W_b1] over Cout, zero-padded, flattened to (9*cin_pad, c1) im2col."""
    _, _, cin, p = wa.shape
    sa, ta = _fold_bn(*bn_a)
    sb, tb = _fold_bn(*bn_b)
    w = jnp.zeros((9, cin_pad, c1), jnp.float32)
    w = w.at[:, :cin, 0:p].set(wa.reshape(9, cin, p) * sa)
    w = w.at[:, :cin, p:2 * p].set(wb.reshape(9, cin, p) * sb)
    bias = jnp.zeros((c1,), jnp.float32).at[0:p].set(ta).at[p:2 * p].set(tb)
    return w.reshape(9 * cin_pad, c1).astype(MATMUL_DTYPE), bias.reshape(1, c1)


def _fuse_layer2(wa, wb, bn_a, bn_b, c1, cp):
    """Dense fused layer-2: rows [0.5*s_a2*W_a2 ; 0.5*s_b2*W_b2], flattened to (9*c1, cp)."""
    _, _, p, _ = wa.shape
    sa, ta = _fold_bn(*bn_a)
    sb, tb = _fold_bn(*bn_b)
    w = jnp.zeros((9, c1, cp), jnp.float32)
    w = w.at[:, 0:p, 0:p].set(0.5 * wa.reshape(9, p, p) * sa)
    w = w.at[:, p:2 * p, 0:p].set(0.5 * wb.reshape(9, p, p) * sb)
    bias = jnp.zeros((cp,), jnp.float32).at[0:p].set(0.5 * (ta + tb))
    return w.reshape(9 * c1, cp).astype(MATMUL_DTYPE), bias.reshape(1, cp)


# --------------------------------------------------------------------------- wrapper


@jax.jit
def shake_shake_block(x_nchw, params):
    """ShakeShakeBlock forward (eval mode).  NCHW float32 in / NCHW float32 out."""
    x = jnp.transpose(x_nchw, (0, 2, 3, 1))                      # NCHW -> NHWC
    n, h, w, cin = x.shape
    planes = params["conv_a1"].shape[-1]
    # TODO(synk): inplanes != planes / stride > 1 needs the downsample residual branch.
    assert cin == planes, "residual add assumes inplanes == planes (stride=1, no downsample)"

    cp = _round_up(planes, LANE)         # lane-dense input / residual / output channels
    c1 = _round_up(2 * planes, LANE)     # lane-dense fused (branch-a | branch-b) channels
    m = h * w

    w1, b1 = _fuse_layer1(params["conv_a1"], params["conv_b1"],
                          params["bn_a1"], params["bn_b1"], cp, c1)
    w2, b2 = _fuse_layer2(params["conv_a2"], params["conv_b2"],
                          params["bn_a2"], params["bn_b2"], c1, cp)

    # conv zero padding (spatial) + channel padding to the lane width, once on the host
    x_pad = jnp.pad(x, ((0, 0), (1, 1), (1, 1), (0, cp - cin)))

    kernel = functools.partial(_shake_block_kernel, H=h, W=w)

    # Per-step VMEM footprint (double-buffered x/out, resident bf16 weights, scratches).
    blk_bytes = (
        2 * (h + 2) * (w + 2) * cp * 4           # x block (double-buffered)
        + 2 * h * w * cp * 4                     # output block (double-buffered)
        + 2 * (9 * cp * c1 + 9 * c1 * cp) * 2    # bf16 weights (grid-invariant, 2 buffers)
        + (h + 2) * (w + 2) * c1 * 2             # y1 scratch (bf16)
        + m * 9 * cp * 2 + m * 9 * c1 * 2        # im2col scratches (bf16)
        + 3 * m * (c1 + cp) * 4                  # f32 intermediates headroom
    )
    vmem_limit = int(min(max(2 * blk_bytes, 16 * 2**20), 48 * 2**20))

    out_nhwc = pl.pallas_call(
        kernel,
        out_shape=jax.ShapeDtypeStruct((n, h, w, cp), x.dtype),
        grid=(n,),
        in_specs=[
            pl.BlockSpec((1, h + 2, w + 2, cp), lambda b: (b, 0, 0, 0)),
            pl.BlockSpec((9 * cp, c1), lambda b: (0, 0)),     # grid-invariant -> DMA'd once
            pl.BlockSpec((1, c1), lambda b: (0, 0)),
            pl.BlockSpec((9 * c1, cp), lambda b: (0, 0)),
            pl.BlockSpec((1, cp), lambda b: (0, 0)),
        ],
        out_specs=pl.BlockSpec((1, h, w, cp), lambda b: (b, 0, 0, 0)),
        scratch_shapes=[
            pltpu.VMEM((h + 2, w + 2, c1), MATMUL_DTYPE),     # y1 (persistent, zero halo)
            pltpu.VMEM((m, 9 * cp), MATMUL_DTYPE),            # layer-1 im2col
            pltpu.VMEM((m, 9 * c1), MATMUL_DTYPE),            # layer-2 im2col
        ],
        compiler_params=pltpu.CompilerParams(
            dimension_semantics=("parallel",),    # batch steps independent -> megacore / 2xTC
            vmem_limit_bytes=vmem_limit),
    )(x_pad, w1, b1, w2, b2)

    out = out_nhwc[..., :planes]                               # drop lane padding
    return jnp.transpose(out, (0, 3, 1, 2))                    # NHWC -> NCHW


# ----------------------------------------------------------------------- synthetic params


def make_params(key, inplanes, planes):
    """Deterministic synthetic parameters matching ShakeShakeBlock.__init__ shapes."""
    keys = jax.random.split(key, 20)
    ki = iter(range(20))

    def conv_w(cin, cout):
        # stored directly in (kh, kw, cin, cout) == HWIO layout
        return 0.1 * jax.random.normal(keys[next(ki)], (3, 3, cin, cout), jnp.float32)

    def bn(c):
        gamma = 0.5 + jax.random.uniform(keys[next(ki)], (c,), jnp.float32)
        beta = 0.1 * jax.random.normal(keys[next(ki)], (c,), jnp.float32)
        mean = 0.1 * jax.random.normal(keys[next(ki)], (c,), jnp.float32)
        var = 0.5 + jax.random.uniform(keys[next(ki)], (c,), jnp.float32)
        return gamma, beta, mean, var

    return {
        "conv_a1": conv_w(inplanes, planes), "bn_a1": bn(planes),
        "conv_a2": conv_w(planes, planes),   "bn_a2": bn(planes),
        "conv_b1": conv_w(inplanes, planes), "bn_b1": bn(planes),
        "conv_b2": conv_w(planes, planes),   "bn_b2": bn(planes),
    }


# --------------------------------------------------------------------------- reference


def _reference(x_nchw, params):
    """Pure-JAX f32 reference (XLA conv) for verification."""
    x = jnp.transpose(x_nchw, (0, 2, 3, 1))
    dn = ("NHWC", "HWIO", "NHWC")

    def conv(inp, w):
        return jax.lax.conv_general_dilated(
            inp, w, window_strides=(1, 1), padding=((1, 1), (1, 1)),
            dimension_numbers=dn)

    def bn(inp, p):
        gamma, beta, mean, var = p
        return gamma * (inp - mean) / jnp.sqrt(var + 1e-5) + beta

    def branch(inp, w1, p1, w2, p2):
        y = bn(conv(jax.nn.relu(inp), w1), p1)
        return bn(conv(jax.nn.relu(y), w2), p2)

    a = branch(x, params["conv_a1"], params["bn_a1"], params["conv_a2"], params["bn_a2"])
    b = branch(x, params["conv_b1"], params["bn_b1"], params["conv_b2"], params["bn_b2"])
    out = x + 0.5 * a + 0.5 * b
    return jnp.transpose(out, (0, 3, 1, 2))


# -------------------------------------------------------------------------------- main


if __name__ == "__main__":
    key = jax.random.PRNGKey(0)
    k_x, k_p = jax.random.split(key)

    inplanes = planes = 4
    x = jax.random.normal(k_x, (2, inplanes, 16, 16), jnp.float32)   # NCHW like PyTorch
    params = make_params(k_p, inplanes, planes)

    out = jax.block_until_ready(shake_shake_block(x, params))

    ref = jax.block_until_ready(_reference(x, params))
    assert out.shape == ref.shape == (2, planes, 16, 16)
    # bf16 MXU operands (f32 accumulation, BN scales folded into the bf16 weights) across
    # two stacked convs -> ~1e-2-scale absolute error vs the f32 reference.
    max_err = float(jnp.max(jnp.abs(out - ref)))
    assert max_err < 3e-2, f"mismatch vs reference, max_err={max_err}"

    print("KERNEL_OK")
</pallas_src>

<mosaic_0001>
module attributes {stable_mosaic.version = 11 : i64} {
  func.func @_shake_block_kernel(%arg0: i32, %arg1: memref<1x18x18x128xf32, #tpu.memory_space<vmem>>, %arg2: memref<1152x128xbf16, #tpu.memory_space<vmem>>, %arg3: memref<1x128xf32, #tpu.memory_space<vmem>>, %arg4: memref<1152x128xbf16, #tpu.memory_space<vmem>>, %arg5: memref<1x128xf32, #tpu.memory_space<vmem>>, %arg6: memref<1x16x16x128xf32, #tpu.memory_space<vmem>>, %arg7: memref<18x18x128xbf16, #tpu.memory_space<vmem>>, %arg8: memref<256x1152xbf16, #tpu.memory_space<vmem>>, %arg9: memref<256x1152xbf16, #tpu.memory_space<vmem>>) attributes {dimension_semantics = [#tpu.dimension_semantics<parallel>], iteration_bounds = array<i64: 2>, scalar_prefetch = 0 : i64, scratch_operands = 3 : i64, tpu.core_type = #tpu.core_type<tc>, window_params = [{transform_indices = @transform_0, window_bounds = array<i64: 1, 18, 18, 128>}, {pipeline_mode = #tpu.pipeline_mode<synchronous>, transform_indices = @transform_1, window_bounds = array<i64: 1152, 128>}, {pipeline_mode = #tpu.pipeline_mode<synchronous>, transform_indices = @transform_2, window_bounds = array<i64: 1, 128>}, {pipeline_mode = #tpu.pipeline_mode<synchronous>, transform_indices = @transform_3, window_bounds = array<i64: 1152, 128>}, {pipeline_mode = #tpu.pipeline_mode<synchronous>, transform_indices = @transform_4, window_bounds = array<i64: 1, 128>}, {transform_indices = @transform_5, window_bounds = array<i64: 1, 16, 16, 128>}]} {
    %cst = arith.constant 0.000000e+00 : bf16
    %0 = vector.broadcast %cst : bf16 to vector<1x18x128xbf16>
    %cst_0 = arith.constant 0.000000e+00 : bf16
    %1 = vector.broadcast %cst_0 : bf16 to vector<18x1x128xbf16>
    %c0 = arith.constant 0 : index
    %c0_1 = arith.constant 0 : index
    %c0_2 = arith.constant 0 : index
    %2 = vector.load %arg7[%c0, %c0_1, %c0_2] : memref<18x18x128xbf16, #tpu.memory_space<vmem>>, vector<1x18x128xbf16>
    tpu.vector_store %arg7[%c0, %c0_1, %c0_2], %0 {strides = array<i32>} : memref<18x18x128xbf16, #tpu.memory_space<vmem>>, vector<1x18x128xbf16>,
    %c17 = arith.constant 17 : index
    %c0_3 = arith.constant 0 : index
    %c0_4 = arith.constant 0 : index
    %3 = vector.load %arg7[%c17, %c0_3, %c0_4] : memref<18x18x128xbf16, #tpu.memory_space<vmem>>, vector<1x18x128xbf16>
    tpu.vector_store %arg7[%c17, %c0_3, %c0_4], %0 {strides = array<i32>} : memref<18x18x128xbf16, #tpu.memory_space<vmem>>, vector<1x18x128xbf16>,
    %c0_5 = arith.constant 0 : index
    %c0_6 = arith.constant 0 : index
    %c0_7 = arith.constant 0 : index
    %4 = vector.load %arg7[%c0_5, %c0_6, %c0_7] : memref<18x18x128xbf16, #tpu.memory_space<vmem>>, vector<18x1x128xbf16>
    tpu.vector_store %arg7[%c0_5, %c0_6, %c0_7], %1 {strides = array<i32>} : memref<18x18x128xbf16, #tpu.memory_space<vmem>>, vector<18x1x128xbf16>,
    %c0_8 = arith.constant 0 : index
    %c17_9 = arith.constant 17 : index
    %c0_10 = arith.constant 0 : index
    %5 = vector.load %arg7[%c0_8, %c17_9, %c0_10] : memref<18x18x128xbf16, #tpu.memory_space<vmem>>, vector<18x1x128xbf16>
    tpu.vector_store %arg7[%c0_8, %c17_9, %c0_10], %1 {strides = array<i32>} : memref<18x18x128xbf16, #tpu.memory_space<vmem>>, vector<18x1x128xbf16>,
    %c0_11 = arith.constant 0 : index
    %c0_12 = arith.constant 0 : index
    %c0_13 = arith.constant 0 : index
    %c0_14 = arith.constant 0 : index
    %6 = vector.load %arg1[%c0_11, %c0_12, %c0_13, %c0_14] : memref<1x18x18x128xf32, #tpu.memory_space<vmem>>, vector<1x18x18x128xf32>
    %7 = vector.shape_cast %6 : vector<1x18x18x128xf32> to vector<18x18x128xf32>
    %cst_15 = arith.constant 0.000000e+00 : f32
    %8 = vector.broadcast %cst_15 : f32 to vector<18x18x128xf32>
    %9 = arith.maximumf %7, %8 : vector<18x18x128xf32>
    %10 = arith.truncf %9 : vector<18x18x128xf32> to vector<18x18x128xbf16>
    %11 = vector.extract_strided_slice %10 {offsets = [0, 0, 0], sizes = [16, 16, 128], strides = [1, 1, 1]} : vector<18x18x128xbf16> to vector<16x16x128xbf16>
    %12 = vector.shape_cast %11 : vector<16x16x128xbf16> to vector<256x128xbf16>
    %c0_16 = arith.constant 0 : index
    %c0_17 = arith.constant 0 : index
    %13 = vector.load %arg8[%c0_16, %c0_17] : memref<256x1152xbf16, #tpu.memory_space<vmem>>, vector<256x128xbf16>
    tpu.vector_store %arg8[%c0_16, %c0_17], %12 {strides = array<i32>} : memref<256x1152xbf16, #tpu.memory_space<vmem>>, vector<256x128xbf16>,
    %14 = vector.extract_strided_slice %10 {offsets = [0, 1, 0], sizes = [16, 16, 128], strides = [1, 1, 1]} : vector<18x18x128xbf16> to vector<16x16x128xbf16>
    %15 = vector.shape_cast %14 : vector<16x16x128xbf16> to vector<256x128xbf16>
    %c0_18 = arith.constant 0 : index
    %c128 = arith.constant 128 : index
    %16 = vector.load %arg8[%c0_18, %c128] : memref<256x1152xbf16, #tpu.memory_space<vmem>>, vector<256x128xbf16>
    tpu.vector_store %arg8[%c0_18, %c128], %15 {strides = array<i32>} : memref<256x1152xbf16, #tpu.memory_space<vmem>>, vector<256x128xbf16>,
    %17 = vector.extract_strided_slice %10 {offsets = [0, 2, 0], sizes = [16, 16, 128], strides = [1, 1, 1]} : vector<18x18x128xbf16> to vector<16x16x128xbf16>
    %18 = vector.shape_cast %17 : vector<16x16x128xbf16> to vector<256x128xbf16>
    %c0_19 = arith.constant 0 : index
    %c256 = arith.constant 256 : index
    %19 = vector.load %arg8[%c0_19, %c256] : memref<256x1152xbf16, #tpu.memory_space<vmem>>, vector<256x128xbf16>
    tpu.vector_store %arg8[%c0_19, %c256], %18 {strides = array<i32>} : memref<256x1152xbf16, #tpu.memory_space<vmem>>, vector<256x128xbf16>,
    %20 = vector.extract_strided_slice %10 {offsets = [1, 0, 0], sizes = [16, 16, 128], strides = [1, 1, 1]} : vector<18x18x128xbf16> to vector<16x16x128xbf16>
    %21 = vector.shape_cast %20 : vector<16x16x128xbf16> to vector<256x128xbf16>
    %c0_20 = arith.constant 0 : index
    %c384 = arith.constant 384 : index
    %22 = vector.load %arg8[%c0_20, %c384] : memref<256x1152xbf16, #tpu.memory_space<vmem>>, vector<256x128xbf16>
    tpu.vector_store %arg8[%c0_20, %c384], %21 {strides = array<i32>} : memref<256x1152xbf16, #tpu.memory_space<vmem>>, vector<256x128xbf16>,
    %23 = vector.extract_strided_slice %10 {offsets = [1, 1, 0], sizes = [16, 16, 128], strides = [1, 1, 1]} : vector<18x18x128xbf16> to vector<16x16x128xbf16>
    %24 = vector.shape_cast %23 : vector<16x16x128xbf16> to vector<256x128xbf16>
    %c0_21 = arith.constant 0 : index
    %c512 = arith.constant 512 : index
    %25 = vector.load %arg8[%c0_21, %c512] : memref<256x1152xbf16, #tpu.memory_space<vmem>>, vector<256x128xbf16>
    tpu.vector_store %arg8[%c0_21, %c512], %24 {strides = array<i32>} : memref<256x1152xbf16, #tpu.memory_space<vmem>>, vector<256x128xbf16>,
    %26 = vector.extract_strided_slice %10 {offsets = [1, 2, 0], sizes = [16, 16, 128], strides = [1, 1, 1]} : vector<18x18x128xbf16> to vector<16x16x128xbf16>
    %27 = vector.shape_cast %26 : vector<16x16x128xbf16> to vector<256x128xbf16>
    %c0_22 = arith.constant 0 : index
    %c640 = arith.constant 640 : index
    %28 = vector.load %arg8[%c0_22, %c640] : memref<256x1152xbf16, #tpu.memory_space<vmem>>, vector<256x128xbf16>
    tpu.vector_store %arg8[%c0_22, %c640], %27 {strides = array<i32>} : memref<256x1152xbf16, #tpu.memory_space<vmem>>, vector<256x128xbf16>,
    %29 = vector.extract_strided_slice %10 {offsets = [2, 0, 0], sizes = [16, 16, 128], strides = [1, 1, 1]} : vector<18x18x128xbf16> to vector<16x16x128xbf16>
    %30 = vector.shape_cast %29 : vector<16x16x128xbf16> to vector<256x128xbf16>
    %c0_23 = arith.constant 0 : index
    %c768 = arith.constant 768 : index
    %31 = vector.load %arg8[%c0_23, %c768] : memref<256x1152xbf16, #tpu.memory_space<vmem>>, vector<256x128xbf16>
    tpu.vector_store %arg8[%c0_23, %c768], %30 {strides = array<i32>} : memref<256x1152xbf16, #tpu.memory_space<vmem>>, vector<256x128xbf16>,
    %32 = vector.extract_strided_slice %10 {offsets = [2, 1, 0], sizes = [16, 16, 128], strides = [1, 1, 1]} : vector<18x18x128xbf16> to vector<16x16x128xbf16>
    %33 = vector.shape_cast %32 : vector<16x16x128xbf16> to vector<256x128xbf16>
    %c0_24 = arith.constant 0 : index
    %c896 = arith.constant 896 : index
    %34 = vector.load %arg8[%c0_24, %c896] : memref<256x1152xbf16, #tpu.memory_space<vmem>>, vector<256x128xbf16>
    tpu.vector_store %arg8[%c0_24, %c896], %33 {strides = array<i32>} : memref<256x1152xbf16, #tpu.memory_space<vmem>>, vector<256x128xbf16>,
    %35 = vector.extract_strided_slice %10 {offsets = [2, 2, 0], sizes = [16, 16, 128], strides = [1, 1, 1]} : vector<18x18x128xbf16> to vector<16x16x128xbf16>
    %36 = vector.shape_cast %35 : vector<16x16x128xbf16> to vector<256x128xbf16>
    %c0_25 = arith.constant 0 : index
    %c1024 = arith.constant 1024 : index
    %37 = vector.load %arg8[%c0_25, %c1024] : memref<256x1152xbf16, #tpu.memory_space<vmem>>, vector<256x128xbf16>
    tpu.vector_store %arg8[%c0_25, %c1024], %36 {strides = array<i32>} : memref<256x1152xbf16, #tpu.memory_space<vmem>>, vector<256x128xbf16>,
    %c0_26 = arith.constant 0 : index
    %c0_27 = arith.constant 0 : index
    %38 = vector.load %arg8[%c0_26, %c0_27] : memref<256x1152xbf16, #tpu.memory_space<vmem>>, vector<256x1152xbf16>
    %c0_28 = arith.constant 0 : index
    %c0_29 = arith.constant 0 : index
    %39 = vector.load %arg2[%c0_28, %c0_29] : memref<1152x128xbf16, #tpu.memory_space<vmem>>, vector<1152x128xbf16>
    %cst_30 = arith.constant dense<0.000000e+00> : vector<256x128xf32>
    %40 = tpu.matmul %38, %39, %cst_30 {dimension_numbers = #tpu.dot_dimension_numbers<[1], [0], [0], [1], [0, 0, 1, 1], [], []>} : vector<256x1152xbf16>, vector<1152x128xbf16>, vector<256x128xf32> -> vector<256x128xf32>
    %c0_31 = arith.constant 0 : index
    %c0_32 = arith.constant 0 : index
    %41 = vector.load %arg3[%c0_31, %c0_32] : memref<1x128xf32, #tpu.memory_space<vmem>>, vector<1x128xf32>
    %42 = vector.broadcast %41 : vector<1x128xf32> to vector<256x128xf32>
    %43 = arith.addf %40, %42 : vector<256x128xf32>
    %cst_33 = arith.constant 0.000000e+00 : f32
    %44 = vector.broadcast %cst_33 : f32 to vector<256x128xf32>
    %45 = arith.maximumf %43, %44 : vector<256x128xf32>
    %46 = vector.shape_cast %45 : vector<256x128xf32> to vector<16x16x128xf32>
    %47 = arith.truncf %46 : vector<16x16x128xf32> to vector<16x16x128xbf16>
    %c1 = arith.constant 1 : index
    %c1_34 = arith.constant 1 : index
    %c0_35 = arith.constant 0 : index
    %48 = vector.load %arg7[%c1, %c1_34, %c0_35] : memref<18x18x128xbf16, #tpu.memory_space<vmem>>, vector<16x16x128xbf16>
    tpu.vector_store %arg7[%c1, %c1_34, %c0_35], %47 {strides = array<i32>} : memref<18x18x128xbf16, #tpu.memory_space<vmem>>, vector<16x16x128xbf16>,
    %c0_36 = arith.constant 0 : index
    %c0_37 = arith.constant 0 : index
    %c0_38 = arith.constant 0 : index
    %49 = vector.load %arg7[%c0_36, %c0_37, %c0_38] : memref<18x18x128xbf16, #tpu.memory_space<vmem>>, vector<16x16x128xbf16>
    %50 = vector.shape_cast %49 : vector<16x16x128xbf16> to vector<256x128xbf16>
    %c0_39 = arith.constant 0 : index
    %c0_40 = arith.constant 0 : index
    %51 = vector.load %arg9[%c0_39, %c0_40] : memref<256x1152xbf16, #tpu.memory_space<vmem>>, vector<256x128xbf16>
    tpu.vector_store %arg9[%c0_39, %c0_40], %50 {strides = array<i32>} : memref<256x1152xbf16, #tpu.memory_space<vmem>>, vector<256x128xbf16>,
    %c0_41 = arith.constant 0 : index
    %c1_42 = arith.constant 1 : index
    %c0_43 = arith.constant 0 : index
    %52 = vector.load %arg7[%c0_41, %c1_42, %c0_43] : memref<18x18x128xbf16, #tpu.memory_space<vmem>>, vector<16x16x128xbf16>
    %53 = vector.shape_cast %52 : vector<16x16x128xbf16> to vector<256x128xbf16>
    %c0_44 = arith.constant 0 : index
    %c128_45 = arith.constant 128 : index
    %54 = vector.load %arg9[%c0_44, %c128_45] : memref<256x1152xbf16, #tpu.memory_space<vmem>>, vector<256x128xbf16>
    tpu.vector_store %arg9[%c0_44, %c128_45], %53 {strides = array<i32>} : memref<256x1152xbf16, #tpu.memory_space<vmem>>, vector<256x128xbf16>,
    %c0_46 = arith.constant 0 : index
    %c2 = arith.constant 2 : index
    %c0_47 = arith.constant 0 : index
    %55 = vector.load %arg7[%c0_46, %c2, %c0_47] : memref<18x18x128xbf16, #tpu.memory_space<vmem>>, vector<16x16x128xbf16>
    %56 = vector.shape_cast %55 : vector<16x16x128xbf16> to vector<256x128xbf16>
    %c0_48 = arith.constant 0 : index
    %c256_49 = arith.constant 256 : index
    %57 = vector.load %arg9[%c0_48, %c256_49] : memref<256x1152xbf16, #tpu.memory_space<vmem>>, vector<256x128xbf16>
    tpu.vector_store %arg9[%c0_48, %c256_49], %56 {strides = array<i32>} : memref<256x1152xbf16, #tpu.memory_space<vmem>>, vector<256x128xbf16>,
    %c1_50 = arith.constant 1 : index
    %c0_51 = arith.constant 0 : index
    %c0_52 = arith.constant 0 : index
    %58 = vector.load %arg7[%c1_50, %c0_51, %c0_52] : memref<18x18x128xbf16, #tpu.memory_space<vmem>>, vector<16x16x128xbf16>
    %59 = vector.shape_cast %58 : vector<16x16x128xbf16> to vector<256x128xbf16>
    %c0_53 = arith.constant 0 : index
    %c384_54 = arith.constant 384 : index
    %60 = vector.load %arg9[%c0_53, %c384_54] : memref<256x1152xbf16, #tpu.memory_space<vmem>>, vector<256x128xbf16>
    tpu.vector_store %arg9[%c0_53, %c384_54], %59 {strides = array<i32>} : memref<256x1152xbf16, #tpu.memory_space<vmem>>, vector<256x128xbf16>,
    %c1_55 = arith.constant 1 : index
    %c1_56 = arith.constant 1 : index
    %c0_57 = arith.constant 0 : index
    %61 = vector.load %arg7[%c1_55, %c1_56, %c0_57] : memref<18x18x128xbf16, #tpu.memory_space<vmem>>, vector<16x16x128xbf16>
    %62 = vector.shape_cast %61 : vector<16x16x128xbf16> to vector<256x128xbf16>
    %c0_58 = arith.constant 0 : index
    %c512_59 = arith.constant 512 : index
    %63 = vector.load %arg9[%c0_58, %c512_59] : memref<256x1152xbf16, #tpu.memory_space<vmem>>, vector<256x128xbf16>
    tpu.vector_store %arg9[%c0_58, %c512_59], %62 {strides = array<i32>} : memref<256x1152xbf16, #tpu.memory_space<vmem>>, vector<256x128xbf16>,
    %c1_60 = arith.constant 1 : index
    %c2_61 = arith.constant 2 : index
    %c0_62 = arith.constant 0 : index
    %64 = vector.load %arg7[%c1_60, %c2_61, %c0_62] : memref<18x18x128xbf16, #tpu.memory_space<vmem>>, vector<16x16x128xbf16>
    %65 = vector.shape_cast %64 : vector<16x16x128xbf16> to vector<256x128xbf16>
    %c0_63 = arith.constant 0 : index
    %c640_64 = arith.constant 640 : index
    %66 = vector.load %arg9[%c0_63, %c640_64] : memref<256x1152xbf16, #tpu.memory_space<vmem>>, vector<256x128xbf16>
    tpu.vector_store %arg9[%c0_63, %c640_64], %65 {strides = array<i32>} : memref<256x1152xbf16, #tpu.memory_space<vmem>>, vector<256x128xbf16>,
    %c2_65 = arith.constant 2 : index
    %c0_66 = arith.constant 0 : index
    %c0_67 = arith.constant 0 : index
    %67 = vector.load %arg7[%c2_65, %c0_66, %c0_67] : memref<18x18x128xbf16, #tpu.memory_space<vmem>>, vector<16x16x128xbf16>
    %68 = vector.shape_cast %67 : vector<16x16x128xbf16> to vector<256x128xbf16>
    %c0_68 = arith.constant 0 : index
    %c768_69 = arith.constant 768 : index
    %69 = vector.load %arg9[%c0_68, %c768_69] : memref<256x1152xbf16, #tpu.memory_space<vmem>>, vector<256x128xbf16>
    tpu.vector_store %arg9[%c0_68, %c768_69], %68 {strides = array<i32>} : memref<256x1152xbf16, #tpu.memory_space<vmem>>, vector<256x128xbf16>,
    %c2_70 = arith.constant 2 : index
    %c1_71 = arith.constant 1 : index
    %c0_72 = arith.constant 0 : index
    %70 = vector.load %arg7[%c2_70, %c1_71, %c0_72] : memref<18x18x128xbf16, #tpu.memory_space<vmem>>, vector<16x16x128xbf16>
    %71 = vector.shape_cast %70 : vector<16x16x128xbf16> to vector<256x128xbf16>
    %c0_73 = arith.constant 0 : index
    %c896_74 = arith.constant 896 : index
    %72 = vector.load %arg9[%c0_73, %c896_74] : memref<256x1152xbf16, #tpu.memory_space<vmem>>, vector<256x128xbf16>
    tpu.vector_store %arg9[%c0_73, %c896_74], %71 {strides = array<i32>} : memref<256x1152xbf16, #tpu.memory_space<vmem>>, vector<256x128xbf16>,
    %c2_75 = arith.constant 2 : index
    %c2_76 = arith.constant 2 : index
    %c0_77 = arith.constant 0 : index
    %73 = vector.load %arg7[%c2_75, %c2_76, %c0_77] : memref<18x18x128xbf16, #tpu.memory_space<vmem>>, vector<16x16x128xbf16>
    %74 = vector.shape_cast %73 : vector<16x16x128xbf16> to vector<256x128xbf16>
    %c0_78 = arith.constant 0 : index
    %c1024_79 = arith.constant 1024 : index
    %75 = vector.load %arg9[%c0_78, %c1024_79] : memref<256x1152xbf16, #tpu.memory_space<vmem>>, vector<256x128xbf16>
    tpu.vector_store %arg9[%c0_78, %c1024_79], %74 {strides = array<i32>} : memref<256x1152xbf16, #tpu.memory_space<vmem>>, vector<256x128xbf16>,
    %c0_80 = arith.constant 0 : index
    %c0_81 = arith.constant 0 : index
    %76 = vector.load %arg9[%c0_80, %c0_81] : memref<256x1152xbf16, #tpu.memory_space<vmem>>, vector<256x1152xbf16>
    %c0_82 = arith.constant 0 : index
    %c0_83 = arith.constant 0 : index
    %77 = vector.load %arg4[%c0_82, %c0_83] : memref<1152x128xbf16, #tpu.memory_space<vmem>>, vector<1152x128xbf16>
    %cst_84 = arith.constant dense<0.000000e+00> : vector<256x128xf32>
    %78 = tpu.matmul %76, %77, %cst_84 {dimension_numbers = #tpu.dot_dimension_numbers<[1], [0], [0], [1], [0, 0, 1, 1], [], []>} : vector<256x1152xbf16>, vector<1152x128xbf16>, vector<256x128xf32> -> vector<256x128xf32>
    %c0_85 = arith.constant 0 : index
    %c1_86 = arith.constant 1 : index
    %c1_87 = arith.constant 1 : index
    %c0_88 = arith.constant 0 : index
    %79 = vector.load %arg1[%c0_85, %c1_86, %c1_87, %c0_88] : memref<1x18x18x128xf32, #tpu.memory_space<vmem>>, vector<1x16x16x128xf32>
    %80 = vector.shape_cast %79 : vector<1x16x16x128xf32> to vector<16x16x128xf32>
    %81 = vector.shape_cast %80 : vector<16x16x128xf32> to vector<256x128xf32>
    %82 = arith.addf %81, %78 : vector<256x128xf32>
    %c0_89 = arith.constant 0 : index
    %c0_90 = arith.constant 0 : index
    %83 = vector.load %arg5[%c0_89, %c0_90] : memref<1x128xf32, #tpu.memory_space<vmem>>, vector<1x128xf32>
    %84 = vector.broadcast %83 : vector<1x128xf32> to vector<256x128xf32>
    %85 = arith.addf %82, %84 : vector<256x128xf32>
    %86 = vector.shape_cast %85 : vector<256x128xf32> to vector<1x16x16x128xf32>
    %c0_91 = arith.constant 0 : index
    %c0_92 = arith.constant 0 : index
    %c0_93 = arith.constant 0 : index
    %c0_94 = arith.constant 0 : index
    %87 = vector.load %arg6[%c0_91, %c0_92, %c0_93, %c0_94] : memref<1x16x16x128xf32, #tpu.memory_space<vmem>>, vector<1x16x16x128xf32>
    tpu.vector_store %arg6[%c0_91, %c0_92, %c0_93, %c0_94], %86 {strides = array<i32>} : memref<1x16x16x128xf32, #tpu.memory_space<vmem>>, vector<1x16x16x128xf32>,
    return
  }
  func.func @transform_0(%arg0: i32) -> (i32, i32, i32, i32) {
    %c0_i32 = arith.constant 0 : i32
    %c0_i32_0 = arith.constant 0 : i32
    %c0_i32_1 = arith.constant 0 : i32
    %c0_i32_2 = arith.constant 0 : i32
    return %arg0, %c0_i32, %c0_i32_0, %c0_i32_1 : i32, i32, i32, i32
  }
  func.func @transform_1(%arg0: i32) -> (i32, i32) {
    %c0_i32 = arith.constant 0 : i32
    %c0_i32_0 = arith.constant 0 : i32
    %c0_i32_1 = arith.constant 0 : i32
    return %c0_i32, %c0_i32_0 : i32, i32
  }
  func.func @transform_2(%arg0: i32) -> (i32, i32) {
    %c0_i32 = arith.constant 0 : i32
    %c0_i32_0 = arith.constant 0 : i32
    %c0_i32_1 = arith.constant 0 : i32
    return %c0_i32, %c0_i32_0 : i32, i32
  }
  func.func @transform_3(%arg0: i32) -> (i32, i32) {
    %c0_i32 = arith.constant 0 : i32
    %c0_i32_0 = arith.constant 0 : i32
    %c0_i32_1 = arith.constant 0 : i32
    return %c0_i32, %c0_i32_0 : i32, i32
  }
  func.func @transform_4(%arg0: i32) -> (i32, i32) {
    %c0_i32 = arith.constant 0 : i32
    %c0_i32_0 = arith.constant 0 : i32
    %c0_i32_1 = arith.constant 0 : i32
    return %c0_i32, %c0_i32_0 : i32, i32
  }
  func.func @transform_5(%arg0: i32) -> (i32, i32, i32, i32) {
    %c0_i32 = arith.constant 0 : i32
    %c0_i32_0 = arith.constant 0 : i32
    %c0_i32_1 = arith.constant 0 : i32
    %c0_i32_2 = arith.constant 0 : i32
    return %arg0, %c0_i32, %c0_i32_0, %c0_i32_1 : i32, i32, i32, i32
  }
}

</mosaic_0001>

<llo_original>
// kernel: shake_shake_block.1
$region0: #{shake_shake_block.1}
  #allocation0 [shape = 'u32[]', space=smem, size = 0x4, offset = 0x4, fixed_abs, tag = 'smem constant byte address 0x4 - core index']
  #allocation1 [shape = 'u32[144,128]{1,0:T(1,128)}', space=vmem, size = 0x12000, scoped, tag = 'internal scratch']
  #allocation2 [shape = 'bf16[18,18,128]{2,1,0:T(8,128)(2,1)}', space=vmem, size = 0x1b000, scoped, tag = 'scratch operand']
  #allocation3 [shape = 'bf16[256,1152]{1,0:T(16,128)(2,1)}', space=vmem, size = 0x90000, scoped, tag = 'scratch operand']
  #allocation4 [shape = 'bf16[256,1152]{1,0:T(16,128)(2,1)}', space=vmem, size = 0x90000, scoped, tag = 'scratch operand']
  %s0 = inlined_call_operand.vmem [shape: f32[2,18,18,128], index: 0, kind: input, shape index: {}]
  %s1 = inlined_call_operand.vmem [shape: bf16[1152,128], index: 1, kind: input, shape index: {}]
  %s2 = inlined_call_operand.vmem [shape: f32[1,128], index: 2, kind: input, shape index: {}]
  %s3 = inlined_call_operand.vmem [shape: bf16[1152,128], index: 3, kind: input, shape index: {}]
  %s4 = inlined_call_operand.vmem [shape: f32[1,128], index: 4, kind: input, shape index: {}]
  %s5 = inlined_call_operand.vmem [shape: f32[2,16,16,128], index: 5, kind: output, shape index: {}]
  %s6 = sld [smem:[#allocation0]]
  $region53: #{shake_shake_block.1} parent=0
    _
  %s8 = ssub.s32 1, %s6
  %s9 = scalar_select 0, %s8, %s6
  loop: start=0, step=1, limit=4
  $region2: #{shake_shake_block.1} parent=0 // loop_pre_header
    _
  $region3: #{shake_shake_block.1} parent=0 // loop_header
    %s11 = sphi 0, %s15
    %p12 = scmp.ge.s32.totalorder %s11, 4
    %s21 = sphi 0, %s23
    %s24 = sphi 0, %s21
    %s25 = sphi 0, %s24
    %s41 = sphi 0, %s25
    %s45 = sphi 0, %s45
    %s47 = sphi 0, %s45
    %s48 = sphi 0, %s47
    %s62 = sphi 0, %s48
    %s66 = sphi 0, %s66
    %s68 = sphi 0, %s66
    %s69 = sphi 0, %s68
    %s83 = sphi 0, %s69
    %s87 = sphi 0, %s87
    %s89 = sphi 0, %s87
    %s90 = sphi 0, %s89
    %s104 = sphi 0, %s90
    %s108 = sphi 0, %s108
    %s110 = sphi 0, %s108
    %s111 = sphi 0, %s110
    %s125 = sphi 0, %s111
    %s131 = sphi 0, %s133
    %s134 = sphi 0, %s131
    %s135 = sphi 0, %s134
    %s151 = sphi 0, %s135
  $region4: #{shake_shake_block.1} parent=0 // loop_header_branch
    %14 = sbr.rel (%p12) target = $region8
  $region5: #{shake_shake_block.1} parent=0 // loop_body
    %s16 = ssub.s32 %s11, 1
    %s17 = ssub.s32 %s11, 2
    %s18 = sadd.s32 %s11, 1
    %s19 = ssub.s32 %s11, %s18
    %p20 = scmp.eq.s32.totalorder %s19, 0
    %s22 = sadd.s32 %s21, 1
    %s23 = scalar_select %p20, %s21, %s22
    %p26 = pneg %p20
    %p27 = scmp.eq.s32.totalorder %s11, 1
    %p28 = por %p26, %p27
    %p29 = scmp.ne.s32.totalorder %s21, %s24
    %p30 = scmp.eq.s32.totalorder %s11, 0
    %p31 = por %p29, %p30
    %p32 = scmp.ne.s32.totalorder %s21, %s24
    %p33 = scmp.eq.s32.totalorder %s16, 1
    %p34 = por %p32, %p33
    %p35 = scmp.ne.s32.totalorder %s24, %s25
    %p36 = scmp.eq.s32.totalorder %s16, 0
    %p37 = por %p35, %p36
    %p38 = scmp.ne.s32.totalorder %s24, %s25
    %p39 = scmp.eq.s32.totalorder %s17, 1
    %p40 = por %p38, %p39
    %p42 = scmp.ne.s32.totalorder %s25, %s41
    %p43 = scmp.eq.s32.totalorder %s17, 0
    %p44 = por %p42, %p43
    %s46 = sadd.s32 %s45, 1
    %p49 = scmp.eq.s32.totalorder %s11, 1
    %p50 = scmp.ne.s32.totalorder %s45, %s47
    %p51 = scmp.eq.s32.totalorder %s11, 0
    %p52 = por %p50, %p51
    %p53 = scmp.ne.s32.totalorder %s45, %s47
    %p54 = scmp.eq.s32.totalorder %s16, 1
    %p55 = por %p53, %p54
    %p56 = scmp.ne.s32.totalorder %s47, %s48
    %p57 = scmp.eq.s32.totalorder %s16, 0
    %p58 = por %p56, %p57
    %p59 = scmp.ne.s32.totalorder %s47, %s48
    %p60 = scmp.eq.s32.totalorder %s17, 1
    %p61 = por %p59, %p60
    %p63 = scmp.ne.s32.totalorder %s48, %s62
    %p64 = scmp.eq.s32.totalorder %s17, 0
    %p65 = por %p63, %p64
    %s67 = sadd.s32 %s66, 1
    %p70 = scmp.eq.s32.totalorder %s11, 1
    %p71 = scmp.ne.s32.totalorder %s66, %s68
    %p72 = scmp.eq.s32.totalorder %s11, 0
    %p73 = por %p71, %p72
    %p74 = scmp.ne.s32.totalorder %s66, %s68
    %p75 = scmp.eq.s32.totalorder %s16, 1
    %p76 = por %p74, %p75
    %p77 = scmp.ne.s32.totalorder %s68, %s69
    %p78 = scmp.eq.s32.totalorder %s16, 0
    %p79 = por %p77, %p78
    %p80 = scmp.ne.s32.totalorder %s68, %s69
    %p81 = scmp.eq.s32.totalorder %s17, 1
    %p82 = por %p80, %p81
    %p84 = scmp.ne.s32.totalorder %s69, %s83
    %p85 = scmp.eq.s32.totalorder %s17, 0
    %p86 = por %p84, %p85
    %s88 = sadd.s32 %s87, 1
    %p91 = scmp.eq.s32.totalorder %s11, 1
    %p92 = scmp.ne.s32.totalorder %s87, %s89
    %p93 = scmp.eq.s32.totalorder %s11, 0
    %p94 = por %p92, %p93
    %p95 = scmp.ne.s32.totalorder %s87, %s89
    %p96 = scmp.eq.s32.totalorder %s16, 1
    %p97 = por %p95, %p96
    %p98 = scmp.ne.s32.totalorder %s89, %s90
    %p99 = scmp.eq.s32.totalorder %s16, 0
    %p100 = por %p98, %p99
    %p101 = scmp.ne.s32.totalorder %s89, %s90
    %p102 = scmp.eq.s32.totalorder %s17, 1
    %p103 = por %p101, %p102
    %p105 = scmp.ne.s32.totalorder %s90, %s104
    %p106 = scmp.eq.s32.totalorder %s17, 0
    %p107 = por %p105, %p106
    %s109 = sadd.s32 %s108, 1
    %p112 = scmp.eq.s32.totalorder %s11, 1
    %p113 = scmp.ne.s32.totalorder %s108, %s110
    %p114 = scmp.eq.s32.totalorder %s11, 0
    %p115 = por %p113, %p114
    %p116 = scmp.ne.s32.totalorder %s108, %s110
    %p117 = scmp.eq.s32.totalorder %s16, 1
    %p118 = por %p116, %p117
    %p119 = scmp.ne.s32.totalorder %s110, %s111
    %p120 = scmp.eq.s32.totalorder %s16, 0
    %p121 = por %p119, %p120
    %p122 = scmp.ne.s32.totalorder %s110, %s111
    %p123 = scmp.eq.s32.totalorder %s17, 1
    %p124 = por %p122, %p123
    %p126 = scmp.ne.s32.totalorder %s111, %s125
    %p127 = scmp.eq.s32.totalorder %s17, 0
    %p128 = por %p126, %p127
    %s129 = ssub.s32 %s11, %s18
    %p130 = scmp.eq.s32.totalorder %s129, 0
    %s132 = sadd.s32 %s131, 1
    %s133 = scalar_select %p130, %s131, %s132
    %p136 = pneg %p130
    %p137 = scmp.eq.s32.totalorder %s11, 1
    %p138 = por %p136, %p137
    %p139 = scmp.ne.s32.totalorder %s131, %s134
    %p140 = scmp.eq.s32.totalorder %s11, 0
    %p141 = por %p139, %p140
    %p142 = scmp.ne.s32.totalorder %s131, %s134
    %p143 = scmp.eq.s32.totalorder %s16, 1
    %p144 = por %p142, %p143
    %p145 = scmp.ne.s32.totalorder %s134, %s135
    %p146 = scmp.eq.s32.totalorder %s16, 0
    %p147 = por %p145, %p146
    %p148 = scmp.ne.s32.totalorder %s134, %s135
    %p149 = scmp.eq.s32.totalorder %s17, 1
    %p150 = por %p148, %p149
    %p152 = scmp.ne.s32.totalorder %s135, %s151
    %p153 = scmp.eq.s32.totalorder %s17, 0
    %p154 = por %p152, %p153
    %p155 = scmp.le.s32.totalorder 1, %s11
    %p156 = scmp.lt.s32.totalorder %s11, 3
    %p157 = pnand %p155, %p156
    %p158 = pneg %p157
    // Predicated region
    $region9: #{shake_shake_block.1} parent=5 // pred_check
      _
    $region10: #{shake_shake_block.1} parent=5 // pred_check_branch
      %160 = sbr.rel (%p157) target = $region12
    $region11: #{shake_shake_block.1} parent=5 // pred_region
      %s161 = ssub.s32 %s11, 1
      // Predicated region
      $region13: #{shake_shake_block.1} parent=11 // pred_check
        %p162 = pneg %p58
      $region14: #{shake_shake_block.1} parent=11 // pred_check_branch
        %164 = sbr.rel (%p162) target = $region16
      $region15: #{shake_shake_block.1} parent=11 // pred_region
        _
      $region16: #{shake_shake_block.1} parent=11 // pred_fallthru
        _
      // Predicated region
      $region17: #{shake_shake_block.1} parent=11 // pred_check
        %p165 = pneg %p79
      $region18: #{shake_shake_block.1} parent=11 // pred_check_branch
        %167 = sbr.rel (%p165) target = $region20
      $region19: #{shake_shake_block.1} parent=11 // pred_region
        _
      $region20: #{shake_shake_block.1} parent=11 // pred_fallthru
        _
      // Predicated region
      $region21: #{shake_shake_block.1} parent=11 // pred_check
        %p168 = pneg %p100
      $region22: #{shake_shake_block.1} parent=11 // pred_check_branch
        %170 = sbr.rel (%p168) target = $region24
      $region23: #{shake_shake_block.1} parent=11 // pred_region
        _
      $region24: #{shake_shake_block.1} parent=11 // pred_fallthru
        _
      // Predicated region
      $region25: #{shake_shake_block.1} parent=11 // pred_check
        %p171 = pneg %p121
      $region26: #{shake_shake_block.1} parent=11 // pred_check_branch
        %173 = sbr.rel (%p171) target = $region28
      $region27: #{shake_shake_block.1} parent=11 // pred_region
        _
      $region28: #{shake_shake_block.1} parent=11 // pred_fallthru
        _
    $region12: #{shake_shake_block.1} parent=5 // pred_fallthru
      _
    %p174 = scmp.lt.s32.totalorder %s11, 2
    // Predicated region
    $region29: #{shake_shake_block.1} parent=5 // pred_check
      %p175 = pneg %p174
    $region30: #{shake_shake_block.1} parent=5 // pred_check_branch
      %177 = sbr.rel (%p175) target = $region32
    $region31: #{shake_shake_block.1} parent=5 // pred_region
      // Predicated region
      $region33: #{shake_shake_block.1} parent=31 // pred_check
        %p178 = pneg %p31
      $region34: #{shake_shake_block.1} parent=31 // pred_check_branch
        %180 = sbr.rel (%p178) target = $region36
      $region35: #{shake_shake_block.1} parent=31 // pred_region
        %p181 = scmp.lt.s32.totalorder %s11, 1
        %s182 = scalar_select %p181, %s11, 1
        %s183 = smul.addr %s182, 54
        %s184 = smul.addr %s183, 8
        %s185 = scalar_lea.vmem %s0, %s184
      $region36: #{shake_shake_block.1} parent=31 // pred_fallthru
        _
    $region32: #{shake_shake_block.1} parent=5 // pred_fallthru
      _
    %p186 = scmp.le.s32.totalorder 1, %s11
    %p187 = scmp.lt.s32.totalorder %s11, 3
    %p188 = pnand %p186, %p187
    %p189 = pneg %p188
    // Predicated region
    $region37: #{shake_shake_block.1} parent=5 // pred_check
      _
    $region38: #{shake_shake_block.1} parent=5 // pred_check_branch
      %191 = sbr.rel (%p188) target = $region40
    $region39: #{shake_shake_block.1} parent=5 // pred_region
      %s192 = ssub.s32 %s11, 1
      %p193 = scmp.lt.s32.totalorder %s16, 1
      %s194 = scalar_select %p193, %s16, 1
      %s195 = smul.addr %s194, 54
      %s196 = smul.addr %s195, 8
      %s197 = scalar_lea.vmem %s0, %s196
      %p198 = pneg %p37
      %p199 = pneg %p34
      %p200 = pneg %p58
      %p201 = pneg %p55
      %p202 = pneg %p79
      %p203 = pneg %p76
      %p204 = pneg %p100
      %p205 = pneg %p97
      %p206 = pneg %p121
      %p207 = pneg %p118
      %p208 = pneg %p147
      %p209 = pneg %p144
      %p210 = scmp.lt.s32.totalorder %s16, 1
      %s211 = scalar_select %p210, %s16, 1
      %s212 = smul.addr %s211, 32
      %s213 = smul.addr %s212, 8
      %s214 = scalar_lea.vmem %s5, %s213
      %p215 = scmp.lt.s32.totalorder %s16, 1
      %s216 = scalar_select %p215, %s16, 1
      %s217 = smul.addr %s216, 54
      %s218 = smul.addr %s217, 8
      %s219 = scalar_lea.vmem %s0, %s218
      %p220 = scmp.lt.s32.totalorder %s16, 1
      %s221 = scalar_select %p220, %s16, 1
      %s222 = smul.addr %s221, 32
      %s223 = smul.addr %s222, 8
      %s224 = scalar_lea.vmem %s5, %s223
      %226 = vst [vmem:[#allocation2] sm:$0xf] 0
      %227 = vst [vmem:[#allocation2 + $0x4] sm:$0xf] 0
      %228 = vst [vmem:[#allocation2 + $0x8] sm:$0x1] 0
      %s229 = scalar_lea.vmem [#allocation2], 204
      %230 = vst [vmem:[%s229] sm:$0xf] 0
      %231 = vst [vmem:[%s229 + $0x4] sm:$0xf] 0
      %232 = vst [vmem:[%s229 + $0x8] sm:$0x1] 0
      %vm233 = vcmask 1040384
      %vm234 = vsmask.f32 256
      %vm235 = vmand %vm233, %vm234
      %v236 = vld [vmem:[#allocation2] sm:$0x1]
      %v237 = vsel %vm235, 0, %v236
      %238 = vst [vmem:[#allocation2] sm:$0x1] %v237
      %v239 = vld [vmem:[#allocation2 + $0xc] sm:$0x1]
      %v240 = vsel %vm235, 0, %v239
      %241 = vst [vmem:[#allocation2 + $0xc] sm:$0x1] %v240
      %v242 = vld [vmem:[#allocation2 + $0x18] sm:$0x1]
      %v243 = vsel %vm235, 0, %v242
      %244 = vst [vmem:[#allocation2 + $0x18] sm:$0x1] %v243
      %v245 = vld [vmem:[#allocation2 + $0x24] sm:$0x1]
      %v246 = vsel %vm235, 0, %v245
      %247 = vst [vmem:[#allocation2 + $0x24] sm:$0x1] %v246
      %v248 = vld [vmem:[#allocation2 + $0x30] sm:$0x1]
      %v249 = vsel %vm235, 0, %v248
      %250 = vst [vmem:[#allocation2 + $0x30] sm:$0x1] %v249
      %v251 = vld [vmem:[#allocation2 + $0x3c] sm:$0x1]
      %v252 = vsel %vm235, 0, %v251
      %253 = vst [vmem:[#allocation2 + $0x3c] sm:$0x1] %v252
      %v254 = vld [vmem:[#allocation2 + $0x48] sm:$0x1]
      %v255 = vsel %vm235, 0, %v254
      %256 = vst [vmem:[#allocation2 + $0x48] sm:$0x1] %v255
      %v257 = vld [vmem:[#allocation2 + $0x54] sm:$0x1]
      %v258 = vsel %vm235, 0, %v257
      %259 = vst [vmem:[#allocation2 + $0x54] sm:$0x1] %v258
      %v260 = vld [vmem:[#allocation2 + $0x60] sm:$0x1]
      %v261 = vsel %vm235, 0, %v260
      %262 = vst [vmem:[#allocation2 + $0x60] sm:$0x1] %v261
      %v263 = vld [vmem:[#allocation2 + $0x6c] sm:$0x1]
      %v264 = vsel %vm235, 0, %v263
      %265 = vst [vmem:[#allocation2 + $0x6c] sm:$0x1] %v264
      %v266 = vld [vmem:[#allocation2 + $0x78] sm:$0x1]
      %v267 = vsel %vm235, 0, %v266
      %268 = vst [vmem:[#allocation2 + $0x78] sm:$0x1] %v267
      %v269 = vld [vmem:[#allocation2 + $0x84] sm:$0x1]
      %v270 = vsel %vm235, 0, %v269
      %271 = vst [vmem:[#allocation2 + $0x84] sm:$0x1] %v270
      %v272 = vld [vmem:[#allocation2 + $0x90] sm:$0x1]
      %v273 = vsel %vm235, 0, %v272
      %274 = vst [vmem:[#allocation2 + $0x90] sm:$0x1] %v273
      %v275 = vld [vmem:[#allocation2 + $0x9c] sm:$0x1]
      %v276 = vsel %vm235, 0, %v275
      %277 = vst [vmem:[#allocation2 + $0x9c] sm:$0x1] %v276
      %v278 = vld [vmem:[#allocation2 + $0xa8] sm:$0x1]
      %v279 = vsel %vm235, 0, %v278
      %280 = vst [vmem:[#allocation2 + $0xa8] sm:$0x1] %v279
      %v281 = vld [vmem:[#allocation2 + $0xb4] sm:$0x1]
      %v282 = vsel %vm235, 0, %v281
      %283 = vst [vmem:[#allocation2 + $0xb4] sm:$0x1] %v282
      %v284 = vld [vmem:[#allocation2 + $0xc0] sm:$0x1]
      %v285 = vsel %vm235, 0, %v284
      %286 = vst [vmem:[#allocation2 + $0xc0] sm:$0x1] %v285
      %v287 = vld [vmem:[#allocation2 + $0xcc] sm:$0x1]
      %v288 = vsel %vm235, 0, %v287
      %289 = vst [vmem:[#allocation2 + $0xcc] sm:$0x1] %v288
      %vm290 = vsmask.f32 7938
      %vm291 = vmand %vm233, %vm290
      %v292 = vld [vmem:[#allocation2 + $0x8] sm:$0x1]
      %v293 = vsel %vm291, 0, %v292
      %294 = vst [vmem:[#allocation2 + $0x8] sm:$0x1] %v293
      %v295 = vld [vmem:[#allocation2 + $0x14] sm:$0x1]
      %v296 = vsel %vm291, 0, %v295
      %297 = vst [vmem:[#allocation2 + $0x14] sm:$0x1] %v296
      %v298 = vld [vmem:[#allocation2 + $0x20] sm:$0x1]
      %v299 = vsel %vm291, 0, %v298
      %300 = vst [vmem:[#allocation2 + $0x20] sm:$0x1] %v299
      %v301 = vld [vmem:[#allocation2 + $0x2c] sm:$0x1]
      %v302 = vsel %vm291, 0, %v301
      %303 = vst [vmem:[#allocation2 + $0x2c] sm:$0x1] %v302
      %v304 = vld [vmem:[#allocation2 + $0x38] sm:$0x1]
      %v305 = vsel %vm291, 0, %v304
      %306 = vst [vmem:[#allocation2 + $0x38] sm:$0x1] %v305
      %v307 = vld [vmem:[#allocation2 + $0x44] sm:$0x1]
      %v308 = vsel %vm291, 0, %v307
      %309 = vst [vmem:[#allocation2 + $0x44] sm:$0x1] %v308
      %v310 = vld [vmem:[#allocation2 + $0x50] sm:$0x1]
      %v311 = vsel %vm291, 0, %v310
      %312 = vst [vmem:[#allocation2 + $0x50] sm:$0x1] %v311
      %v313 = vld [vmem:[#allocation2 + $0x5c] sm:$0x1]
      %v314 = vsel %vm291, 0, %v313
      %315 = vst [vmem:[#allocation2 + $0x5c] sm:$0x1] %v314
      %v316 = vld [vmem:[#allocation2 + $0x68] sm:$0x1]
      %v317 = vsel %vm291, 0, %v316
      %318 = vst [vmem:[#allocation2 + $0x68] sm:$0x1] %v317
      %v319 = vld [vmem:[#allocation2 + $0x74] sm:$0x1]
      %v320 = vsel %vm291, 0, %v319
      %321 = vst [vmem:[#allocation2 + $0x74] sm:$0x1] %v320
      %v322 = vld [vmem:[#allocation2 + $0x80] sm:$0x1]
      %v323 = vsel %vm291, 0, %v322
      %324 = vst [vmem:[#allocation2 + $0x80] sm:$0x1] %v323
      %v325 = vld [vmem:[#allocation2 + $0x8c] sm:$0x1]
      %v326 = vsel %vm291, 0, %v325
      %327 = vst [vmem:[#allocation2 + $0x8c] sm:$0x1] %v326
      %v328 = vld [vmem:[#allocation2 + $0x98] sm:$0x1]
      %v329 = vsel %vm291, 0, %v328
      %330 = vst [vmem:[#allocation2 + $0x98] sm:$0x1] %v329
      %v331 = vld [vmem:[#allocation2 + $0xa4] sm:$0x1]
      %v332 = vsel %vm291, 0, %v331
      %333 = vst [vmem:[#allocation2 + $0xa4] sm:$0x1] %v332
      %v334 = vld [vmem:[#allocation2 + $0xb0] sm:$0x1]
      %v335 = vsel %vm291, 0, %v334
      %336 = vst [vmem:[#allocation2 + $0xb0] sm:$0x1] %v335
      %v337 = vld [vmem:[#allocation2 + $0xbc] sm:$0x1]
      %v338 = vsel %vm291, 0, %v337
      %339 = vst [vmem:[#allocation2 + $0xbc] sm:$0x1] %v338
      %v340 = vld [vmem:[#allocation2 + $0xc8] sm:$0x1]
      %v341 = vsel %vm291, 0, %v340
      %342 = vst [vmem:[#allocation2 + $0xc8] sm:$0x1] %v341
      %v343 = vld [vmem:[#allocation2 + $0xd4] sm:$0x1]
      %v344 = vsel %vm291, 0, %v343
      %345 = vst [vmem:[#allocation2 + $0xd4] sm:$0x1] %v344
      %v346 = vld [vmem:[%s219] sm:$0xff]
      %v347 = vld [vmem:[%s219 + $0x8] sm:$0xff]
      %v348 = vld [vmem:[%s219 + $0x10] sm:$0x3]
      %v349 = vld [vmem:[%s219 + $0x18] sm:$0xff]
      %v350 = vld [vmem:[%s219 + $0x20] sm:$0xff]
      %v351 = vld [vmem:[%s219 + $0x28] sm:$0x3]
      %v352 = vld [vmem:[%s219 + $0x30] sm:$0xff]
      %v353 = vld [vmem:[%s219 + $0x38] sm:$0xff]
      %v354 = vld [vmem:[%s219 + $0x40] sm:$0x3]
      %v355 = vld [vmem:[%s219 + $0x48] sm:$0xff]
      %v356 = vld [vmem:[%s219 + $0x50] sm:$0xff]
      %v357 = vld [vmem:[%s219 + $0x58] sm:$0x3]
      %v358 = vld [vmem:[%s219 + $0x60] sm:$0xff]
      %v359 = vld [vmem:[%s219 + $0x68] sm:$0xff]
      %v360 = vld [vmem:[%s219 + $0x70] sm:$0x3]
      %v361 = vld [vmem:[%s219 + $0x78] sm:$0xff]
      %v362 = vld [vmem:[%s219 + $0x80] sm:$0xff]
      %v363 = vld [vmem:[%s219 + $0x88] sm:$0x3]
      %v364 = vld [vmem:[%s219 + $0x90] sm:$0xff]
      %v365 = vld [vmem:[%s219 + $0x98] sm:$0xff]
      %v366 = vld [vmem:[%s219 + $0xa0] sm:$0x3]
      %v367 = vld [vmem:[%s219 + $0xa8] sm:$0xff]
      %v368 = vld [vmem:[%s219 + $0xb0] sm:$0xff]
      %v369 = vld [vmem:[%s219 + $0xb8] sm:$0x3]
      %v370 = vld [vmem:[%s219 + $0xc0] sm:$0xff]
      %v371 = vld [vmem:[%s219 + $0xc8] sm:$0xff]
      %v372 = vld [vmem:[%s219 + $0xd0] sm:$0x3]
      %v373 = vld [vmem:[%s219 + $0xd8] sm:$0xff]
      %v374 = vld [vmem:[%s219 + $0xe0] sm:$0xff]
      %v375 = vld [vmem:[%s219 + $0xe8] sm:$0x3]
      %v376 = vld [vmem:[%s219 + $0xf0] sm:$0xff]
      %v377 = vld [vmem:[%s219 + $0xf8] sm:$0xff]
      %v378 = vld [vmem:[%s219 + $0x100] sm:$0x3]
      %v379 = vld [vmem:[%s219 + $0x108] sm:$0xff]
      %v380 = vld [vmem:[%s219 + $0x110] sm:$0xff]
      %v381 = vld [vmem:[%s219 + $0x118] sm:$0x3]
      %v382 = vld [vmem:[%s219 + $0x120] sm:$0xff]
      %v383 = vld [vmem:[%s219 + $0x128] sm:$0xff]
      %v384 = vld [vmem:[%s219 + $0x130] sm:$0x3]
      %v385 = vld [vmem:[%s219 + $0x138] sm:$0xff]
      %v386 = vld [vmem:[%s219 + $0x140] sm:$0xff]
      %v387 = vld [vmem:[%s219 + $0x148] sm:$0x3]
      %v388 = vld [vmem:[%s219 + $0x150] sm:$0xff]
      %v389 = vld [vmem:[%s219 + $0x158] sm:$0xff]
      %v390 = vld [vmem:[%s219 + $0x160] sm:$0x3]
      %v391 = vld [vmem:[%s219 + $0x168] sm:$0xff]
      %v392 = vld [vmem:[%s219 + $0x170] sm:$0xff]
      %v393 = vld [vmem:[%s219 + $0x178] sm:$0x3]
      %v394 = vld [vmem:[%s219 + $0x180] sm:$0xff]
      %v395 = vld [vmem:[%s219 + $0x188] sm:$0xff]
      %v396 = vld [vmem:[%s219 + $0x190] sm:$0x3]
      %v397 = vld [vmem:[%s219 + $0x198] sm:$0xff]
      %v398 = vld [vmem:[%s219 + $0x1a0] sm:$0xff]
      %v399 = vld [vmem:[%s219 + $0x1a8] sm:$0x3]
      %v400 = vmax.f32 %v346, 0.0
      %v401 = vmax.f32 %v347, 0.0
      %v402 = vmax.f32 %v348, 0.0
      %v403 = vmax.f32 %v349, 0.0
      %v404 = vmax.f32 %v350, 0.0
      %v405 = vmax.f32 %v351, 0.0
      %v406 = vmax.f32 %v352, 0.0
      %v407 = vmax.f32 %v353, 0.0
      %v408 = vmax.f32 %v354, 0.0
      %v409 = vmax.f32 %v355, 0.0
      %v410 = vmax.f32 %v356, 0.0
      %v411 = vmax.f32 %v357, 0.0
      %v412 = vmax.f32 %v358, 0.0
      %v413 = vmax.f32 %v359, 0.0
      %v414 = vmax.f32 %v360, 0.0
      %v415 = vmax.f32 %v361, 0.0
      %v416 = vmax.f32 %v362, 0.0
      %v417 = vmax.f32 %v363, 0.0
      %v418 = vmax.f32 %v364, 0.0
      %v419 = vmax.f32 %v365, 0.0
      %v420 = vmax.f32 %v366, 0.0
      %v421 = vmax.f32 %v367, 0.0
      %v422 = vmax.f32 %v368, 0.0
      %v423 = vmax.f32 %v369, 0.0
      %v424 = vmax.f32 %v370, 0.0
      %v425 = vmax.f32 %v371, 0.0
      %v426 = vmax.f32 %v372, 0.0
      %v427 = vmax.f32 %v373, 0.0
      %v428 = vmax.f32 %v374, 0.0
      %v429 = vmax.f32 %v375, 0.0
      %v430 = vmax.f32 %v376, 0.0
      %v431 = vmax.f32 %v377, 0.0
      %v432 = vmax.f32 %v378, 0.0
      %v433 = vmax.f32 %v379, 0.0
      %v434 = vmax.f32 %v380, 0.0
      %v435 = vmax.f32 %v381, 0.0
      %v436 = vmax.f32 %v382, 0.0
      %v437 = vmax.f32 %v383, 0.0
      %v438 = vmax.f32 %v384, 0.0
      %v439 = vmax.f32 %v385, 0.0
      %v440 = vmax.f32 %v386, 0.0
      %v441 = vmax.f32 %v387, 0.0
      %v442 = vmax.f32 %v388, 0.0
      %v443 = vmax.f32 %v389, 0.0
      %v444 = vmax.f32 %v390, 0.0
      %v445 = vmax.f32 %v391, 0.0
      %v446 = vmax.f32 %v392, 0.0
      %v447 = vmax.f32 %v393, 0.0
      %v448 = vmax.f32 %v394, 0.0
      %v449 = vmax.f32 %v395, 0.0
      %v450 = vmax.f32 %v396, 0.0
      %v451 = vmax.f32 %v397, 0.0
      %v452 = vmax.f32 %v398, 0.0
      %v453 = vmax.f32 %v399, 0.0
      %v454 = vpack.c.bf16 %v401, %v400
      %v455 = vpack.c.bf16 %v402, %v402
      %v456 = vpack.c.bf16 %v404, %v403
      %v457 = vpack.c.bf16 %v405, %v405
      %v458 = vpack.c.bf16 %v407, %v406
      %v459 = vpack.c.bf16 %v408, %v408
      %v460 = vpack.c.bf16 %v410, %v409
      %v461 = vpack.c.bf16 %v411, %v411
      %v462 = vpack.c.bf16 %v413, %v412
      %v463 = vpack.c.bf16 %v414, %v414
      %v464 = vpack.c.bf16 %v416, %v415
      %v465 = vpack.c.bf16 %v417, %v417
      %v466 = vpack.c.bf16 %v419, %v418
      %v467 = vpack.c.bf16 %v420, %v420
      %v468 = vpack.c.bf16 %v422, %v421
      %v469 = vpack.c.bf16 %v423, %v423
      %v470 = vpack.c.bf16 %v425, %v424
      %v471 = vpack.c.bf16 %v426, %v426
      %v472 = vpack.c.bf16 %v428, %v427
      %v473 = vpack.c.bf16 %v429, %v429
      %v474 = vpack.c.bf16 %v431, %v430
      %v475 = vpack.c.bf16 %v432, %v432
      %v476 = vpack.c.bf16 %v434, %v433
      %v477 = vpack.c.bf16 %v435, %v435
      %v478 = vpack.c.bf16 %v437, %v436
      %v479 = vpack.c.bf16 %v438, %v438
      %v480 = vpack.c.bf16 %v440, %v439
      %v481 = vpack.c.bf16 %v441, %v441
      %v482 = vpack.c.bf16 %v443, %v442
      %v483 = vpack.c.bf16 %v444, %v444
      %v484 = vpack.c.bf16 %v446, %v445
      %v485 = vpack.c.bf16 %v447, %v447
      %v486 = vpack.c.bf16 %v449, %v448
      %v487 = vpack.c.bf16 %v450, %v450
      %v488 = vpack.c.bf16 %v452, %v451
      %v489 = vpack.c.bf16 %v453, %v453
      %490 = vst [vmem:[#allocation3] sm:$0xff] %v454
      %491 = vst [vmem:[#allocation3 + $0x48] sm:$0xff] %v456
      %492 = vst [vmem:[#allocation3 + $0x90] sm:$0xff] %v458
      %493 = vst [vmem:[#allocation3 + $0xd8] sm:$0xff] %v460
      %494 = vst [vmem:[#allocation3 + $0x120] sm:$0xff] %v462
      %495 = vst [vmem:[#allocation3 + $0x168] sm:$0xff] %v464
      %496 = vst [vmem:[#allocation3 + $0x1b0] sm:$0xff] %v466
      %497 = vst [vmem:[#allocation3 + $0x1f8] sm:$0xff] %v468
      %498 = vst [vmem:[#allocation3 + $0x240] sm:$0xff] %v470
      %499 = vst [vmem:[#allocation3 + $0x288] sm:$0xff] %v472
      %500 = vst [vmem:[#allocation3 + $0x2d0] sm:$0xff] %v474
      %501 = vst [vmem:[#allocation3 + $0x318] sm:$0xff] %v476
      %502 = vst [vmem:[#allocation3 + $0x360] sm:$0xff] %v478
      %503 = vst [vmem:[#allocation3 + $0x3a8] sm:$0xff] %v480
      %504 = vst [vmem:[#allocation3 + $0x3f0] sm:$0xff] %v482
      %505 = vst [vmem:[#allocation3 + $0x438] sm:$0xff] %v484
      %vm506 = vsmask.f32 7424
      %v508 = vshrl.u32 %v454, 16
      %v510 = vshll.u32 %v454, 16
      %v512 = vrot.slane %v510, 1
      %v513 = vor.u32 %v508, %v512
      %v515 = vshll.u32 %v455, 16
      %v517 = vrot.slane %v515, 1
      %v518 = vsel %vm506, %v513, %v517
      %v520 = vshrl.u32 %v456, 16
      %v522 = vshll.u32 %v456, 16
      %v524 = vrot.slane %v522, 1
      %v525 = vor.u32 %v520, %v524
      %v527 = vshll.u32 %v457, 16
      %v529 = vrot.slane %v527, 1
      %v530 = vsel %vm506, %v525, %v529
      %v532 = vshrl.u32 %v458, 16
      %v534 = vshll.u32 %v458, 16
      %v536 = vrot.slane %v534, 1
      %v537 = vor.u32 %v532, %v536
      %v539 = vshll.u32 %v459, 16
      %v541 = vrot.slane %v539, 1
      %v542 = vsel %vm506, %v537, %v541
      %v544 = vshrl.u32 %v460, 16
      %v546 = vshll.u32 %v460, 16
      %v548 = vrot.slane %v546, 1
      %v549 = vor.u32 %v544, %v548
      %v551 = vshll.u32 %v461, 16
      %v553 = vrot.slane %v551, 1
      %v554 = vsel %vm506, %v549, %v553
      %v556 = vshrl.u32 %v462, 16
      %v558 = vshll.u32 %v462, 16
      %v560 = vrot.slane %v558, 1
      %v561 = vor.u32 %v556, %v560
      %v563 = vshll.u32 %v463, 16
      %v565 = vrot.slane %v563, 1
      %v566 = vsel %vm506, %v561, %v565
      %v568 = vshrl.u32 %v464, 16
      %v570 = vshll.u32 %v464, 16
      %v572 = vrot.slane %v570, 1
      %v573 = vor.u32 %v568, %v572
      %v575 = vshll.u32 %v465, 16
      %v577 = vrot.slane %v575, 1
      %v578 = vsel %vm506, %v573, %v577
      %v580 = vshrl.u32 %v466, 16
      %v582 = vshll.u32 %v466, 16
      %v584 = vrot.slane %v582, 1
      %v585 = vor.u32 %v580, %v584
      %v587 = vshll.u32 %v467, 16
      %v589 = vrot.slane %v587, 1
      %v590 = vsel %vm506, %v585, %v589
      %v592 = vshrl.u32 %v468, 16
      %v594 = vshll.u32 %v468, 16
      %v596 = vrot.slane %v594, 1
      %v597 = vor.u32 %v592, %v596
      %v599 = vshll.u32 %v469, 16
      %v601 = vrot.slane %v599, 1
      %v602 = vsel %vm506, %v597, %v601
      %v604 = vshrl.u32 %v470, 16
      %v606 = vshll.u32 %v470, 16
      %v608 = vrot.slane %v606, 1
      %v609 = vor.u32 %v604, %v608
      %v611 = vshll.u32 %v471, 16
      %v613 = vrot.slane %v611, 1
      %v614 = vsel %vm506, %v609, %v613
      %v616 = vshrl.u32 %v472, 16
      %v618 = vshll.u32 %v472, 16
      %v620 = vrot.slane %v618, 1
      %v621 = vor.u32 %v616, %v620
      %v623 = vshll.u32 %v473, 16
      %v625 = vrot.slane %v623, 1
      %v626 = vsel %vm506, %v621, %v625
      %v628 = vshrl.u32 %v474, 16
      %v630 = vshll.u32 %v474, 16
      %v632 = vrot.slane %v630, 1
      %v633 = vor.u32 %v628, %v632
      %v635 = vshll.u32 %v475, 16
      %v637 = vrot.slane %v635, 1
      %v638 = vsel %vm506, %v633, %v637
      %v640 = vshrl.u32 %v476, 16
      %v642 = vshll.u32 %v476, 16
      %v644 = vrot.slane %v642, 1
      %v645 = vor.u32 %v640, %v644
      %v647 = vshll.u32 %v477, 16
      %v649 = vrot.slane %v647, 1
      %v650 = vsel %vm506, %v645, %v649
      %v652 = vshrl.u32 %v478, 16
      %v654 = vshll.u32 %v478, 16
      %v656 = vrot.slane %v654, 1
      %v657 = vor.u32 %v652, %v656
      %v659 = vshll.u32 %v479, 16
      %v661 = vrot.slane %v659, 1
      %v662 = vsel %vm506, %v657, %v661
      %v664 = vshrl.u32 %v480, 16
      %v666 = vshll.u32 %v480, 16
      %v668 = vrot.slane %v666, 1
      %v669 = vor.u32 %v664, %v668
      %v671 = vshll.u32 %v481, 16
      %v673 = vrot.slane %v671, 1
      %v674 = vsel %vm506, %v669, %v673
      %v676 = vshrl.u32 %v482, 16
      %v678 = vshll.u32 %v482, 16
      %v680 = vrot.slane %v678, 1
      %v681 = vor.u32 %v676, %v680
      %v683 = vshll.u32 %v483, 16
      %v685 = vrot.slane %v683, 1
      %v686 = vsel %vm506, %v681, %v685
      %v688 = vshrl.u32 %v484, 16
      %v690 = vshll.u32 %v484, 16
      %v692 = vrot.slane %v690, 1
      %v693 = vor.u32 %v688, %v692
      %v695 = vshll.u32 %v485, 16
      %v697 = vrot.slane %v695, 1
      %v698 = vsel %vm506, %v693, %v697
      %715 = vst [vmem:[#allocation3 + $0x8] sm:$0xff] %v518
      %716 = vst [vmem:[#allocation3 + $0x50] sm:$0xff] %v530
      %717 = vst [vmem:[#allocation3 + $0x98] sm:$0xff] %v542
      %718 = vst [vmem:[#allocation3 + $0xe0] sm:$0xff] %v554
      %719 = vst [vmem:[#allocation3 + $0x128] sm:$0xff] %v566
      %720 = vst [vmem:[#allocation3 + $0x170] sm:$0xff] %v578
      %721 = vst [vmem:[#allocation3 + $0x1b8] sm:$0xff] %v590
      %722 = vst [vmem:[#allocation3 + $0x200] sm:$0xff] %v602
      %723 = vst [vmem:[#allocation3 + $0x248] sm:$0xff] %v614
      %724 = vst [vmem:[#allocation3 + $0x290] sm:$0xff] %v626
      %725 = vst [vmem:[#allocation3 + $0x2d8] sm:$0xff] %v638
      %726 = vst [vmem:[#allocation3 + $0x320] sm:$0xff] %v650
      %727 = vst [vmem:[#allocation3 + $0x368] sm:$0xff] %v662
      %728 = vst [vmem:[#allocation3 + $0x3b0] sm:$0xff] %v674
      %729 = vst [vmem:[#allocation3 + $0x3f8] sm:$0xff] %v686
      %730 = vst [vmem:[#allocation3 + $0x440] sm:$0xff] %v698
      %vm763 = vcmask 1046528
      %v764 = vrot.slane %v454, 1
      %v765 = vrot.slane %v455, 1
      %v766 = vsel %vm763, %v764, %v765
      %v767 = vrot.slane %v456, 1
      %v768 = vrot.slane %v457, 1
      %v769 = vsel %vm763, %v767, %v768
      %v770 = vrot.slane %v458, 1
      %v771 = vrot.slane %v459, 1
      %v772 = vsel %vm763, %v770, %v771
      %v773 = vrot.slane %v460, 1
      %v774 = vrot.slane %v461, 1
      %v775 = vsel %vm763, %v773, %v774
      %v776 = vrot.slane %v462, 1
      %v777 = vrot.slane %v463, 1
      %v778 = vsel %vm763, %v776, %v777
      %v779 = vrot.slane %v464, 1
      %v780 = vrot.slane %v465, 1
      %v781 = vsel %vm763, %v779, %v780
      %v782 = vrot.slane %v466, 1
      %v783 = vrot.slane %v467, 1
      %v784 = vsel %vm763, %v782, %v783
      %v785 = vrot.slane %v468, 1
      %v786 = vrot.slane %v469, 1
      %v787 = vsel %vm763, %v785, %v786
      %v788 = vrot.slane %v470, 1
      %v789 = vrot.slane %v471, 1
      %v790 = vsel %vm763, %v788, %v789
      %v791 = vrot.slane %v472, 1
      %v792 = vrot.slane %v473, 1
      %v793 = vsel %vm763, %v791, %v792
      %v794 = vrot.slane %v474, 1
      %v795 = vrot.slane %v475, 1
      %v796 = vsel %vm763, %v794, %v795
      %v797 = vrot.slane %v476, 1
      %v798 = vrot.slane %v477, 1
      %v799 = vsel %vm763, %v797, %v798
      %v800 = vrot.slane %v478, 1
      %v801 = vrot.slane %v479, 1
      %v802 = vsel %vm763, %v800, %v801
      %v803 = vrot.slane %v480, 1
      %v804 = vrot.slane %v481, 1
      %v805 = vsel %vm763, %v803, %v804
      %v806 = vrot.slane %v482, 1
      %v807 = vrot.slane %v483, 1
      %v808 = vsel %vm763, %v806, %v807
      %v809 = vrot.slane %v484, 1
      %v810 = vrot.slane %v485, 1
      %v811 = vsel %vm763, %v809, %v810
      %828 = vst [vmem:[#allocation3 + $0x10] sm:$0xff] %v766
      %829 = vst [vmem:[#allocation3 + $0x58] sm:$0xff] %v769
      %830 = vst [vmem:[#allocation3 + $0xa0] sm:$0xff] %v772
      %831 = vst [vmem:[#allocation3 + $0xe8] sm:$0xff] %v775
      %832 = vst [vmem:[#allocation3 + $0x130] sm:$0xff] %v778
      %833 = vst [vmem:[#allocation3 + $0x178] sm:$0xff] %v781
      %834 = vst [vmem:[#allocation3 + $0x1c0] sm:$0xff] %v784
      %835 = vst [vmem:[#allocation3 + $0x208] sm:$0xff] %v787
      %836 = vst [vmem:[#allocation3 + $0x250] sm:$0xff] %v790
      %837 = vst [vmem:[#allocation3 + $0x298] sm:$0xff] %v793
      %838 = vst [vmem:[#allocation3 + $0x2e0] sm:$0xff] %v796
      %839 = vst [vmem:[#allocation3 + $0x328] sm:$0xff] %v799
      %840 = vst [vmem:[#allocation3 + $0x370] sm:$0xff] %v802
      %841 = vst [vmem:[#allocation3 + $0x3b8] sm:$0xff] %v805
      %842 = vst [vmem:[#allocation3 + $0x400] sm:$0xff] %v808
      %843 = vst [vmem:[#allocation3 + $0x448] sm:$0xff] %v811
      %844 = vst [vmem:[#allocation3 + $0x18] sm:$0xff] %v456
      %845 = vst [vmem:[#allocation3 + $0x60] sm:$0xff] %v458
      %846 = vst [vmem:[#allocation3 + $0xa8] sm:$0xff] %v460
      %847 = vst [vmem:[#allocation3 + $0xf0] sm:$0xff] %v462
      %848 = vst [vmem:[#allocation3 + $0x138] sm:$0xff] %v464
      %849 = vst [vmem:[#allocation3 + $0x180] sm:$0xff] %v466
      %850 = vst [vmem:[#allocation3 + $0x1c8] sm:$0xff] %v468
      %851 = vst [vmem:[#allocation3 + $0x210] sm:$0xff] %v470
      %852 = vst [vmem:[#allocation3 + $0x258] sm:$0xff] %v472
      %853 = vst [vmem:[#allocation3 + $0x2a0] sm:$0xff] %v474
      %854 = vst [vmem:[#allocation3 + $0x2e8] sm:$0xff] %v476
      %855 = vst [vmem:[#allocation3 + $0x330] sm:$0xff] %v478
      %856 = vst [vmem:[#allocation3 + $0x378] sm:$0xff] %v480
      %857 = vst [vmem:[#allocation3 + $0x3c0] sm:$0xff] %v482
      %858 = vst [vmem:[#allocation3 + $0x408] sm:$0xff] %v484
      %859 = vst [vmem:[#allocation3 + $0x450] sm:$0xff] %v486
      %v861 = vshrl.u32 %v486, 16
      %v863 = vshll.u32 %v486, 16
      %v865 = vrot.slane %v863, 1
      %v866 = vor.u32 %v861, %v865
      %v868 = vshll.u32 %v487, 16
      %v870 = vrot.slane %v868, 1
      %v871 = vsel %vm506, %v866, %v870
      %873 = vst [vmem:[#allocation3 + $0x20] sm:$0xff] %v530
      %874 = vst [vmem:[#allocation3 + $0x68] sm:$0xff] %v542
      %875 = vst [vmem:[#allocation3 + $0xb0] sm:$0xff] %v554
      %876 = vst [vmem:[#allocation3 + $0xf8] sm:$0xff] %v566
      %877 = vst [vmem:[#allocation3 + $0x140] sm:$0xff] %v578
      %878 = vst [vmem:[#allocation3 + $0x188] sm:$0xff] %v590
      %879 = vst [vmem:[#allocation3 + $0x1d0] sm:$0xff] %v602
      %880 = vst [vmem:[#allocation3 + $0x218] sm:$0xff] %v614
      %881 = vst [vmem:[#allocation3 + $0x260] sm:$0xff] %v626
      %882 = vst [vmem:[#allocation3 + $0x2a8] sm:$0xff] %v638
      %883 = vst [vmem:[#allocation3 + $0x2f0] sm:$0xff] %v650
      %884 = vst [vmem:[#allocation3 + $0x338] sm:$0xff] %v662
      %885 = vst [vmem:[#allocation3 + $0x380] sm:$0xff] %v674
      %886 = vst [vmem:[#allocation3 + $0x3c8] sm:$0xff] %v686
      %887 = vst [vmem:[#allocation3 + $0x410] sm:$0xff] %v698
      %888 = vst [vmem:[#allocation3 + $0x458] sm:$0xff] %v871
      %v891 = vrot.slane %v486, 1
      %v892 = vrot.slane %v487, 1
      %v893 = vsel %vm763, %v891, %v892
      %895 = vst [vmem:[#allocation3 + $0x28] sm:$0xff] %v769
      %896 = vst [vmem:[#allocation3 + $0x70] sm:$0xff] %v772
      %897 = vst [vmem:[#allocation3 + $0xb8] sm:$0xff] %v775
      %898 = vst [vmem:[#allocation3 + $0x100] sm:$0xff] %v778
      %899 = vst [vmem:[#allocation3 + $0x148] sm:$0xff] %v781
      %900 = vst [vmem:[#allocation3 + $0x190] sm:$0xff] %v784
      %901 = vst [vmem:[#allocation3 + $0x1d8] sm:$0xff] %v787
      %902 = vst [vmem:[#allocation3 + $0x220] sm:$0xff] %v790
      %903 = vst [vmem:[#allocation3 + $0x268] sm:$0xff] %v793
      %904 = vst [vmem:[#allocation3 + $0x2b0] sm:$0xff] %v796
      %905 = vst [vmem:[#allocation3 + $0x2f8] sm:$0xff] %v799
      %906 = vst [vmem:[#allocation3 + $0x340] sm:$0xff] %v802
      %907 = vst [vmem:[#allocation3 + $0x388] sm:$0xff] %v805
      %908 = vst [vmem:[#allocation3 + $0x3d0] sm:$0xff] %v808
      %909 = vst [vmem:[#allocation3 + $0x418] sm:$0xff] %v811
      %910 = vst [vmem:[#allocation3 + $0x460] sm:$0xff] %v893
      %911 = vst [vmem:[#allocation3 + $0x30] sm:$0xff] %v458
      %912 = vst [vmem:[#allocation3 + $0x78] sm:$0xff] %v460
      %913 = vst [vmem:[#allocation3 + $0xc0] sm:$0xff] %v462
      %914 = vst [vmem:[#allocation3 + $0x108] sm:$0xff] %v464
      %915 = vst [vmem:[#allocation3 + $0x150] sm:$0xff] %v466
      %916 = vst [vmem:[#allocation3 + $0x198] sm:$0xff] %v468
      %917 = vst [vmem:[#allocation3 + $0x1e0] sm:$0xff] %v470
      %918 = vst [vmem:[#allocation3 + $0x228] sm:$0xff] %v472
      %919 = vst [vmem:[#allocation3 + $0x270] sm:$0xff] %v474
      %920 = vst [vmem:[#allocation3 + $0x2b8] sm:$0xff] %v476
      %921 = vst [vmem:[#allocation3 + $0x300] sm:$0xff] %v478
      %922 = vst [vmem:[#allocation3 + $0x348] sm:$0xff] %v480
      %923 = vst [vmem:[#allocation3 + $0x390] sm:$0xff] %v482
      %924 = vst [vmem:[#allocation3 + $0x3d8] sm:$0xff] %v484
      %925 = vst [vmem:[#allocation3 + $0x420] sm:$0xff] %v486
      %926 = vst [vmem:[#allocation3 + $0x468] sm:$0xff] %v488
      %v928 = vshrl.u32 %v488, 16
      %v930 = vshll.u32 %v488, 16
      %v932 = vrot.slane %v930, 1
      %v933 = vor.u32 %v928, %v932
      %v935 = vshll.u32 %v489, 16
      %v937 = vrot.slane %v935, 1
      %v938 = vsel %vm506, %v933, %v937
      %940 = vst [vmem:[#allocation3 + $0x38] sm:$0xff] %v542
      %941 = vst [vmem:[#allocation3 + $0x80] sm:$0xff] %v554
      %942 = vst [vmem:[#allocation3 + $0xc8] sm:$0xff] %v566
      %943 = vst [vmem:[#allocation3 + $0x110] sm:$0xff] %v578
      %944 = vst [vmem:[#allocation3 + $0x158] sm:$0xff] %v590
      %945 = vst [vmem:[#allocation3 + $0x1a0] sm:$0xff] %v602
      %946 = vst [vmem:[#allocation3 + $0x1e8] sm:$0xff] %v614
      %947 = vst [vmem:[#allocation3 + $0x230] sm:$0xff] %v626
      %948 = vst [vmem:[#allocation3 + $0x278] sm:$0xff] %v638
      %949 = vst [vmem:[#allocation3 + $0x2c0] sm:$0xff] %v650
      %950 = vst [vmem:[#allocation3 + $0x308] sm:$0xff] %v662
      %951 = vst [vmem:[#allocation3 + $0x350] sm:$0xff] %v674
      %952 = vst [vmem:[#allocation3 + $0x398] sm:$0xff] %v686
      %953 = vst [vmem:[#allocation3 + $0x3e0] sm:$0xff] %v698
      %954 = vst [vmem:[#allocation3 + $0x428] sm:$0xff] %v871
      %955 = vst [vmem:[#allocation3 + $0x470] sm:$0xff] %v938
      %v958 = vrot.slane %v488, 1
      %v959 = vrot.slane %v489, 1
      %v960 = vsel %vm763, %v958, %v959
      %962 = vst [vmem:[#allocation3 + $0x40] sm:$0xff] %v772
      %963 = vst [vmem:[#allocation3 + $0x88] sm:$0xff] %v775
      %964 = vst [vmem:[#allocation3 + $0xd0] sm:$0xff] %v778
      %965 = vst [vmem:[#allocation3 + $0x118] sm:$0xff] %v781
      %966 = vst [vmem:[#allocation3 + $0x160] sm:$0xff] %v784
      %967 = vst [vmem:[#allocation3 + $0x1a8] sm:$0xff] %v787
      %968 = vst [vmem:[#allocation3 + $0x1f0] sm:$0xff] %v790
      %969 = vst [vmem:[#allocation3 + $0x238] sm:$0xff] %v793
      %970 = vst [vmem:[#allocation3 + $0x280] sm:$0xff] %v796
      %971 = vst [vmem:[#allocation3 + $0x2c8] sm:$0xff] %v799
      %972 = vst [vmem:[#allocation3 + $0x310] sm:$0xff] %v802
      %973 = vst [vmem:[#allocation3 + $0x358] sm:$0xff] %v805
      %974 = vst [vmem:[#allocation3 + $0x3a0] sm:$0xff] %v808
      %975 = vst [vmem:[#allocation3 + $0x3e8] sm:$0xff] %v811
      %976 = vst [vmem:[#allocation3 + $0x430] sm:$0xff] %v893
      %977 = vst [vmem:[#allocation3 + $0x478] sm:$0xff] %v960
      %v978 = vld [vmem:[#allocation3] sm:$0xff]
      %v979 = vld [vmem:[#allocation3 + $0x8] sm:$0xff]
      %v980 = vld [vmem:[#allocation3 + $0x10] sm:$0xff]
      %v981 = vld [vmem:[#allocation3 + $0x18] sm:$0xff]
      %v982 = vld [vmem:[#allocation3 + $0x20] sm:$0xff]
      %v983 = vld [vmem:[#allocation3 + $0x28] sm:$0xff]
      %v984 = vld [vmem:[#allocation3 + $0x30] sm:$0xff]
      %v985 = vld [vmem:[#allocation3 + $0x38] sm:$0xff]
      %v986 = vld [vmem:[#allocation3 + $0x40] sm:$0xff]
      %v987 = vld [vmem:[#allocation3 + $0x48] sm:$0xff]
      %v988 = vld [vmem:[#allocation3 + $0x50] sm:$0xff]
      %v989 = vld [vmem:[#allocation3 + $0x58] sm:$0xff]
      %v990 = vld [vmem:[#allocation3 + $0x60] sm:$0xff]
      %v991 = vld [vmem:[#allocation3 + $0x68] sm:$0xff]
      %v992 = vld [vmem:[#allocation3 + $0x70] sm:$0xff]
      %v993 = vld [vmem:[#allocation3 + $0x78] sm:$0xff]
      %v994 = vld [vmem:[#allocation3 + $0x80] sm:$0xff]
      %v995 = vld [vmem:[#allocation3 + $0x88] sm:$0xff]
      %v996 = vld [vmem:[#allocation3 + $0x90] sm:$0xff]
      %v997 = vld [vmem:[#allocation3 + $0x98] sm:$0xff]
      %v998 = vld [vmem:[#allocation3 + $0xa0] sm:$0xff]
      %v999 = vld [vmem:[#allocation3 + $0xa8] sm:$0xff]
      %v1000 = vld [vmem:[#allocation3 + $0xb0] sm:$0xff]
      %v1001 = vld [vmem:[#allocation3 + $0xb8] sm:$0xff]
      %v1002 = vld [vmem:[#allocation3 + $0xc0] sm:$0xff]
      %v1003 = vld [vmem:[#allocation3 + $0xc8] sm:$0xff]
      %v1004 = vld [vmem:[#allocation3 + $0xd0] sm:$0xff]
      %v1005 = vld [vmem:[#allocation3 + $0xd8] sm:$0xff]
      %v1006 = vld [vmem:[#allocation3 + $0xe0] sm:$0xff]
      %v1007 = vld [vmem:[#allocation3 + $0xe8] sm:$0xff]
      %v1008 = vld [vmem:[#allocation3 + $0xf0] sm:$0xff]
      %v1009 = vld [vmem:[#allocation3 + $0xf8] sm:$0xff]
      %v1010 = vld [vmem:[#allocation3 + $0x100] sm:$0xff]
      %v1011 = vld [vmem:[#allocation3 + $0x108] sm:$0xff]
      %v1012 = vld [vmem:[#allocation3 + $0x110] sm:$0xff]
      %v1013 = vld [vmem:[#allocation3 + $0x118] sm:$0xff]
      %v1014 = vld [vmem:[#allocation3 + $0x120] sm:$0xff]
      %v1015 = vld [vmem:[#allocation3 + $0x128] sm:$0xff]
      %v1016 = vld [vmem:[#allocation3 + $0x130] sm:$0xff]
      %v1017 = vld [vmem:[#allocation3 + $0x138] sm:$0xff]
      %v1018 = vld [vmem:[#allocation3 + $0x140] sm:$0xff]
      %v1019 = vld [vmem:[#allocation3 + $0x148] sm:$0xff]
      %v1020 = vld [vmem:[#allocation3 + $0x150] sm:$0xff]
      %v1021 = vld [vmem:[#allocation3 + $0x158] sm:$0xff]
      %v1022 = vld [vmem:[#allocation3 + $0x160] sm:$0xff]
      %v1023 = vld [vmem:[#allocation3 + $0x168] sm:$0xff]
      %v1024 = vld [vmem:[#allocation3 + $0x170] sm:$0xff]
      %v1025 = vld [vmem:[#allocation3 + $0x178] sm:$0xff]
      %v1026 = vld [vmem:[#allocation3 + $0x180] sm:$0xff]
      %v1027 = vld [vmem:[#allocation3 + $0x188] sm:$0xff]
      %v1028 = vld [vmem:[#allocation3 + $0x190] sm:$0xff]
      %v1029 = vld [vmem:[#allocation3 + $0x198] sm:$0xff]
      %v1030 = vld [vmem:[#allocation3 + $0x1a0] sm:$0xff]
      %v1031 = vld [vmem:[#allocation3 + $0x1a8] sm:$0xff]
      %v1032 = vld [vmem:[#allocation3 + $0x1b0] sm:$0xff]
      %v1033 = vld [vmem:[#allocation3 + $0x1b8] sm:$0xff]
      %v1034 = vld [vmem:[#allocation3 + $0x1c0] sm:$0xff]
      %v1035 = vld [vmem:[#allocation3 + $0x1c8] sm:$0xff]
      %v1036 = vld [vmem:[#allocation3 + $0x1d0] sm:$0xff]
      %v1037 = vld [vmem:[#allocation3 + $0x1d8] sm:$0xff]
      %v1038 = vld [vmem:[#allocation3 + $0x1e0] sm:$0xff]
      %v1039 = vld [vmem:[#allocation3 + $0x1e8] sm:$0xff]
      %v1040 = vld [vmem:[#allocation3 + $0x1f0] sm:$0xff]
      %v1041 = vld [vmem:[#allocation3 + $0x1f8] sm:$0xff]
      %v1042 = vld [vmem:[#allocation3 + $0x200] sm:$0xff]
      %v1043 = vld [vmem:[#allocation3 + $0x208] sm:$0xff]
      %v1044 = vld [vmem:[#allocation3 + $0x210] sm:$0xff]
      %v1045 = vld [vmem:[#allocation3 + $0x218] sm:$0xff]
      %v1046 = vld [vmem:[#allocation3 + $0x220] sm:$0xff]
      %v1047 = vld [vmem:[#allocation3 + $0x228] sm:$0xff]
      %v1048 = vld [vmem:[#allocation3 + $0x230] sm:$0xff]
      %v1049 = vld [vmem:[#allocation3 + $0x238] sm:$0xff]
      %v1050 = vld [vmem:[#allocation3 + $0x240] sm:$0xff]
      %v1051 = vld [vmem:[#allocation3 + $0x248] sm:$0xff]
      %v1052 = vld [vmem:[#allocation3 + $0x250] sm:$0xff]
      %v1053 = vld [vmem:[#allocation3 + $0x258] sm:$0xff]
      %v1054 = vld [vmem:[#allocation3 + $0x260] sm:$0xff]
      %v1055 = vld [vmem:[#allocation3 + $0x268] sm:$0xff]
      %v1056 = vld [vmem:[#allocation3 + $0x270] sm:$0xff]
      %v1057 = vld [vmem:[#allocation3 + $0x278] sm:$0xff]
      %v1058 = vld [vmem:[#allocation3 + $0x280] sm:$0xff]
      %v1059 = vld [vmem:[#allocation3 + $0x288] sm:$0xff]
      %v1060 = vld [vmem:[#allocation3 + $0x290] sm:$0xff]
      %v1061 = vld [vmem:[#allocation3 + $0x298] sm:$0xff]
      %v1062 = vld [vmem:[#allocation3 + $0x2a0] sm:$0xff]
      %v1063 = vld [vmem:[#allocation3 + $0x2a8] sm:$0xff]
      %v1064 = vld [vmem:[#allocation3 + $0x2b0] sm:$0xff]
      %v1065 = vld [vmem:[#allocation3 + $0x2b8] sm:$0xff]
      %v1066 = vld [vmem:[#allocation3 + $0x2c0] sm:$0xff]
      %v1067 = vld [vmem:[#allocation3 + $0x2c8] sm:$0xff]
      %v1068 = vld [vmem:[#allocation3 + $0x2d0] sm:$0xff]
      %v1069 = vld [vmem:[#allocation3 + $0x2d8] sm:$0xff]
      %v1070 = vld [vmem:[#allocation3 + $0x2e0] sm:$0xff]
      %v1071 = vld [vmem:[#allocation3 + $0x2e8] sm:$0xff]
      %v1072 = vld [vmem:[#allocation3 + $0x2f0] sm:$0xff]
      %v1073 = vld [vmem:[#allocation3 + $0x2f8] sm:$0xff]
      %v1074 = vld [vmem:[#allocation3 + $0x300] sm:$0xff]
      %v1075 = vld [vmem:[#allocation3 + $0x308] sm:$0xff]
      %v1076 = vld [vmem:[#allocation3 + $0x310] sm:$0xff]
      %v1077 = vld [vmem:[#allocation3 + $0x318] sm:$0xff]
      %v1078 = vld [vmem:[#allocation3 + $0x320] sm:$0xff]
      %v1079 = vld [vmem:[#allocation3 + $0x328] sm:$0xff]
      %v1080 = vld [vmem:[#allocation3 + $0x330] sm:$0xff]
      %v1081 = vld [vmem:[#allocation3 + $0x338] sm:$0xff]
      %v1082 = vld [vmem:[#allocation3 + $0x340] sm:$0xff]
      %v1083 = vld [vmem:[#allocation3 + $0x348] sm:$0xff]
      %v1084 = vld [vmem:[#allocation3 + $0x350] sm:$0xff]
      %v1085 = vld [vmem:[#allocation3 + $0x358] sm:$0xff]
      %v1086 = vld [vmem:[#allocation3 + $0x360] sm:$0xff]
      %v1087 = vld [vmem:[#allocation3 + $0x368] sm:$0xff]
      %v1088 = vld [vmem:[#allocation3 + $0x370] sm:$0xff]
      %v1089 = vld [vmem:[#allocation3 + $0x378] sm:$0xff]
      %v1090 = vld [vmem:[#allocation3 + $0x380] sm:$0xff]
      %v1091 = vld [vmem:[#allocation3 + $0x388] sm:$0xff]
      %v1092 = vld [vmem:[#allocation3 + $0x390] sm:$0xff]
      %v1093 = vld [vmem:[#allocation3 + $0x398] sm:$0xff]
      %v1094 = vld [vmem:[#allocation3 + $0x3a0] sm:$0xff]
      %v1095 = vld [vmem:[#allocation3 + $0x3a8] sm:$0xff]
      %v1096 = vld [vmem:[#allocation3 + $0x3b0] sm:$0xff]
      %v1097 = vld [vmem:[#allocation3 + $0x3b8] sm:$0xff]
      %v1098 = vld [vmem:[#allocation3 + $0x3c0] sm:$0xff]
      %v1099 = vld [vmem:[#allocation3 + $0x3c8] sm:$0xff]
      %v1100 = vld [vmem:[#allocation3 + $0x3d0] sm:$0xff]
      %v1101 = vld [vmem:[#allocation3 + $0x3d8] sm:$0xff]
      %v1102 = vld [vmem:[#allocation3 + $0x3e0] sm:$0xff]
      %v1103 = vld [vmem:[#allocation3 + $0x3e8] sm:$0xff]
      %v1104 = vld [vmem:[#allocation3 + $0x3f0] sm:$0xff]
      %v1105 = vld [vmem:[#allocation3 + $0x3f8] sm:$0xff]
      %v1106 = vld [vmem:[#allocation3 + $0x400] sm:$0xff]
      %v1107 = vld [vmem:[#allocation3 + $0x408] sm:$0xff]
      %v1108 = vld [vmem:[#allocation3 + $0x410] sm:$0xff]
      %v1109 = vld [vmem:[#allocation3 + $0x418] sm:$0xff]
      %v1110 = vld [vmem:[#allocation3 + $0x420] sm:$0xff]
      %v1111 = vld [vmem:[#allocation3 + $0x428] sm:$0xff]
      %v1112 = vld [vmem:[#allocation3 + $0x430] sm:$0xff]
      %v1113 = vld [vmem:[#allocation3 + $0x438] sm:$0xff]
      %v1114 = vld [vmem:[#allocation3 + $0x440] sm:$0xff]
      %v1115 = vld [vmem:[#allocation3 + $0x448] sm:$0xff]
      %v1116 = vld [vmem:[#allocation3 + $0x450] sm:$0xff]
      %v1117 = vld [vmem:[#allocation3 + $0x458] sm:$0xff]
      %v1118 = vld [vmem:[#allocation3 + $0x460] sm:$0xff]
      %v1119 = vld [vmem:[#allocation3 + $0x468] sm:$0xff]
      %v1120 = vld [vmem:[#allocation3 + $0x470] sm:$0xff]
      %v1121 = vld [vmem:[#allocation3 + $0x478] sm:$0xff]
      %v1122 = vld [vmem:[%s1] sm:$0xf]
      %v1123 = vld [vmem:[%s1 + $0x4] sm:$0xf]
      %v1124 = vld [vmem:[%s1 + $0x8] sm:$0xf]
      %v1125 = vld [vmem:[%s1 + $0xc] sm:$0xf]
      %v1126 = vld [vmem:[%s1 + $0x10] sm:$0xf]
      %v1127 = vld [vmem:[%s1 + $0x14] sm:$0xf]
      %v1128 = vld [vmem:[%s1 + $0x18] sm:$0xf]
      %v1129 = vld [vmem:[%s1 + $0x1c] sm:$0xf]
      %v1130 = vld [vmem:[%s1 + $0x20] sm:$0xf]
      %v1131 = vld [vmem:[%s1 + $0x24] sm:$0xf]
      %v1132 = vld [vmem:[%s1 + $0x28] sm:$0xf]
      %v1133 = vld [vmem:[%s1 + $0x2c] sm:$0xf]
      %v1134 = vld [vmem:[%s1 + $0x30] sm:$0xf]
      %v1135 = vld [vmem:[%s1 + $0x34] sm:$0xf]
      %v1136 = vld [vmem:[%s1 + $0x38] sm:$0xf]
      %v1137 = vld [vmem:[%s1 + $0x3c] sm:$0xf]
      %v1138 = vld [vmem:[%s1 + $0x40] sm:$0xf]
      %v1139 = vld [vmem:[%s1 + $0x44] sm:$0xf]
      %v1140 = vld [vmem:[%s1 + $0x48] sm:$0xf]
      %v1141 = vld [vmem:[%s1 + $0x4c] sm:$0xf]
      %v1142 = vld [vmem:[%s1 + $0x50] sm:$0xf]
      %v1143 = vld [vmem:[%s1 + $0x54] sm:$0xf]
      %v1144 = vld [vmem:[%s1 + $0x58] sm:$0xf]
      %v1145 = vld [vmem:[%s1 + $0x5c] sm:$0xf]
      %v1146 = vld [vmem:[%s1 + $0x60] sm:$0xf]
      %v1147 = vld [vmem:[%s1 + $0x64] sm:$0xf]
      %v1148 = vld [vmem:[%s1 + $0x68] sm:$0xf]
      %v1149 = vld [vmem:[%s1 + $0x6c] sm:$0xf]
      %v1150 = vld [vmem:[%s1 + $0x70] sm:$0xf]
      %v1151 = vld [vmem:[%s1 + $0x74] sm:$0xf]
      %v1152 = vld [vmem:[%s1 + $0x78] sm:$0xf]
      %v1153 = vld [vmem:[%s1 + $0x7c] sm:$0xf]
      %v1154 = vld [vmem:[%s1 + $0x80] sm:$0xf]
      %v1155 = vld [vmem:[%s1 + $0x84] sm:$0xf]
      %v1156 = vld [vmem:[%s1 + $0x88] sm:$0xf]
      %v1157 = vld [vmem:[%s1 + $0x8c] sm:$0xf]
      %v1158 = vld [vmem:[%s1 + $0x90] sm:$0xf]
      %v1159 = vld [vmem:[%s1 + $0x94] sm:$0xf]
      %v1160 = vld [vmem:[%s1 + $0x98] sm:$0xf]
      %v1161 = vld [vmem:[%s1 + $0x9c] sm:$0xf]
      %v1162 = vld [vmem:[%s1 + $0xa0] sm:$0xf]
      %v1163 = vld [vmem:[%s1 + $0xa4] sm:$0xf]
      %v1164 = vld [vmem:[%s1 + $0xa8] sm:$0xf]
      %v1165 = vld [vmem:[%s1 + $0xac] sm:$0xf]
      %v1166 = vld [vmem:[%s1 + $0xb0] sm:$0xf]
      %v1167 = vld [vmem:[%s1 + $0xb4] sm:$0xf]
      %v1168 = vld [vmem:[%s1 + $0xb8] sm:$0xf]
      %v1169 = vld [vmem:[%s1 + $0xbc] sm:$0xf]
      %v1170 = vld [vmem:[%s1 + $0xc0] sm:$0xf]
      %v1171 = vld [vmem:[%s1 + $0xc4] sm:$0xf]
      %v1172 = vld [vmem:[%s1 + $0xc8] sm:$0xf]
      %v1173 = vld [vmem:[%s1 + $0xcc] sm:$0xf]
      %v1174 = vld [vmem:[%s1 + $0xd0] sm:$0xf]
      %v1175 = vld [vmem:[%s1 + $0xd4] sm:$0xf]
      %v1176 = vld [vmem:[%s1 + $0xd8] sm:$0xf]
      %v1177 = vld [vmem:[%s1 + $0xdc] sm:$0xf]
      %v1178 = vld [vmem:[%s1 + $0xe0] sm:$0xf]
      %v1179 = vld [vmem:[%s1 + $0xe4] sm:$0xf]
      %v1180 = vld [vmem:[%s1 + $0xe8] sm:$0xf]
      %v1181 = vld [vmem:[%s1 + $0xec] sm:$0xf]
      %v1182 = vld [vmem:[%s1 + $0xf0] sm:$0xf]
      %v1183 = vld [vmem:[%s1 + $0xf4] sm:$0xf]
      %v1184 = vld [vmem:[%s1 + $0xf8] sm:$0xf]
      %v1185 = vld [vmem:[%s1 + $0xfc] sm:$0xf]
      %v1186 = vld [vmem:[%s1 + $0x100] sm:$0xf]
      %v1187 = vld [vmem:[%s1 + $0x104] sm:$0xf]
      %v1188 = vld [vmem:[%s1 + $0x108] sm:$0xf]
      %v1189 = vld [vmem:[%s1 + $0x10c] sm:$0xf]
      %v1190 = vld [vmem:[%s1 + $0x110] sm:$0xf]
      %v1191 = vld [vmem:[%s1 + $0x114] sm:$0xf]
      %v1192 = vld [vmem:[%s1 + $0x118] sm:$0xf]
      %v1193 = vld [vmem:[%s1 + $0x11c] sm:$0xf]
      %v1194 = vld [vmem:[%s1 + $0x120] sm:$0xf]
      %v1195 = vld [vmem:[%s1 + $0x124] sm:$0xf]
      %v1196 = vld [vmem:[%s1 + $0x128] sm:$0xf]
      %v1197 = vld [vmem:[%s1 + $0x12c] sm:$0xf]
      %v1198 = vld [vmem:[%s1 + $0x130] sm:$0xf]
      %v1199 = vld [vmem:[%s1 + $0x134] sm:$0xf]
      %v1200 = vld [vmem:[%s1 + $0x138] sm:$0xf]
      %v1201 = vld [vmem:[%s1 + $0x13c] sm:$0xf]
      %v1202 = vld [vmem:[%s1 + $0x140] sm:$0xf]
      %v1203 = vld [vmem:[%s1 + $0x144] sm:$0xf]
      %v1204 = vld [vmem:[%s1 + $0x148] sm:$0xf]
      %v1205 = vld [vmem:[%s1 + $0x14c] sm:$0xf]
      %v1206 = vld [vmem:[%s1 + $0x150] sm:$0xf]
      %v1207 = vld [vmem:[%s1 + $0x154] sm:$0xf]
      %v1208 = vld [vmem:[%s1 + $0x158] sm:$0xf]
      %v1209 = vld [vmem:[%s1 + $0x15c] sm:$0xf]
      %v1210 = vld [vmem:[%s1 + $0x160] sm:$0xf]
      %v1211 = vld [vmem:[%s1 + $0x164] sm:$0xf]
      %v1212 = vld [vmem:[%s1 + $0x168] sm:$0xf]
      %v1213 = vld [vmem:[%s1 + $0x16c] sm:$0xf]
      %v1214 = vld [vmem:[%s1 + $0x170] sm:$0xf]
      %v1215 = vld [vmem:[%s1 + $0x174] sm:$0xf]
      %v1216 = vld [vmem:[%s1 + $0x178] sm:$0xf]
      %v1217 = vld [vmem:[%s1 + $0x17c] sm:$0xf]
      %v1218 = vld [vmem:[%s1 + $0x180] sm:$0xf]
      %v1219 = vld [vmem:[%s1 + $0x184] sm:$0xf]
      %v1220 = vld [vmem:[%s1 + $0x188] sm:$0xf]
      %v1221 = vld [vmem:[%s1 + $0x18c] sm:$0xf]
      %v1222 = vld [vmem:[%s1 + $0x190] sm:$0xf]
      %v1223 = vld [vmem:[%s1 + $0x194] sm:$0xf]
      %v1224 = vld [vmem:[%s1 + $0x198] sm:$0xf]
      %v1225 = vld [vmem:[%s1 + $0x19c] sm:$0xf]
      %v1226 = vld [vmem:[%s1 + $0x1a0] sm:$0xf]
      %v1227 = vld [vmem:[%s1 + $0x1a4] sm:$0xf]
      %v1228 = vld [vmem:[%s1 + $0x1a8] sm:$0xf]
      %v1229 = vld [vmem:[%s1 + $0x1ac] sm:$0xf]
      %v1230 = vld [vmem:[%s1 + $0x1b0] sm:$0xf]
      %v1231 = vld [vmem:[%s1 + $0x1b4] sm:$0xf]
      %v1232 = vld [vmem:[%s1 + $0x1b8] sm:$0xf]
      %v1233 = vld [vmem:[%s1 + $0x1bc] sm:$0xf]
      %v1234 = vld [vmem:[%s1 + $0x1c0] sm:$0xf]
      %v1235 = vld [vmem:[%s1 + $0x1c4] sm:$0xf]
      %v1236 = vld [vmem:[%s1 + $0x1c8] sm:$0xf]
      %v1237 = vld [vmem:[%s1 + $0x1cc] sm:$0xf]
      %v1238 = vld [vmem:[%s1 + $0x1d0] sm:$0xf]
      %v1239 = vld [vmem:[%s1 + $0x1d4] sm:$0xf]
      %v1240 = vld [vmem:[%s1 + $0x1d8] sm:$0xf]
      %v1241 = vld [vmem:[%s1 + $0x1dc] sm:$0xf]
      %v1242 = vld [vmem:[%s1 + $0x1e0] sm:$0xf]
      %v1243 = vld [vmem:[%s1 + $0x1e4] sm:$0xf]
      %v1244 = vld [vmem:[%s1 + $0x1e8] sm:$0xf]
      %v1245 = vld [vmem:[%s1 + $0x1ec] sm:$0xf]
      %v1246 = vld [vmem:[%s1 + $0x1f0] sm:$0xf]
      %v1247 = vld [vmem:[%s1 + $0x1f4] sm:$0xf]
      %v1248 = vld [vmem:[%s1 + $0x1f8] sm:$0xf]
      %v1249 = vld [vmem:[%s1 + $0x1fc] sm:$0xf]
      %v1250 = vld [vmem:[%s1 + $0x200] sm:$0xf]
      %v1251 = vld [vmem:[%s1 + $0x204] sm:$0xf]
      %v1252 = vld [vmem:[%s1 + $0x208] sm:$0xf]
      %v1253 = vld [vmem:[%s1 + $0x20c] sm:$0xf]
      %v1254 = vld [vmem:[%s1 + $0x210] sm:$0xf]
      %v1255 = vld [vmem:[%s1 + $0x214] sm:$0xf]
      %v1256 = vld [vmem:[%s1 + $0x218] sm:$0xf]
      %v1257 = vld [vmem:[%s1 + $0x21c] sm:$0xf]
      %v1258 = vld [vmem:[%s1 + $0x220] sm:$0xf]
      %v1259 = vld [vmem:[%s1 + $0x224] sm:$0xf]
      %v1260 = vld [vmem:[%s1 + $0x228] sm:$0xf]
      %v1261 = vld [vmem:[%s1 + $0x22c] sm:$0xf]
      %v1262 = vld [vmem:[%s1 + $0x230] sm:$0xf]
      %v1263 = vld [vmem:[%s1 + $0x234] sm:$0xf]
      %v1264 = vld [vmem:[%s1 + $0x238] sm:$0xf]
      %v1265 = vld [vmem:[%s1 + $0x23c] sm:$0xf]
      %v1266 = vld [vmem:[%s2] sm:$0x1]
      %v1268 = vlaneseq
      %v1269 = vshrl.u32 %v1268, 7
      %v1270 = vsub.s32 0, %v1269
      %v1271 = vrot.slane %v1266, %v1270
      %v1417 = vunpack.c.l.b16 %v1122
      %v1418 = vunpack.c.l.b16 %v1123
      %v1419 = vunpack.c.l.b16 %v1124
      %v1420 = vunpack.c.l.b16 %v1125
      %v1421 = vunpack.c.l.b16 %v1126
      %v1422 = vunpack.c.l.b16 %v1127
      %v1423 = vunpack.c.l.b16 %v1128
      %v1424 = vunpack.c.l.b16 %v1129
      %v1425 = vunpack.c.l.b16 %v1130
      %v1426 = vunpack.c.l.b16 %v1131
      %v1427 = vunpack.c.l.b16 %v1132
      %v1428 = vunpack.c.l.b16 %v1133
      %v1429 = vunpack.c.l.b16 %v1134
      %v1430 = vunpack.c.l.b16 %v1135
      %v1431 = vunpack.c.l.b16 %v1136
      %v1432 = vunpack.c.l.b16 %v1137
      %v1433 = vunpack.c.l.b16 %v1138
      %v1434 = vunpack.c.l.b16 %v1139
      %v1435 = vunpack.c.l.b16 %v1140
      %v1436 = vunpack.c.l.b16 %v1141
      %v1437 = vunpack.c.l.b16 %v1142
      %v1438 = vunpack.c.l.b16 %v1143
      %v1439 = vunpack.c.l.b16 %v1144
      %v1440 = vunpack.c.l.b16 %v1145
      %v1441 = vunpack.c.l.b16 %v1146
      %v1442 = vunpack.c.l.b16 %v1147
      %v1443 = vunpack.c.l.b16 %v1148
      %v1444 = vunpack.c.l.b16 %v1149
      %v1445 = vunpack.c.l.b16 %v1150
      %v1446 = vunpack.c.l.b16 %v1151
      %v1447 = vunpack.c.l.b16 %v1152
      %v1448 = vunpack.c.l.b16 %v1153
      %v1449 = vunpack.c.l.b16 %v1154
      %v1450 = vunpack.c.l.b16 %v1155
      %v1451 = vunpack.c.l.b16 %v1156
      %v1452 = vunpack.c.l.b16 %v1157
      %v1453 = vunpack.c.l.b16 %v1158
      %v1454 = vunpack.c.l.b16 %v1159
      %v1455 = vunpack.c.l.b16 %v1160
      %v1456 = vunpack.c.l.b16 %v1161
      %v1457 = vunpack.c.l.b16 %v1162
      %v1458 = vunpack.c.l.b16 %v1163
      %v1459 = vunpack.c.l.b16 %v1164
      %v1460 = vunpack.c.l.b16 %v1165
      %v1461 = vunpack.c.l.b16 %v1166
      %v1462 = vunpack.c.l.b16 %v1167
      %v1463 = vunpack.c.l.b16 %v1168
      %v1464 = vunpack.c.l.b16 %v1169
      %v1465 = vunpack.c.l.b16 %v1170
      %v1466 = vunpack.c.l.b16 %v1171
      %v1467 = vunpack.c.l.b16 %v1172
      %v1468 = vunpack.c.l.b16 %v1173
      %v1469 = vunpack.c.l.b16 %v1174
      %v1470 = vunpack.c.l.b16 %v1175
      %v1471 = vunpack.c.l.b16 %v1176
      %v1472 = vunpack.c.l.b16 %v1177
      %v1473 = vunpack.c.l.b16 %v1178
      %v1474 = vunpack.c.l.b16 %v1179
      %v1475 = vunpack.c.l.b16 %v1180
      %v1476 = vunpack.c.l.b16 %v1181
      %v1477 = vunpack.c.l.b16 %v1182
      %v1478 = vunpack.c.l.b16 %v1183
      %v1479 = vunpack.c.l.b16 %v1184
      %v1480 = vunpack.c.l.b16 %v1185
      %v1481 = vunpack.c.l.b16 %v1186
      %v1482 = vunpack.c.l.b16 %v1187
      %v1483 = vunpack.c.l.b16 %v1188
      %v1484 = vunpack.c.l.b16 %v1189
      %v1485 = vunpack.c.l.b16 %v1190
      %v1486 = vunpack.c.l.b16 %v1191
      %v1487 = vunpack.c.l.b16 %v1192
      %v1488 = vunpack.c.l.b16 %v1193
      %v1489 = vunpack.c.l.b16 %v1194
      %v1490 = vunpack.c.l.b16 %v1195
      %v1491 = vunpack.c.l.b16 %v1196
      %v1492 = vunpack.c.l.b16 %v1197
      %v1493 = vunpack.c.l.b16 %v1198
      %v1494 = vunpack.c.l.b16 %v1199
      %v1495 = vunpack.c.l.b16 %v1200
      %v1496 = vunpack.c.l.b16 %v1201
      %v1497 = vunpack.c.l.b16 %v1202
      %v1498 = vunpack.c.l.b16 %v1203
      %v1499 = vunpack.c.l.b16 %v1204
      %v1500 = vunpack.c.l.b16 %v1205
      %v1501 = vunpack.c.l.b16 %v1206
      %v1502 = vunpack.c.l.b16 %v1207
      %v1503 = vunpack.c.l.b16 %v1208
      %v1504 = vunpack.c.l.b16 %v1209
      %v1505 = vunpack.c.l.b16 %v1210
      %v1506 = vunpack.c.l.b16 %v1211
      %v1507 = vunpack.c.l.b16 %v1212
      %v1508 = vunpack.c.l.b16 %v1213
      %v1509 = vunpack.c.l.b16 %v1214
      %v1510 = vunpack.c.l.b16 %v1215
      %v1511 = vunpack.c.l.b16 %v1216
      %v1512 = vunpack.c.l.b16 %v1217
      %v1513 = vunpack.c.l.b16 %v1218
      %v1514 = vunpack.c.l.b16 %v1219
      %v1515 = vunpack.c.l.b16 %v1220
      %v1516 = vunpack.c.l.b16 %v1221
      %v1517 = vunpack.c.l.b16 %v1222
      %v1518 = vunpack.c.l.b16 %v1223
      %v1519 = vunpack.c.l.b16 %v1224
      %v1520 = vunpack.c.l.b16 %v1225
      %v1521 = vunpack.c.l.b16 %v1226
      %v1522 = vunpack.c.l.b16 %v1227
      %v1523 = vunpack.c.l.b16 %v1228
      %v1524 = vunpack.c.l.b16 %v1229
      %v1525 = vunpack.c.l.b16 %v1230
      %v1526 = vunpack.c.l.b16 %v1231
      %v1527 = vunpack.c.l.b16 %v1232
      %v1528 = vunpack.c.l.b16 %v1233
      %v1529 = vunpack.c.l.b16 %v1234
      %v1530 = vunpack.c.l.b16 %v1235
      %v1531 = vunpack.c.l.b16 %v1236
      %v1532 = vunpack.c.l.b16 %v1237
      %v1533 = vunpack.c.l.b16 %v1238
      %v1534 = vunpack.c.l.b16 %v1239
      %v1535 = vunpack.c.l.b16 %v1240
      %v1536 = vunpack.c.l.b16 %v1241
      %v1537 = vunpack.c.l.b16 %v1242
      %v1538 = vunpack.c.l.b16 %v1243
      %v1539 = vunpack.c.l.b16 %v1244
      %v1540 = vunpack.c.l.b16 %v1245
      %v1541 = vunpack.c.l.b16 %v1246
      %v1542 = vunpack.c.l.b16 %v1247
      %v1543 = vunpack.c.l.b16 %v1248
      %v1544 = vunpack.c.l.b16 %v1249
      %v1545 = vunpack.c.l.b16 %v1250
      %v1546 = vunpack.c.l.b16 %v1251
      %v1547 = vunpack.c.l.b16 %v1252
      %v1548 = vunpack.c.l.b16 %v1253
      %v1549 = vunpack.c.l.b16 %v1254
      %v1550 = vunpack.c.l.b16 %v1255
      %v1551 = vunpack.c.l.b16 %v1256
      %v1552 = vunpack.c.l.b16 %v1257
      %v1553 = vunpack.c.l.b16 %v1258
      %v1554 = vunpack.c.l.b16 %v1259
      %v1555 = vunpack.c.l.b16 %v1260
      %v1556 = vunpack.c.l.b16 %v1261
      %v1557 = vunpack.c.l.b16 %v1262
      %v1558 = vunpack.c.l.b16 %v1263
      %v1559 = vunpack.c.l.b16 %v1264
      %v1560 = vunpack.c.l.b16 %v1265
      %v1561 = vpack.c.b16 %v1418, %v1417
      %v1562 = vpack.c.b16 %v1420, %v1419
      %v1563 = vpack.c.b16 %v1422, %v1421
      %v1564 = vpack.c.b16 %v1424, %v1423
      %v1565 = vpack.c.b16 %v1426, %v1425
      %v1566 = vpack.c.b16 %v1428, %v1427
      %v1567 = vpack.c.b16 %v1430, %v1429
      %v1568 = vpack.c.b16 %v1432, %v1431
      %v1569 = vpack.c.b16 %v1434, %v1433
      %v1570 = vpack.c.b16 %v1436, %v1435
      %v1571 = vpack.c.b16 %v1438, %v1437
      %v1572 = vpack.c.b16 %v1440, %v1439
      %v1573 = vpack.c.b16 %v1442, %v1441
      %v1574 = vpack.c.b16 %v1444, %v1443
      %v1575 = vpack.c.b16 %v1446, %v1445
      %v1576 = vpack.c.b16 %v1448, %v1447
      %v1577 = vpack.c.b16 %v1450, %v1449
      %v1578 = vpack.c.b16 %v1452, %v1451
      %v1579 = vpack.c.b16 %v1454, %v1453
      %v1580 = vpack.c.b16 %v1456, %v1455
      %v1581 = vpack.c.b16 %v1458, %v1457
      %v1582 = vpack.c.b16 %v1460, %v1459
      %v1583 = vpack.c.b16 %v1462, %v1461
      %v1584 = vpack.c.b16 %v1464, %v1463
      %v1585 = vpack.c.b16 %v1466, %v1465
      %v1586 = vpack.c.b16 %v1468, %v1467
      %v1587 = vpack.c.b16 %v1470, %v1469
      %v1588 = vpack.c.b16 %v1472, %v1471
      %v1589 = vpack.c.b16 %v1474, %v1473
      %v1590 = vpack.c.b16 %v1476, %v1475
      %v1591 = vpack.c.b16 %v1478, %v1477
      %v1592 = vpack.c.b16 %v1480, %v1479
      %v1593 = vpack.c.b16 %v1482, %v1481
      %v1594 = vpack.c.b16 %v1484, %v1483
      %v1595 = vpack.c.b16 %v1486, %v1485
      %v1596 = vpack.c.b16 %v1488, %v1487
      %v1597 = vpack.c.b16 %v1490, %v1489
      %v1598 = vpack.c.b16 %v1492, %v1491
      %v1599 = vpack.c.b16 %v1494, %v1493
      %v1600 = vpack.c.b16 %v1496, %v1495
      %v1601 = vpack.c.b16 %v1498, %v1497
      %v1602 = vpack.c.b16 %v1500, %v1499
      %v1603 = vpack.c.b16 %v1502, %v1501
      %v1604 = vpack.c.b16 %v1504, %v1503
      %v1605 = vpack.c.b16 %v1506, %v1505
      %v1606 = vpack.c.b16 %v1508, %v1507
      %v1607 = vpack.c.b16 %v1510, %v1509
      %v1608 = vpack.c.b16 %v1512, %v1511
      %v1609 = vpack.c.b16 %v1514, %v1513
      %v1610 = vpack.c.b16 %v1516, %v1515
      %v1611 = vpack.c.b16 %v1518, %v1517
      %v1612 = vpack.c.b16 %v1520, %v1519
      %v1613 = vpack.c.b16 %v1522, %v1521
      %v1614 = vpack.c.b16 %v1524, %v1523
      %v1615 = vpack.c.b16 %v1526, %v1525
      %v1616 = vpack.c.b16 %v1528, %v1527
      %v1617 = vpack.c.b16 %v1530, %v1529
      %v1618 = vpack.c.b16 %v1532, %v1531
      %v1619 = vpack.c.b16 %v1534, %v1533
      %v1620 = vpack.c.b16 %v1536, %v1535
      %v1621 = vpack.c.b16 %v1538, %v1537
      %v1622 = vpack.c.b16 %v1540, %v1539
      %v1623 = vpack.c.b16 %v1542, %v1541
      %v1624 = vpack.c.b16 %v1544, %v1543
      %v1625 = vpack.c.b16 %v1546, %v1545
      %v1626 = vpack.c.b16 %v1548, %v1547
      %v1627 = vpack.c.b16 %v1550, %v1549
      %v1628 = vpack.c.b16 %v1552, %v1551
      %v1629 = vpack.c.b16 %v1554, %v1553
      %v1630 = vpack.c.b16 %v1556, %v1555
      %v1631 = vpack.c.b16 %v1558, %v1557
      %v1632 = vpack.c.b16 %v1560, %v1559
      %1705 = vmatprep.subr.bf16.mxu0 0
      %1706 = vmatpush1.bf16.msra.mxu0 %v1561
      %1707 = vmatprep.subr.bf16.mxu0 0
      %1708 = vmatpush1.bf16.msra.mxu0 %v1562
      %1709 = vmatprep.subr.bf16.mxu0 0
      %1710 = vmatpush1.bf16.msra.mxu0 %v1563
      %1711 = vmatprep.subr.bf16.mxu0 0
      %1712 = vmatpush1.bf16.msra.mxu0 %v1564
      %1713 = vmatprep.subr.bf16.mxu0 0
      %1714 = vmatpush1.bf16.msra.mxu0 %v1565
      %1715 = vmatprep.subr.bf16.mxu0 0
      %1716 = vmatpush1.bf16.msra.mxu0 %v1566
      %1717 = vmatprep.subr.bf16.mxu0 0
      %1718 = vmatpush1.bf16.msra.mxu0 %v1567
      %1719 = vmatprep.subr.bf16.mxu0 0
      %1720 = vmatpush1.bf16.msra.mxu0 %v1568
      %1721 = vmatprep.subr.bf16.mxu0 0
      %1722 = vmatpush1.bf16.msra.mxu0 %v1569
      %1723 = vmatprep.subr.bf16.mxu0 0
      %1724 = vmatpush1.bf16.msra.mxu0 %v1570
      %1725 = vmatprep.subr.bf16.mxu0 0
      %1726 = vmatpush1.bf16.msra.mxu0 %v1571
      %1727 = vmatprep.subr.bf16.mxu0 0
      %1728 = vmatpush1.bf16.msra.mxu0 %v1572
      %1729 = vmatprep.subr.bf16.mxu0 0
      %1730 = vmatpush1.bf16.msra.mxu0 %v1573
      %1731 = vmatprep.subr.bf16.mxu0 0
      %1732 = vmatpush1.bf16.msra.mxu0 %v1574
      %1733 = vmatprep.subr.bf16.mxu0 0
      %1734 = vmatpush1.bf16.msra.mxu0 %v1575
      %1735 = vmatprep.subr.bf16.mxu0 0
      %1736 = vmatpush1.bf16.msra.mxu0 %v1576
      %1737 = vmatprep.mubr.bf16.mxu0 %v979
      %1738 = vmatmul.mubr.bf16.gmra.mrb[0].mxu0 %v978
      %v1739 = vpop.f32.mrb[0].mxu0
      %v1740 = vadd.f32 %v1271, %v1739
      %v1741 = vpop.f32.mrb[0].mxu0
      %v1742 = vpop.f32.mrb[0].mxu0
      %v1743 = vadd.f32 %v1271, %v1742
      %v1744 = vpop.f32.mrb[0].mxu0
      %1745 = vmatprep.mubr.bf16.mxu0 %v988
      %1746 = vmatmul.mubr.bf16.gmra.mrb[0].mxu0 %v987
      %v1747 = vpop.f32.mrb[0].mxu0
      %v1748 = vadd.f32 %v1271, %v1747
      %v1749 = vpop.f32.mrb[0].mxu0
      %v1750 = vpop.f32.mrb[0].mxu0
      %v1751 = vadd.f32 %v1271, %v1750
      %v1752 = vpop.f32.mrb[0].mxu0
      %1753 = vmatprep.mubr.bf16.mxu0 %v997
      %1754 = vmatmul.mubr.bf16.gmra.mrb[0].mxu0 %v996
      %v1755 = vpop.f32.mrb[0].mxu0
      %v1756 = vadd.f32 %v1271, %v1755
      %v1757 = vpop.f32.mrb[0].mxu0
      %v1758 = vpop.f32.mrb[0].mxu0
      %v1759 = vadd.f32 %v1271, %v1758
      %v1760 = vpop.f32.mrb[0].mxu0
      %1761 = vmatprep.mubr.bf16.mxu0 %v1006
      %1762 = vmatmul.mubr.bf16.gmra.mrb[0].mxu0 %v1005
      %v1763 = vpop.f32.mrb[0].mxu0
      %v1764 = vadd.f32 %v1271, %v1763
      %v1765 = vpop.f32.mrb[0].mxu0
      %v1766 = vpop.f32.mrb[0].mxu0
      %v1767 = vadd.f32 %v1271, %v1766
      %v1768 = vpop.f32.mrb[0].mxu0
      %1769 = vmatprep.mubr.bf16.mxu0 %v1015
      %1770 = vmatmul.mubr.bf16.gmra.mrb[0].mxu0 %v1014
      %v1771 = vpop.f32.mrb[0].mxu0
      %v1772 = vadd.f32 %v1271, %v1771
      %v1773 = vpop.f32.mrb[0].mxu0
      %v1774 = vpop.f32.mrb[0].mxu0
      %v1775 = vadd.f32 %v1271, %v1774
      %v1776 = vpop.f32.mrb[0].mxu0
      %1777 = vmatprep.mubr.bf16.mxu0 %v1024
      %1778 = vmatmul.mubr.bf16.gmra.mrb[0].mxu0 %v1023
      %v1779 = vpop.f32.mrb[0].mxu0
      %v1780 = vadd.f32 %v1271, %v1779
      %v1781 = vpop.f32.mrb[0].mxu0
      %v1782 = vpop.f32.mrb[0].mxu0
      %v1783 = vadd.f32 %v1271, %v1782
      %v1784 = vpop.f32.mrb[0].mxu0
      %1785 = vmatprep.mubr.bf16.mxu0 %v1033
      %1786 = vmatmul.mubr.bf16.gmra.mrb[0].mxu0 %v1032
      %v1787 = vpop.f32.mrb[0].mxu0
      %v1788 = vadd.f32 %v1271, %v1787
      %v1789 = vpop.f32.mrb[0].mxu0
      %v1790 = vpop.f32.mrb[0].mxu0
      %v1791 = vadd.f32 %v1271, %v1790
      %v1792 = vpop.f32.mrb[0].mxu0
      %1793 = vmatprep.mubr.bf16.mxu0 %v1042
      %1794 = vmatmul.mubr.bf16.gmra.mrb[0].mxu0 %v1041
      %v1795 = vpop.f32.mrb[0].mxu0
      %v1796 = vadd.f32 %v1271, %v1795
      %v1797 = vpop.f32.mrb[0].mxu0
      %v1798 = vpop.f32.mrb[0].mxu0
      %v1799 = vadd.f32 %v1271, %v1798
      %v1800 = vpop.f32.mrb[0].mxu0
      %1801 = vmatprep.mubr.bf16.mxu0 %v1051
      %1802 = vmatmul.mubr.bf16.gmra.mrb[0].mxu0 %v1050
      %v1803 = vpop.f32.mrb[0].mxu0
      %v1804 = vadd.f32 %v1271, %v1803
      %v1805 = vpop.f32.mrb[0].mxu0
      %v1806 = vpop.f32.mrb[0].mxu0
      %v1807 = vadd.f32 %v1271, %v1806
      %v1808 = vpop.f32.mrb[0].mxu0
      %1809 = vmatprep.mubr.bf16.mxu0 %v1060
      %1810 = vmatmul.mubr.bf16.gmra.mrb[0].mxu0 %v1059
      %v1811 = vpop.f32.mrb[0].mxu0
      %v1812 = vadd.f32 %v1271, %v1811
      %v1813 = vpop.f32.mrb[0].mxu0
      %v1814 = vpop.f32.mrb[0].mxu0
      %v1815 = vadd.f32 %v1271, %v1814
      %v1816 = vpop.f32.mrb[0].mxu0
      %1817 = vmatprep.mubr.bf16.mxu0 %v1069
      %1818 = vmatmul.mubr.bf16.gmra.mrb[0].mxu0 %v1068
      %v1819 = vpop.f32.mrb[0].mxu0
      %v1820 = vadd.f32 %v1271, %v1819
      %v1821 = vpop.f32.mrb[0].mxu0
      %v1822 = vpop.f32.mrb[0].mxu0
      %v1823 = vadd.f32 %v1271, %v1822
      %v1824 = vpop.f32.mrb[0].mxu0
      %1825 = vmatprep.mubr.bf16.mxu0 %v1078
      %1826 = vmatmul.mubr.bf16.gmra.mrb[0].mxu0 %v1077
      %v1827 = vpop.f32.mrb[0].mxu0
      %v1828 = vadd.f32 %v1271, %v1827
      %v1829 = vpop.f32.mrb[0].mxu0
      %v1830 = vpop.f32.mrb[0].mxu0
      %v1831 = vadd.f32 %v1271, %v1830
      %v1832 = vpop.f32.mrb[0].mxu0
      %1833 = vmatprep.mubr.bf16.mxu0 %v1087
      %1834 = vmatmul.mubr.bf16.gmra.mrb[0].mxu0 %v1086
      %v1835 = vpop.f32.mrb[0].mxu0
      %v1836 = vadd.f32 %v1271, %v1835
      %v1837 = vpop.f32.mrb[0].mxu0
      %v1838 = vpop.f32.mrb[0].mxu0
      %v1839 = vadd.f32 %v1271, %v1838
      %v1840 = vpop.f32.mrb[0].mxu0
      %1841 = vmatprep.mubr.bf16.mxu0 %v1096
      %1842 = vmatmul.mubr.bf16.gmra.mrb[0].mxu0 %v1095
      %v1843 = vpop.f32.mrb[0].mxu0
      %v1844 = vadd.f32 %v1271, %v1843
      %v1845 = vpop.f32.mrb[0].mxu0
      %v1846 = vpop.f32.mrb[0].mxu0
      %v1847 = vadd.f32 %v1271, %v1846
      %v1848 = vpop.f32.mrb[0].mxu0
      %1849 = vmatprep.mubr.bf16.mxu0 %v1105
      %1850 = vmatmul.mubr.bf16.gmra.mrb[0].mxu0 %v1104
      %v1851 = vpop.f32.mrb[0].mxu0
      %v1852 = vadd.f32 %v1271, %v1851
      %v1853 = vpop.f32.mrb[0].mxu0
      %v1854 = vpop.f32.mrb[0].mxu0
      %v1855 = vadd.f32 %v1271, %v1854
      %v1856 = vpop.f32.mrb[0].mxu0
      %1857 = vmatprep.mubr.bf16.mxu0 %v1114
      %1858 = vmatmul.mubr.bf16.gmra.mrb[0].mxu0 %v1113
      %v1859 = vpop.f32.mrb[0].mxu0
      %v1860 = vadd.f32 %v1271, %v1859
      %v1861 = vpop.f32.mrb[0].mxu0
      %v1862 = vpop.f32.mrb[0].mxu0
      %v1863 = vadd.f32 %v1271, %v1862
      %v1864 = vpop.f32.mrb[0].mxu0
      %1865 = vdwg.mxu0
      %1866 = vmatprep.subr.bf16.mxu0 0
      %1867 = vmatpush1.bf16.msra.mxu0 %v1577
      %1868 = vmatprep.subr.bf16.mxu0 0
      %1869 = vmatpush1.bf16.msra.mxu0 %v1578
      %1870 = vmatprep.subr.bf16.mxu0 0
      %1871 = vmatpush1.bf16.msra.mxu0 %v1579
      %1872 = vmatprep.subr.bf16.mxu0 0
      %1873 = vmatpush1.bf16.msra.mxu0 %v1580
      %1874 = vmatprep.subr.bf16.mxu0 0
      %1875 = vmatpush1.bf16.msra.mxu0 %v1581
      %1876 = vmatprep.subr.bf16.mxu0 0
      %1877 = vmatpush1.bf16.msra.mxu0 %v1582
      %1878 = vmatprep.subr.bf16.mxu0 0
      %1879 = vmatpush1.bf16.msra.mxu0 %v1583
      %1880 = vmatprep.subr.bf16.mxu0 0
      %1881 = vmatpush1.bf16.msra.mxu0 %v1584
      %1882 = vmatprep.subr.bf16.mxu0 0
      %1883 = vmatpush1.bf16.msra.mxu0 %v1585
      %1884 = vmatprep.subr.bf16.mxu0 0
      %1885 = vmatpush1.bf16.msra.mxu0 %v1586
      %1886 = vmatprep.subr.bf16.mxu0 0
      %1887 = vmatpush1.bf16.msra.mxu0 %v1587
      %1888 = vmatprep.subr.bf16.mxu0 0
      %1889 = vmatpush1.bf16.msra.mxu0 %v1588
      %1890 = vmatprep.subr.bf16.mxu0 0
      %1891 = vmatpush1.bf16.msra.mxu0 %v1589
      %1892 = vmatprep.subr.bf16.mxu0 0
      %1893 = vmatpush1.bf16.msra.mxu0 %v1590
      %1894 = vmatprep.subr.bf16.mxu0 0
      %1895 = vmatpush1.bf16.msra.mxu0 %v1591
      %1896 = vmatprep.subr.bf16.mxu0 0
      %1897 = vmatpush1.bf16.msra.mxu0 %v1592
      %1898 = vmatprep.mubr.bf16.mxu0 %v981
      %1899 = vmatmul.mubr.bf16.gmra.mrb[0].mxu0 %v980
      %v1900 = vpop.f32.mrb[0].mxu0
      %v1901 = vadd.f32 %v1740, %v1900
      %v1902 = vpop.f32.mrb[0].mxu0
      %v1903 = vpop.f32.mrb[0].mxu0
      %v1904 = vadd.f32 %v1743, %v1903
      %v1905 = vpop.f32.mrb[0].mxu0
      %1906 = vmatprep.mubr.bf16.mxu0 %v990
      %1907 = vmatmul.mubr.bf16.gmra.mrb[0].mxu0 %v989
      %v1908 = vpop.f32.mrb[0].mxu0
      %v1909 = vadd.f32 %v1748, %v1908
      %v1910 = vpop.f32.mrb[0].mxu0
      %v1911 = vpop.f32.mrb[0].mxu0
      %v1912 = vadd.f32 %v1751, %v1911
      %v1913 = vpop.f32.mrb[0].mxu0
      %1914 = vmatprep.mubr.bf16.mxu0 %v999
      %1915 = vmatmul.mubr.bf16.gmra.mrb[0].mxu0 %v998
      %v1916 = vpop.f32.mrb[0].mxu0
      %v1917 = vadd.f32 %v1756, %v1916
      %v1918 = vpop.f32.mrb[0].mxu0
      %v1919 = vpop.f32.mrb[0].mxu0
      %v1920 = vadd.f32 %v1759, %v1919
      %v1921 = vpop.f32.mrb[0].mxu0
      %1922 = vmatprep.mubr.bf16.mxu0 %v1008
      %1923 = vmatmul.mubr.bf16.gmra.mrb[0].mxu0 %v1007
      %v1924 = vpop.f32.mrb[0].mxu0
      %v1925 = vadd.f32 %v1764, %v1924
      %v1926 = vpop.f32.mrb[0].mxu0
      %v1927 = vpop.f32.mrb[0].mxu0
      %v1928 = vadd.f32 %v1767, %v1927
      %v1929 = vpop.f32.mrb[0].mxu0
      %1930 = vmatprep.mubr.bf16.mxu0 %v1017
      %1931 = vmatmul.mubr.bf16.gmra.mrb[0].mxu0 %v1016
      %v1932 = vpop.f32.mrb[0].mxu0
      %v1933 = vadd.f32 %v1772, %v1932
      %v1934 = vpop.f32.mrb[0].mxu0
      %v1935 = vpop.f32.mrb[0].mxu0
      %v1936 = vadd.f32 %v1775, %v1935
      %v1937 = vpop.f32.mrb[0].mxu0
      %1938 = vmatprep.mubr.bf16.mxu0 %v1026
      %1939 = vmatmul.mubr.bf16.gmra.mrb[0].mxu0 %v1025
      %v1940 = vpop.f32.mrb[0].mxu0
      %v1941 = vadd.f32 %v1780, %v1940
      %v1942 = vpop.f32.mrb[0].mxu0
      %v1943 = vpop.f32.mrb[0].mxu0
      %v1944 = vadd.f32 %v1783, %v1943
      %v1945 = vpop.f32.mrb[0].mxu0
      %1946 = vmatprep.mubr.bf16.mxu0 %v1035
      %1947 = vmatmul.mubr.bf16.gmra.mrb[0].mxu0 %v1034
      %v1948 = vpop.f32.mrb[0].mxu0
      %v1949 = vadd.f32 %v1788, %v1948
      %v1950 = vpop.f32.mrb[0].mxu0
      %v1951 = vpop.f32.mrb[0].mxu0
      %v1952 = vadd.f32 %v1791, %v1951
      %v1953 = vpop.f32.mrb[0].mxu0
      %1954 = vmatprep.mubr.bf16.mxu0 %v1044
      %1955 = vmatmul.mubr.bf16.gmra.mrb[0].mxu0 %v1043
      %v1956 = vpop.f32.mrb[0].mxu0
      %v1957 = vadd.f32 %v1796, %v1956
      %v1958 = vpop.f32.mrb[0].mxu0
      %v1959 = vpop.f32.mrb[0].mxu0
      %v1960 = vadd.f32 %v1799, %v1959
      %v1961 = vpop.f32.mrb[0].mxu0
      %1962 = vmatprep.mubr.bf16.mxu0 %v1053
      %1963 = vmatmul.mubr.bf16.gmra.mrb[0].mxu0 %v1052
      %v1964 = vpop.f32.mrb[0].mxu0
      %v1965 = vadd.f32 %v1804, %v1964
      %v1966 = vpop.f32.mrb[0].mxu0
      %v1967 = vpop.f32.mrb[0].mxu0
      %v1968 = vadd.f32 %v1807, %v1967
      %v1969 = vpop.f32.mrb[0].mxu0
      %1970 = vmatprep.mubr.bf16.mxu0 %v1062
      %1971 = vmatmul.mubr.bf16.gmra.mrb[0].mxu0 %v1061
      %v1972 = vpop.f32.mrb[0].mxu0
      %v1973 = vadd.f32 %v1812, %v1972
      %v1974 = vpop.f32.mrb[0].mxu0
      %v1975 = vpop.f32.mrb[0].mxu0
      %v1976 = vadd.f32 %v1815, %v1975
      %v1977 = vpop.f32.mrb[0].mxu0
      %1978 = vmatprep.mubr.bf16.mxu0 %v1071
      %1979 = vmatmul.mubr.bf16.gmra.mrb[0].mxu0 %v1070
      %v1980 = vpop.f32.mrb[0].mxu0
      %v1981 = vadd.f32 %v1820, %v1980
      %v1982 = vpop.f32.mrb[0].mxu0
      %v1983 = vpop.f32.mrb[0].mxu0
      %v1984 = vadd.f32 %v1823, %v1983
      %v1985 = vpop.f32.mrb[0].mxu0
      %1986 = vmatprep.mubr.bf16.mxu0 %v1080
      %1987 = vmatmul.mubr.bf16.gmra.mrb[0].mxu0 %v1079
      %v1988 = vpop.f32.mrb[0].mxu0
      %v1989 = vadd.f32 %v1828, %v1988
      %v1990 = vpop.f32.mrb[0].mxu0
      %v1991 = vpop.f32.mrb[0].mxu0
      %v1992 = vadd.f32 %v1831, %v1991
      %v1993 = vpop.f32.mrb[0].mxu0
      %1994 = vmatprep.mubr.bf16.mxu0 %v1089
      %1995 = vmatmul.mubr.bf16.gmra.mrb[0].mxu0 %v1088
      %v1996 = vpop.f32.mrb[0].mxu0
      %v1997 = vadd.f32 %v1836, %v1996
      %v1998 = vpop.f32.mrb[0].mxu0
      %v1999 = vpop.f32.mrb[0].mxu0
      %v2000 = vadd.f32 %v1839, %v1999
      %v2001 = vpop.f32.mrb[0].mxu0
      %2002 = vmatprep.mubr.bf16.mxu0 %v1098
      %2003 = vmatmul.mubr.bf16.gmra.mrb[0].mxu0 %v1097
      %v2004 = vpop.f32.mrb[0].mxu0
      %v2005 = vadd.f32 %v1844, %v2004
      %v2006 = vpop.f32.mrb[0].mxu0
      %v2007 = vpop.f32.mrb[0].mxu0
      %v2008 = vadd.f32 %v1847, %v2007
      %v2009 = vpop.f32.mrb[0].mxu0
      %2010 = vmatprep.mubr.bf16.mxu0 %v1107
      %2011 = vmatmul.mubr.bf16.gmra.mrb[0].mxu0 %v1106
      %v2012 = vpop.f32.mrb[0].mxu0
      %v2013 = vadd.f32 %v1852, %v2012
      %v2014 = vpop.f32.mrb[0].mxu0
      %v2015 = vpop.f32.mrb[0].mxu0
      %v2016 = vadd.f32 %v1855, %v2015
      %v2017 = vpop.f32.mrb[0].mxu0
      %2018 = vmatprep.mubr.bf16.mxu0 %v1116
      %2019 = vmatmul.mubr.bf16.gmra.mrb[0].mxu0 %v1115
      %v2020 = vpop.f32.mrb[0].mxu0
      %v2021 = vadd.f32 %v1860, %v2020
      %v2022 = vpop.f32.mrb[0].mxu0
      %v2023 = vpop.f32.mrb[0].mxu0
      %v2024 = vadd.f32 %v1863, %v2023
      %v2025 = vpop.f32.mrb[0].mxu0
      %2026 = vdwg.mxu0
      %2027 = vmatprep.subr.bf16.mxu0 0
      %2028 = vmatpush1.bf16.msra.mxu0 %v1593
      %2029 = vmatprep.subr.bf16.mxu0 0
      %2030 = vmatpush1.bf16.msra.mxu0 %v1594
      %2031 = vmatprep.subr.bf16.mxu0 0
      %2032 = vmatpush1.bf16.msra.mxu0 %v1595
      %2033 = vmatprep.subr.bf16.mxu0 0
      %2034 = vmatpush1.bf16.msra.mxu0 %v1596
      %2035 = vmatprep.subr.bf16.mxu0 0
      %2036 = vmatpush1.bf16.msra.mxu0 %v1597
      %2037 = vmatprep.subr.bf16.mxu0 0
      %2038 = vmatpush1.bf16.msra.mxu0 %v1598
      %2039 = vmatprep.subr.bf16.mxu0 0
      %2040 = vmatpush1.bf16.msra.mxu0 %v1599
      %2041 = vmatprep.subr.bf16.mxu0 0
      %2042 = vmatpush1.bf16.msra.mxu0 %v1600
      %2043 = vmatprep.subr.bf16.mxu0 0
      %2044 = vmatpush1.bf16.msra.mxu0 %v1601
      %2045 = vmatprep.subr.bf16.mxu0 0
      %2046 = vmatpush1.bf16.msra.mxu0 %v1602
      %2047 = vmatprep.subr.bf16.mxu0 0
      %2048 = vmatpush1.bf16.msra.mxu0 %v1603
      %2049 = vmatprep.subr.bf16.mxu0 0
      %2050 = vmatpush1.bf16.msra.mxu0 %v1604
      %2051 = vmatprep.subr.bf16.mxu0 0
      %2052 = vmatpush1.bf16.msra.mxu0 %v1605
      %2053 = vmatprep.subr.bf16.mxu0 0
      %2054 = vmatpush1.bf16.msra.mxu0 %v1606
      %2055 = vmatprep.subr.bf16.mxu0 0
      %2056 = vmatpush1.bf16.msra.mxu0 %v1607
      %2057 = vmatprep.subr.bf16.mxu0 0
      %2058 = vmatpush1.bf16.msra.mxu0 %v1608
      %2059 = vmatprep.mubr.bf16.mxu0 %v983
      %2060 = vmatmul.mubr.bf16.gmra.mrb[0].mxu0 %v982
      %v2061 = vpop.f32.mrb[0].mxu0
      %v2062 = vadd.f32 %v1901, %v2061
      %v2063 = vpop.f32.mrb[0].mxu0
      %v2064 = vpop.f32.mrb[0].mxu0
      %v2065 = vadd.f32 %v1904, %v2064
      %v2066 = vpop.f32.mrb[0].mxu0
      %2067 = vmatprep.mubr.bf16.mxu0 %v992
      %2068 = vmatmul.mubr.bf16.gmra.mrb[0].mxu0 %v991
      %v2069 = vpop.f32.mrb[0].mxu0
      %v2070 = vadd.f32 %v1909, %v2069
      %v2071 = vpop.f32.mrb[0].mxu0
      %v2072 = vpop.f32.mrb[0].mxu0
      %v2073 = vadd.f32 %v1912, %v2072
      %v2074 = vpop.f32.mrb[0].mxu0
      %2075 = vmatprep.mubr.bf16.mxu0 %v1001
      %2076 = vmatmul.mubr.bf16.gmra.mrb[0].mxu0 %v1000
      %v2077 = vpop.f32.mrb[0].mxu0
      %v2078 = vadd.f32 %v1917, %v2077
      %v2079 = vpop.f32.mrb[0].mxu0
      %v2080 = vpop.f32.mrb[0].mxu0
      %v2081 = vadd.f32 %v1920, %v2080
      %v2082 = vpop.f32.mrb[0].mxu0
      %2083 = vmatprep.mubr.bf16.mxu0 %v1010
      %2084 = vmatmul.mubr.bf16.gmra.mrb[0].mxu0 %v1009
      %v2085 = vpop.f32.mrb[0].mxu0
      %v2086 = vadd.f32 %v1925, %v2085
      %v2087 = vpop.f32.mrb[0].mxu0
      %v2088 = vpop.f32.mrb[0].mxu0
      %v2089 = vadd.f32 %v1928, %v2088
      %v2090 = vpop.f32.mrb[0].mxu0
      %2091 = vmatprep.mubr.bf16.mxu0 %v1019
      %2092 = vmatmul.mubr.bf16.gmra.mrb[0].mxu0 %v1018
      %v2093 = vpop.f32.mrb[0].mxu0
      %v2094 = vadd.f32 %v1933, %v2093
      %v2095 = vpop.f32.mrb[0].mxu0
      %v2096 = vpop.f32.mrb[0].mxu0
      %v2097 = vadd.f32 %v1936, %v2096
      %v2098 = vpop.f32.mrb[0].mxu0
      %2099 = vmatprep.mubr.bf16.mxu0 %v1028
      %2100 = vmatmul.mubr.bf16.gmra.mrb[0].mxu0 %v1027
      %v2101 = vpop.f32.mrb[0].mxu0
      %v2102 = vadd.f32 %v1941, %v2101
      %v2103 = vpop.f32.mrb[0].mxu0
      %v2104 = vpop.f32.mrb[0].mxu0
      %v2105 = vadd.f32 %v1944, %v2104
      %v2106 = vpop.f32.mrb[0].mxu0
      %2107 = vmatprep.mubr.bf16.mxu0 %v1037
      %2108 = vmatmul.mubr.bf16.gmra.mrb[0].mxu0 %v1036
      %v2109 = vpop.f32.mrb[0].mxu0
      %v2110 = vadd.f32 %v1949, %v2109
      %v2111 = vpop.f32.mrb[0].mxu0
      %v2112 = vpop.f32.mrb[0].mxu0
      %v2113 = vadd.f32 %v1952, %v2112
      %v2114 = vpop.f32.mrb[0].mxu0
      %2115 = vmatprep.mubr.bf16.mxu0 %v1046
      %2116 = vmatmul.mubr.bf16.gmra.mrb[0].mxu0 %v1045
      %v2117 = vpop.f32.mrb[0].mxu0
      %v2118 = vadd.f32 %v1957, %v2117
      %v2119 = vpop.f32.mrb[0].mxu0
      %v2120 = vpop.f32.mrb[0].mxu0
      %v2121 = vadd.f32 %v1960, %v2120
      %v2122 = vpop.f32.mrb[0].mxu0
      %2123 = vmatprep.mubr.bf16.mxu0 %v1055
      %2124 = vmatmul.mubr.bf16.gmra.mrb[0].mxu0 %v1054
      %v2125 = vpop.f32.mrb[0].mxu0
      %v2126 = vadd.f32 %v1965, %v2125
      %v2127 = vpop.f32.mrb[0].mxu0
      %v2128 = vpop.f32.mrb[0].mxu0
      %v2129 = vadd.f32 %v1968, %v2128
      %v2130 = vpop.f32.mrb[0].mxu0
      %2131 = vmatprep.mubr.bf16.mxu0 %v1064
      %2132 = vmatmul.mubr.bf16.gmra.mrb[0].mxu0 %v1063
      %v2133 = vpop.f32.mrb[0].mxu0
      %v2134 = vadd.f32 %v1973, %v2133
      %v2135 = vpop.f32.mrb[0].mxu0
      %v2136 = vpop.f32.mrb[0].mxu0
      %v2137 = vadd.f32 %v1976, %v2136
      %v2138 = vpop.f32.mrb[0].mxu0
      %2139 = vmatprep.mubr.bf16.mxu0 %v1073
      %2140 = vmatmul.mubr.bf16.gmra.mrb[0].mxu0 %v1072
      %v2141 = vpop.f32.mrb[0].mxu0
      %v2142 = vadd.f32 %v1981, %v2141
      %v2143 = vpop.f32.mrb[0].mxu0
      %v2144 = vpop.f32.mrb[0].mxu0
      %v2145 = vadd.f32 %v1984, %v2144
      %v2146 = vpop.f32.mrb[0].mxu0
      %2147 = vmatprep.mubr.bf16.mxu0 %v1082
      %2148 = vmatmul.mubr.bf16.gmra.mrb[0].mxu0 %v1081
      %v2149 = vpop.f32.mrb[0].mxu0
      %v2150 = vadd.f32 %v1989, %v2149
      %v2151 = vpop.f32.mrb[0].mxu0
      %v2152 = vpop.f32.mrb[0].mxu0
      %v2153 = vadd.f32 %v1992, %v2152
      %v2154 = vpop.f32.mrb[0].mxu0
      %2155 = vmatprep.mubr.bf16.mxu0 %v1091
      %2156 = vmatmul.mubr.bf16.gmra.mrb[0].mxu0 %v1090
      %v2157 = vpop.f32.mrb[0].mxu0
      %v2158 = vadd.f32 %v1997, %v2157
      %v2159 = vpop.f32.mrb[0].mxu0
      %v2160 = vpop.f32.mrb[0].mxu0
      %v2161 = vadd.f32 %v2000, %v2160
      %v2162 = vpop.f32.mrb[0].mxu0
      %2163 = vmatprep.mubr.bf16.mxu0 %v1100
      %2164 = vmatmul.mubr.bf16.gmra.mrb[0].mxu0 %v1099
      %v2165 = vpop.f32.mrb[0].mxu0
      %v2166 = vadd.f32 %v2005, %v2165
      %v2167 = vpop.f32.mrb[0].mxu0
      %v2168 = vpop.f32.mrb[0].mxu0
      %v2169 = vadd.f32 %v2008, %v2168
      %v2170 = vpop.f32.mrb[0].mxu0
      %2171 = vmatprep.mubr.bf16.mxu0 %v1109
      %2172 = vmatmul.mubr.bf16.gmra.mrb[0].mxu0 %v1108
      %v2173 = vpop.f32.mrb[0].mxu0
      %v2174 = vadd.f32 %v2013, %v2173
      %v2175 = vpop.f32.mrb[0].mxu0
      %v2176 = vpop.f32.mrb[0].mxu0
      %v2177 = vadd.f32 %v2016, %v2176
      %v2178 = vpop.f32.mrb[0].mxu0
      %2179 = vmatprep.mubr.bf16.mxu0 %v1118
      %2180 = vmatmul.mubr.bf16.gmra.mrb[0].mxu0 %v1117
      %v2181 = vpop.f32.mrb[0].mxu0
      %v2182 = vadd.f32 %v2021, %v2181
      %v2183 = vpop.f32.mrb[0].mxu0
      %v2184 = vpop.f32.mrb[0].mxu0
      %v2185 = vadd.f32 %v2024, %v2184
      %v2186 = vpop.f32.mrb[0].mxu0
      %2187 = vdwg.mxu0
      %2188 = vmatprep.subr.bf16.mxu0 0
      %2189 = vmatpush1.bf16.msra.mxu0 %v1609
      %2190 = vmatprep.subr.bf16.mxu0 0
      %2191 = vmatpush1.bf16.msra.mxu0 %v1610
      %2192 = vmatprep.subr.bf16.mxu0 0
      %2193 = vmatpush1.bf16.msra.mxu0 %v1611
      %2194 = vmatprep.subr.bf16.mxu0 0
      %2195 = vmatpush1.bf16.msra.mxu0 %v1612
      %2196 = vmatprep.subr.bf16.mxu0 0
      %2197 = vmatpush1.bf16.msra.mxu0 %v1613
      %2198 = vmatprep.subr.bf16.mxu0 0
      %2199 = vmatpush1.bf16.msra.mxu0 %v1614
      %2200 = vmatprep.subr.bf16.mxu0 0
      %2201 = vmatpush1.bf16.msra.mxu0 %v1615
      %2202 = vmatprep.subr.bf16.mxu0 0
      %2203 = vmatpush1.bf16.msra.mxu0 %v1616
      %2204 = vmatprep.subr.bf16.mxu0 0
      %2205 = vmatpush1.bf16.msra.mxu0 %v1617
      %2206 = vmatprep.subr.bf16.mxu0 0
      %2207 = vmatpush1.bf16.msra.mxu0 %v1618
      %2208 = vmatprep.subr.bf16.mxu0 0
      %2209 = vmatpush1.bf16.msra.mxu0 %v1619
      %2210 = vmatprep.subr.bf16.mxu0 0
      %2211 = vmatpush1.bf16.msra.mxu0 %v1620
      %2212 = vmatprep.subr.bf16.mxu0 0
      %2213 = vmatpush1.bf16.msra.mxu0 %v1621
      %2214 = vmatprep.subr.bf16.mxu0 0
      %2215 = vmatpush1.bf16.msra.mxu0 %v1622
      %2216 = vmatprep.subr.bf16.mxu0 0
      %2217 = vmatpush1.bf16.msra.mxu0 %v1623
      %2218 = vmatprep.subr.bf16.mxu0 0
      %2219 = vmatpush1.bf16.msra.mxu0 %v1624
      %2220 = vmatprep.mubr.bf16.mxu0 %v985
      %2221 = vmatmul.mubr.bf16.gmra.mrb[0].mxu0 %v984
      %v2222 = vpop.f32.mrb[0].mxu0
      %v2223 = vadd.f32 %v2062, %v2222
      %v2224 = vpop.f32.mrb[0].mxu0
      %v2225 = vpop.f32.mrb[0].mxu0
      %v2226 = vadd.f32 %v2065, %v2225
      %v2227 = vpop.f32.mrb[0].mxu0
      %2228 = vmatprep.mubr.bf16.mxu0 %v994
      %2229 = vmatmul.mubr.bf16.gmra.mrb[0].mxu0 %v993
      %v2230 = vpop.f32.mrb[0].mxu0
      %v2231 = vadd.f32 %v2070, %v2230
      %v2232 = vpop.f32.mrb[0].mxu0
      %v2233 = vpop.f32.mrb[0].mxu0
      %v2234 = vadd.f32 %v2073, %v2233
      %v2235 = vpop.f32.mrb[0].mxu0
      %2236 = vmatprep.mubr.bf16.mxu0 %v1003
      %2237 = vmatmul.mubr.bf16.gmra.mrb[0].mxu0 %v1002
      %v2238 = vpop.f32.mrb[0].mxu0
      %v2239 = vadd.f32 %v2078, %v2238
      %v2240 = vpop.f32.mrb[0].mxu0
      %v2241 = vpop.f32.mrb[0].mxu0
      %v2242 = vadd.f32 %v2081, %v2241
      %v2243 = vpop.f32.mrb[0].mxu0
      %2244 = vmatprep.mubr.bf16.mxu0 %v1012
      %2245 = vmatmul.mubr.bf16.gmra.mrb[0].mxu0 %v1011
      %v2246 = vpop.f32.mrb[0].mxu0
      %v2247 = vadd.f32 %v2086, %v2246
      %v2248 = vpop.f32.mrb[0].mxu0
      %v2249 = vpop.f32.mrb[0].mxu0
      %v2250 = vadd.f32 %v2089, %v2249
      %v2251 = vpop.f32.mrb[0].mxu0
      %2252 = vmatprep.mubr.bf16.mxu0 %v1021
      %2253 = vmatmul.mubr.bf16.gmra.mrb[0].mxu0 %v1020
      %v2254 = vpop.f32.mrb[0].mxu0
      %v2255 = vadd.f32 %v2094, %v2254
      %v2256 = vpop.f32.mrb[0].mxu0
      %v2257 = vpop.f32.mrb[0].mxu0
      %v2258 = vadd.f32 %v2097, %v2257
      %v2259 = vpop.f32.mrb[0].mxu0
      %2260 = vmatprep.mubr.bf16.mxu0 %v1030
      %2261 = vmatmul.mubr.bf16.gmra.mrb[0].mxu0 %v1029
      %v2262 = vpop.f32.mrb[0].mxu0
      %v2263 = vadd.f32 %v2102, %v2262
      %v2264 = vpop.f32.mrb[0].mxu0
      %v2265 = vpop.f32.mrb[0].mxu0
      %v2266 = vadd.f32 %v2105, %v2265
      %v2267 = vpop.f32.mrb[0].mxu0
      %2268 = vmatprep.mubr.bf16.mxu0 %v1039
      %2269 = vmatmul.mubr.bf16.gmra.mrb[0].mxu0 %v1038
      %v2270 = vpop.f32.mrb[0].mxu0
      %v2271 = vadd.f32 %v2110, %v2270
      %v2272 = vpop.f32.mrb[0].mxu0
      %v2273 = vpop.f32.mrb[0].mxu0
      %v2274 = vadd.f32 %v2113, %v2273
      %v2275 = vpop.f32.mrb[0].mxu0
      %2276 = vmatprep.mubr.bf16.mxu0 %v1048
      %2277 = vmatmul.mubr.bf16.gmra.mrb[0].mxu0 %v1047
      %v2278 = vpop.f32.mrb[0].mxu0
      %v2279 = vadd.f32 %v2118, %v2278
      %v2280 = vpop.f32.mrb[0].mxu0
      %v2281 = vpop.f32.mrb[0].mxu0
      %v2282 = vadd.f32 %v2121, %v2281
      %v2283 = vpop.f32.mrb[0].mxu0
      %2284 = vmatprep.mubr.bf16.mxu0 %v1057
      %2285 = vmatmul.mubr.bf16.gmra.mrb[0].mxu0 %v1056
      %v2286 = vpop.f32.mrb[0].mxu0
      %v2287 = vadd.f32 %v2126, %v2286
      %v2288 = vpop.f32.mrb[0].mxu0
      %v2289 = vpop.f32.mrb[0].mxu0
      %v2290 = vadd.f32 %v2129, %v2289
      %v2291 = vpop.f32.mrb[0].mxu0
      %2292 = vmatprep.mubr.bf16.mxu0 %v1066
      %2293 = vmatmul.mubr.bf16.gmra.mrb[0].mxu0 %v1065
      %v2294 = vpop.f32.mrb[0].mxu0
      %v2295 = vadd.f32 %v2134, %v2294
      %v2296 = vpop.f32.mrb[0].mxu0
      %v2297 = vpop.f32.mrb[0].mxu0
      %v2298 = vadd.f32 %v2137, %v2297
      %v2299 = vpop.f32.mrb[0].mxu0
      %2300 = vmatprep.mubr.bf16.mxu0 %v1075
      %2301 = vmatmul.mubr.bf16.gmra.mrb[0].mxu0 %v1074
      %v2302 = vpop.f32.mrb[0].mxu0
      %v2303 = vadd.f32 %v2142, %v2302
      %v2304 = vpop.f32.mrb[0].mxu0
      %v2305 = vpop.f32.mrb[0].mxu0
      %v2306 = vadd.f32 %v2145, %v2305
      %v2307 = vpop.f32.mrb[0].mxu0
      %2308 = vmatprep.mubr.bf16.mxu0 %v1084
      %2309 = vmatmul.mubr.bf16.gmra.mrb[0].mxu0 %v1083
      %v2310 = vpop.f32.mrb[0].mxu0
      %v2311 = vadd.f32 %v2150, %v2310
      %v2312 = vpop.f32.mrb[0].mxu0
      %v2313 = vpop.f32.mrb[0].mxu0
      %v2314 = vadd.f32 %v2153, %v2313
      %v2315 = vpop.f32.mrb[0].mxu0
      %2316 = vmatprep.mubr.bf16.mxu0 %v1093
      %2317 = vmatmul.mubr.bf16.gmra.mrb[0].mxu0 %v1092
      %v2318 = vpop.f32.mrb[0].mxu0
      %v2319 = vadd.f32 %v2158, %v2318
      %v2320 = vpop.f32.mrb[0].mxu0
      %v2321 = vpop.f32.mrb[0].mxu0
      %v2322 = vadd.f32 %v2161, %v2321
      %v2323 = vpop.f32.mrb[0].mxu0
      %2324 = vmatprep.mubr.bf16.mxu0 %v1102
      %2325 = vmatmul.mubr.bf16.gmra.mrb[0].mxu0 %v1101
      %v2326 = vpop.f32.mrb[0].mxu0
      %v2327 = vadd.f32 %v2166, %v2326
      %v2328 = vpop.f32.mrb[0].mxu0
      %v2329 = vpop.f32.mrb[0].mxu0
      %v2330 = vadd.f32 %v2169, %v2329
      %v2331 = vpop.f32.mrb[0].mxu0
      %2332 = vmatprep.mubr.bf16.mxu0 %v1111
      %2333 = vmatmul.mubr.bf16.gmra.mrb[0].mxu0 %v1110
      %v2334 = vpop.f32.mrb[0].mxu0
      %v2335 = vadd.f32 %v2174, %v2334
      %v2336 = vpop.f32.mrb[0].mxu0
      %v2337 = vpop.f32.mrb[0].mxu0
      %v2338 = vadd.f32 %v2177, %v2337
      %v2339 = vpop.f32.mrb[0].mxu0
      %2340 = vmatprep.mubr.bf16.mxu0 %v1120
      %2341 = vmatmul.mubr.bf16.gmra.mrb[0].mxu0 %v1119
      %v2342 = vpop.f32.mrb[0].mxu0
      %v2343 = vadd.f32 %v2182, %v2342
      %v2344 = vpop.f32.mrb[0].mxu0
      %v2345 = vpop.f32.mrb[0].mxu0
      %v2346 = vadd.f32 %v2185, %v2345
      %v2347 = vpop.f32.mrb[0].mxu0
      %2348 = vdwg.mxu0
      %2349 = vmatprep.subr.bf16.mxu0 0
      %2350 = vmatpush1.bf16.msra.mxu0 %v1625
      %2351 = vmatprep.subr.bf16.mxu0 0
      %2352 = vmatpush1.bf16.msra.mxu0 %v1626
      %2353 = vmatprep.subr.bf16.mxu0 0
      %2354 = vmatpush1.bf16.msra.mxu0 %v1627
      %2355 = vmatprep.subr.bf16.mxu0 0
      %2356 = vmatpush1.bf16.msra.mxu0 %v1628
      %2357 = vmatprep.subr.bf16.mxu0 0
      %2358 = vmatpush1.bf16.msra.mxu0 %v1629
      %2359 = vmatprep.subr.bf16.mxu0 0
      %2360 = vmatpush1.bf16.msra.mxu0 %v1630
      %2361 = vmatprep.subr.bf16.mxu0 0
      %2362 = vmatpush1.bf16.msra.mxu0 %v1631
      %2363 = vmatprep.subr.bf16.mxu0 0
      %2364 = vmatpush1.bf16.msra.mxu0 %v1632
      %2365 = vmatprep.subr.bf16.mxu0 0
      %2366 = vmatpush1.bf16.msra.mxu0 0
      %2367 = vmatprep.subr.bf16.mxu0 0
      %2368 = vmatpush1.bf16.msra.mxu0 0
      %2369 = vmatprep.subr.bf16.mxu0 0
      %2370 = vmatpush1.bf16.msra.mxu0 0
      %2371 = vmatprep.subr.bf16.mxu0 0
      %2372 = vmatpush1.bf16.msra.mxu0 0
      %2373 = vmatprep.subr.bf16.mxu0 0
      %2374 = vmatpush1.bf16.msra.mxu0 0
      %2375 = vmatprep.subr.bf16.mxu0 0
      %2376 = vmatpush1.bf16.msra.mxu0 0
      %2377 = vmatprep.subr.bf16.mxu0 0
      %2378 = vmatpush1.bf16.msra.mxu0 0
      %2379 = vmatprep.subr.bf16.mxu0 0
      %2380 = vmatpush1.bf16.msra.mxu0 0
      %2381 = vmatprep.mubr.bf16.mxu0 0
      %2382 = vmatmul.mubr.bf16.gmra.mrb[0].mxu0 %v986
      %v2383 = vpop.f32.mrb[0].mxu0
      %v2384 = vadd.f32 %v2223, %v2383
      %v2385 = vpop.f32.mrb[0].mxu0
      %v2386 = vpop.f32.mrb[0].mxu0
      %v2387 = vadd.f32 %v2226, %v2386
      %v2388 = vpop.f32.mrb[0].mxu0
      %2389 = vmatprep.mubr.bf16.mxu0 0
      %2390 = vmatmul.mubr.bf16.gmra.mrb[0].mxu0 %v995
      %v2391 = vpop.f32.mrb[0].mxu0
      %v2392 = vadd.f32 %v2231, %v2391
      %v2393 = vpop.f32.mrb[0].mxu0
      %v2394 = vpop.f32.mrb[0].mxu0
      %v2395 = vadd.f32 %v2234, %v2394
      %v2396 = vpop.f32.mrb[0].mxu0
      %2397 = vmatprep.mubr.bf16.mxu0 0
      %2398 = vmatmul.mubr.bf16.gmra.mrb[0].mxu0 %v1004
      %v2399 = vpop.f32.mrb[0].mxu0
      %v2400 = vadd.f32 %v2239, %v2399
      %v2401 = vpop.f32.mrb[0].mxu0
      %v2402 = vpop.f32.mrb[0].mxu0
      %v2403 = vadd.f32 %v2242, %v2402
      %v2404 = vpop.f32.mrb[0].mxu0
      %2405 = vmatprep.mubr.bf16.mxu0 0
      %2406 = vmatmul.mubr.bf16.gmra.mrb[0].mxu0 %v1013
      %v2407 = vpop.f32.mrb[0].mxu0
      %v2408 = vadd.f32 %v2247, %v2407
      %v2409 = vpop.f32.mrb[0].mxu0
      %v2410 = vpop.f32.mrb[0].mxu0
      %v2411 = vadd.f32 %v2250, %v2410
      %v2412 = vpop.f32.mrb[0].mxu0
      %2413 = vmatprep.mubr.bf16.mxu0 0
      %2414 = vmatmul.mubr.bf16.gmra.mrb[0].mxu0 %v1022
      %v2415 = vpop.f32.mrb[0].mxu0
      %v2416 = vadd.f32 %v2255, %v2415
      %v2417 = vpop.f32.mrb[0].mxu0
      %v2418 = vpop.f32.mrb[0].mxu0
      %v2419 = vadd.f32 %v2258, %v2418
      %v2420 = vpop.f32.mrb[0].mxu0
      %2421 = vmatprep.mubr.bf16.mxu0 0
      %2422 = vmatmul.mubr.bf16.gmra.mrb[0].mxu0 %v1031
      %v2423 = vpop.f32.mrb[0].mxu0
      %v2424 = vadd.f32 %v2263, %v2423
      %v2425 = vpop.f32.mrb[0].mxu0
      %v2426 = vpop.f32.mrb[0].mxu0
      %v2427 = vadd.f32 %v2266, %v2426
      %v2428 = vpop.f32.mrb[0].mxu0
      %2429 = vmatprep.mubr.bf16.mxu0 0
      %2430 = vmatmul.mubr.bf16.gmra.mrb[0].mxu0 %v1040
      %v2431 = vpop.f32.mrb[0].mxu0
      %v2432 = vadd.f32 %v2271, %v2431
      %v2433 = vpop.f32.mrb[0].mxu0
      %v2434 = vpop.f32.mrb[0].mxu0
      %v2435 = vadd.f32 %v2274, %v2434
      %v2436 = vpop.f32.mrb[0].mxu0
      %2437 = vmatprep.mubr.bf16.mxu0 0
      %2438 = vmatmul.mubr.bf16.gmra.mrb[0].mxu0 %v1049
      %v2439 = vpop.f32.mrb[0].mxu0
      %v2440 = vadd.f32 %v2279, %v2439
      %v2441 = vpop.f32.mrb[0].mxu0
      %v2442 = vpop.f32.mrb[0].mxu0
      %v2443 = vadd.f32 %v2282, %v2442
      %v2444 = vpop.f32.mrb[0].mxu0
      %2445 = vmatprep.mubr.bf16.mxu0 0
      %2446 = vmatmul.mubr.bf16.gmra.mrb[0].mxu0 %v1058
      %v2447 = vpop.f32.mrb[0].mxu0
      %v2448 = vadd.f32 %v2287, %v2447
      %v2449 = vpop.f32.mrb[0].mxu0
      %v2450 = vpop.f32.mrb[0].mxu0
      %v2451 = vadd.f32 %v2290, %v2450
      %v2452 = vpop.f32.mrb[0].mxu0
      %2453 = vmatprep.mubr.bf16.mxu0 0
      %2454 = vmatmul.mubr.bf16.gmra.mrb[0].mxu0 %v1067
      %v2455 = vpop.f32.mrb[0].mxu0
      %v2456 = vadd.f32 %v2295, %v2455
      %v2457 = vpop.f32.mrb[0].mxu0
      %v2458 = vpop.f32.mrb[0].mxu0
      %v2459 = vadd.f32 %v2298, %v2458
      %v2460 = vpop.f32.mrb[0].mxu0
      %2461 = vmatprep.mubr.bf16.mxu0 0
      %2462 = vmatmul.mubr.bf16.gmra.mrb[0].mxu0 %v1076
      %v2463 = vpop.f32.mrb[0].mxu0
      %v2464 = vadd.f32 %v2303, %v2463
      %v2465 = vpop.f32.mrb[0].mxu0
      %v2466 = vpop.f32.mrb[0].mxu0
      %v2467 = vadd.f32 %v2306, %v2466
      %v2468 = vpop.f32.mrb[0].mxu0
      %2469 = vmatprep.mubr.bf16.mxu0 0
      %2470 = vmatmul.mubr.bf16.gmra.mrb[0].mxu0 %v1085
      %v2471 = vpop.f32.mrb[0].mxu0
      %v2472 = vadd.f32 %v2311, %v2471
      %v2473 = vpop.f32.mrb[0].mxu0
      %v2474 = vpop.f32.mrb[0].mxu0
      %v2475 = vadd.f32 %v2314, %v2474
      %v2476 = vpop.f32.mrb[0].mxu0
      %2477 = vmatprep.mubr.bf16.mxu0 0
      %2478 = vmatmul.mubr.bf16.gmra.mrb[0].mxu0 %v1094
      %v2479 = vpop.f32.mrb[0].mxu0
      %v2480 = vadd.f32 %v2319, %v2479
      %v2481 = vpop.f32.mrb[0].mxu0
      %v2482 = vpop.f32.mrb[0].mxu0
      %v2483 = vadd.f32 %v2322, %v2482
      %v2484 = vpop.f32.mrb[0].mxu0
      %2485 = vmatprep.mubr.bf16.mxu0 0
      %2486 = vmatmul.mubr.bf16.gmra.mrb[0].mxu0 %v1103
      %v2487 = vpop.f32.mrb[0].mxu0
      %v2488 = vadd.f32 %v2327, %v2487
      %v2489 = vpop.f32.mrb[0].mxu0
      %v2490 = vpop.f32.mrb[0].mxu0
      %v2491 = vadd.f32 %v2330, %v2490
      %v2492 = vpop.f32.mrb[0].mxu0
      %2493 = vmatprep.mubr.bf16.mxu0 0
      %2494 = vmatmul.mubr.bf16.gmra.mrb[0].mxu0 %v1112
      %v2495 = vpop.f32.mrb[0].mxu0
      %v2496 = vadd.f32 %v2335, %v2495
      %v2497 = vpop.f32.mrb[0].mxu0
      %v2498 = vpop.f32.mrb[0].mxu0
      %v2499 = vadd.f32 %v2338, %v2498
      %v2500 = vpop.f32.mrb[0].mxu0
      %2501 = vmatprep.mubr.bf16.mxu0 0
      %2502 = vmatmul.mubr.bf16.gmra.mrb[0].mxu0 %v1121
      %v2503 = vpop.f32.mrb[0].mxu0
      %v2504 = vadd.f32 %v2343, %v2503
      %v2505 = vpop.f32.mrb[0].mxu0
      %v2506 = vpop.f32.mrb[0].mxu0
      %v2507 = vadd.f32 %v2346, %v2506
      %v2508 = vpop.f32.mrb[0].mxu0
      %2509 = vdwg.mxu0
      %v2510 = vmax.f32 %v2384, 0.0
      %v2511 = vmax.f32 %v2387, 0.0
      %v2512 = vmax.f32 %v2392, 0.0
      %v2513 = vmax.f32 %v2395, 0.0
      %v2514 = vmax.f32 %v2400, 0.0
      %v2515 = vmax.f32 %v2403, 0.0
      %v2516 = vmax.f32 %v2408, 0.0
      %v2517 = vmax.f32 %v2411, 0.0
      %v2518 = vmax.f32 %v2416, 0.0
      %v2519 = vmax.f32 %v2419, 0.0
      %v2520 = vmax.f32 %v2424, 0.0
      %v2521 = vmax.f32 %v2427, 0.0
      %v2522 = vmax.f32 %v2432, 0.0
      %v2523 = vmax.f32 %v2435, 0.0
      %v2524 = vmax.f32 %v2440, 0.0
      %v2525 = vmax.f32 %v2443, 0.0
      %v2526 = vmax.f32 %v2448, 0.0
      %v2527 = vmax.f32 %v2451, 0.0
      %v2528 = vmax.f32 %v2456, 0.0
      %v2529 = vmax.f32 %v2459, 0.0
      %v2530 = vmax.f32 %v2464, 0.0
      %v2531 = vmax.f32 %v2467, 0.0
      %v2532 = vmax.f32 %v2472, 0.0
      %v2533 = vmax.f32 %v2475, 0.0
      %v2534 = vmax.f32 %v2480, 0.0
      %v2535 = vmax.f32 %v2483, 0.0
      %v2536 = vmax.f32 %v2488, 0.0
      %v2537 = vmax.f32 %v2491, 0.0
      %v2538 = vmax.f32 %v2496, 0.0
      %v2539 = vmax.f32 %v2499, 0.0
      %v2540 = vmax.f32 %v2504, 0.0
      %v2541 = vmax.f32 %v2507, 0.0
      %v2542 = vpack.c.bf16 %v2511, %v2510
      %v2543 = vpack.c.bf16 %v2513, %v2512
      %v2544 = vpack.c.bf16 %v2515, %v2514
      %v2545 = vpack.c.bf16 %v2517, %v2516
      %v2546 = vpack.c.bf16 %v2519, %v2518
      %v2547 = vpack.c.bf16 %v2521, %v2520
      %v2548 = vpack.c.bf16 %v2523, %v2522
      %v2549 = vpack.c.bf16 %v2525, %v2524
      %v2550 = vpack.c.bf16 %v2527, %v2526
      %v2551 = vpack.c.bf16 %v2529, %v2528
      %v2552 = vpack.c.bf16 %v2531, %v2530
      %v2553 = vpack.c.bf16 %v2533, %v2532
      %v2554 = vpack.c.bf16 %v2535, %v2534
      %v2555 = vpack.c.bf16 %v2537, %v2536
      %v2556 = vpack.c.bf16 %v2539, %v2538
      %v2557 = vpack.c.bf16 %v2541, %v2540
      %v2574 = vunpack.c.l.b16 %v2542
      %v2575 = vunpack.c.h.b16 %v2542
      %v2576 = vunpack.c.l.b16 %v2543
      %v2577 = vunpack.c.h.b16 %v2543
      %v2578 = vunpack.c.l.b16 %v2544
      %v2579 = vunpack.c.h.b16 %v2544
      %v2580 = vunpack.c.l.b16 %v2545
      %v2581 = vunpack.c.h.b16 %v2545
      %v2582 = vunpack.c.l.b16 %v2546
      %v2583 = vunpack.c.h.b16 %v2546
      %v2584 = vunpack.c.l.b16 %v2547
      %v2585 = vunpack.c.h.b16 %v2547
      %v2586 = vunpack.c.l.b16 %v2548
      %v2587 = vunpack.c.h.b16 %v2548
      %v2588 = vunpack.c.l.b16 %v2549
      %v2589 = vunpack.c.h.b16 %v2549
      %v2590 = vunpack.c.l.b16 %v2550
      %v2591 = vunpack.c.h.b16 %v2550
      %v2592 = vunpack.c.l.b16 %v2551
      %v2593 = vunpack.c.h.b16 %v2551
      %v2594 = vunpack.c.l.b16 %v2552
      %v2595 = vunpack.c.h.b16 %v2552
      %v2596 = vunpack.c.l.b16 %v2553
      %v2597 = vunpack.c.h.b16 %v2553
      %v2598 = vunpack.c.l.b16 %v2554
      %v2599 = vunpack.c.h.b16 %v2554
      %v2600 = vunpack.c.l.b16 %v2555
      %v2601 = vunpack.c.h.b16 %v2555
      %v2602 = vunpack.c.l.b16 %v2556
      %v2603 = vunpack.c.h.b16 %v2556
      %v2604 = vunpack.c.l.b16 %v2557
      %v2605 = vunpack.c.h.b16 %v2557
      %v2606 = vpack.c.b16 %v2574, %v2574
      %v2607 = vpack.c.b16 %v2575, %v2575
      %v2608 = vpack.c.b16 %v2576, %v2576
      %v2609 = vpack.c.b16 %v2577, %v2577
      %v2610 = vpack.c.b16 %v2578, %v2578
      %v2611 = vpack.c.b16 %v2579, %v2579
      %v2612 = vpack.c.b16 %v2580, %v2580
      %v2613 = vpack.c.b16 %v2581, %v2581
      %v2614 = vpack.c.b16 %v2582, %v2582
      %v2615 = vpack.c.b16 %v2583, %v2583
      %v2616 = vpack.c.b16 %v2584, %v2584
      %v2617 = vpack.c.b16 %v2585, %v2585
      %v2618 = vpack.c.b16 %v2586, %v2586
      %v2619 = vpack.c.b16 %v2587, %v2587
      %v2620 = vpack.c.b16 %v2588, %v2588
      %v2621 = vpack.c.b16 %v2589, %v2589
      %v2622 = vpack.c.b16 %v2590, %v2590
      %v2623 = vpack.c.b16 %v2591, %v2591
      %v2624 = vpack.c.b16 %v2592, %v2592
      %v2625 = vpack.c.b16 %v2593, %v2593
      %v2626 = vpack.c.b16 %v2594, %v2594
      %v2627 = vpack.c.b16 %v2595, %v2595
      %v2628 = vpack.c.b16 %v2596, %v2596
      %v2629 = vpack.c.b16 %v2597, %v2597
      %v2630 = vpack.c.b16 %v2598, %v2598
      %v2631 = vpack.c.b16 %v2599, %v2599
      %v2632 = vpack.c.b16 %v2600, %v2600
      %v2633 = vpack.c.b16 %v2601, %v2601
      %v2634 = vpack.c.b16 %v2602, %v2602
      %v2635 = vpack.c.b16 %v2603, %v2603
      %v2636 = vpack.c.b16 %v2604, %v2604
      %v2637 = vpack.c.b16 %v2605, %v2605
      %vm2638 = vsmask.f32 4368
      %vm2639 = vmor %vm234, %vm2638
      %v2641 = vshrl.u32 %v2606, 16
      %v2643 = vrot.slane %v2641, 7
      %v2644 = vshll.u32 %v2606, 16
      %v2646 = vor.u32 %v2643, %v2644
      %v2647 = vrot.slane %v2643, 4
      %v2649 = vshrl.u32 %v2607, 16
      %v2651 = vrot.slane %v2649, 7
      %v2652 = vshll.u32 %v2607, 16
      %v2654 = vor.u32 %v2651, %v2652
      %v2655 = vsel %vm2639, %v2647, %v2654
      %v2656 = vrot.slane %v2651, 4
      %v2658 = vshrl.u32 %v2608, 16
      %v2660 = vrot.slane %v2658, 7
      %v2661 = vshll.u32 %v2608, 16
      %v2663 = vor.u32 %v2660, %v2661
      %v2664 = vrot.slane %v2660, 4
      %v2666 = vshrl.u32 %v2609, 16
      %v2668 = vrot.slane %v2666, 7
      %v2669 = vshll.u32 %v2609, 16
      %v2671 = vor.u32 %v2668, %v2669
      %v2672 = vsel %vm2639, %v2664, %v2671
      %v2673 = vrot.slane %v2668, 4
      %v2675 = vshrl.u32 %v2610, 16
      %v2677 = vrot.slane %v2675, 7
      %v2678 = vshll.u32 %v2610, 16
      %v2680 = vor.u32 %v2677, %v2678
      %v2681 = vrot.slane %v2677, 4
      %v2683 = vshrl.u32 %v2611, 16
      %v2685 = vrot.slane %v2683, 7
      %v2686 = vshll.u32 %v2611, 16
      %v2688 = vor.u32 %v2685, %v2686
      %v2689 = vsel %vm2639, %v2681, %v2688
      %v2690 = vrot.slane %v2685, 4
      %v2692 = vshrl.u32 %v2612, 16
      %v2694 = vrot.slane %v2692, 7
      %v2695 = vshll.u32 %v2612, 16
      %v2697 = vor.u32 %v2694, %v2695
      %v2698 = vrot.slane %v2694, 4
      %v2700 = vshrl.u32 %v2613, 16
      %v2702 = vrot.slane %v2700, 7
      %v2703 = vshll.u32 %v2613, 16
      %v2705 = vor.u32 %v2702, %v2703
      %v2706 = vsel %vm2639, %v2698, %v2705
      %v2707 = vrot.slane %v2702, 4
      %v2709 = vshrl.u32 %v2614, 16
      %v2711 = vrot.slane %v2709, 7
      %v2712 = vshll.u32 %v2614, 16
      %v2714 = vor.u32 %v2711, %v2712
      %v2715 = vrot.slane %v2711, 4
      %v2717 = vshrl.u32 %v2615, 16
      %v2719 = vrot.slane %v2717, 7
      %v2720 = vshll.u32 %v2615, 16
      %v2722 = vor.u32 %v2719, %v2720
      %v2723 = vsel %vm2639, %v2715, %v2722
      %v2724 = vrot.slane %v2719, 4
      %v2726 = vshrl.u32 %v2616, 16
      %v2728 = vrot.slane %v2726, 7
      %v2729 = vshll.u32 %v2616, 16
      %v2731 = vor.u32 %v2728, %v2729
      %v2732 = vrot.slane %v2728, 4
      %v2734 = vshrl.u32 %v2617, 16
      %v2736 = vrot.slane %v2734, 7
      %v2737 = vshll.u32 %v2617, 16
      %v2739 = vor.u32 %v2736, %v2737
      %v2740 = vsel %vm2639, %v2732, %v2739
      %v2741 = vrot.slane %v2736, 4
      %v2743 = vshrl.u32 %v2618, 16
      %v2745 = vrot.slane %v2743, 7
      %v2746 = vshll.u32 %v2618, 16
      %v2748 = vor.u32 %v2745, %v2746
      %v2749 = vrot.slane %v2745, 4
      %v2751 = vshrl.u32 %v2619, 16
      %v2753 = vrot.slane %v2751, 7
      %v2754 = vshll.u32 %v2619, 16
      %v2756 = vor.u32 %v2753, %v2754
      %v2757 = vsel %vm2639, %v2749, %v2756
      %v2758 = vrot.slane %v2753, 4
      %v2760 = vshrl.u32 %v2620, 16
      %v2762 = vrot.slane %v2760, 7
      %v2763 = vshll.u32 %v2620, 16
      %v2765 = vor.u32 %v2762, %v2763
      %v2766 = vrot.slane %v2762, 4
      %v2768 = vshrl.u32 %v2621, 16
      %v2770 = vrot.slane %v2768, 7
      %v2771 = vshll.u32 %v2621, 16
      %v2773 = vor.u32 %v2770, %v2771
      %v2774 = vsel %vm2639, %v2766, %v2773
      %v2775 = vrot.slane %v2770, 4
      %v2777 = vshrl.u32 %v2622, 16
      %v2779 = vrot.slane %v2777, 7
      %v2780 = vshll.u32 %v2622, 16
      %v2782 = vor.u32 %v2779, %v2780
      %v2783 = vrot.slane %v2779, 4
      %v2785 = vshrl.u32 %v2623, 16
      %v2787 = vrot.slane %v2785, 7
      %v2788 = vshll.u32 %v2623, 16
      %v2790 = vor.u32 %v2787, %v2788
      %v2791 = vsel %vm2639, %v2783, %v2790
      %v2792 = vrot.slane %v2787, 4
      %v2794 = vshrl.u32 %v2624, 16
      %v2796 = vrot.slane %v2794, 7
      %v2797 = vshll.u32 %v2624, 16
      %v2799 = vor.u32 %v2796, %v2797
      %v2800 = vrot.slane %v2796, 4
      %v2802 = vshrl.u32 %v2625, 16
      %v2804 = vrot.slane %v2802, 7
      %v2805 = vshll.u32 %v2625, 16
      %v2807 = vor.u32 %v2804, %v2805
      %v2808 = vsel %vm2639, %v2800, %v2807
      %v2809 = vrot.slane %v2804, 4
      %v2811 = vshrl.u32 %v2626, 16
      %v2813 = vrot.slane %v2811, 7
      %v2814 = vshll.u32 %v2626, 16
      %v2816 = vor.u32 %v2813, %v2814
      %v2817 = vrot.slane %v2813, 4
      %v2819 = vshrl.u32 %v2627, 16
      %v2821 = vrot.slane %v2819, 7
      %v2822 = vshll.u32 %v2627, 16
      %v2824 = vor.u32 %v2821, %v2822
      %v2825 = vsel %vm2639, %v2817, %v2824
      %v2826 = vrot.slane %v2821, 4
      %v2828 = vshrl.u32 %v2628, 16
      %v2830 = vrot.slane %v2828, 7
      %v2831 = vshll.u32 %v2628, 16
      %v2833 = vor.u32 %v2830, %v2831
      %v2834 = vrot.slane %v2830, 4
      %v2836 = vshrl.u32 %v2629, 16
      %v2838 = vrot.slane %v2836, 7
      %v2839 = vshll.u32 %v2629, 16
      %v2841 = vor.u32 %v2838, %v2839
      %v2842 = vsel %vm2639, %v2834, %v2841
      %v2843 = vrot.slane %v2838, 4
      %v2845 = vshrl.u32 %v2630, 16
      %v2847 = vrot.slane %v2845, 7
      %v2848 = vshll.u32 %v2630, 16
      %v2850 = vor.u32 %v2847, %v2848
      %v2851 = vrot.slane %v2847, 4
      %v2853 = vshrl.u32 %v2631, 16
      %v2855 = vrot.slane %v2853, 7
      %v2856 = vshll.u32 %v2631, 16
      %v2858 = vor.u32 %v2855, %v2856
      %v2859 = vsel %vm2639, %v2851, %v2858
      %v2860 = vrot.slane %v2855, 4
      %v2862 = vshrl.u32 %v2632, 16
      %v2864 = vrot.slane %v2862, 7
      %v2865 = vshll.u32 %v2632, 16
      %v2867 = vor.u32 %v2864, %v2865
      %v2868 = vrot.slane %v2864, 4
      %v2870 = vshrl.u32 %v2633, 16
      %v2872 = vrot.slane %v2870, 7
      %v2873 = vshll.u32 %v2633, 16
      %v2875 = vor.u32 %v2872, %v2873
      %v2876 = vsel %vm2639, %v2868, %v2875
      %v2877 = vrot.slane %v2872, 4
      %v2879 = vshrl.u32 %v2634, 16
      %v2881 = vrot.slane %v2879, 7
      %v2882 = vshll.u32 %v2634, 16
      %v2884 = vor.u32 %v2881, %v2882
      %v2885 = vrot.slane %v2881, 4
      %v2887 = vshrl.u32 %v2635, 16
      %v2889 = vrot.slane %v2887, 7
      %v2890 = vshll.u32 %v2635, 16
      %v2892 = vor.u32 %v2889, %v2890
      %v2893 = vsel %vm2639, %v2885, %v2892
      %v2894 = vrot.slane %v2889, 4
      %v2896 = vshrl.u32 %v2636, 16
      %v2898 = vrot.slane %v2896, 7
      %v2899 = vshll.u32 %v2636, 16
      %v2901 = vor.u32 %v2898, %v2899
      %v2902 = vrot.slane %v2898, 4
      %v2904 = vshrl.u32 %v2637, 16
      %v2906 = vrot.slane %v2904, 7
      %v2907 = vshll.u32 %v2637, 16
      %v2909 = vor.u32 %v2906, %v2907
      %v2910 = vsel %vm2639, %v2902, %v2909
      %v2911 = vrot.slane %v2906, 4
      %s2960 = scalar_lea.vmem [#allocation2], 12
      %vm2961 = vcmask 1043456
      %vm2962 = vmand %vm2961, %vm290
      %v2963 = vld [vmem:[%s2960] sm:$0xf]
      %v2964 = vsel %vm2962, %v2646, %v2963
      %2965 = vst [vmem:[%s2960] sm:$0xf] %v2964
      %2966 = vst [vmem:[%s2960 + $0x4] sm:$0xf] %v2655
      %v2967 = vld [vmem:[%s2960 + $0x8] sm:$0x1]
      %v2968 = vsel %vm235, %v2656, %v2967
      %2969 = vst [vmem:[%s2960 + $0x8] sm:$0x1] %v2968
      %v2970 = vld [vmem:[%s2960 + $0xc] sm:$0xf]
      %v2971 = vsel %vm2962, %v2663, %v2970
      %2972 = vst [vmem:[%s2960 + $0xc] sm:$0xf] %v2971
      %2973 = vst [vmem:[%s2960 + $0x10] sm:$0xf] %v2672
      %v2974 = vld [vmem:[%s2960 + $0x14] sm:$0x1]
      %v2975 = vsel %vm235, %v2673, %v2974
      %2976 = vst [vmem:[%s2960 + $0x14] sm:$0x1] %v2975
      %v2977 = vld [vmem:[%s2960 + $0x18] sm:$0xf]
      %v2978 = vsel %vm2962, %v2680, %v2977
      %2979 = vst [vmem:[%s2960 + $0x18] sm:$0xf] %v2978
      %2980 = vst [vmem:[%s2960 + $0x1c] sm:$0xf] %v2689
      %v2981 = vld [vmem:[%s2960 + $0x20] sm:$0x1]
      %v2982 = vsel %vm235, %v2690, %v2981
      %2983 = vst [vmem:[%s2960 + $0x20] sm:$0x1] %v2982
      %v2984 = vld [vmem:[%s2960 + $0x24] sm:$0xf]
      %v2985 = vsel %vm2962, %v2697, %v2984
      %2986 = vst [vmem:[%s2960 + $0x24] sm:$0xf] %v2985
      %2987 = vst [vmem:[%s2960 + $0x28] sm:$0xf] %v2706
      %v2988 = vld [vmem:[%s2960 + $0x2c] sm:$0x1]
      %v2989 = vsel %vm235, %v2707, %v2988
      %2990 = vst [vmem:[%s2960 + $0x2c] sm:$0x1] %v2989
      %v2991 = vld [vmem:[%s2960 + $0x30] sm:$0xf]
      %v2992 = vsel %vm2962, %v2714, %v2991
      %2993 = vst [vmem:[%s2960 + $0x30] sm:$0xf] %v2992
      %2994 = vst [vmem:[%s2960 + $0x34] sm:$0xf] %v2723
      %v2995 = vld [vmem:[%s2960 + $0x38] sm:$0x1]
      %v2996 = vsel %vm235, %v2724, %v2995
      %2997 = vst [vmem:[%s2960 + $0x38] sm:$0x1] %v2996
      %v2998 = vld [vmem:[%s2960 + $0x3c] sm:$0xf]
      %v2999 = vsel %vm2962, %v2731, %v2998
      %3000 = vst [vmem:[%s2960 + $0x3c] sm:$0xf] %v2999
      %3001 = vst [vmem:[%s2960 + $0x40] sm:$0xf] %v2740
      %v3002 = vld [vmem:[%s2960 + $0x44] sm:$0x1]
      %v3003 = vsel %vm235, %v2741, %v3002
      %3004 = vst [vmem:[%s2960 + $0x44] sm:$0x1] %v3003
      %v3005 = vld [vmem:[%s2960 + $0x48] sm:$0xf]
      %v3006 = vsel %vm2962, %v2748, %v3005
      %3007 = vst [vmem:[%s2960 + $0x48] sm:$0xf] %v3006
      %3008 = vst [vmem:[%s2960 + $0x4c] sm:$0xf] %v2757
      %v3009 = vld [vmem:[%s2960 + $0x50] sm:$0x1]
      %v3010 = vsel %vm235, %v2758, %v3009
      %3011 = vst [vmem:[%s2960 + $0x50] sm:$0x1] %v3010
      %v3012 = vld [vmem:[%s2960 + $0x54] sm:$0xf]
      %v3013 = vsel %vm2962, %v2765, %v3012
      %3014 = vst [vmem:[%s2960 + $0x54] sm:$0xf] %v3013
      %3015 = vst [vmem:[%s2960 + $0x58] sm:$0xf] %v2774
      %v3016 = vld [vmem:[%s2960 + $0x5c] sm:$0x1]
      %v3017 = vsel %vm235, %v2775, %v3016
      %3018 = vst [vmem:[%s2960 + $0x5c] sm:$0x1] %v3017
      %v3019 = vld [vmem:[%s2960 + $0x60] sm:$0xf]
      %v3020 = vsel %vm2962, %v2782, %v3019
      %3021 = vst [vmem:[%s2960 + $0x60] sm:$0xf] %v3020
      %3022 = vst [vmem:[%s2960 + $0x64] sm:$0xf] %v2791
      %v3023 = vld [vmem:[%s2960 + $0x68] sm:$0x1]
      %v3024 = vsel %vm235, %v2792, %v3023
      %3025 = vst [vmem:[%s2960 + $0x68] sm:$0x1] %v3024
      %v3026 = vld [vmem:[%s2960 + $0x6c] sm:$0xf]
      %v3027 = vsel %vm2962, %v2799, %v3026
      %3028 = vst [vmem:[%s2960 + $0x6c] sm:$0xf] %v3027
      %3029 = vst [vmem:[%s2960 + $0x70] sm:$0xf] %v2808
      %v3030 = vld [vmem:[%s2960 + $0x74] sm:$0x1]
      %v3031 = vsel %vm235, %v2809, %v3030
      %3032 = vst [vmem:[%s2960 + $0x74] sm:$0x1] %v3031
      %v3033 = vld [vmem:[%s2960 + $0x78] sm:$0xf]
      %v3034 = vsel %vm2962, %v2816, %v3033
      %3035 = vst [vmem:[%s2960 + $0x78] sm:$0xf] %v3034
      %3036 = vst [vmem:[%s2960 + $0x7c] sm:$0xf] %v2825
      %v3037 = vld [vmem:[%s2960 + $0x80] sm:$0x1]
      %v3038 = vsel %vm235, %v2826, %v3037
      %3039 = vst [vmem:[%s2960 + $0x80] sm:$0x1] %v3038
      %v3040 = vld [vmem:[%s2960 + $0x84] sm:$0xf]
      %v3041 = vsel %vm2962, %v2833, %v3040
      %3042 = vst [vmem:[%s2960 + $0x84] sm:$0xf] %v3041
      %3043 = vst [vmem:[%s2960 + $0x88] sm:$0xf] %v2842
      %v3044 = vld [vmem:[%s2960 + $0x8c] sm:$0x1]
      %v3045 = vsel %vm235, %v2843, %v3044
      %3046 = vst [vmem:[%s2960 + $0x8c] sm:$0x1] %v3045
      %v3047 = vld [vmem:[%s2960 + $0x90] sm:$0xf]
      %v3048 = vsel %vm2962, %v2850, %v3047
      %3049 = vst [vmem:[%s2960 + $0x90] sm:$0xf] %v3048
      %3050 = vst [vmem:[%s2960 + $0x94] sm:$0xf] %v2859
      %v3051 = vld [vmem:[%s2960 + $0x98] sm:$0x1]
      %v3052 = vsel %vm235, %v2860, %v3051
      %3053 = vst [vmem:[%s2960 + $0x98] sm:$0x1] %v3052
      %v3054 = vld [vmem:[%s2960 + $0x9c] sm:$0xf]
      %v3055 = vsel %vm2962, %v2867, %v3054
      %3056 = vst [vmem:[%s2960 + $0x9c] sm:$0xf] %v3055
      %3057 = vst [vmem:[%s2960 + $0xa0] sm:$0xf] %v2876
      %v3058 = vld [vmem:[%s2960 + $0xa4] sm:$0x1]
      %v3059 = vsel %vm235, %v2877, %v3058
      %3060 = vst [vmem:[%s2960 + $0xa4] sm:$0x1] %v3059
      %v3061 = vld [vmem:[%s2960 + $0xa8] sm:$0xf]
      %v3062 = vsel %vm2962, %v2884, %v3061
      %3063 = vst [vmem:[%s2960 + $0xa8] sm:$0xf] %v3062
      %3064 = vst [vmem:[%s2960 + $0xac] sm:$0xf] %v2893
      %v3065 = vld [vmem:[%s2960 + $0xb0] sm:$0x1]
      %v3066 = vsel %vm235, %v2894, %v3065
      %3067 = vst [vmem:[%s2960 + $0xb0] sm:$0x1] %v3066
      %v3068 = vld [vmem:[%s2960 + $0xb4] sm:$0xf]
      %v3069 = vsel %vm2962, %v2901, %v3068
      %3070 = vst [vmem:[%s2960 + $0xb4] sm:$0xf] %v3069
      %3071 = vst [vmem:[%s2960 + $0xb8] sm:$0xf] %v2910
      %v3072 = vld [vmem:[%s2960 + $0xbc] sm:$0x1]
      %v3073 = vsel %vm235, %v2911, %v3072
      %3074 = vst [vmem:[%s2960 + $0xbc] sm:$0x1] %v3073
      %v3075 = vld [vmem:[#allocation2] sm:$0xf]
      %v3076 = vld [vmem:[#allocation2 + $0x4] sm:$0xf]
      %v3077 = vld [vmem:[#allocation2 + $0xc] sm:$0xf]
      %v3078 = vld [vmem:[#allocation2 + $0x10] sm:$0xf]
      %v3079 = vld [vmem:[#allocation2 + $0x18] sm:$0xf]
      %v3080 = vld [vmem:[#allocation2 + $0x1c] sm:$0xf]
      %v3081 = vld [vmem:[#allocation2 + $0x24] sm:$0xf]
      %v3082 = vld [vmem:[#allocation2 + $0x28] sm:$0xf]
      %v3083 = vld [vmem:[#allocation2 + $0x30] sm:$0xf]
      %v3084 = vld [vmem:[#allocation2 + $0x34] sm:$0xf]
      %v3085 = vld [vmem:[#allocation2 + $0x3c] sm:$0xf]
      %v3086 = vld [vmem:[#allocation2 + $0x40] sm:$0xf]
      %v3087 = vld [vmem:[#allocation2 + $0x48] sm:$0xf]
      %v3088 = vld [vmem:[#allocation2 + $0x4c] sm:$0xf]
      %v3089 = vld [vmem:[#allocation2 + $0x54] sm:$0xf]
      %v3090 = vld [vmem:[#allocation2 + $0x58] sm:$0xf]
      %v3091 = vld [vmem:[#allocation2 + $0x60] sm:$0xf]
      %v3092 = vld [vmem:[#allocation2 + $0x64] sm:$0xf]
      %v3093 = vld [vmem:[#allocation2 + $0x6c] sm:$0xf]
      %v3094 = vld [vmem:[#allocation2 + $0x70] sm:$0xf]
      %v3095 = vld [vmem:[#allocation2 + $0x78] sm:$0xf]
      %v3096 = vld [vmem:[#allocation2 + $0x7c] sm:$0xf]
      %v3097 = vld [vmem:[#allocation2 + $0x84] sm:$0xf]
      %v3098 = vld [vmem:[#allocation2 + $0x88] sm:$0xf]
      %v3099 = vld [vmem:[#allocation2 + $0x90] sm:$0xf]
      %v3100 = vld [vmem:[#allocation2 + $0x94] sm:$0xf]
      %v3101 = vld [vmem:[#allocation2 + $0x9c] sm:$0xf]
      %v3102 = vld [vmem:[#allocation2 + $0xa0] sm:$0xf]
      %v3103 = vld [vmem:[#allocation2 + $0xa8] sm:$0xf]
      %v3104 = vld [vmem:[#allocation2 + $0xac] sm:$0xf]
      %v3105 = vld [vmem:[#allocation2 + $0xb4] sm:$0xf]
      %v3106 = vld [vmem:[#allocation2 + $0xb8] sm:$0xf]
      %v3139 = vunpack.c.l.b16 %v3075
      %v3140 = vunpack.c.l.b16 %v3076
      %v3141 = vunpack.c.l.b16 %v3077
      %v3142 = vunpack.c.l.b16 %v3078
      %v3143 = vunpack.c.l.b16 %v3079
      %v3144 = vunpack.c.l.b16 %v3080
      %v3145 = vunpack.c.l.b16 %v3081
      %v3146 = vunpack.c.l.b16 %v3082
      %v3147 = vunpack.c.l.b16 %v3083
      %v3148 = vunpack.c.l.b16 %v3084
      %v3149 = vunpack.c.l.b16 %v3085
      %v3150 = vunpack.c.l.b16 %v3086
      %v3151 = vunpack.c.l.b16 %v3087
      %v3152 = vunpack.c.l.b16 %v3088
      %v3153 = vunpack.c.l.b16 %v3089
      %v3154 = vunpack.c.l.b16 %v3090
      %v3155 = vunpack.c.l.b16 %v3091
      %v3156 = vunpack.c.l.b16 %v3092
      %v3157 = vunpack.c.l.b16 %v3093
      %v3158 = vunpack.c.l.b16 %v3094
      %v3159 = vunpack.c.l.b16 %v3095
      %v3160 = vunpack.c.l.b16 %v3096
      %v3161 = vunpack.c.l.b16 %v3097
      %v3162 = vunpack.c.l.b16 %v3098
      %v3163 = vunpack.c.l.b16 %v3099
      %v3164 = vunpack.c.l.b16 %v3100
      %v3165 = vunpack.c.l.b16 %v3101
      %v3166 = vunpack.c.l.b16 %v3102
      %v3167 = vunpack.c.l.b16 %v3103
      %v3168 = vunpack.c.l.b16 %v3104
      %v3169 = vunpack.c.l.b16 %v3105
      %v3170 = vunpack.c.l.b16 %v3106
      %v3171 = vpack.c.b16 %v3140, %v3139
      %v3172 = vpack.c.b16 %v3142, %v3141
      %v3173 = vpack.c.b16 %v3144, %v3143
      %v3174 = vpack.c.b16 %v3146, %v3145
      %v3175 = vpack.c.b16 %v3148, %v3147
      %v3176 = vpack.c.b16 %v3150, %v3149
      %v3177 = vpack.c.b16 %v3152, %v3151
      %v3178 = vpack.c.b16 %v3154, %v3153
      %v3179 = vpack.c.b16 %v3156, %v3155
      %v3180 = vpack.c.b16 %v3158, %v3157
      %v3181 = vpack.c.b16 %v3160, %v3159
      %v3182 = vpack.c.b16 %v3162, %v3161
      %v3183 = vpack.c.b16 %v3164, %v3163
      %v3184 = vpack.c.b16 %v3166, %v3165
      %v3185 = vpack.c.b16 %v3168, %v3167
      %v3186 = vpack.c.b16 %v3170, %v3169
      %3203 = vst [vmem:[#allocation4] sm:$0xff] %v3171
      %3204 = vst [vmem:[#allocation4 + $0x48] sm:$0xff] %v3172
      %3205 = vst [vmem:[#allocation4 + $0x90] sm:$0xff] %v3173
      %3206 = vst [vmem:[#allocation4 + $0xd8] sm:$0xff] %v3174
      %3207 = vst [vmem:[#allocation4 + $0x120] sm:$0xff] %v3175
      %3208 = vst [vmem:[#allocation4 + $0x168] sm:$0xff] %v3176
      %3209 = vst [vmem:[#allocation4 + $0x1b0] sm:$0xff] %v3177
      %3210 = vst [vmem:[#allocation4 + $0x1f8] sm:$0xff] %v3178
      %3211 = vst [vmem:[#allocation4 + $0x240] sm:$0xff] %v3179
      %3212 = vst [vmem:[#allocation4 + $0x288] sm:$0xff] %v3180
      %3213 = vst [vmem:[#allocation4 + $0x2d0] sm:$0xff] %v3181
      %3214 = vst [vmem:[#allocation4 + $0x318] sm:$0xff] %v3182
      %3215 = vst [vmem:[#allocation4 + $0x360] sm:$0xff] %v3183
      %3216 = vst [vmem:[#allocation4 + $0x3a8] sm:$0xff] %v3184
      %3217 = vst [vmem:[#allocation4 + $0x3f0] sm:$0xff] %v3185
      %3218 = vst [vmem:[#allocation4 + $0x438] sm:$0xff] %v3186
      %v3219 = vld [vmem:[#allocation2] sm:$0xf]
      %v3220 = vld [vmem:[#allocation2 + $0x4] sm:$0xf]
      %v3221 = vld [vmem:[#allocation2 + $0x8] sm:$0x1]
      %v3222 = vld [vmem:[#allocation2 + $0xc] sm:$0xf]
      %v3223 = vld [vmem:[#allocation2 + $0x10] sm:$0xf]
      %v3224 = vld [vmem:[#allocation2 + $0x14] sm:$0x1]
      %v3225 = vld [vmem:[#allocation2 + $0x18] sm:$0xf]
      %v3226 = vld [vmem:[#allocation2 + $0x1c] sm:$0xf]
      %v3227 = vld [vmem:[#allocation2 + $0x20] sm:$0x1]
      %v3228 = vld [vmem:[#allocation2 + $0x24] sm:$0xf]
      %v3229 = vld [vmem:[#allocation2 + $0x28] sm:$0xf]
      %v3230 = vld [vmem:[#allocation2 + $0x2c] sm:$0x1]
      %v3231 = vld [vmem:[#allocation2 + $0x30] sm:$0xf]
      %v3232 = vld [vmem:[#allocation2 + $0x34] sm:$0xf]
      %v3233 = vld [vmem:[#allocation2 + $0x38] sm:$0x1]
      %v3234 = vld [vmem:[#allocation2 + $0x3c] sm:$0xf]
      %v3235 = vld [vmem:[#allocation2 + $0x40] sm:$0xf]
      %v3236 = vld [vmem:[#allocation2 + $0x44] sm:$0x1]
      %v3237 = vld [vmem:[#allocation2 + $0x48] sm:$0xf]
      %v3238 = vld [vmem:[#allocation2 + $0x4c] sm:$0xf]
      %v3239 = vld [vmem:[#allocation2 + $0x50] sm:$0x1]
      %v3240 = vld [vmem:[#allocation2 + $0x54] sm:$0xf]
      %v3241 = vld [vmem:[#allocation2 + $0x58] sm:$0xf]
      %v3242 = vld [vmem:[#allocation2 + $0x5c] sm:$0x1]
      %v3243 = vld [vmem:[#allocation2 + $0x60] sm:$0xf]
      %v3244 = vld [vmem:[#allocation2 + $0x64] sm:$0xf]
      %v3245 = vld [vmem:[#allocation2 + $0x68] sm:$0x1]
      %v3246 = vld [vmem:[#allocation2 + $0x6c] sm:$0xf]
      %v3247 = vld [vmem:[#allocation2 + $0x70] sm:$0xf]
      %v3248 = vld [vmem:[#allocation2 + $0x74] sm:$0x1]
      %v3249 = vld [vmem:[#allocation2 + $0x78] sm:$0xf]
      %v3250 = vld [vmem:[#allocation2 + $0x7c] sm:$0xf]
      %v3251 = vld [vmem:[#allocation2 + $0x80] sm:$0x1]
      %v3252 = vld [vmem:[#allocation2 + $0x84] sm:$0xf]
      %v3253 = vld [vmem:[#allocation2 + $0x88] sm:$0xf]
      %v3254 = vld [vmem:[#allocation2 + $0x8c] sm:$0x1]
      %v3255 = vld [vmem:[#allocation2 + $0x90] sm:$0xf]
      %v3256 = vld [vmem:[#allocation2 + $0x94] sm:$0xf]
      %v3257 = vld [vmem:[#allocation2 + $0x98] sm:$0x1]
      %v3258 = vld [vmem:[#allocation2 + $0x9c] sm:$0xf]
      %v3259 = vld [vmem:[#allocation2 + $0xa0] sm:$0xf]
      %v3260 = vld [vmem:[#allocation2 + $0xa4] sm:$0x1]
      %v3261 = vld [vmem:[#allocation2 + $0xa8] sm:$0xf]
      %v3262 = vld [vmem:[#allocation2 + $0xac] sm:$0xf]
      %v3263 = vld [vmem:[#allocation2 + $0xb0] sm:$0x1]
      %v3264 = vld [vmem:[#allocation2 + $0xb4] sm:$0xf]
      %v3265 = vld [vmem:[#allocation2 + $0xb8] sm:$0xf]
      %v3266 = vld [vmem:[#allocation2 + $0xbc] sm:$0x1]
      %vm3267 = vsmask.f32 3328
      %vm3268 = vsmask.f32 7440
      %vm3269 = vmor %vm3267, %vm3268
      %v3271 = vshrl.u32 %v3219, 16
      %v3273 = vrot.slane %v3271, 4
      %v3274 = vshll.u32 %v3219, 16
      %v3276 = vrot.slane %v3274, 5
      %v3277 = vor.u32 %v3273, %v3276
      %v3278 = vrot.slane %v3277, 4
      %v3280 = vshll.u32 %v3220, 16
      %v3282 = vrot.slane %v3280, 5
      %v3283 = vsel %vm3269, %v3278, %v3282
      %v3284 = vshrl.u32 %v3220, 16
      %v3286 = vrot.slane %v3284, 4
      %v3287 = vor.u32 %v3286, %v3282
      %v3288 = vrot.slane %v3287, 4
      %v3290 = vshll.u32 %v3221, 16
      %v3292 = vrot.slane %v3290, 5
      %v3293 = vsel %vm3269, %v3288, %v3292
      %v3295 = vshrl.u32 %v3222, 16
      %v3297 = vrot.slane %v3295, 4
      %v3298 = vshll.u32 %v3222, 16
      %v3300 = vrot.slane %v3298, 5
      %v3301 = vor.u32 %v3297, %v3300
      %v3302 = vrot.slane %v3301, 4
      %v3304 = vshll.u32 %v3223, 16
      %v3306 = vrot.slane %v3304, 5
      %v3307 = vsel %vm3269, %v3302, %v3306
      %v3308 = vshrl.u32 %v3223, 16
      %v3310 = vrot.slane %v3308, 4
      %v3311 = vor.u32 %v3310, %v3306
      %v3312 = vrot.slane %v3311, 4
      %v3314 = vshll.u32 %v3224, 16
      %v3316 = vrot.slane %v3314, 5
      %v3317 = vsel %vm3269, %v3312, %v3316
      %v3319 = vshrl.u32 %v3225, 16
      %v3321 = vrot.slane %v3319, 4
      %v3322 = vshll.u32 %v3225, 16
      %v3324 = vrot.slane %v3322, 5
      %v3325 = vor.u32 %v3321, %v3324
      %v3326 = vrot.slane %v3325, 4
      %v3328 = vshll.u32 %v3226, 16
      %v3330 = vrot.slane %v3328, 5
      %v3331 = vsel %vm3269, %v3326, %v3330
      %v3332 = vshrl.u32 %v3226, 16
      %v3334 = vrot.slane %v3332, 4
      %v3335 = vor.u32 %v3334, %v3330
      %v3336 = vrot.slane %v3335, 4
      %v3338 = vshll.u32 %v3227, 16
      %v3340 = vrot.slane %v3338, 5
      %v3341 = vsel %vm3269, %v3336, %v3340
      %v3343 = vshrl.u32 %v3228, 16
      %v3345 = vrot.slane %v3343, 4
      %v3346 = vshll.u32 %v3228, 16
      %v3348 = vrot.slane %v3346, 5
      %v3349 = vor.u32 %v3345, %v3348
      %v3350 = vrot.slane %v3349, 4
      %v3352 = vshll.u32 %v3229, 16
      %v3354 = vrot.slane %v3352, 5
      %v3355 = vsel %vm3269, %v3350, %v3354
      %v3356 = vshrl.u32 %v3229, 16
      %v3358 = vrot.slane %v3356, 4
      %v3359 = vor.u32 %v3358, %v3354
      %v3360 = vrot.slane %v3359, 4
      %v3362 = vshll.u32 %v3230, 16
      %v3364 = vrot.slane %v3362, 5
      %v3365 = vsel %vm3269, %v3360, %v3364
      %v3367 = vshrl.u32 %v3231, 16
      %v3369 = vrot.slane %v3367, 4
      %v3370 = vshll.u32 %v3231, 16
      %v3372 = vrot.slane %v3370, 5
      %v3373 = vor.u32 %v3369, %v3372
      %v3374 = vrot.slane %v3373, 4
      %v3376 = vshll.u32 %v3232, 16
      %v3378 = vrot.slane %v3376, 5
      %v3379 = vsel %vm3269, %v3374, %v3378
      %v3380 = vshrl.u32 %v3232, 16
      %v3382 = vrot.slane %v3380, 4
      %v3383 = vor.u32 %v3382, %v3378
      %v3384 = vrot.slane %v3383, 4
      %v3386 = vshll.u32 %v3233, 16
      %v3388 = vrot.slane %v3386, 5
      %v3389 = vsel %vm3269, %v3384, %v3388
      %v3391 = vshrl.u32 %v3234, 16
      %v3393 = vrot.slane %v3391, 4
      %v3394 = vshll.u32 %v3234, 16
      %v3396 = vrot.slane %v3394, 5
      %v3397 = vor.u32 %v3393, %v3396
      %v3398 = vrot.slane %v3397, 4
      %v3400 = vshll.u32 %v3235, 16
      %v3402 = vrot.slane %v3400, 5
      %v3403 = vsel %vm3269, %v3398, %v3402
      %v3404 = vshrl.u32 %v3235, 16
      %v3406 = vrot.slane %v3404, 4
      %v3407 = vor.u32 %v3406, %v3402
      %v3408 = vrot.slane %v3407, 4
      %v3410 = vshll.u32 %v3236, 16
      %v3412 = vrot.slane %v3410, 5
      %v3413 = vsel %vm3269, %v3408, %v3412
      %v3415 = vshrl.u32 %v3237, 16
      %v3417 = vrot.slane %v3415, 4
      %v3418 = vshll.u32 %v3237, 16
      %v3420 = vrot.slane %v3418, 5
      %v3421 = vor.u32 %v3417, %v3420
      %v3422 = vrot.slane %v3421, 4
      %v3424 = vshll.u32 %v3238, 16
      %v3426 = vrot.slane %v3424, 5
      %v3427 = vsel %vm3269, %v3422, %v3426
      %v3428 = vshrl.u32 %v3238, 16
      %v3430 = vrot.slane %v3428, 4
      %v3431 = vor.u32 %v3430, %v3426
      %v3432 = vrot.slane %v3431, 4
      %v3434 = vshll.u32 %v3239, 16
      %v3436 = vrot.slane %v3434, 5
      %v3437 = vsel %vm3269, %v3432, %v3436
      %v3439 = vshrl.u32 %v3240, 16
      %v3441 = vrot.slane %v3439, 4
      %v3442 = vshll.u32 %v3240, 16
      %v3444 = vrot.slane %v3442, 5
      %v3445 = vor.u32 %v3441, %v3444
      %v3446 = vrot.slane %v3445, 4
      %v3448 = vshll.u32 %v3241, 16
      %v3450 = vrot.slane %v3448, 5
      %v3451 = vsel %vm3269, %v3446, %v3450
      %v3452 = vshrl.u32 %v3241, 16
      %v3454 = vrot.slane %v3452, 4
      %v3455 = vor.u32 %v3454, %v3450
      %v3456 = vrot.slane %v3455, 4
      %v3458 = vshll.u32 %v3242, 16
      %v3460 = vrot.slane %v3458, 5
      %v3461 = vsel %vm3269, %v3456, %v3460
      %v3463 = vshrl.u32 %v3243, 16
      %v3465 = vrot.slane %v3463, 4
      %v3466 = vshll.u32 %v3243, 16
      %v3468 = vrot.slane %v3466, 5
      %v3469 = vor.u32 %v3465, %v3468
      %v3470 = vrot.slane %v3469, 4
      %v3472 = vshll.u32 %v3244, 16
      %v3474 = vrot.slane %v3472, 5
      %v3475 = vsel %vm3269, %v3470, %v3474
      %v3476 = vshrl.u32 %v3244, 16
      %v3478 = vrot.slane %v3476, 4
      %v3479 = vor.u32 %v3478, %v3474
      %v3480 = vrot.slane %v3479, 4
      %v3482 = vshll.u32 %v3245, 16
      %v3484 = vrot.slane %v3482, 5
      %v3485 = vsel %vm3269, %v3480, %v3484
      %v3487 = vshrl.u32 %v3246, 16
      %v3489 = vrot.slane %v3487, 4
      %v3490 = vshll.u32 %v3246, 16
      %v3492 = vrot.slane %v3490, 5
      %v3493 = vor.u32 %v3489, %v3492
      %v3494 = vrot.slane %v3493, 4
      %v3496 = vshll.u32 %v3247, 16
      %v3498 = vrot.slane %v3496, 5
      %v3499 = vsel %vm3269, %v3494, %v3498
      %v3500 = vshrl.u32 %v3247, 16
      %v3502 = vrot.slane %v3500, 4
      %v3503 = vor.u32 %v3502, %v3498
      %v3504 = vrot.slane %v3503, 4
      %v3506 = vshll.u32 %v3248, 16
      %v3508 = vrot.slane %v3506, 5
      %v3509 = vsel %vm3269, %v3504, %v3508
      %v3511 = vshrl.u32 %v3249, 16
      %v3513 = vrot.slane %v3511, 4
      %v3514 = vshll.u32 %v3249, 16
      %v3516 = vrot.slane %v3514, 5
      %v3517 = vor.u32 %v3513, %v3516
      %v3518 = vrot.slane %v3517, 4
      %v3520 = vshll.u32 %v3250, 16
      %v3522 = vrot.slane %v3520, 5
      %v3523 = vsel %vm3269, %v3518, %v3522
      %v3524 = vshrl.u32 %v3250, 16
      %v3526 = vrot.slane %v3524, 4
      %v3527 = vor.u32 %v3526, %v3522
      %v3528 = vrot.slane %v3527, 4
      %v3530 = vshll.u32 %v3251, 16
      %v3532 = vrot.slane %v3530, 5
      %v3533 = vsel %vm3269, %v3528, %v3532
      %v3535 = vshrl.u32 %v3252, 16
      %v3537 = vrot.slane %v3535, 4
      %v3538 = vshll.u32 %v3252, 16
      %v3540 = vrot.slane %v3538, 5
      %v3541 = vor.u32 %v3537, %v3540
      %v3542 = vrot.slane %v3541, 4
      %v3544 = vshll.u32 %v3253, 16
      %v3546 = vrot.slane %v3544, 5
      %v3547 = vsel %vm3269, %v3542, %v3546
      %v3548 = vshrl.u32 %v3253, 16
      %v3550 = vrot.slane %v3548, 4
      %v3551 = vor.u32 %v3550, %v3546
      %v3552 = vrot.slane %v3551, 4
      %v3554 = vshll.u32 %v3254, 16
      %v3556 = vrot.slane %v3554, 5
      %v3557 = vsel %vm3269, %v3552, %v3556
      %v3559 = vshrl.u32 %v3255, 16
      %v3561 = vrot.slane %v3559, 4
      %v3562 = vshll.u32 %v3255, 16
      %v3564 = vrot.slane %v3562, 5
      %v3565 = vor.u32 %v3561, %v3564
      %v3566 = vrot.slane %v3565, 4
      %v3568 = vshll.u32 %v3256, 16
      %v3570 = vrot.slane %v3568, 5
      %v3571 = vsel %vm3269, %v3566, %v3570
      %v3572 = vshrl.u32 %v3256, 16
      %v3574 = vrot.slane %v3572, 4
      %v3575 = vor.u32 %v3574, %v3570
      %v3576 = vrot.slane %v3575, 4
      %v3578 = vshll.u32 %v3257, 16
      %v3580 = vrot.slane %v3578, 5
      %v3581 = vsel %vm3269, %v3576, %v3580
      %v3583 = vshrl.u32 %v3258, 16
      %v3585 = vrot.slane %v3583, 4
      %v3586 = vshll.u32 %v3258, 16
      %v3588 = vrot.slane %v3586, 5
      %v3589 = vor.u32 %v3585, %v3588
      %v3590 = vrot.slane %v3589, 4
      %v3592 = vshll.u32 %v3259, 16
      %v3594 = vrot.slane %v3592, 5
      %v3595 = vsel %vm3269, %v3590, %v3594
      %v3596 = vshrl.u32 %v3259, 16
      %v3598 = vrot.slane %v3596, 4
      %v3599 = vor.u32 %v3598, %v3594
      %v3600 = vrot.slane %v3599, 4
      %v3602 = vshll.u32 %v3260, 16
      %v3604 = vrot.slane %v3602, 5
      %v3605 = vsel %vm3269, %v3600, %v3604
      %v3607 = vshrl.u32 %v3261, 16
      %v3609 = vrot.slane %v3607, 4
      %v3610 = vshll.u32 %v3261, 16
      %v3612 = vrot.slane %v3610, 5
      %v3613 = vor.u32 %v3609, %v3612
      %v3614 = vrot.slane %v3613, 4
      %v3616 = vshll.u32 %v3262, 16
      %v3618 = vrot.slane %v3616, 5
      %v3619 = vsel %vm3269, %v3614, %v3618
      %v3620 = vshrl.u32 %v3262, 16
      %v3622 = vrot.slane %v3620, 4
      %v3623 = vor.u32 %v3622, %v3618
      %v3624 = vrot.slane %v3623, 4
      %v3626 = vshll.u32 %v3263, 16
      %v3628 = vrot.slane %v3626, 5
      %v3629 = vsel %vm3269, %v3624, %v3628
      %v3631 = vshrl.u32 %v3264, 16
      %v3633 = vrot.slane %v3631, 4
      %v3634 = vshll.u32 %v3264, 16
      %v3636 = vrot.slane %v3634, 5
      %v3637 = vor.u32 %v3633, %v3636
      %v3638 = vrot.slane %v3637, 4
      %v3640 = vshll.u32 %v3265, 16
      %v3642 = vrot.slane %v3640, 5
      %v3643 = vsel %vm3269, %v3638, %v3642
      %v3644 = vshrl.u32 %v3265, 16
      %v3646 = vrot.slane %v3644, 4
      %v3647 = vor.u32 %v3646, %v3642
      %v3648 = vrot.slane %v3647, 4
      %v3650 = vshll.u32 %v3266, 16
      %v3652 = vrot.slane %v3650, 5
      %v3653 = vsel %vm3269, %v3648, %v3652
      %v3654 = vunpack.c.l.b16 %v3283
      %v3655 = vunpack.c.l.b16 %v3293
      %v3656 = vunpack.c.l.b16 %v3307
      %v3657 = vunpack.c.l.b16 %v3317
      %v3658 = vunpack.c.l.b16 %v3331
      %v3659 = vunpack.c.l.b16 %v3341
      %v3660 = vunpack.c.l.b16 %v3355
      %v3661 = vunpack.c.l.b16 %v3365
      %v3662 = vunpack.c.l.b16 %v3379
      %v3663 = vunpack.c.l.b16 %v3389
      %v3664 = vunpack.c.l.b16 %v3403
      %v3665 = vunpack.c.l.b16 %v3413
      %v3666 = vunpack.c.l.b16 %v3427
      %v3667 = vunpack.c.l.b16 %v3437
      %v3668 = vunpack.c.l.b16 %v3451
      %v3669 = vunpack.c.l.b16 %v3461
      %v3670 = vunpack.c.l.b16 %v3475
      %v3671 = vunpack.c.l.b16 %v3485
      %v3672 = vunpack.c.l.b16 %v3499
      %v3673 = vunpack.c.l.b16 %v3509
      %v3674 = vunpack.c.l.b16 %v3523
      %v3675 = vunpack.c.l.b16 %v3533
      %v3676 = vunpack.c.l.b16 %v3547
      %v3677 = vunpack.c.l.b16 %v3557
      %v3678 = vunpack.c.l.b16 %v3571
      %v3679 = vunpack.c.l.b16 %v3581
      %v3680 = vunpack.c.l.b16 %v3595
      %v3681 = vunpack.c.l.b16 %v3605
      %v3682 = vunpack.c.l.b16 %v3619
      %v3683 = vunpack.c.l.b16 %v3629
      %v3684 = vunpack.c.l.b16 %v3643
      %v3685 = vunpack.c.l.b16 %v3653
      %v3686 = vpack.c.b16 %v3655, %v3654
      %v3687 = vpack.c.b16 %v3657, %v3656
      %v3688 = vpack.c.b16 %v3659, %v3658
      %v3689 = vpack.c.b16 %v3661, %v3660
      %v3690 = vpack.c.b16 %v3663, %v3662
      %v3691 = vpack.c.b16 %v3665, %v3664
      %v3692 = vpack.c.b16 %v3667, %v3666
      %v3693 = vpack.c.b16 %v3669, %v3668
      %v3694 = vpack.c.b16 %v3671, %v3670
      %v3695 = vpack.c.b16 %v3673, %v3672
      %v3696 = vpack.c.b16 %v3675, %v3674
      %v3697 = vpack.c.b16 %v3677, %v3676
      %v3698 = vpack.c.b16 %v3679, %v3678
      %v3699 = vpack.c.b16 %v3681, %v3680
      %v3700 = vpack.c.b16 %v3683, %v3682
      %v3701 = vpack.c.b16 %v3685, %v3684
      %3718 = vst [vmem:[#allocation4 + $0x8] sm:$0xff] %v3686
      %3719 = vst [vmem:[#allocation4 + $0x50] sm:$0xff] %v3687
      %3720 = vst [vmem:[#allocation4 + $0x98] sm:$0xff] %v3688
      %3721 = vst [vmem:[#allocation4 + $0xe0] sm:$0xff] %v3689
      %3722 = vst [vmem:[#allocation4 + $0x128] sm:$0xff] %v3690
      %3723 = vst [vmem:[#allocation4 + $0x170] sm:$0xff] %v3691
      %3724 = vst [vmem:[#allocation4 + $0x1b8] sm:$0xff] %v3692
      %3725 = vst [vmem:[#allocation4 + $0x200] sm:$0xff] %v3693
      %3726 = vst [vmem:[#allocation4 + $0x248] sm:$0xff] %v3694
      %3727 = vst [vmem:[#allocation4 + $0x290] sm:$0xff] %v3695
      %3728 = vst [vmem:[#allocation4 + $0x2d8] sm:$0xff] %v3696
      %3729 = vst [vmem:[#allocation4 + $0x320] sm:$0xff] %v3697
      %3730 = vst [vmem:[#allocation4 + $0x368] sm:$0xff] %v3698
      %3731 = vst [vmem:[#allocation4 + $0x3b0] sm:$0xff] %v3699
      %3732 = vst [vmem:[#allocation4 + $0x3f8] sm:$0xff] %v3700
      %3733 = vst [vmem:[#allocation4 + $0x440] sm:$0xff] %v3701
      %v3734 = vld [vmem:[#allocation2] sm:$0xe]
      %v3735 = vld [vmem:[#allocation2 + $0x4] sm:$0xf]
      %v3736 = vld [vmem:[#allocation2 + $0x8] sm:$0x1]
      %v3737 = vld [vmem:[#allocation2 + $0xc] sm:$0xe]
      %v3738 = vld [vmem:[#allocation2 + $0x10] sm:$0xf]
      %v3739 = vld [vmem:[#allocation2 + $0x14] sm:$0x1]
      %v3740 = vld [vmem:[#allocation2 + $0x18] sm:$0xe]
      %v3741 = vld [vmem:[#allocation2 + $0x1c] sm:$0xf]
      %v3742 = vld [vmem:[#allocation2 + $0x20] sm:$0x1]
      %v3743 = vld [vmem:[#allocation2 + $0x24] sm:$0xe]
      %v3744 = vld [vmem:[#allocation2 + $0x28] sm:$0xf]
      %v3745 = vld [vmem:[#allocation2 + $0x2c] sm:$0x1]
      %v3746 = vld [vmem:[#allocation2 + $0x30] sm:$0xe]
      %v3747 = vld [vmem:[#allocation2 + $0x34] sm:$0xf]
      %v3748 = vld [vmem:[#allocation2 + $0x38] sm:$0x1]
      %v3749 = vld [vmem:[#allocation2 + $0x3c] sm:$0xe]
      %v3750 = vld [vmem:[#allocation2 + $0x40] sm:$0xf]
      %v3751 = vld [vmem:[#allocation2 + $0x44] sm:$0x1]
      %v3752 = vld [vmem:[#allocation2 + $0x48] sm:$0xe]
      %v3753 = vld [vmem:[#allocation2 + $0x4c] sm:$0xf]
      %v3754 = vld [vmem:[#allocation2 + $0x50] sm:$0x1]
      %v3755 = vld [vmem:[#allocation2 + $0x54] sm:$0xe]
      %v3756 = vld [vmem:[#allocation2 + $0x58] sm:$0xf]
      %v3757 = vld [vmem:[#allocation2 + $0x5c] sm:$0x1]
      %v3758 = vld [vmem:[#allocation2 + $0x60] sm:$0xe]
      %v3759 = vld [vmem:[#allocation2 + $0x64] sm:$0xf]
      %v3760 = vld [vmem:[#allocation2 + $0x68] sm:$0x1]
      %v3761 = vld [vmem:[#allocation2 + $0x6c] sm:$0xe]
      %v3762 = vld [vmem:[#allocation2 + $0x70] sm:$0xf]
      %v3763 = vld [vmem:[#allocation2 + $0x74] sm:$0x1]
      %v3764 = vld [vmem:[#allocation2 + $0x78] sm:$0xe]
      %v3765 = vld [vmem:[#allocation2 + $0x7c] sm:$0xf]
      %v3766 = vld [vmem:[#allocation2 + $0x80] sm:$0x1]
      %v3767 = vld [vmem:[#allocation2 + $0x84] sm:$0xe]
      %v3768 = vld [vmem:[#allocation2 + $0x88] sm:$0xf]
      %v3769 = vld [vmem:[#allocation2 + $0x8c] sm:$0x1]
      %v3770 = vld [vmem:[#allocation2 + $0x90] sm:$0xe]
      %v3771 = vld [vmem:[#allocation2 + $0x94] sm:$0xf]
      %v3772 = vld [vmem:[#allocation2 + $0x98] sm:$0x1]
      %v3773 = vld [vmem:[#allocation2 + $0x9c] sm:$0xe]
      %v3774 = vld [vmem:[#allocation2 + $0xa0] sm:$0xf]
      %v3775 = vld [vmem:[#allocation2 + $0xa4] sm:$0x1]
      %v3776 = vld [vmem:[#allocation2 + $0xa8] sm:$0xe]
      %v3777 = vld [vmem:[#allocation2 + $0xac] sm:$0xf]
      %v3778 = vld [vmem:[#allocation2 + $0xb0] sm:$0x1]
      %v3779 = vld [vmem:[#allocation2 + $0xb4] sm:$0xe]
      %v3780 = vld [vmem:[#allocation2 + $0xb8] sm:$0xf]
      %v3781 = vld [vmem:[#allocation2 + $0xbc] sm:$0x1]
      %vm3830 = vcmask 1042432
      %vm3831 = vcmask 1046532
      %vm3832 = vmor %vm3830, %vm3831
      %v3833 = vrot.slane %v3734, 5
      %v3834 = vrot.slane %v3833, 4
      %v3835 = vrot.slane %v3735, 5
      %v3836 = vsel %vm3832, %v3834, %v3835
      %v3837 = vrot.slane %v3835, 4
      %v3838 = vrot.slane %v3736, 5
      %v3839 = vsel %vm3832, %v3837, %v3838
      %v3840 = vrot.slane %v3737, 5
      %v3841 = vrot.slane %v3840, 4
      %v3842 = vrot.slane %v3738, 5
      %v3843 = vsel %vm3832, %v3841, %v3842
      %v3844 = vrot.slane %v3842, 4
      %v3845 = vrot.slane %v3739, 5
      %v3846 = vsel %vm3832, %v3844, %v3845
      %v3847 = vrot.slane %v3740, 5
      %v3848 = vrot.slane %v3847, 4
      %v3849 = vrot.slane %v3741, 5
      %v3850 = vsel %vm3832, %v3848, %v3849
      %v3851 = vrot.slane %v3849, 4
      %v3852 = vrot.slane %v3742, 5
      %v3853 = vsel %vm3832, %v3851, %v3852
      %v3854 = vrot.slane %v3743, 5
      %v3855 = vrot.slane %v3854, 4
      %v3856 = vrot.slane %v3744, 5
      %v3857 = vsel %vm3832, %v3855, %v3856
      %v3858 = vrot.slane %v3856, 4
      %v3859 = vrot.slane %v3745, 5
      %v3860 = vsel %vm3832, %v3858, %v3859
      %v3861 = vrot.slane %v3746, 5
      %v3862 = vrot.slane %v3861, 4
      %v3863 = vrot.slane %v3747, 5
      %v3864 = vsel %vm3832, %v3862, %v3863
      %v3865 = vrot.slane %v3863, 4
      %v3866 = vrot.slane %v3748, 5
      %v3867 = vsel %vm3832, %v3865, %v3866
      %v3868 = vrot.slane %v3749, 5
      %v3869 = vrot.slane %v3868, 4
      %v3870 = vrot.slane %v3750, 5
      %v3871 = vsel %vm3832, %v3869, %v3870
      %v3872 = vrot.slane %v3870, 4
      %v3873 = vrot.slane %v3751, 5
      %v3874 = vsel %vm3832, %v3872, %v3873
      %v3875 = vrot.slane %v3752, 5
      %v3876 = vrot.slane %v3875, 4
      %v3877 = vrot.slane %v3753, 5
      %v3878 = vsel %vm3832, %v3876, %v3877
      %v3879 = vrot.slane %v3877, 4
      %v3880 = vrot.slane %v3754, 5
      %v3881 = vsel %vm3832, %v3879, %v3880
      %v3882 = vrot.slane %v3755, 5
      %v3883 = vrot.slane %v3882, 4
      %v3884 = vrot.slane %v3756, 5
      %v3885 = vsel %vm3832, %v3883, %v3884
      %v3886 = vrot.slane %v3884, 4
      %v3887 = vrot.slane %v3757, 5
      %v3888 = vsel %vm3832, %v3886, %v3887
      %v3889 = vrot.slane %v3758, 5
      %v3890 = vrot.slane %v3889, 4
      %v3891 = vrot.slane %v3759, 5
      %v3892 = vsel %vm3832, %v3890, %v3891
      %v3893 = vrot.slane %v3891, 4
      %v3894 = vrot.slane %v3760, 5
      %v3895 = vsel %vm3832, %v3893, %v3894
      %v3896 = vrot.slane %v3761, 5
      %v3897 = vrot.slane %v3896, 4
      %v3898 = vrot.slane %v3762, 5
      %v3899 = vsel %vm3832, %v3897, %v3898
      %v3900 = vrot.slane %v3898, 4
      %v3901 = vrot.slane %v3763, 5
      %v3902 = vsel %vm3832, %v3900, %v3901
      %v3903 = vrot.slane %v3764, 5
      %v3904 = vrot.slane %v3903, 4
      %v3905 = vrot.slane %v3765, 5
      %v3906 = vsel %vm3832, %v3904, %v3905
      %v3907 = vrot.slane %v3905, 4
      %v3908 = vrot.slane %v3766, 5
      %v3909 = vsel %vm3832, %v3907, %v3908
      %v3910 = vrot.slane %v3767, 5
      %v3911 = vrot.slane %v3910, 4
      %v3912 = vrot.slane %v3768, 5
      %v3913 = vsel %vm3832, %v3911, %v3912
      %v3914 = vrot.slane %v3912, 4
      %v3915 = vrot.slane %v3769, 5
      %v3916 = vsel %vm3832, %v3914, %v3915
      %v3917 = vrot.slane %v3770, 5
      %v3918 = vrot.slane %v3917, 4
      %v3919 = vrot.slane %v3771, 5
      %v3920 = vsel %vm3832, %v3918, %v3919
      %v3921 = vrot.slane %v3919, 4
      %v3922 = vrot.slane %v3772, 5
      %v3923 = vsel %vm3832, %v3921, %v3922
      %v3924 = vrot.slane %v3773, 5
      %v3925 = vrot.slane %v3924, 4
      %v3926 = vrot.slane %v3774, 5
      %v3927 = vsel %vm3832, %v3925, %v3926
      %v3928 = vrot.slane %v3926, 4
      %v3929 = vrot.slane %v3775, 5
      %v3930 = vsel %vm3832, %v3928, %v3929
      %v3931 = vrot.slane %v3776, 5
      %v3932 = vrot.slane %v3931, 4
      %v3933 = vrot.slane %v3777, 5
      %v3934 = vsel %vm3832, %v3932, %v3933
      %v3935 = vrot.slane %v3933, 4
      %v3936 = vrot.slane %v3778, 5
      %v3937 = vsel %vm3832, %v3935, %v3936
      %v3938 = vrot.slane %v3779, 5
      %v3939 = vrot.slane %v3938, 4
      %v3940 = vrot.slane %v3780, 5
      %v3941 = vsel %vm3832, %v3939, %v3940
      %v3942 = vrot.slane %v3940, 4
      %v3943 = vrot.slane %v3781, 5
      %v3944 = vsel %vm3832, %v3942, %v3943
      %v3945 = vunpack.c.l.b16 %v3836
      %v3946 = vunpack.c.l.b16 %v3839
      %v3947 = vunpack.c.l.b16 %v3843
      %v3948 = vunpack.c.l.b16 %v3846
      %v3949 = vunpack.c.l.b16 %v3850
      %v3950 = vunpack.c.l.b16 %v3853
      %v3951 = vunpack.c.l.b16 %v3857
      %v3952 = vunpack.c.l.b16 %v3860
      %v3953 = vunpack.c.l.b16 %v3864
      %v3954 = vunpack.c.l.b16 %v3867
      %v3955 = vunpack.c.l.b16 %v3871
      %v3956 = vunpack.c.l.b16 %v3874
      %v3957 = vunpack.c.l.b16 %v3878
      %v3958 = vunpack.c.l.b16 %v3881
      %v3959 = vunpack.c.l.b16 %v3885
      %v3960 = vunpack.c.l.b16 %v3888
      %v3961 = vunpack.c.l.b16 %v3892
      %v3962 = vunpack.c.l.b16 %v3895
      %v3963 = vunpack.c.l.b16 %v3899
      %v3964 = vunpack.c.l.b16 %v3902
      %v3965 = vunpack.c.l.b16 %v3906
      %v3966 = vunpack.c.l.b16 %v3909
      %v3967 = vunpack.c.l.b16 %v3913
      %v3968 = vunpack.c.l.b16 %v3916
      %v3969 = vunpack.c.l.b16 %v3920
      %v3970 = vunpack.c.l.b16 %v3923
      %v3971 = vunpack.c.l.b16 %v3927
      %v3972 = vunpack.c.l.b16 %v3930
      %v3973 = vunpack.c.l.b16 %v3934
      %v3974 = vunpack.c.l.b16 %v3937
      %v3975 = vunpack.c.l.b16 %v3941
      %v3976 = vunpack.c.l.b16 %v3944
      %v3977 = vpack.c.b16 %v3946, %v3945
      %v3978 = vpack.c.b16 %v3948, %v3947
      %v3979 = vpack.c.b16 %v3950, %v3949
      %v3980 = vpack.c.b16 %v3952, %v3951
      %v3981 = vpack.c.b16 %v3954, %v3953
      %v3982 = vpack.c.b16 %v3956, %v3955
      %v3983 = vpack.c.b16 %v3958, %v3957
      %v3984 = vpack.c.b16 %v3960, %v3959
      %v3985 = vpack.c.b16 %v3962, %v3961
      %v3986 = vpack.c.b16 %v3964, %v3963
      %v3987 = vpack.c.b16 %v3966, %v3965
      %v3988 = vpack.c.b16 %v3968, %v3967
      %v3989 = vpack.c.b16 %v3970, %v3969
      %v3990 = vpack.c.b16 %v3972, %v3971
      %v3991 = vpack.c.b16 %v3974, %v3973
      %v3992 = vpack.c.b16 %v3976, %v3975
      %4009 = vst [vmem:[#allocation4 + $0x10] sm:$0xff] %v3977
      %4010 = vst [vmem:[#allocation4 + $0x58] sm:$0xff] %v3978
      %4011 = vst [vmem:[#allocation4 + $0xa0] sm:$0xff] %v3979
      %4012 = vst [vmem:[#allocation4 + $0xe8] sm:$0xff] %v3980
      %4013 = vst [vmem:[#allocation4 + $0x130] sm:$0xff] %v3981
      %4014 = vst [vmem:[#allocation4 + $0x178] sm:$0xff] %v3982
      %4015 = vst [vmem:[#allocation4 + $0x1c0] sm:$0xff] %v3983
      %4016 = vst [vmem:[#allocation4 + $0x208] sm:$0xff] %v3984
      %4017 = vst [vmem:[#allocation4 + $0x250] sm:$0xff] %v3985
      %4018 = vst [vmem:[#allocation4 + $0x298] sm:$0xff] %v3986
      %4019 = vst [vmem:[#allocation4 + $0x2e0] sm:$0xff] %v3987
      %4020 = vst [vmem:[#allocation4 + $0x328] sm:$0xff] %v3988
      %4021 = vst [vmem:[#allocation4 + $0x370] sm:$0xff] %v3989
      %4022 = vst [vmem:[#allocation4 + $0x3b8] sm:$0xff] %v3990
      %4023 = vst [vmem:[#allocation4 + $0x400] sm:$0xff] %v3991
      %4024 = vst [vmem:[#allocation4 + $0x448] sm:$0xff] %v3992
      %v4025 = vld [vmem:[%s2960] sm:$0xf]
      %v4026 = vld [vmem:[%s2960 + $0x4] sm:$0xf]
      %v4027 = vld [vmem:[%s2960 + $0xc] sm:$0xf]
      %v4028 = vld [vmem:[%s2960 + $0x10] sm:$0xf]
      %v4029 = vld [vmem:[%s2960 + $0x18] sm:$0xf]
      %v4030 = vld [vmem:[%s2960 + $0x1c] sm:$0xf]
      %v4031 = vld [vmem:[%s2960 + $0x24] sm:$0xf]
      %v4032 = vld [vmem:[%s2960 + $0x28] sm:$0xf]
      %v4033 = vld [vmem:[%s2960 + $0x30] sm:$0xf]
      %v4034 = vld [vmem:[%s2960 + $0x34] sm:$0xf]
      %v4035 = vld [vmem:[%s2960 + $0x3c] sm:$0xf]
      %v4036 = vld [vmem:[%s2960 + $0x40] sm:$0xf]
      %v4037 = vld [vmem:[%s2960 + $0x48] sm:$0xf]
      %v4038 = vld [vmem:[%s2960 + $0x4c] sm:$0xf]
      %v4039 = vld [vmem:[%s2960 + $0x54] sm:$0xf]
      %v4040 = vld [vmem:[%s2960 + $0x58] sm:$0xf]
      %v4041 = vld [vmem:[%s2960 + $0x60] sm:$0xf]
      %v4042 = vld [vmem:[%s2960 + $0x64] sm:$0xf]
      %v4043 = vld [vmem:[%s2960 + $0x6c] sm:$0xf]
      %v4044 = vld [vmem:[%s2960 + $0x70] sm:$0xf]
      %v4045 = vld [vmem:[%s2960 + $0x78] sm:$0xf]
      %v4046 = vld [vmem:[%s2960 + $0x7c] sm:$0xf]
      %v4047 = vld [vmem:[%s2960 + $0x84] sm:$0xf]
      %v4048 = vld [vmem:[%s2960 + $0x88] sm:$0xf]
      %v4049 = vld [vmem:[%s2960 + $0x90] sm:$0xf]
      %v4050 = vld [vmem:[%s2960 + $0x94] sm:$0xf]
      %v4051 = vld [vmem:[%s2960 + $0x9c] sm:$0xf]
      %v4052 = vld [vmem:[%s2960 + $0xa0] sm:$0xf]
      %v4053 = vld [vmem:[%s2960 + $0xa8] sm:$0xf]
      %v4054 = vld [vmem:[%s2960 + $0xac] sm:$0xf]
      %v4055 = vld [vmem:[%s2960 + $0xb4] sm:$0xf]
      %v4056 = vld [vmem:[%s2960 + $0xb8] sm:$0xf]
      %v4089 = vunpack.c.l.b16 %v4025
      %v4090 = vunpack.c.l.b16 %v4026
      %v4091 = vunpack.c.l.b16 %v4027
      %v4092 = vunpack.c.l.b16 %v4028
      %v4093 = vunpack.c.l.b16 %v4029
      %v4094 = vunpack.c.l.b16 %v4030
      %v4095 = vunpack.c.l.b16 %v4031
      %v4096 = vunpack.c.l.b16 %v4032
      %v4097 = vunpack.c.l.b16 %v4033
      %v4098 = vunpack.c.l.b16 %v4034
      %v4099 = vunpack.c.l.b16 %v4035
      %v4100 = vunpack.c.l.b16 %v4036
      %v4101 = vunpack.c.l.b16 %v4037
      %v4102 = vunpack.c.l.b16 %v4038
      %v4103 = vunpack.c.l.b16 %v4039
      %v4104 = vunpack.c.l.b16 %v4040
      %v4105 = vunpack.c.l.b16 %v4041
      %v4106 = vunpack.c.l.b16 %v4042
      %v4107 = vunpack.c.l.b16 %v4043
      %v4108 = vunpack.c.l.b16 %v4044
      %v4109 = vunpack.c.l.b16 %v4045
      %v4110 = vunpack.c.l.b16 %v4046
      %v4111 = vunpack.c.l.b16 %v4047
      %v4112 = vunpack.c.l.b16 %v4048
      %v4113 = vunpack.c.l.b16 %v4049
      %v4114 = vunpack.c.l.b16 %v4050
      %v4115 = vunpack.c.l.b16 %v4051
      %v4116 = vunpack.c.l.b16 %v4052
      %v4117 = vunpack.c.l.b16 %v4053
      %v4118 = vunpack.c.l.b16 %v4054
      %v4119 = vunpack.c.l.b16 %v4055
      %v4120 = vunpack.c.l.b16 %v4056
      %v4121 = vpack.c.b16 %v4090, %v4089
      %v4122 = vpack.c.b16 %v4092, %v4091
      %v4123 = vpack.c.b16 %v4094, %v4093
      %v4124 = vpack.c.b16 %v4096, %v4095
      %v4125 = vpack.c.b16 %v4098, %v4097
      %v4126 = vpack.c.b16 %v4100, %v4099
      %v4127 = vpack.c.b16 %v4102, %v4101
      %v4128 = vpack.c.b16 %v4104, %v4103
      %v4129 = vpack.c.b16 %v4106, %v4105
      %v4130 = vpack.c.b16 %v4108, %v4107
      %v4131 = vpack.c.b16 %v4110, %v4109
      %v4132 = vpack.c.b16 %v4112, %v4111
      %v4133 = vpack.c.b16 %v4114, %v4113
      %v4134 = vpack.c.b16 %v4116, %v4115
      %v4135 = vpack.c.b16 %v4118, %v4117
      %v4136 = vpack.c.b16 %v4120, %v4119
      %4153 = vst [vmem:[#allocation4 + $0x18] sm:$0xff] %v4121
      %4154 = vst [vmem:[#allocation4 + $0x60] sm:$0xff] %v4122
      %4155 = vst [vmem:[#allocation4 + $0xa8] sm:$0xff] %v4123
      %4156 = vst [vmem:[#allocation4 + $0xf0] sm:$0xff] %v4124
      %4157 = vst [vmem:[#allocation4 + $0x138] sm:$0xff] %v4125
      %4158 = vst [vmem:[#allocation4 + $0x180] sm:$0xff] %v4126
      %4159 = vst [vmem:[#allocation4 + $0x1c8] sm:$0xff] %v4127
      %4160 = vst [vmem:[#allocation4 + $0x210] sm:$0xff] %v4128
      %4161 = vst [vmem:[#allocation4 + $0x258] sm:$0xff] %v4129
      %4162 = vst [vmem:[#allocation4 + $0x2a0] sm:$0xff] %v4130
      %4163 = vst [vmem:[#allocation4 + $0x2e8] sm:$0xff] %v4131
      %4164 = vst [vmem:[#allocation4 + $0x330] sm:$0xff] %v4132
      %4165 = vst [vmem:[#allocation4 + $0x378] sm:$0xff] %v4133
      %4166 = vst [vmem:[#allocation4 + $0x3c0] sm:$0xff] %v4134
      %4167 = vst [vmem:[#allocation4 + $0x408] sm:$0xff] %v4135
      %4168 = vst [vmem:[#allocation4 + $0x450] sm:$0xff] %v4136
      %v4169 = vld [vmem:[%s2960] sm:$0xf]
      %v4170 = vld [vmem:[%s2960 + $0x4] sm:$0xf]
      %v4171 = vld [vmem:[%s2960 + $0x8] sm:$0x1]
      %v4172 = vld [vmem:[%s2960 + $0xc] sm:$0xf]
      %v4173 = vld [vmem:[%s2960 + $0x10] sm:$0xf]
      %v4174 = vld [vmem:[%s2960 + $0x14] sm:$0x1]
      %v4175 = vld [vmem:[%s2960 + $0x18] sm:$0xf]
      %v4176 = vld [vmem:[%s2960 + $0x1c] sm:$0xf]
      %v4177 = vld [vmem:[%s2960 + $0x20] sm:$0x1]
      %v4178 = vld [vmem:[%s2960 + $0x24] sm:$0xf]
      %v4179 = vld [vmem:[%s2960 + $0x28] sm:$0xf]
      %v4180 = vld [vmem:[%s2960 + $0x2c] sm:$0x1]
      %v4181 = vld [vmem:[%s2960 + $0x30] sm:$0xf]
      %v4182 = vld [vmem:[%s2960 + $0x34] sm:$0xf]
      %v4183 = vld [vmem:[%s2960 + $0x38] sm:$0x1]
      %v4184 = vld [vmem:[%s2960 + $0x3c] sm:$0xf]
      %v4185 = vld [vmem:[%s2960 + $0x40] sm:$0xf]
      %v4186 = vld [vmem:[%s2960 + $0x44] sm:$0x1]
      %v4187 = vld [vmem:[%s2960 + $0x48] sm:$0xf]
      %v4188 = vld [vmem:[%s2960 + $0x4c] sm:$0xf]
      %v4189 = vld [vmem:[%s2960 + $0x50] sm:$0x1]
      %v4190 = vld [vmem:[%s2960 + $0x54] sm:$0xf]
      %v4191 = vld [vmem:[%s2960 + $0x58] sm:$0xf]
      %v4192 = vld [vmem:[%s2960 + $0x5c] sm:$0x1]
      %v4193 = vld [vmem:[%s2960 + $0x60] sm:$0xf]
      %v4194 = vld [vmem:[%s2960 + $0x64] sm:$0xf]
      %v4195 = vld [vmem:[%s2960 + $0x68] sm:$0x1]
      %v4196 = vld [vmem:[%s2960 + $0x6c] sm:$0xf]
      %v4197 = vld [vmem:[%s2960 + $0x70] sm:$0xf]
      %v4198 = vld [vmem:[%s2960 + $0x74] sm:$0x1]
      %v4199 = vld [vmem:[%s2960 + $0x78] sm:$0xf]
      %v4200 = vld [vmem:[%s2960 + $0x7c] sm:$0xf]
      %v4201 = vld [vmem:[%s2960 + $0x80] sm:$0x1]
      %v4202 = vld [vmem:[%s2960 + $0x84] sm:$0xf]
      %v4203 = vld [vmem:[%s2960 + $0x88] sm:$0xf]
      %v4204 = vld [vmem:[%s2960 + $0x8c] sm:$0x1]
      %v4205 = vld [vmem:[%s2960 + $0x90] sm:$0xf]
      %v4206 = vld [vmem:[%s2960 + $0x94] sm:$0xf]
      %v4207 = vld [vmem:[%s2960 + $0x98] sm:$0x1]
      %v4208 = vld [vmem:[%s2960 + $0x9c] sm:$0xf]
      %v4209 = vld [vmem:[%s2960 + $0xa0] sm:$0xf]
      %v4210 = vld [vmem:[%s2960 + $0xa4] sm:$0x1]
      %v4211 = vld [vmem:[%s2960 + $0xa8] sm:$0xf]
      %v4212 = vld [vmem:[%s2960 + $0xac] sm:$0xf]
      %v4213 = vld [vmem:[%s2960 + $0xb0] sm:$0x1]
      %v4214 = vld [vmem:[%s2960 + $0xb4] sm:$0xf]
      %v4215 = vld [vmem:[%s2960 + $0xb8] sm:$0xf]
      %v4216 = vld [vmem:[%s2960 + $0xbc] sm:$0x1]
      %v4218 = vshrl.u32 %v4169, 16
      %v4220 = vrot.slane %v4218, 4
      %v4221 = vshll.u32 %v4169, 16
      %v4223 = vrot.slane %v4221, 5
      %v4224 = vor.u32 %v4220, %v4223
      %v4225 = vrot.slane %v4224, 4
      %v4227 = vshll.u32 %v4170, 16
      %v4229 = vrot.slane %v4227, 5
      %v4230 = vsel %vm3269, %v4225, %v4229
      %v4231 = vshrl.u32 %v4170, 16
      %v4233 = vrot.slane %v4231, 4
      %v4234 = vor.u32 %v4233, %v4229
      %v4235 = vrot.slane %v4234, 4
      %v4237 = vshll.u32 %v4171, 16
      %v4239 = vrot.slane %v4237, 5
      %v4240 = vsel %vm3269, %v4235, %v4239
      %v4242 = vshrl.u32 %v4172, 16
      %v4244 = vrot.slane %v4242, 4
      %v4245 = vshll.u32 %v4172, 16
      %v4247 = vrot.slane %v4245, 5
      %v4248 = vor.u32 %v4244, %v4247
      %v4249 = vrot.slane %v4248, 4
      %v4251 = vshll.u32 %v4173, 16
      %v4253 = vrot.slane %v4251, 5
      %v4254 = vsel %vm3269, %v4249, %v4253
      %v4255 = vshrl.u32 %v4173, 16
      %v4257 = vrot.slane %v4255, 4
      %v4258 = vor.u32 %v4257, %v4253
      %v4259 = vrot.slane %v4258, 4
      %v4261 = vshll.u32 %v4174, 16
      %v4263 = vrot.slane %v4261, 5
      %v4264 = vsel %vm3269, %v4259, %v4263
      %v4266 = vshrl.u32 %v4175, 16
      %v4268 = vrot.slane %v4266, 4
      %v4269 = vshll.u32 %v4175, 16
      %v4271 = vrot.slane %v4269, 5
      %v4272 = vor.u32 %v4268, %v4271
      %v4273 = vrot.slane %v4272, 4
      %v4275 = vshll.u32 %v4176, 16
      %v4277 = vrot.slane %v4275, 5
      %v4278 = vsel %vm3269, %v4273, %v4277
      %v4279 = vshrl.u32 %v4176, 16
      %v4281 = vrot.slane %v4279, 4
      %v4282 = vor.u32 %v4281, %v4277
      %v4283 = vrot.slane %v4282, 4
      %v4285 = vshll.u32 %v4177, 16
      %v4287 = vrot.slane %v4285, 5
      %v4288 = vsel %vm3269, %v4283, %v4287
      %v4290 = vshrl.u32 %v4178, 16
      %v4292 = vrot.slane %v4290, 4
      %v4293 = vshll.u32 %v4178, 16
      %v4295 = vrot.slane %v4293, 5
      %v4296 = vor.u32 %v4292, %v4295
      %v4297 = vrot.slane %v4296, 4
      %v4299 = vshll.u32 %v4179, 16
      %v4301 = vrot.slane %v4299, 5
      %v4302 = vsel %vm3269, %v4297, %v4301
      %v4303 = vshrl.u32 %v4179, 16
      %v4305 = vrot.slane %v4303, 4
      %v4306 = vor.u32 %v4305, %v4301
      %v4307 = vrot.slane %v4306, 4
      %v4309 = vshll.u32 %v4180, 16
      %v4311 = vrot.slane %v4309, 5
      %v4312 = vsel %vm3269, %v4307, %v4311
      %v4314 = vshrl.u32 %v4181, 16
      %v4316 = vrot.slane %v4314, 4
      %v4317 = vshll.u32 %v4181, 16
      %v4319 = vrot.slane %v4317, 5
      %v4320 = vor.u32 %v4316, %v4319
      %v4321 = vrot.slane %v4320, 4
      %v4323 = vshll.u32 %v4182, 16
      %v4325 = vrot.slane %v4323, 5
      %v4326 = vsel %vm3269, %v4321, %v4325
      %v4327 = vshrl.u32 %v4182, 16
      %v4329 = vrot.slane %v4327, 4
      %v4330 = vor.u32 %v4329, %v4325
      %v4331 = vrot.slane %v4330, 4
      %v4333 = vshll.u32 %v4183, 16
      %v4335 = vrot.slane %v4333, 5
      %v4336 = vsel %vm3269, %v4331, %v4335
      %v4338 = vshrl.u32 %v4184, 16
      %v4340 = vrot.slane %v4338, 4
      %v4341 = vshll.u32 %v4184, 16
      %v4343 = vrot.slane %v4341, 5
      %v4344 = vor.u32 %v4340, %v4343
      %v4345 = vrot.slane %v4344, 4
      %v4347 = vshll.u32 %v4185, 16
      %v4349 = vrot.slane %v4347, 5
      %v4350 = vsel %vm3269, %v4345, %v4349
      %v4351 = vshrl.u32 %v4185, 16
      %v4353 = vrot.slane %v4351, 4
      %v4354 = vor.u32 %v4353, %v4349
      %v4355 = vrot.slane %v4354, 4
      %v4357 = vshll.u32 %v4186, 16
      %v4359 = vrot.slane %v4357, 5
      %v4360 = vsel %vm3269, %v4355, %v4359
      %v4362 = vshrl.u32 %v4187, 16
      %v4364 = vrot.slane %v4362, 4
      %v4365 = vshll.u32 %v4187, 16
      %v4367 = vrot.slane %v4365, 5
      %v4368 = vor.u32 %v4364, %v4367
      %v4369 = vrot.slane %v4368, 4
      %v4371 = vshll.u32 %v4188, 16
      %v4373 = vrot.slane %v4371, 5
      %v4374 = vsel %vm3269, %v4369, %v4373
      %v4375 = vshrl.u32 %v4188, 16
      %v4377 = vrot.slane %v4375, 4
      %v4378 = vor.u32 %v4377, %v4373
      %v4379 = vrot.slane %v4378, 4
      %v4381 = vshll.u32 %v4189, 16
      %v4383 = vrot.slane %v4381, 5
      %v4384 = vsel %vm3269, %v4379, %v4383
      %v4386 = vshrl.u32 %v4190, 16
      %v4388 = vrot.slane %v4386, 4
      %v4389 = vshll.u32 %v4190, 16
      %v4391 = vrot.slane %v4389, 5
      %v4392 = vor.u32 %v4388, %v4391
      %v4393 = vrot.slane %v4392, 4
      %v4395 = vshll.u32 %v4191, 16
      %v4397 = vrot.slane %v4395, 5
      %v4398 = vsel %vm3269, %v4393, %v4397
      %v4399 = vshrl.u32 %v4191, 16
      %v4401 = vrot.slane %v4399, 4
      %v4402 = vor.u32 %v4401, %v4397
      %v4403 = vrot.slane %v4402, 4
      %v4405 = vshll.u32 %v4192, 16
      %v4407 = vrot.slane %v4405, 5
      %v4408 = vsel %vm3269, %v4403, %v4407
      %v4410 = vshrl.u32 %v4193, 16
      %v4412 = vrot.slane %v4410, 4
      %v4413 = vshll.u32 %v4193, 16
      %v4415 = vrot.slane %v4413, 5
      %v4416 = vor.u32 %v4412, %v4415
      %v4417 = vrot.slane %v4416, 4
      %v4419 = vshll.u32 %v4194, 16
      %v4421 = vrot.slane %v4419, 5
      %v4422 = vsel %vm3269, %v4417, %v4421
      %v4423 = vshrl.u32 %v4194, 16
      %v4425 = vrot.slane %v4423, 4
      %v4426 = vor.u32 %v4425, %v4421
      %v4427 = vrot.slane %v4426, 4
      %v4429 = vshll.u32 %v4195, 16
      %v4431 = vrot.slane %v4429, 5
      %v4432 = vsel %vm3269, %v4427, %v4431
      %v4434 = vshrl.u32 %v4196, 16
      %v4436 = vrot.slane %v4434, 4
      %v4437 = vshll.u32 %v4196, 16
      %v4439 = vrot.slane %v4437, 5
      %v4440 = vor.u32 %v4436, %v4439
      %v4441 = vrot.slane %v4440, 4
      %v4443 = vshll.u32 %v4197, 16
      %v4445 = vrot.slane %v4443, 5
      %v4446 = vsel %vm3269, %v4441, %v4445
      %v4447 = vshrl.u32 %v4197, 16
      %v4449 = vrot.slane %v4447, 4
      %v4450 = vor.u32 %v4449, %v4445
      %v4451 = vrot.slane %v4450, 4
      %v4453 = vshll.u32 %v4198, 16
      %v4455 = vrot.slane %v4453, 5
      %v4456 = vsel %vm3269, %v4451, %v4455
      %v4458 = vshrl.u32 %v4199, 16
      %v4460 = vrot.slane %v4458, 4
      %v4461 = vshll.u32 %v4199, 16
      %v4463 = vrot.slane %v4461, 5
      %v4464 = vor.u32 %v4460, %v4463
      %v4465 = vrot.slane %v4464, 4
      %v4467 = vshll.u32 %v4200, 16
      %v4469 = vrot.slane %v4467, 5
      %v4470 = vsel %vm3269, %v4465, %v4469
      %v4471 = vshrl.u32 %v4200, 16
      %v4473 = vrot.slane %v4471, 4
      %v4474 = vor.u32 %v4473, %v4469
      %v4475 = vrot.slane %v4474, 4
      %v4477 = vshll.u32 %v4201, 16
      %v4479 = vrot.slane %v4477, 5
      %v4480 = vsel %vm3269, %v4475, %v4479
      %v4482 = vshrl.u32 %v4202, 16
      %v4484 = vrot.slane %v4482, 4
      %v4485 = vshll.u32 %v4202, 16
      %v4487 = vrot.slane %v4485, 5
      %v4488 = vor.u32 %v4484, %v4487
      %v4489 = vrot.slane %v4488, 4
      %v4491 = vshll.u32 %v4203, 16
      %v4493 = vrot.slane %v4491, 5
      %v4494 = vsel %vm3269, %v4489, %v4493
      %v4495 = vshrl.u32 %v4203, 16
      %v4497 = vrot.slane %v4495, 4
      %v4498 = vor.u32 %v4497, %v4493
      %v4499 = vrot.slane %v4498, 4
      %v4501 = vshll.u32 %v4204, 16
      %v4503 = vrot.slane %v4501, 5
      %v4504 = vsel %vm3269, %v4499, %v4503
      %v4506 = vshrl.u32 %v4205, 16
      %v4508 = vrot.slane %v4506, 4
      %v4509 = vshll.u32 %v4205, 16
      %v4511 = vrot.slane %v4509, 5
      %v4512 = vor.u32 %v4508, %v4511
      %v4513 = vrot.slane %v4512, 4
      %v4515 = vshll.u32 %v4206, 16
      %v4517 = vrot.slane %v4515, 5
      %v4518 = vsel %vm3269, %v4513, %v4517
      %v4519 = vshrl.u32 %v4206, 16
      %v4521 = vrot.slane %v4519, 4
      %v4522 = vor.u32 %v4521, %v4517
      %v4523 = vrot.slane %v4522, 4
      %v4525 = vshll.u32 %v4207, 16
      %v4527 = vrot.slane %v4525, 5
      %v4528 = vsel %vm3269, %v4523, %v4527
      %v4530 = vshrl.u32 %v4208, 16
      %v4532 = vrot.slane %v4530, 4
      %v4533 = vshll.u32 %v4208, 16
      %v4535 = vrot.slane %v4533, 5
      %v4536 = vor.u32 %v4532, %v4535
      %v4537 = vrot.slane %v4536, 4
      %v4539 = vshll.u32 %v4209, 16
      %v4541 = vrot.slane %v4539, 5
      %v4542 = vsel %vm3269, %v4537, %v4541
      %v4543 = vshrl.u32 %v4209, 16
      %v4545 = vrot.slane %v4543, 4
      %v4546 = vor.u32 %v4545, %v4541
      %v4547 = vrot.slane %v4546, 4
      %v4549 = vshll.u32 %v4210, 16
      %v4551 = vrot.slane %v4549, 5
      %v4552 = vsel %vm3269, %v4547, %v4551
      %v4554 = vshrl.u32 %v4211, 16
      %v4556 = vrot.slane %v4554, 4
      %v4557 = vshll.u32 %v4211, 16
      %v4559 = vrot.slane %v4557, 5
      %v4560 = vor.u32 %v4556, %v4559
      %v4561 = vrot.slane %v4560, 4
      %v4563 = vshll.u32 %v4212, 16
      %v4565 = vrot.slane %v4563, 5
      %v4566 = vsel %vm3269, %v4561, %v4565
      %v4567 = vshrl.u32 %v4212, 16
      %v4569 = vrot.slane %v4567, 4
      %v4570 = vor.u32 %v4569, %v4565
      %v4571 = vrot.slane %v4570, 4
      %v4573 = vshll.u32 %v4213, 16
      %v4575 = vrot.slane %v4573, 5
      %v4576 = vsel %vm3269, %v4571, %v4575
      %v4578 = vshrl.u32 %v4214, 16
      %v4580 = vrot.slane %v4578, 4
      %v4581 = vshll.u32 %v4214, 16
      %v4583 = vrot.slane %v4581, 5
      %v4584 = vor.u32 %v4580, %v4583
      %v4585 = vrot.slane %v4584, 4
      %v4587 = vshll.u32 %v4215, 16
      %v4589 = vrot.slane %v4587, 5
      %v4590 = vsel %vm3269, %v4585, %v4589
      %v4591 = vshrl.u32 %v4215, 16
      %v4593 = vrot.slane %v4591, 4
      %v4594 = vor.u32 %v4593, %v4589
      %v4595 = vrot.slane %v4594, 4
      %v4597 = vshll.u32 %v4216, 16
      %v4599 = vrot.slane %v4597, 5
      %v4600 = vsel %vm3269, %v4595, %v4599
      %v4601 = vunpack.c.l.b16 %v4230
      %v4602 = vunpack.c.l.b16 %v4240
      %v4603 = vunpack.c.l.b16 %v4254
      %v4604 = vunpack.c.l.b16 %v4264
      %v4605 = vunpack.c.l.b16 %v4278
      %v4606 = vunpack.c.l.b16 %v4288
      %v4607 = vunpack.c.l.b16 %v4302
      %v4608 = vunpack.c.l.b16 %v4312
      %v4609 = vunpack.c.l.b16 %v4326
      %v4610 = vunpack.c.l.b16 %v4336
      %v4611 = vunpack.c.l.b16 %v4350
      %v4612 = vunpack.c.l.b16 %v4360
      %v4613 = vunpack.c.l.b16 %v4374
      %v4614 = vunpack.c.l.b16 %v4384
      %v4615 = vunpack.c.l.b16 %v4398
      %v4616 = vunpack.c.l.b16 %v4408
      %v4617 = vunpack.c.l.b16 %v4422
      %v4618 = vunpack.c.l.b16 %v4432
      %v4619 = vunpack.c.l.b16 %v4446
      %v4620 = vunpack.c.l.b16 %v4456
      %v4621 = vunpack.c.l.b16 %v4470
      %v4622 = vunpack.c.l.b16 %v4480
      %v4623 = vunpack.c.l.b16 %v4494
      %v4624 = vunpack.c.l.b16 %v4504
      %v4625 = vunpack.c.l.b16 %v4518
      %v4626 = vunpack.c.l.b16 %v4528
      %v4627 = vunpack.c.l.b16 %v4542
      %v4628 = vunpack.c.l.b16 %v4552
      %v4629 = vunpack.c.l.b16 %v4566
      %v4630 = vunpack.c.l.b16 %v4576
      %v4631 = vunpack.c.l.b16 %v4590
      %v4632 = vunpack.c.l.b16 %v4600
      %v4633 = vpack.c.b16 %v4602, %v4601
      %v4634 = vpack.c.b16 %v4604, %v4603
      %v4635 = vpack.c.b16 %v4606, %v4605
      %v4636 = vpack.c.b16 %v4608, %v4607
      %v4637 = vpack.c.b16 %v4610, %v4609
      %v4638 = vpack.c.b16 %v4612, %v4611
      %v4639 = vpack.c.b16 %v4614, %v4613
      %v4640 = vpack.c.b16 %v4616, %v4615
      %v4641 = vpack.c.b16 %v4618, %v4617
      %v4642 = vpack.c.b16 %v4620, %v4619
      %v4643 = vpack.c.b16 %v4622, %v4621
      %v4644 = vpack.c.b16 %v4624, %v4623
      %v4645 = vpack.c.b16 %v4626, %v4625
      %v4646 = vpack.c.b16 %v4628, %v4627
      %v4647 = vpack.c.b16 %v4630, %v4629
      %v4648 = vpack.c.b16 %v4632, %v4631
      %4665 = vst [vmem:[#allocation4 + $0x20] sm:$0xff] %v4633
      %4666 = vst [vmem:[#allocation4 + $0x68] sm:$0xff] %v4634
      %4667 = vst [vmem:[#allocation4 + $0xb0] sm:$0xff] %v4635
      %4668 = vst [vmem:[#allocation4 + $0xf8] sm:$0xff] %v4636
      %4669 = vst [vmem:[#allocation4 + $0x140] sm:$0xff] %v4637
      %4670 = vst [vmem:[#allocation4 + $0x188] sm:$0xff] %v4638
      %4671 = vst [vmem:[#allocation4 + $0x1d0] sm:$0xff] %v4639
      %4672 = vst [vmem:[#allocation4 + $0x218] sm:$0xff] %v4640
      %4673 = vst [vmem:[#allocation4 + $0x260] sm:$0xff] %v4641
      %4674 = vst [vmem:[#allocation4 + $0x2a8] sm:$0xff] %v4642
      %4675 = vst [vmem:[#allocation4 + $0x2f0] sm:$0xff] %v4643
      %4676 = vst [vmem:[#allocation4 + $0x338] sm:$0xff] %v4644
      %4677 = vst [vmem:[#allocation4 + $0x380] sm:$0xff] %v4645
      %4678 = vst [vmem:[#allocation4 + $0x3c8] sm:$0xff] %v4646
      %4679 = vst [vmem:[#allocation4 + $0x410] sm:$0xff] %v4647
      %4680 = vst [vmem:[#allocation4 + $0x458] sm:$0xff] %v4648
      %v4681 = vld [vmem:[%s2960] sm:$0xe]
      %v4682 = vld [vmem:[%s2960 + $0x4] sm:$0xf]
      %v4683 = vld [vmem:[%s2960 + $0x8] sm:$0x1]
      %v4684 = vld [vmem:[%s2960 + $0xc] sm:$0xe]
      %v4685 = vld [vmem:[%s2960 + $0x10] sm:$0xf]
      %v4686 = vld [vmem:[%s2960 + $0x14] sm:$0x1]
      %v4687 = vld [vmem:[%s2960 + $0x18] sm:$0xe]
      %v4688 = vld [vmem:[%s2960 + $0x1c] sm:$0xf]
      %v4689 = vld [vmem:[%s2960 + $0x20] sm:$0x1]
      %v4690 = vld [vmem:[%s2960 + $0x24] sm:$0xe]
      %v4691 = vld [vmem:[%s2960 + $0x28] sm:$0xf]
      %v4692 = vld [vmem:[%s2960 + $0x2c] sm:$0x1]
      %v4693 = vld [vmem:[%s2960 + $0x30] sm:$0xe]
      %v4694 = vld [vmem:[%s2960 + $0x34] sm:$0xf]
      %v4695 = vld [vmem:[%s2960 + $0x38] sm:$0x1]
      %v4696 = vld [vmem:[%s2960 + $0x3c] sm:$0xe]
      %v4697 = vld [vmem:[%s2960 + $0x40] sm:$0xf]
      %v4698 = vld [vmem:[%s2960 + $0x44] sm:$0x1]
      %v4699 = vld [vmem:[%s2960 + $0x48] sm:$0xe]
      %v4700 = vld [vmem:[%s2960 + $0x4c] sm:$0xf]
      %v4701 = vld [vmem:[%s2960 + $0x50] sm:$0x1]
      %v4702 = vld [vmem:[%s2960 + $0x54] sm:$0xe]
      %v4703 = vld [vmem:[%s2960 + $0x58] sm:$0xf]
      %v4704 = vld [vmem:[%s2960 + $0x5c] sm:$0x1]
      %v4705 = vld [vmem:[%s2960 + $0x60] sm:$0xe]
      %v4706 = vld [vmem:[%s2960 + $0x64] sm:$0xf]
      %v4707 = vld [vmem:[%s2960 + $0x68] sm:$0x1]
      %v4708 = vld [vmem:[%s2960 + $0x6c] sm:$0xe]
      %v4709 = vld [vmem:[%s2960 + $0x70] sm:$0xf]
      %v4710 = vld [vmem:[%s2960 + $0x74] sm:$0x1]
      %v4711 = vld [vmem:[%s2960 + $0x78] sm:$0xe]
      %v4712 = vld [vmem:[%s2960 + $0x7c] sm:$0xf]
      %v4713 = vld [vmem:[%s2960 + $0x80] sm:$0x1]
      %v4714 = vld [vmem:[%s2960 + $0x84] sm:$0xe]
      %v4715 = vld [vmem:[%s2960 + $0x88] sm:$0xf]
      %v4716 = vld [vmem:[%s2960 + $0x8c] sm:$0x1]
      %v4717 = vld [vmem:[%s2960 + $0x90] sm:$0xe]
      %v4718 = vld [vmem:[%s2960 + $0x94] sm:$0xf]
      %v4719 = vld [vmem:[%s2960 + $0x98] sm:$0x1]
      %v4720 = vld [vmem:[%s2960 + $0x9c] sm:$0xe]
      %v4721 = vld [vmem:[%s2960 + $0xa0] sm:$0xf]
      %v4722 = vld [vmem:[%s2960 + $0xa4] sm:$0x1]
      %v4723 = vld [vmem:[%s2960 + $0xa8] sm:$0xe]
      %v4724 = vld [vmem:[%s2960 + $0xac] sm:$0xf]
      %v4725 = vld [vmem:[%s2960 + $0xb0] sm:$0x1]
      %v4726 = vld [vmem:[%s2960 + $0xb4] sm:$0xe]
      %v4727 = vld [vmem:[%s2960 + $0xb8] sm:$0xf]
      %v4728 = vld [vmem:[%s2960 + $0xbc] sm:$0x1]
      %v4777 = vrot.slane %v4681, 5
      %v4778 = vrot.slane %v4777, 4
      %v4779 = vrot.slane %v4682, 5
      %v4780 = vsel %vm3832, %v4778, %v4779
      %v4781 = vrot.slane %v4779, 4
      %v4782 = vrot.slane %v4683, 5
      %v4783 = vsel %vm3832, %v4781, %v4782
      %v4784 = vrot.slane %v4684, 5
      %v4785 = vrot.slane %v4784, 4
      %v4786 = vrot.slane %v4685, 5
      %v4787 = vsel %vm3832, %v4785, %v4786
      %v4788 = vrot.slane %v4786, 4
      %v4789 = vrot.slane %v4686, 5
      %v4790 = vsel %vm3832, %v4788, %v4789
      %v4791 = vrot.slane %v4687, 5
      %v4792 = vrot.slane %v4791, 4
      %v4793 = vrot.slane %v4688, 5
      %v4794 = vsel %vm3832, %v4792, %v4793
      %v4795 = vrot.slane %v4793, 4
      %v4796 = vrot.slane %v4689, 5
      %v4797 = vsel %vm3832, %v4795, %v4796
      %v4798 = vrot.slane %v4690, 5
      %v4799 = vrot.slane %v4798, 4
      %v4800 = vrot.slane %v4691, 5
      %v4801 = vsel %vm3832, %v4799, %v4800
      %v4802 = vrot.slane %v4800, 4
      %v4803 = vrot.slane %v4692, 5
      %v4804 = vsel %vm3832, %v4802, %v4803
      %v4805 = vrot.slane %v4693, 5
      %v4806 = vrot.slane %v4805, 4
      %v4807 = vrot.slane %v4694, 5
      %v4808 = vsel %vm3832, %v4806, %v4807
      %v4809 = vrot.slane %v4807, 4
      %v4810 = vrot.slane %v4695, 5
      %v4811 = vsel %vm3832, %v4809, %v4810
      %v4812 = vrot.slane %v4696, 5
      %v4813 = vrot.slane %v4812, 4
      %v4814 = vrot.slane %v4697, 5
      %v4815 = vsel %vm3832, %v4813, %v4814
      %v4816 = vrot.slane %v4814, 4
      %v4817 = vrot.slane %v4698, 5
      %v4818 = vsel %vm3832, %v4816, %v4817
      %v4819 = vrot.slane %v4699, 5
      %v4820 = vrot.slane %v4819, 4
      %v4821 = vrot.slane %v4700, 5
      %v4822 = vsel %vm3832, %v4820, %v4821
      %v4823 = vrot.slane %v4821, 4
      %v4824 = vrot.slane %v4701, 5
      %v4825 = vsel %vm3832, %v4823, %v4824
      %v4826 = vrot.slane %v4702, 5
      %v4827 = vrot.slane %v4826, 4
      %v4828 = vrot.slane %v4703, 5
      %v4829 = vsel %vm3832, %v4827, %v4828
      %v4830 = vrot.slane %v4828, 4
      %v4831 = vrot.slane %v4704, 5
      %v4832 = vsel %vm3832, %v4830, %v4831
      %v4833 = vrot.slane %v4705, 5
      %v4834 = vrot.slane %v4833, 4
      %v4835 = vrot.slane %v4706, 5
      %v4836 = vsel %vm3832, %v4834, %v4835
      %v4837 = vrot.slane %v4835, 4
      %v4838 = vrot.slane %v4707, 5
      %v4839 = vsel %vm3832, %v4837, %v4838
      %v4840 = vrot.slane %v4708, 5
      %v4841 = vrot.slane %v4840, 4
      %v4842 = vrot.slane %v4709, 5
      %v4843 = vsel %vm3832, %v4841, %v4842
      %v4844 = vrot.slane %v4842, 4
      %v4845 = vrot.slane %v4710, 5
      %v4846 = vsel %vm3832, %v4844, %v4845
      %v4847 = vrot.slane %v4711, 5
      %v4848 = vrot.slane %v4847, 4
      %v4849 = vrot.slane %v4712, 5
      %v4850 = vsel %vm3832, %v4848, %v4849
      %v4851 = vrot.slane %v4849, 4
      %v4852 = vrot.slane %v4713, 5
      %v4853 = vsel %vm3832, %v4851, %v4852
      %v4854 = vrot.slane %v4714, 5
      %v4855 = vrot.slane %v4854, 4
      %v4856 = vrot.slane %v4715, 5
      %v4857 = vsel %vm3832, %v4855, %v4856
      %v4858 = vrot.slane %v4856, 4
      %v4859 = vrot.slane %v4716, 5
      %v4860 = vsel %vm3832, %v4858, %v4859
      %v4861 = vrot.slane %v4717, 5
      %v4862 = vrot.slane %v4861, 4
      %v4863 = vrot.slane %v4718, 5
      %v4864 = vsel %vm3832, %v4862, %v4863
      %v4865 = vrot.slane %v4863, 4
      %v4866 = vrot.slane %v4719, 5
      %v4867 = vsel %vm3832, %v4865, %v4866
      %v4868 = vrot.slane %v4720, 5
      %v4869 = vrot.slane %v4868, 4
      %v4870 = vrot.slane %v4721, 5
      %v4871 = vsel %vm3832, %v4869, %v4870
      %v4872 = vrot.slane %v4870, 4
      %v4873 = vrot.slane %v4722, 5
      %v4874 = vsel %vm3832, %v4872, %v4873
      %v4875 = vrot.slane %v4723, 5
      %v4876 = vrot.slane %v4875, 4
      %v4877 = vrot.slane %v4724, 5
      %v4878 = vsel %vm3832, %v4876, %v4877
      %v4879 = vrot.slane %v4877, 4
      %v4880 = vrot.slane %v4725, 5
      %v4881 = vsel %vm3832, %v4879, %v4880
      %v4882 = vrot.slane %v4726, 5
      %v4883 = vrot.slane %v4882, 4
      %v4884 = vrot.slane %v4727, 5
      %v4885 = vsel %vm3832, %v4883, %v4884
      %v4886 = vrot.slane %v4884, 4
      %v4887 = vrot.slane %v4728, 5
      %v4888 = vsel %vm3832, %v4886, %v4887
      %v4889 = vunpack.c.l.b16 %v4780
      %v4890 = vunpack.c.l.b16 %v4783
      %v4891 = vunpack.c.l.b16 %v4787
      %v4892 = vunpack.c.l.b16 %v4790
      %v4893 = vunpack.c.l.b16 %v4794
      %v4894 = vunpack.c.l.b16 %v4797
      %v4895 = vunpack.c.l.b16 %v4801
      %v4896 = vunpack.c.l.b16 %v4804
      %v4897 = vunpack.c.l.b16 %v4808
      %v4898 = vunpack.c.l.b16 %v4811
      %v4899 = vunpack.c.l.b16 %v4815
      %v4900 = vunpack.c.l.b16 %v4818
      %v4901 = vunpack.c.l.b16 %v4822
      %v4902 = vunpack.c.l.b16 %v4825
      %v4903 = vunpack.c.l.b16 %v4829
      %v4904 = vunpack.c.l.b16 %v4832
      %v4905 = vunpack.c.l.b16 %v4836
      %v4906 = vunpack.c.l.b16 %v4839
      %v4907 = vunpack.c.l.b16 %v4843
      %v4908 = vunpack.c.l.b16 %v4846
      %v4909 = vunpack.c.l.b16 %v4850
      %v4910 = vunpack.c.l.b16 %v4853
      %v4911 = vunpack.c.l.b16 %v4857
      %v4912 = vunpack.c.l.b16 %v4860
      %v4913 = vunpack.c.l.b16 %v4864
      %v4914 = vunpack.c.l.b16 %v4867
      %v4915 = vunpack.c.l.b16 %v4871
      %v4916 = vunpack.c.l.b16 %v4874
      %v4917 = vunpack.c.l.b16 %v4878
      %v4918 = vunpack.c.l.b16 %v4881
      %v4919 = vunpack.c.l.b16 %v4885
      %v4920 = vunpack.c.l.b16 %v4888
      %v4921 = vpack.c.b16 %v4890, %v4889
      %v4922 = vpack.c.b16 %v4892, %v4891
      %v4923 = vpack.c.b16 %v4894, %v4893
      %v4924 = vpack.c.b16 %v4896, %v4895
      %v4925 = vpack.c.b16 %v4898, %v4897
      %v4926 = vpack.c.b16 %v4900, %v4899
      %v4927 = vpack.c.b16 %v4902, %v4901
      %v4928 = vpack.c.b16 %v4904, %v4903
      %v4929 = vpack.c.b16 %v4906, %v4905
      %v4930 = vpack.c.b16 %v4908, %v4907
      %v4931 = vpack.c.b16 %v4910, %v4909
      %v4932 = vpack.c.b16 %v4912, %v4911
      %v4933 = vpack.c.b16 %v4914, %v4913
      %v4934 = vpack.c.b16 %v4916, %v4915
      %v4935 = vpack.c.b16 %v4918, %v4917
      %v4936 = vpack.c.b16 %v4920, %v4919
      %4953 = vst [vmem:[#allocation4 + $0x28] sm:$0xff] %v4921
      %4954 = vst [vmem:[#allocation4 + $0x70] sm:$0xff] %v4922
      %4955 = vst [vmem:[#allocation4 + $0xb8] sm:$0xff] %v4923
      %4956 = vst [vmem:[#allocation4 + $0x100] sm:$0xff] %v4924
      %4957 = vst [vmem:[#allocation4 + $0x148] sm:$0xff] %v4925
      %4958 = vst [vmem:[#allocation4 + $0x190] sm:$0xff] %v4926
      %4959 = vst [vmem:[#allocation4 + $0x1d8] sm:$0xff] %v4927
      %4960 = vst [vmem:[#allocation4 + $0x220] sm:$0xff] %v4928
      %4961 = vst [vmem:[#allocation4 + $0x268] sm:$0xff] %v4929
      %4962 = vst [vmem:[#allocation4 + $0x2b0] sm:$0xff] %v4930
      %4963 = vst [vmem:[#allocation4 + $0x2f8] sm:$0xff] %v4931
      %4964 = vst [vmem:[#allocation4 + $0x340] sm:$0xff] %v4932
      %4965 = vst [vmem:[#allocation4 + $0x388] sm:$0xff] %v4933
      %4966 = vst [vmem:[#allocation4 + $0x3d0] sm:$0xff] %v4934
      %4967 = vst [vmem:[#allocation4 + $0x418] sm:$0xff] %v4935
      %4968 = vst [vmem:[#allocation4 + $0x460] sm:$0xff] %v4936
      %s4969 = scalar_lea.vmem [#allocation2], 24
      %v4970 = vld [vmem:[%s4969] sm:$0xf]
      %v4971 = vld [vmem:[%s4969 + $0x4] sm:$0xf]
      %v4972 = vld [vmem:[%s4969 + $0xc] sm:$0xf]
      %v4973 = vld [vmem:[%s4969 + $0x10] sm:$0xf]
      %v4974 = vld [vmem:[%s4969 + $0x18] sm:$0xf]
      %v4975 = vld [vmem:[%s4969 + $0x1c] sm:$0xf]
      %v4976 = vld [vmem:[%s4969 + $0x24] sm:$0xf]
      %v4977 = vld [vmem:[%s4969 + $0x28] sm:$0xf]
      %v4978 = vld [vmem:[%s4969 + $0x30] sm:$0xf]
      %v4979 = vld [vmem:[%s4969 + $0x34] sm:$0xf]
      %v4980 = vld [vmem:[%s4969 + $0x3c] sm:$0xf]
      %v4981 = vld [vmem:[%s4969 + $0x40] sm:$0xf]
      %v4982 = vld [vmem:[%s4969 + $0x48] sm:$0xf]
      %v4983 = vld [vmem:[%s4969 + $0x4c] sm:$0xf]
      %v4984 = vld [vmem:[%s4969 + $0x54] sm:$0xf]
      %v4985 = vld [vmem:[%s4969 + $0x58] sm:$0xf]
      %v4986 = vld [vmem:[%s4969 + $0x60] sm:$0xf]
      %v4987 = vld [vmem:[%s4969 + $0x64] sm:$0xf]
      %v4988 = vld [vmem:[%s4969 + $0x6c] sm:$0xf]
      %v4989 = vld [vmem:[%s4969 + $0x70] sm:$0xf]
      %v4990 = vld [vmem:[%s4969 + $0x78] sm:$0xf]
      %v4991 = vld [vmem:[%s4969 + $0x7c] sm:$0xf]
      %v4992 = vld [vmem:[%s4969 + $0x84] sm:$0xf]
      %v4993 = vld [vmem:[%s4969 + $0x88] sm:$0xf]
      %v4994 = vld [vmem:[%s4969 + $0x90] sm:$0xf]
      %v4995 = vld [vmem:[%s4969 + $0x94] sm:$0xf]
      %v4996 = vld [vmem:[%s4969 + $0x9c] sm:$0xf]
      %v4997 = vld [vmem:[%s4969 + $0xa0] sm:$0xf]
      %v4998 = vld [vmem:[%s4969 + $0xa8] sm:$0xf]
      %v4999 = vld [vmem:[%s4969 + $0xac] sm:$0xf]
      %v5000 = vld [vmem:[%s4969 + $0xb4] sm:$0xf]
      %v5001 = vld [vmem:[%s4969 + $0xb8] sm:$0xf]
      %v5034 = vunpack.c.l.b16 %v4970
      %v5035 = vunpack.c.l.b16 %v4971
      %v5036 = vunpack.c.l.b16 %v4972
      %v5037 = vunpack.c.l.b16 %v4973
      %v5038 = vunpack.c.l.b16 %v4974
      %v5039 = vunpack.c.l.b16 %v4975
      %v5040 = vunpack.c.l.b16 %v4976
      %v5041 = vunpack.c.l.b16 %v4977
      %v5042 = vunpack.c.l.b16 %v4978
      %v5043 = vunpack.c.l.b16 %v4979
      %v5044 = vunpack.c.l.b16 %v4980
      %v5045 = vunpack.c.l.b16 %v4981
      %v5046 = vunpack.c.l.b16 %v4982
      %v5047 = vunpack.c.l.b16 %v4983
      %v5048 = vunpack.c.l.b16 %v4984
      %v5049 = vunpack.c.l.b16 %v4985
      %v5050 = vunpack.c.l.b16 %v4986
      %v5051 = vunpack.c.l.b16 %v4987
      %v5052 = vunpack.c.l.b16 %v4988
      %v5053 = vunpack.c.l.b16 %v4989
      %v5054 = vunpack.c.l.b16 %v4990
      %v5055 = vunpack.c.l.b16 %v4991
      %v5056 = vunpack.c.l.b16 %v4992
      %v5057 = vunpack.c.l.b16 %v4993
      %v5058 = vunpack.c.l.b16 %v4994
      %v5059 = vunpack.c.l.b16 %v4995
      %v5060 = vunpack.c.l.b16 %v4996
      %v5061 = vunpack.c.l.b16 %v4997
      %v5062 = vunpack.c.l.b16 %v4998
      %v5063 = vunpack.c.l.b16 %v4999
      %v5064 = vunpack.c.l.b16 %v5000
      %v5065 = vunpack.c.l.b16 %v5001
      %v5066 = vpack.c.b16 %v5035, %v5034
      %v5067 = vpack.c.b16 %v5037, %v5036
      %v5068 = vpack.c.b16 %v5039, %v5038
      %v5069 = vpack.c.b16 %v5041, %v5040
      %v5070 = vpack.c.b16 %v5043, %v5042
      %v5071 = vpack.c.b16 %v5045, %v5044
      %v5072 = vpack.c.b16 %v5047, %v5046
      %v5073 = vpack.c.b16 %v5049, %v5048
      %v5074 = vpack.c.b16 %v5051, %v5050
      %v5075 = vpack.c.b16 %v5053, %v5052
      %v5076 = vpack.c.b16 %v5055, %v5054
      %v5077 = vpack.c.b16 %v5057, %v5056
      %v5078 = vpack.c.b16 %v5059, %v5058
      %v5079 = vpack.c.b16 %v5061, %v5060
      %v5080 = vpack.c.b16 %v5063, %v5062
      %v5081 = vpack.c.b16 %v5065, %v5064
      %5098 = vst [vmem:[#allocation4 + $0x30] sm:$0xff] %v5066
      %5099 = vst [vmem:[#allocation4 + $0x78] sm:$0xff] %v5067
      %5100 = vst [vmem:[#allocation4 + $0xc0] sm:$0xff] %v5068
      %5101 = vst [vmem:[#allocation4 + $0x108] sm:$0xff] %v5069
      %5102 = vst [vmem:[#allocation4 + $0x150] sm:$0xff] %v5070
      %5103 = vst [vmem:[#allocation4 + $0x198] sm:$0xff] %v5071
      %5104 = vst [vmem:[#allocation4 + $0x1e0] sm:$0xff] %v5072
      %5105 = vst [vmem:[#allocation4 + $0x228] sm:$0xff] %v5073
      %5106 = vst [vmem:[#allocation4 + $0x270] sm:$0xff] %v5074
      %5107 = vst [vmem:[#allocation4 + $0x2b8] sm:$0xff] %v5075
      %5108 = vst [vmem:[#allocation4 + $0x300] sm:$0xff] %v5076
      %5109 = vst [vmem:[#allocation4 + $0x348] sm:$0xff] %v5077
      %5110 = vst [vmem:[#allocation4 + $0x390] sm:$0xff] %v5078
      %5111 = vst [vmem:[#allocation4 + $0x3d8] sm:$0xff] %v5079
      %5112 = vst [vmem:[#allocation4 + $0x420] sm:$0xff] %v5080
      %5113 = vst [vmem:[#allocation4 + $0x468] sm:$0xff] %v5081
      %v5114 = vld [vmem:[%s4969] sm:$0xf]
      %v5115 = vld [vmem:[%s4969 + $0x4] sm:$0xf]
      %v5116 = vld [vmem:[%s4969 + $0x8] sm:$0x1]
      %v5117 = vld [vmem:[%s4969 + $0xc] sm:$0xf]
      %v5118 = vld [vmem:[%s4969 + $0x10] sm:$0xf]
      %v5119 = vld [vmem:[%s4969 + $0x14] sm:$0x1]
      %v5120 = vld [vmem:[%s4969 + $0x18] sm:$0xf]
      %v5121 = vld [vmem:[%s4969 + $0x1c] sm:$0xf]
      %v5122 = vld [vmem:[%s4969 + $0x20] sm:$0x1]
      %v5123 = vld [vmem:[%s4969 + $0x24] sm:$0xf]
      %v5124 = vld [vmem:[%s4969 + $0x28] sm:$0xf]
      %v5125 = vld [vmem:[%s4969 + $0x2c] sm:$0x1]
      %v5126 = vld [vmem:[%s4969 + $0x30] sm:$0xf]
      %v5127 = vld [vmem:[%s4969 + $0x34] sm:$0xf]
      %v5128 = vld [vmem:[%s4969 + $0x38] sm:$0x1]
      %v5129 = vld [vmem:[%s4969 + $0x3c] sm:$0xf]
      %v5130 = vld [vmem:[%s4969 + $0x40] sm:$0xf]
      %v5131 = vld [vmem:[%s4969 + $0x44] sm:$0x1]
      %v5132 = vld [vmem:[%s4969 + $0x48] sm:$0xf]
      %v5133 = vld [vmem:[%s4969 + $0x4c] sm:$0xf]
      %v5134 = vld [vmem:[%s4969 + $0x50] sm:$0x1]
      %v5135 = vld [vmem:[%s4969 + $0x54] sm:$0xf]
      %v5136 = vld [vmem:[%s4969 + $0x58] sm:$0xf]
      %v5137 = vld [vmem:[%s4969 + $0x5c] sm:$0x1]
      %v5138 = vld [vmem:[%s4969 + $0x60] sm:$0xf]
      %v5139 = vld [vmem:[%s4969 + $0x64] sm:$0xf]
      %v5140 = vld [vmem:[%s4969 + $0x68] sm:$0x1]
      %v5141 = vld [vmem:[%s4969 + $0x6c] sm:$0xf]
      %v5142 = vld [vmem:[%s4969 + $0x70] sm:$0xf]
      %v5143 = vld [vmem:[%s4969 + $0x74] sm:$0x1]
      %v5144 = vld [vmem:[%s4969 + $0x78] sm:$0xf]
      %v5145 = vld [vmem:[%s4969 + $0x7c] sm:$0xf]
      %v5146 = vld [vmem:[%s4969 + $0x80] sm:$0x1]
      %v5147 = vld [vmem:[%s4969 + $0x84] sm:$0xf]
      %v5148 = vld [vmem:[%s4969 + $0x88] sm:$0xf]
      %v5149 = vld [vmem:[%s4969 + $0x8c] sm:$0x1]
      %v5150 = vld [vmem:[%s4969 + $0x90] sm:$0xf]
      %v5151 = vld [vmem:[%s4969 + $0x94] sm:$0xf]
      %v5152 = vld [vmem:[%s4969 + $0x98] sm:$0x1]
      %v5153 = vld [vmem:[%s4969 + $0x9c] sm:$0xf]
      %v5154 = vld [vmem:[%s4969 + $0xa0] sm:$0xf]
      %v5155 = vld [vmem:[%s4969 + $0xa4] sm:$0x1]
      %v5156 = vld [vmem:[%s4969 + $0xa8] sm:$0xf]
      %v5157 = vld [vmem:[%s4969 + $0xac] sm:$0xf]
      %v5158 = vld [vmem:[%s4969 + $0xb0] sm:$0x1]
      %v5159 = vld [vmem:[%s4969 + $0xb4] sm:$0xf]
      %v5160 = vld [vmem:[%s4969 + $0xb8] sm:$0xf]
      %v5161 = vld [vmem:[%s4969 + $0xbc] sm:$0x1]
      %v5163 = vshrl.u32 %v5114, 16
      %v5165 = vrot.slane %v5163, 4
      %v5166 = vshll.u32 %v5114, 16
      %v5168 = vrot.slane %v5166, 5
      %v5169 = vor.u32 %v5165, %v5168
      %v5170 = vrot.slane %v5169, 4
      %v5172 = vshll.u32 %v5115, 16
      %v5174 = vrot.slane %v5172, 5
      %v5175 = vsel %vm3269, %v5170, %v5174
      %v5176 = vshrl.u32 %v5115, 16
      %v5178 = vrot.slane %v5176, 4
      %v5179 = vor.u32 %v5178, %v5174
      %v5180 = vrot.slane %v5179, 4
      %v5182 = vshll.u32 %v5116, 16
      %v5184 = vrot.slane %v5182, 5
      %v5185 = vsel %vm3269, %v5180, %v5184
      %v5187 = vshrl.u32 %v5117, 16
      %v5189 = vrot.slane %v5187, 4
      %v5190 = vshll.u32 %v5117, 16
      %v5192 = vrot.slane %v5190, 5
      %v5193 = vor.u32 %v5189, %v5192
      %v5194 = vrot.slane %v5193, 4
      %v5196 = vshll.u32 %v5118, 16
      %v5198 = vrot.slane %v5196, 5
      %v5199 = vsel %vm3269, %v5194, %v5198
      %v5200 = vshrl.u32 %v5118, 16
      %v5202 = vrot.slane %v5200, 4
      %v5203 = vor.u32 %v5202, %v5198
      %v5204 = vrot.slane %v5203, 4
      %v5206 = vshll.u32 %v5119, 16
      %v5208 = vrot.slane %v5206, 5
      %v5209 = vsel %vm3269, %v5204, %v5208
      %v5211 = vshrl.u32 %v5120, 16
      %v5213 = vrot.slane %v5211, 4
      %v5214 = vshll.u32 %v5120, 16
      %v5216 = vrot.slane %v5214, 5
      %v5217 = vor.u32 %v5213, %v5216
      %v5218 = vrot.slane %v5217, 4
      %v5220 = vshll.u32 %v5121, 16
      %v5222 = vrot.slane %v5220, 5
      %v5223 = vsel %vm3269, %v5218, %v5222
      %v5224 = vshrl.u32 %v5121, 16
      %v5226 = vrot.slane %v5224, 4
      %v5227 = vor.u32 %v5226, %v5222
      %v5228 = vrot.slane %v5227, 4
      %v5230 = vshll.u32 %v5122, 16
      %v5232 = vrot.slane %v5230, 5
      %v5233 = vsel %vm3269, %v5228, %v5232
      %v5235 = vshrl.u32 %v5123, 16
      %v5237 = vrot.slane %v5235, 4
      %v5238 = vshll.u32 %v5123, 16
      %v5240 = vrot.slane %v5238, 5
      %v5241 = vor.u32 %v5237, %v5240
      %v5242 = vrot.slane %v5241, 4
      %v5244 = vshll.u32 %v5124, 16
      %v5246 = vrot.slane %v5244, 5
      %v5247 = vsel %vm3269, %v5242, %v5246
      %v5248 = vshrl.u32 %v5124, 16
      %v5250 = vrot.slane %v5248, 4
      %v5251 = vor.u32 %v5250, %v5246
      %v5252 = vrot.slane %v5251, 4
      %v5254 = vshll.u32 %v5125, 16
      %v5256 = vrot.slane %v5254, 5
      %v5257 = vsel %vm3269, %v5252, %v5256
      %v5259 = vshrl.u32 %v5126, 16
      %v5261 = vrot.slane %v5259, 4
      %v5262 = vshll.u32 %v5126, 16
      %v5264 = vrot.slane %v5262, 5
      %v5265 = vor.u32 %v5261, %v5264
      %v5266 = vrot.slane %v5265, 4
      %v5268 = vshll.u32 %v5127, 16
      %v5270 = vrot.slane %v5268, 5
      %v5271 = vsel %vm3269, %v5266, %v5270
      %v5272 = vshrl.u32 %v5127, 16
      %v5274 = vrot.slane %v5272, 4
      %v5275 = vor.u32 %v5274, %v5270
      %v5276 = vrot.slane %v5275, 4
      %v5278 = vshll.u32 %v5128, 16
      %v5280 = vrot.slane %v5278, 5
      %v5281 = vsel %vm3269, %v5276, %v5280
      %v5283 = vshrl.u32 %v5129, 16
      %v5285 = vrot.slane %v5283, 4
      %v5286 = vshll.u32 %v5129, 16
      %v5288 = vrot.slane %v5286, 5
      %v5289 = vor.u32 %v5285, %v5288
      %v5290 = vrot.slane %v5289, 4
      %v5292 = vshll.u32 %v5130, 16
      %v5294 = vrot.slane %v5292, 5
      %v5295 = vsel %vm3269, %v5290, %v5294
      %v5296 = vshrl.u32 %v5130, 16
      %v5298 = vrot.slane %v5296, 4
      %v5299 = vor.u32 %v5298, %v5294
      %v5300 = vrot.slane %v5299, 4
      %v5302 = vshll.u32 %v5131, 16
      %v5304 = vrot.slane %v5302, 5
      %v5305 = vsel %vm3269, %v5300, %v5304
      %v5307 = vshrl.u32 %v5132, 16
      %v5309 = vrot.slane %v5307, 4
      %v5310 = vshll.u32 %v5132, 16
      %v5312 = vrot.slane %v5310, 5
      %v5313 = vor.u32 %v5309, %v5312
      %v5314 = vrot.slane %v5313, 4
      %v5316 = vshll.u32 %v5133, 16
      %v5318 = vrot.slane %v5316, 5
      %v5319 = vsel %vm3269, %v5314, %v5318
      %v5320 = vshrl.u32 %v5133, 16
      %v5322 = vrot.slane %v5320, 4
      %v5323 = vor.u32 %v5322, %v5318
      %v5324 = vrot.slane %v5323, 4
      %v5326 = vshll.u32 %v5134, 16
      %v5328 = vrot.slane %v5326, 5
      %v5329 = vsel %vm3269, %v5324, %v5328
      %v5331 = vshrl.u32 %v5135, 16
      %v5333 = vrot.slane %v5331, 4
      %v5334 = vshll.u32 %v5135, 16
      %v5336 = vrot.slane %v5334, 5
      %v5337 = vor.u32 %v5333, %v5336
      %v5338 = vrot.slane %v5337, 4
      %v5340 = vshll.u32 %v5136, 16
      %v5342 = vrot.slane %v5340, 5
      %v5343 = vsel %vm3269, %v5338, %v5342
      %v5344 = vshrl.u32 %v5136, 16
      %v5346 = vrot.slane %v5344, 4
      %v5347 = vor.u32 %v5346, %v5342
      %v5348 = vrot.slane %v5347, 4
      %v5350 = vshll.u32 %v5137, 16
      %v5352 = vrot.slane %v5350, 5
      %v5353 = vsel %vm3269, %v5348, %v5352
      %v5355 = vshrl.u32 %v5138, 16
      %v5357 = vrot.slane %v5355, 4
      %v5358 = vshll.u32 %v5138, 16
      %v5360 = vrot.slane %v5358, 5
      %v5361 = vor.u32 %v5357, %v5360
      %v5362 = vrot.slane %v5361, 4
      %v5364 = vshll.u32 %v5139, 16
      %v5366 = vrot.slane %v5364, 5
      %v5367 = vsel %vm3269, %v5362, %v5366
      %v5368 = vshrl.u32 %v5139, 16
      %v5370 = vrot.slane %v5368, 4
      %v5371 = vor.u32 %v5370, %v5366
      %v5372 = vrot.slane %v5371, 4
      %v5374 = vshll.u32 %v5140, 16
      %v5376 = vrot.slane %v5374, 5
      %v5377 = vsel %vm3269, %v5372, %v5376
      %v5379 = vshrl.u32 %v5141, 16
      %v5381 = vrot.slane %v5379, 4
      %v5382 = vshll.u32 %v5141, 16
      %v5384 = vrot.slane %v5382, 5
      %v5385 = vor.u32 %v5381, %v5384
      %v5386 = vrot.slane %v5385, 4
      %v5388 = vshll.u32 %v5142, 16
      %v5390 = vrot.slane %v5388, 5
      %v5391 = vsel %vm3269, %v5386, %v5390
      %v5392 = vshrl.u32 %v5142, 16
      %v5394 = vrot.slane %v5392, 4
      %v5395 = vor.u32 %v5394, %v5390
      %v5396 = vrot.slane %v5395, 4
      %v5398 = vshll.u32 %v5143, 16
      %v5400 = vrot.slane %v5398, 5
      %v5401 = vsel %vm3269, %v5396, %v5400
      %v5403 = vshrl.u32 %v5144, 16
      %v5405 = vrot.slane %v5403, 4
      %v5406 = vshll.u32 %v5144, 16
      %v5408 = vrot.slane %v5406, 5
      %v5409 = vor.u32 %v5405, %v5408
      %v5410 = vrot.slane %v5409, 4
      %v5412 = vshll.u32 %v5145, 16
      %v5414 = vrot.slane %v5412, 5
      %v5415 = vsel %vm3269, %v5410, %v5414
      %v5416 = vshrl.u32 %v5145, 16
      %v5418 = vrot.slane %v5416, 4
      %v5419 = vor.u32 %v5418, %v5414
      %v5420 = vrot.slane %v5419, 4
      %v5422 = vshll.u32 %v5146, 16
      %v5424 = vrot.slane %v5422, 5
      %v5425 = vsel %vm3269, %v5420, %v5424
      %v5427 = vshrl.u32 %v5147, 16
      %v5429 = vrot.slane %v5427, 4
      %v5430 = vshll.u32 %v5147, 16
      %v5432 = vrot.slane %v5430, 5
      %v5433 = vor.u32 %v5429, %v5432
      %v5434 = vrot.slane %v5433, 4
      %v5436 = vshll.u32 %v5148, 16
      %v5438 = vrot.slane %v5436, 5
      %v5439 = vsel %vm3269, %v5434, %v5438
      %v5440 = vshrl.u32 %v5148, 16
      %v5442 = vrot.slane %v5440, 4
      %v5443 = vor.u32 %v5442, %v5438
      %v5444 = vrot.slane %v5443, 4
      %v5446 = vshll.u32 %v5149, 16
      %v5448 = vrot.slane %v5446, 5
      %v5449 = vsel %vm3269, %v5444, %v5448
      %v5451 = vshrl.u32 %v5150, 16
      %v5453 = vrot.slane %v5451, 4
      %v5454 = vshll.u32 %v5150, 16
      %v5456 = vrot.slane %v5454, 5
      %v5457 = vor.u32 %v5453, %v5456
      %v5458 = vrot.slane %v5457, 4
      %v5460 = vshll.u32 %v5151, 16
      %v5462 = vrot.slane %v5460, 5
      %v5463 = vsel %vm3269, %v5458, %v5462
      %v5464 = vshrl.u32 %v5151, 16
      %v5466 = vrot.slane %v5464, 4
      %v5467 = vor.u32 %v5466, %v5462
      %v5468 = vrot.slane %v5467, 4
      %v5470 = vshll.u32 %v5152, 16
      %v5472 = vrot.slane %v5470, 5
      %v5473 = vsel %vm3269, %v5468, %v5472
      %v5475 = vshrl.u32 %v5153, 16
      %v5477 = vrot.slane %v5475, 4
      %v5478 = vshll.u32 %v5153, 16
      %v5480 = vrot.slane %v5478, 5
      %v5481 = vor.u32 %v5477, %v5480
      %v5482 = vrot.slane %v5481, 4
      %v5484 = vshll.u32 %v5154, 16
      %v5486 = vrot.slane %v5484, 5
      %v5487 = vsel %vm3269, %v5482, %v5486
      %v5488 = vshrl.u32 %v5154, 16
      %v5490 = vrot.slane %v5488, 4
      %v5491 = vor.u32 %v5490, %v5486
      %v5492 = vrot.slane %v5491, 4
      %v5494 = vshll.u32 %v5155, 16
      %v5496 = vrot.slane %v5494, 5
      %v5497 = vsel %vm3269, %v5492, %v5496
      %v5499 = vshrl.u32 %v5156, 16
      %v5501 = vrot.slane %v5499, 4
      %v5502 = vshll.u32 %v5156, 16
      %v5504 = vrot.slane %v5502, 5
      %v5505 = vor.u32 %v5501, %v5504
      %v5506 = vrot.slane %v5505, 4
      %v5508 = vshll.u32 %v5157, 16
      %v5510 = vrot.slane %v5508, 5
      %v5511 = vsel %vm3269, %v5506, %v5510
      %v5512 = vshrl.u32 %v5157, 16
      %v5514 = vrot.slane %v5512, 4
      %v5515 = vor.u32 %v5514, %v5510
      %v5516 = vrot.slane %v5515, 4
      %v5518 = vshll.u32 %v5158, 16
      %v5520 = vrot.slane %v5518, 5
      %v5521 = vsel %vm3269, %v5516, %v5520
      %v5523 = vshrl.u32 %v5159, 16
      %v5525 = vrot.slane %v5523, 4
      %v5526 = vshll.u32 %v5159, 16
      %v5528 = vrot.slane %v5526, 5
      %v5529 = vor.u32 %v5525, %v5528
      %v5530 = vrot.slane %v5529, 4
      %v5532 = vshll.u32 %v5160, 16
      %v5534 = vrot.slane %v5532, 5
      %v5535 = vsel %vm3269, %v5530, %v5534
      %v5536 = vshrl.u32 %v5160, 16
      %v5538 = vrot.slane %v5536, 4
      %v5539 = vor.u32 %v5538, %v5534
      %v5540 = vrot.slane %v5539, 4
      %v5542 = vshll.u32 %v5161, 16
      %v5544 = vrot.slane %v5542, 5
      %v5545 = vsel %vm3269, %v5540, %v5544
      %v5546 = vunpack.c.l.b16 %v5175
      %v5547 = vunpack.c.l.b16 %v5185
      %v5548 = vunpack.c.l.b16 %v5199
      %v5549 = vunpack.c.l.b16 %v5209
      %v5550 = vunpack.c.l.b16 %v5223
      %v5551 = vunpack.c.l.b16 %v5233
      %v5552 = vunpack.c.l.b16 %v5247
      %v5553 = vunpack.c.l.b16 %v5257
      %v5554 = vunpack.c.l.b16 %v5271
      %v5555 = vunpack.c.l.b16 %v5281
      %v5556 = vunpack.c.l.b16 %v5295
      %v5557 = vunpack.c.l.b16 %v5305
      %v5558 = vunpack.c.l.b16 %v5319
      %v5559 = vunpack.c.l.b16 %v5329
      %v5560 = vunpack.c.l.b16 %v5343
      %v5561 = vunpack.c.l.b16 %v5353
      %v5562 = vunpack.c.l.b16 %v5367
      %v5563 = vunpack.c.l.b16 %v5377
      %v5564 = vunpack.c.l.b16 %v5391
      %v5565 = vunpack.c.l.b16 %v5401
      %v5566 = vunpack.c.l.b16 %v5415
      %v5567 = vunpack.c.l.b16 %v5425
      %v5568 = vunpack.c.l.b16 %v5439
      %v5569 = vunpack.c.l.b16 %v5449
      %v5570 = vunpack.c.l.b16 %v5463
      %v5571 = vunpack.c.l.b16 %v5473
      %v5572 = vunpack.c.l.b16 %v5487
      %v5573 = vunpack.c.l.b16 %v5497
      %v5574 = vunpack.c.l.b16 %v5511
      %v5575 = vunpack.c.l.b16 %v5521
      %v5576 = vunpack.c.l.b16 %v5535
      %v5577 = vunpack.c.l.b16 %v5545
      %v5578 = vpack.c.b16 %v5547, %v5546
      %v5579 = vpack.c.b16 %v5549, %v5548
      %v5580 = vpack.c.b16 %v5551, %v5550
      %v5581 = vpack.c.b16 %v5553, %v5552
      %v5582 = vpack.c.b16 %v5555, %v5554
      %v5583 = vpack.c.b16 %v5557, %v5556
      %v5584 = vpack.c.b16 %v5559, %v5558
      %v5585 = vpack.c.b16 %v5561, %v5560
      %v5586 = vpack.c.b16 %v5563, %v5562
      %v5587 = vpack.c.b16 %v5565, %v5564
      %v5588 = vpack.c.b16 %v5567, %v5566
      %v5589 = vpack.c.b16 %v5569, %v5568
      %v5590 = vpack.c.b16 %v5571, %v5570
      %v5591 = vpack.c.b16 %v5573, %v5572
      %v5592 = vpack.c.b16 %v5575, %v5574
      %v5593 = vpack.c.b16 %v5577, %v5576
      %5610 = vst [vmem:[#allocation4 + $0x38] sm:$0xff] %v5578
      %5611 = vst [vmem:[#allocation4 + $0x80] sm:$0xff] %v5579
      %5612 = vst [vmem:[#allocation4 + $0xc8] sm:$0xff] %v5580
      %5613 = vst [vmem:[#allocation4 + $0x110] sm:$0xff] %v5581
      %5614 = vst [vmem:[#allocation4 + $0x158] sm:$0xff] %v5582
      %5615 = vst [vmem:[#allocation4 + $0x1a0] sm:$0xff] %v5583
      %5616 = vst [vmem:[#allocation4 + $0x1e8] sm:$0xff] %v5584
      %5617 = vst [vmem:[#allocation4 + $0x230] sm:$0xff] %v5585
      %5618 = vst [vmem:[#allocation4 + $0x278] sm:$0xff] %v5586
      %5619 = vst [vmem:[#allocation4 + $0x2c0] sm:$0xff] %v5587
      %5620 = vst [vmem:[#allocation4 + $0x308] sm:$0xff] %v5588
      %5621 = vst [vmem:[#allocation4 + $0x350] sm:$0xff] %v5589
      %5622 = vst [vmem:[#allocation4 + $0x398] sm:$0xff] %v5590
      %5623 = vst [vmem:[#allocation4 + $0x3e0] sm:$0xff] %v5591
      %5624 = vst [vmem:[#allocation4 + $0x428] sm:$0xff] %v5592
      %5625 = vst [vmem:[#allocation4 + $0x470] sm:$0xff] %v5593
      %v5626 = vld [vmem:[%s4969] sm:$0xe]
      %v5627 = vld [vmem:[%s4969 + $0x4] sm:$0xf]
      %v5628 = vld [vmem:[%s4969 + $0x8] sm:$0x1]
      %v5629 = vld [vmem:[%s4969 + $0xc] sm:$0xe]
      %v5630 = vld [vmem:[%s4969 + $0x10] sm:$0xf]
      %v5631 = vld [vmem:[%s4969 + $0x14] sm:$0x1]
      %v5632 = vld [vmem:[%s4969 + $0x18] sm:$0xe]
      %v5633 = vld [vmem:[%s4969 + $0x1c] sm:$0xf]
      %v5634 = vld [vmem:[%s4969 + $0x20] sm:$0x1]
      %v5635 = vld [vmem:[%s4969 + $0x24] sm:$0xe]
      %v5636 = vld [vmem:[%s4969 + $0x28] sm:$0xf]
      %v5637 = vld [vmem:[%s4969 + $0x2c] sm:$0x1]
      %v5638 = vld [vmem:[%s4969 + $0x30] sm:$0xe]
      %v5639 = vld [vmem:[%s4969 + $0x34] sm:$0xf]
      %v5640 = vld [vmem:[%s4969 + $0x38] sm:$0x1]
      %v5641 = vld [vmem:[%s4969 + $0x3c] sm:$0xe]
      %v5642 = vld [vmem:[%s4969 + $0x40] sm:$0xf]
      %v5643 = vld [vmem:[%s4969 + $0x44] sm:$0x1]
      %v5644 = vld [vmem:[%s4969 + $0x48] sm:$0xe]
      %v5645 = vld [vmem:[%s4969 + $0x4c] sm:$0xf]
      %v5646 = vld [vmem:[%s4969 + $0x50] sm:$0x1]
      %v5647 = vld [vmem:[%s4969 + $0x54] sm:$0xe]
      %v5648 = vld [vmem:[%s4969 + $0x58] sm:$0xf]
      %v5649 = vld [vmem:[%s4969 + $0x5c] sm:$0x1]
      %v5650 = vld [vmem:[%s4969 + $0x60] sm:$0xe]
      %v5651 = vld [vmem:[%s4969 + $0x64] sm:$0xf]
      %v5652 = vld [vmem:[%s4969 + $0x68] sm:$0x1]
      %v5653 = vld [vmem:[%s4969 + $0x6c] sm:$0xe]
      %v5654 = vld [vmem:[%s4969 + $0x70] sm:$0xf]
      %v5655 = vld [vmem:[%s4969 + $0x74] sm:$0x1]
      %v5656 = vld [vmem:[%s4969 + $0x78] sm:$0xe]
      %v5657 = vld [vmem:[%s4969 + $0x7c] sm:$0xf]
      %v5658 = vld [vmem:[%s4969 + $0x80] sm:$0x1]
      %v5659 = vld [vmem:[%s4969 + $0x84] sm:$0xe]
      %v5660 = vld [vmem:[%s4969 + $0x88] sm:$0xf]
      %v5661 = vld [vmem:[%s4969 + $0x8c] sm:$0x1]
      %v5662 = vld [vmem:[%s4969 + $0x90] sm:$0xe]
      %v5663 = vld [vmem:[%s4969 + $0x94] sm:$0xf]
      %v5664 = vld [vmem:[%s4969 + $0x98] sm:$0x1]
      %v5665 = vld [vmem:[%s4969 + $0x9c] sm:$0xe]
      %v5666 = vld [vmem:[%s4969 + $0xa0] sm:$0xf]
      %v5667 = vld [vmem:[%s4969 + $0xa4] sm:$0x1]
      %v5668 = vld [vmem:[%s4969 + $0xa8] sm:$0xe]
      %v5669 = vld [vmem:[%s4969 + $0xac] sm:$0xf]
      %v5670 = vld [vmem:[%s4969 + $0xb0] sm:$0x1]
      %v5671 = vld [vmem:[%s4969 + $0xb4] sm:$0xe]
      %v5672 = vld [vmem:[%s4969 + $0xb8] sm:$0xf]
      %v5673 = vld [vmem:[%s4969 + $0xbc] sm:$0x1]
      %v5722 = vrot.slane %v5626, 5
      %v5723 = vrot.slane %v5722, 4
      %v5724 = vrot.slane %v5627, 5
      %v5725 = vsel %vm3832, %v5723, %v5724
      %v5726 = vrot.slane %v5724, 4
      %v5727 = vrot.slane %v5628, 5
      %v5728 = vsel %vm3832, %v5726, %v5727
      %v5729 = vrot.slane %v5629, 5
      %v5730 = vrot.slane %v5729, 4
      %v5731 = vrot.slane %v5630, 5
      %v5732 = vsel %vm3832, %v5730, %v5731
      %v5733 = vrot.slane %v5731, 4
      %v5734 = vrot.slane %v5631, 5
      %v5735 = vsel %vm3832, %v5733, %v5734
      %v5736 = vrot.slane %v5632, 5
      %v5737 = vrot.slane %v5736, 4
      %v5738 = vrot.slane %v5633, 5
      %v5739 = vsel %vm3832, %v5737, %v5738
      %v5740 = vrot.slane %v5738, 4
      %v5741 = vrot.slane %v5634, 5
      %v5742 = vsel %vm3832, %v5740, %v5741
      %v5743 = vrot.slane %v5635, 5
      %v5744 = vrot.slane %v5743, 4
      %v5745 = vrot.slane %v5636, 5
      %v5746 = vsel %vm3832, %v5744, %v5745
      %v5747 = vrot.slane %v5745, 4
      %v5748 = vrot.slane %v5637, 5
      %v5749 = vsel %vm3832, %v5747, %v5748
      %v5750 = vrot.slane %v5638, 5
      %v5751 = vrot.slane %v5750, 4
      %v5752 = vrot.slane %v5639, 5
      %v5753 = vsel %vm3832, %v5751, %v5752
      %v5754 = vrot.slane %v5752, 4
      %v5755 = vrot.slane %v5640, 5
      %v5756 = vsel %vm3832, %v5754, %v5755
      %v5757 = vrot.slane %v5641, 5
      %v5758 = vrot.slane %v5757, 4
      %v5759 = vrot.slane %v5642, 5
      %v5760 = vsel %vm3832, %v5758, %v5759
      %v5761 = vrot.slane %v5759, 4
      %v5762 = vrot.slane %v5643, 5
      %v5763 = vsel %vm3832, %v5761, %v5762
      %v5764 = vrot.slane %v5644, 5
      %v5765 = vrot.slane %v5764, 4
      %v5766 = vrot.slane %v5645, 5
      %v5767 = vsel %vm3832, %v5765, %v5766
      %v5768 = vrot.slane %v5766, 4
      %v5769 = vrot.slane %v5646, 5
      %v5770 = vsel %vm3832, %v5768, %v5769
      %v5771 = vrot.slane %v5647, 5
      %v5772 = vrot.slane %v5771, 4
      %v5773 = vrot.slane %v5648, 5
      %v5774 = vsel %vm3832, %v5772, %v5773
      %v5775 = vrot.slane %v5773, 4
      %v5776 = vrot.slane %v5649, 5
      %v5777 = vsel %vm3832, %v5775, %v5776
      %v5778 = vrot.slane %v5650, 5
      %v5779 = vrot.slane %v5778, 4
      %v5780 = vrot.slane %v5651, 5
      %v5781 = vsel %vm3832, %v5779, %v5780
      %v5782 = vrot.slane %v5780, 4
      %v5783 = vrot.slane %v5652, 5
      %v5784 = vsel %vm3832, %v5782, %v5783
      %v5785 = vrot.slane %v5653, 5
      %v5786 = vrot.slane %v5785, 4
      %v5787 = vrot.slane %v5654, 5
      %v5788 = vsel %vm3832, %v5786, %v5787
      %v5789 = vrot.slane %v5787, 4
      %v5790 = vrot.slane %v5655, 5
      %v5791 = vsel %vm3832, %v5789, %v5790
      %v5792 = vrot.slane %v5656, 5
      %v5793 = vrot.slane %v5792, 4
      %v5794 = vrot.slane %v5657, 5
      %v5795 = vsel %vm3832, %v5793, %v5794
      %v5796 = vrot.slane %v5794, 4
      %v5797 = vrot.slane %v5658, 5
      %v5798 = vsel %vm3832, %v5796, %v5797
      %v5799 = vrot.slane %v5659, 5
      %v5800 = vrot.slane %v5799, 4
      %v5801 = vrot.slane %v5660, 5
      %v5802 = vsel %vm3832, %v5800, %v5801
      %v5803 = vrot.slane %v5801, 4
      %v5804 = vrot.slane %v5661, 5
      %v5805 = vsel %vm3832, %v5803, %v5804
      %v5806 = vrot.slane %v5662, 5
      %v5807 = vrot.slane %v5806, 4
      %v5808 = vrot.slane %v5663, 5
      %v5809 = vsel %vm3832, %v5807, %v5808
      %v5810 = vrot.slane %v5808, 4
      %v5811 = vrot.slane %v5664, 5
      %v5812 = vsel %vm3832, %v5810, %v5811
      %v5813 = vrot.slane %v5665, 5
      %v5814 = vrot.slane %v5813, 4
      %v5815 = vrot.slane %v5666, 5
      %v5816 = vsel %vm3832, %v5814, %v5815
      %v5817 = vrot.slane %v5815, 4
      %v5818 = vrot.slane %v5667, 5
      %v5819 = vsel %vm3832, %v5817, %v5818
      %v5820 = vrot.slane %v5668, 5
      %v5821 = vrot.slane %v5820, 4
      %v5822 = vrot.slane %v5669, 5
      %v5823 = vsel %vm3832, %v5821, %v5822
      %v5824 = vrot.slane %v5822, 4
      %v5825 = vrot.slane %v5670, 5
      %v5826 = vsel %vm3832, %v5824, %v5825
      %v5827 = vrot.slane %v5671, 5
      %v5828 = vrot.slane %v5827, 4
      %v5829 = vrot.slane %v5672, 5
      %v5830 = vsel %vm3832, %v5828, %v5829
      %v5831 = vrot.slane %v5829, 4
      %v5832 = vrot.slane %v5673, 5
      %v5833 = vsel %vm3832, %v5831, %v5832
      %v5834 = vunpack.c.l.b16 %v5725
      %v5835 = vunpack.c.l.b16 %v5728
      %v5836 = vunpack.c.l.b16 %v5732
      %v5837 = vunpack.c.l.b16 %v5735
      %v5838 = vunpack.c.l.b16 %v5739
      %v5839 = vunpack.c.l.b16 %v5742
      %v5840 = vunpack.c.l.b16 %v5746
      %v5841 = vunpack.c.l.b16 %v5749
      %v5842 = vunpack.c.l.b16 %v5753
      %v5843 = vunpack.c.l.b16 %v5756
      %v5844 = vunpack.c.l.b16 %v5760
      %v5845 = vunpack.c.l.b16 %v5763
      %v5846 = vunpack.c.l.b16 %v5767
      %v5847 = vunpack.c.l.b16 %v5770
      %v5848 = vunpack.c.l.b16 %v5774
      %v5849 = vunpack.c.l.b16 %v5777
      %v5850 = vunpack.c.l.b16 %v5781
      %v5851 = vunpack.c.l.b16 %v5784
      %v5852 = vunpack.c.l.b16 %v5788
      %v5853 = vunpack.c.l.b16 %v5791
      %v5854 = vunpack.c.l.b16 %v5795
      %v5855 = vunpack.c.l.b16 %v5798
      %v5856 = vunpack.c.l.b16 %v5802
      %v5857 = vunpack.c.l.b16 %v5805
      %v5858 = vunpack.c.l.b16 %v5809
      %v5859 = vunpack.c.l.b16 %v5812
      %v5860 = vunpack.c.l.b16 %v5816
      %v5861 = vunpack.c.l.b16 %v5819
      %v5862 = vunpack.c.l.b16 %v5823
      %v5863 = vunpack.c.l.b16 %v5826
      %v5864 = vunpack.c.l.b16 %v5830
      %v5865 = vunpack.c.l.b16 %v5833
      %v5866 = vpack.c.b16 %v5835, %v5834
      %v5867 = vpack.c.b16 %v5837, %v5836
      %v5868 = vpack.c.b16 %v5839, %v5838
      %v5869 = vpack.c.b16 %v5841, %v5840
      %v5870 = vpack.c.b16 %v5843, %v5842
      %v5871 = vpack.c.b16 %v5845, %v5844
      %v5872 = vpack.c.b16 %v5847, %v5846
      %v5873 = vpack.c.b16 %v5849, %v5848
      %v5874 = vpack.c.b16 %v5851, %v5850
      %v5875 = vpack.c.b16 %v5853, %v5852
      %v5876 = vpack.c.b16 %v5855, %v5854
      %v5877 = vpack.c.b16 %v5857, %v5856
      %v5878 = vpack.c.b16 %v5859, %v5858
      %v5879 = vpack.c.b16 %v5861, %v5860
      %v5880 = vpack.c.b16 %v5863, %v5862
      %v5881 = vpack.c.b16 %v5865, %v5864
      %5898 = vst [vmem:[#allocation4 + $0x40] sm:$0xff] %v5866
      %5899 = vst [vmem:[#allocation4 + $0x88] sm:$0xff] %v5867
      %5900 = vst [vmem:[#allocation4 + $0xd0] sm:$0xff] %v5868
      %5901 = vst [vmem:[#allocation4 + $0x118] sm:$0xff] %v5869
      %5902 = vst [vmem:[#allocation4 + $0x160] sm:$0xff] %v5870
      %5903 = vst [vmem:[#allocation4 + $0x1a8] sm:$0xff] %v5871
      %5904 = vst [vmem:[#allocation4 + $0x1f0] sm:$0xff] %v5872
      %5905 = vst [vmem:[#allocation4 + $0x238] sm:$0xff] %v5873
      %5906 = vst [vmem:[#allocation4 + $0x280] sm:$0xff] %v5874
      %5907 = vst [vmem:[#allocation4 + $0x2c8] sm:$0xff] %v5875
      %5908 = vst [vmem:[#allocation4 + $0x310] sm:$0xff] %v5876
      %5909 = vst [vmem:[#allocation4 + $0x358] sm:$0xff] %v5877
      %5910 = vst [vmem:[#allocation4 + $0x3a0] sm:$0xff] %v5878
      %5911 = vst [vmem:[#allocation4 + $0x3e8] sm:$0xff] %v5879
      %5912 = vst [vmem:[#allocation4 + $0x430] sm:$0xff] %v5880
      %5913 = vst [vmem:[#allocation4 + $0x478] sm:$0xff] %v5881
      %v5914 = vld [vmem:[#allocation4] sm:$0xff]
      %v5915 = vld [vmem:[#allocation4 + $0x8] sm:$0xff]
      %v5916 = vld [vmem:[#allocation4 + $0x10] sm:$0xff]
      %v5917 = vld [vmem:[#allocation4 + $0x18] sm:$0xff]
      %v5918 = vld [vmem:[#allocation4 + $0x20] sm:$0xff]
      %v5919 = vld [vmem:[#allocation4 + $0x28] sm:$0xff]
      %v5920 = vld [vmem:[#allocation4 + $0x30] sm:$0xff]
      %v5921 = vld [vmem:[#allocation4 + $0x38] sm:$0xff]
      %v5922 = vld [vmem:[#allocation4 + $0x40] sm:$0xff]
      %v5923 = vld [vmem:[#allocation4 + $0x48] sm:$0xff]
      %v5924 = vld [vmem:[#allocation4 + $0x50] sm:$0xff]
      %v5925 = vld [vmem:[#allocation4 + $0x58] sm:$0xff]
      %v5926 = vld [vmem:[#allocation4 + $0x60] sm:$0xff]
      %v5927 = vld [vmem:[#allocation4 + $0x68] sm:$0xff]
      %v5928 = vld [vmem:[#allocation4 + $0x70] sm:$0xff]
      %v5929 = vld [vmem:[#allocation4 + $0x78] sm:$0xff]
      %v5930 = vld [vmem:[#allocation4 + $0x80] sm:$0xff]
      %v5931 = vld [vmem:[#allocation4 + $0x88] sm:$0xff]
      %v5932 = vld [vmem:[#allocation4 + $0x90] sm:$0xff]
      %v5933 = vld [vmem:[#allocation4 + $0x98] sm:$0xff]
      %v5934 = vld [vmem:[#allocation4 + $0xa0] sm:$0xff]
      %v5935 = vld [vmem:[#allocation4 + $0xa8] sm:$0xff]
      %v5936 = vld [vmem:[#allocation4 + $0xb0] sm:$0xff]
      %v5937 = vld [vmem:[#allocation4 + $0xb8] sm:$0xff]
      %v5938 = vld [vmem:[#allocation4 + $0xc0] sm:$0xff]
      %v5939 = vld [vmem:[#allocation4 + $0xc8] sm:$0xff]
      %v5940 = vld [vmem:[#allocation4 + $0xd0] sm:$0xff]
      %v5941 = vld [vmem:[#allocation4 + $0xd8] sm:$0xff]
      %v5942 = vld [vmem:[#allocation4 + $0xe0] sm:$0xff]
      %v5943 = vld [vmem:[#allocation4 + $0xe8] sm:$0xff]
      %v5944 = vld [vmem:[#allocation4 + $0xf0] sm:$0xff]
      %v5945 = vld [vmem:[#allocation4 + $0xf8] sm:$0xff]
      %v5946 = vld [vmem:[#allocation4 + $0x100] sm:$0xff]
      %v5947 = vld [vmem:[#allocation4 + $0x108] sm:$0xff]
      %v5948 = vld [vmem:[#allocation4 + $0x110] sm:$0xff]
      %v5949 = vld [vmem:[#allocation4 + $0x118] sm:$0xff]
      %v5950 = vld [vmem:[#allocation4 + $0x120] sm:$0xff]
      %v5951 = vld [vmem:[#allocation4 + $0x128] sm:$0xff]
      %v5952 = vld [vmem:[#allocation4 + $0x130] sm:$0xff]
      %v5953 = vld [vmem:[#allocation4 + $0x138] sm:$0xff]
      %v5954 = vld [vmem:[#allocation4 + $0x140] sm:$0xff]
      %v5955 = vld [vmem:[#allocation4 + $0x148] sm:$0xff]
      %v5956 = vld [vmem:[#allocation4 + $0x150] sm:$0xff]
      %v5957 = vld [vmem:[#allocation4 + $0x158] sm:$0xff]
      %v5958 = vld [vmem:[#allocation4 + $0x160] sm:$0xff]
      %v5959 = vld [vmem:[#allocation4 + $0x168] sm:$0xff]
      %v5960 = vld [vmem:[#allocation4 + $0x170] sm:$0xff]
      %v5961 = vld [vmem:[#allocation4 + $0x178] sm:$0xff]
      %v5962 = vld [vmem:[#allocation4 + $0x180] sm:$0xff]
      %v5963 = vld [vmem:[#allocation4 + $0x188] sm:$0xff]
      %v5964 = vld [vmem:[#allocation4 + $0x190] sm:$0xff]
      %v5965 = vld [vmem:[#allocation4 + $0x198] sm:$0xff]
      %v5966 = vld [vmem:[#allocation4 + $0x1a0] sm:$0xff]
      %v5967 = vld [vmem:[#allocation4 + $0x1a8] sm:$0xff]
      %v5968 = vld [vmem:[#allocation4 + $0x1b0] sm:$0xff]
      %v5969 = vld [vmem:[#allocation4 + $0x1b8] sm:$0xff]
      %v5970 = vld [vmem:[#allocation4 + $0x1c0] sm:$0xff]
      %v5971 = vld [vmem:[#allocation4 + $0x1c8] sm:$0xff]
      %v5972 = vld [vmem:[#allocation4 + $0x1d0] sm:$0xff]
      %v5973 = vld [vmem:[#allocation4 + $0x1d8] sm:$0xff]
      %v5974 = vld [vmem:[#allocation4 + $0x1e0] sm:$0xff]
      %v5975 = vld [vmem:[#allocation4 + $0x1e8] sm:$0xff]
      %v5976 = vld [vmem:[#allocation4 + $0x1f0] sm:$0xff]
      %v5977 = vld [vmem:[#allocation4 + $0x1f8] sm:$0xff]
      %v5978 = vld [vmem:[#allocation4 + $0x200] sm:$0xff]
      %v5979 = vld [vmem:[#allocation4 + $0x208] sm:$0xff]
      %v5980 = vld [vmem:[#allocation4 + $0x210] sm:$0xff]
      %v5981 = vld [vmem:[#allocation4 + $0x218] sm:$0xff]
      %v5982 = vld [vmem:[#allocation4 + $0x220] sm:$0xff]
      %v5983 = vld [vmem:[#allocation4 + $0x228] sm:$0xff]
      %v5984 = vld [vmem:[#allocation4 + $0x230] sm:$0xff]
      %v5985 = vld [vmem:[#allocation4 + $0x238] sm:$0xff]
      %v5986 = vld [vmem:[#allocation4 + $0x240] sm:$0xff]
      %v5987 = vld [vmem:[#allocation4 + $0x248] sm:$0xff]
      %v5988 = vld [vmem:[#allocation4 + $0x250] sm:$0xff]
      %v5989 = vld [vmem:[#allocation4 + $0x258] sm:$0xff]
      %v5990 = vld [vmem:[#allocation4 + $0x260] sm:$0xff]
      %v5991 = vld [vmem:[#allocation4 + $0x268] sm:$0xff]
      %v5992 = vld [vmem:[#allocation4 + $0x270] sm:$0xff]
      %v5993 = vld [vmem:[#allocation4 + $0x278] sm:$0xff]
      %v5994 = vld [vmem:[#allocation4 + $0x280] sm:$0xff]
      %v5995 = vld [vmem:[#allocation4 + $0x288] sm:$0xff]
      %v5996 = vld [vmem:[#allocation4 + $0x290] sm:$0xff]
      %v5997 = vld [vmem:[#allocation4 + $0x298] sm:$0xff]
      %v5998 = vld [vmem:[#allocation4 + $0x2a0] sm:$0xff]
      %v5999 = vld [vmem:[#allocation4 + $0x2a8] sm:$0xff]
      %v6000 = vld [vmem:[#allocation4 + $0x2b0] sm:$0xff]
      %v6001 = vld [vmem:[#allocation4 + $0x2b8] sm:$0xff]
      %v6002 = vld [vmem:[#allocation4 + $0x2c0] sm:$0xff]
      %v6003 = vld [vmem:[#allocation4 + $0x2c8] sm:$0xff]
      %v6004 = vld [vmem:[#allocation4 + $0x2d0] sm:$0xff]
      %v6005 = vld [vmem:[#allocation4 + $0x2d8] sm:$0xff]
      %v6006 = vld [vmem:[#allocation4 + $0x2e0] sm:$0xff]
      %v6007 = vld [vmem:[#allocation4 + $0x2e8] sm:$0xff]
      %v6008 = vld [vmem:[#allocation4 + $0x2f0] sm:$0xff]
      %v6009 = vld [vmem:[#allocation4 + $0x2f8] sm:$0xff]
      %v6010 = vld [vmem:[#allocation4 + $0x300] sm:$0xff]
      %v6011 = vld [vmem:[#allocation4 + $0x308] sm:$0xff]
      %v6012 = vld [vmem:[#allocation4 + $0x310] sm:$0xff]
      %v6013 = vld [vmem:[#allocation4 + $0x318] sm:$0xff]
      %v6014 = vld [vmem:[#allocation4 + $0x320] sm:$0xff]
      %v6015 = vld [vmem:[#allocation4 + $0x328] sm:$0xff]
      %v6016 = vld [vmem:[#allocation4 + $0x330] sm:$0xff]
      %v6017 = vld [vmem:[#allocation4 + $0x338] sm:$0xff]
      %v6018 = vld [vmem:[#allocation4 + $0x340] sm:$0xff]
      %v6019 = vld [vmem:[#allocation4 + $0x348] sm:$0xff]
      %v6020 = vld [vmem:[#allocation4 + $0x350] sm:$0xff]
      %v6021 = vld [vmem:[#allocation4 + $0x358] sm:$0xff]
      %v6022 = vld [vmem:[#allocation4 + $0x360] sm:$0xff]
      %v6023 = vld [vmem:[#allocation4 + $0x368] sm:$0xff]
      %v6024 = vld [vmem:[#allocation4 + $0x370] sm:$0xff]
      %v6025 = vld [vmem:[#allocation4 + $0x378] sm:$0xff]
      %v6026 = vld [vmem:[#allocation4 + $0x380] sm:$0xff]
      %v6027 = vld [vmem:[#allocation4 + $0x388] sm:$0xff]
      %v6028 = vld [vmem:[#allocation4 + $0x390] sm:$0xff]
      %v6029 = vld [vmem:[#allocation4 + $0x398] sm:$0xff]
      %v6030 = vld [vmem:[#allocation4 + $0x3a0] sm:$0xff]
      %v6031 = vld [vmem:[#allocation4 + $0x3a8] sm:$0xff]
      %v6032 = vld [vmem:[#allocation4 + $0x3b0] sm:$0xff]
      %v6033 = vld [vmem:[#allocation4 + $0x3b8] sm:$0xff]
      %v6034 = vld [vmem:[#allocation4 + $0x3c0] sm:$0xff]
      %v6035 = vld [vmem:[#allocation4 + $0x3c8] sm:$0xff]
      %v6036 = vld [vmem:[#allocation4 + $0x3d0] sm:$0xff]
      %v6037 = vld [vmem:[#allocation4 + $0x3d8] sm:$0xff]
      %v6038 = vld [vmem:[#allocation4 + $0x3e0] sm:$0xff]
      %v6039 = vld [vmem:[#allocation4 + $0x3e8] sm:$0xff]
      %v6040 = vld [vmem:[#allocation4 + $0x3f0] sm:$0xff]
      %v6041 = vld [vmem:[#allocation4 + $0x3f8] sm:$0xff]
      %v6042 = vld [vmem:[#allocation4 + $0x400] sm:$0xff]
      %v6043 = vld [vmem:[#allocation4 + $0x408] sm:$0xff]
      %v6044 = vld [vmem:[#allocation4 + $0x410] sm:$0xff]
      %v6045 = vld [vmem:[#allocation4 + $0x418] sm:$0xff]
      %v6046 = vld [vmem:[#allocation4 + $0x420] sm:$0xff]
      %v6047 = vld [vmem:[#allocation4 + $0x428] sm:$0xff]
      %v6048 = vld [vmem:[#allocation4 + $0x430] sm:$0xff]
      %v6049 = vld [vmem:[#allocation4 + $0x438] sm:$0xff]
      %v6050 = vld [vmem:[#allocation4 + $0x440] sm:$0xff]
      %v6051 = vld [vmem:[#allocation4 + $0x448] sm:$0xff]
      %v6052 = vld [vmem:[#allocation4 + $0x450] sm:$0xff]
      %v6053 = vld [vmem:[#allocation4 + $0x458] sm:$0xff]
      %v6054 = vld [vmem:[#allocation4 + $0x460] sm:$0xff]
      %v6055 = vld [vmem:[#allocation4 + $0x468] sm:$0xff]
      %v6056 = vld [vmem:[#allocation4 + $0x470] sm:$0xff]
      %v6057 = vld [vmem:[#allocation4 + $0x478] sm:$0xff]
      %v6058 = vld [vmem:[%s3] sm:$0xf]
      %v6059 = vld [vmem:[%s3 + $0x4] sm:$0xf]
      %v6060 = vld [vmem:[%s3 + $0x8] sm:$0xf]
      %v6061 = vld [vmem:[%s3 + $0xc] sm:$0xf]
      %v6062 = vld [vmem:[%s3 + $0x10] sm:$0xf]
      %v6063 = vld [vmem:[%s3 + $0x14] sm:$0xf]
      %v6064 = vld [vmem:[%s3 + $0x18] sm:$0xf]
      %v6065 = vld [vmem:[%s3 + $0x1c] sm:$0xf]
      %v6066 = vld [vmem:[%s3 + $0x20] sm:$0xf]
      %v6067 = vld [vmem:[%s3 + $0x24] sm:$0xf]
      %v6068 = vld [vmem:[%s3 + $0x28] sm:$0xf]
      %v6069 = vld [vmem:[%s3 + $0x2c] sm:$0xf]
      %v6070 = vld [vmem:[%s3 + $0x30] sm:$0xf]
      %v6071 = vld [vmem:[%s3 + $0x34] sm:$0xf]
      %v6072 = vld [vmem:[%s3 + $0x38] sm:$0xf]
      %v6073 = vld [vmem:[%s3 + $0x3c] sm:$0xf]
      %v6074 = vld [vmem:[%s3 + $0x40] sm:$0xf]
      %v6075 = vld [vmem:[%s3 + $0x44] sm:$0xf]
      %v6076 = vld [vmem:[%s3 + $0x48] sm:$0xf]
      %v6077 = vld [vmem:[%s3 + $0x4c] sm:$0xf]
      %v6078 = vld [vmem:[%s3 + $0x50] sm:$0xf]
      %v6079 = vld [vmem:[%s3 + $0x54] sm:$0xf]
      %v6080 = vld [vmem:[%s3 + $0x58] sm:$0xf]
      %v6081 = vld [vmem:[%s3 + $0x5c] sm:$0xf]
      %v6082 = vld [vmem:[%s3 + $0x60] sm:$0xf]
      %v6083 = vld [vmem:[%s3 + $0x64] sm:$0xf]
      %v6084 = vld [vmem:[%s3 + $0x68] sm:$0xf]
      %v6085 = vld [vmem:[%s3 + $0x6c] sm:$0xf]
      %v6086 = vld [vmem:[%s3 + $0x70] sm:$0xf]
      %v6087 = vld [vmem:[%s3 + $0x74] sm:$0xf]
      %v6088 = vld [vmem:[%s3 + $0x78] sm:$0xf]
      %v6089 = vld [vmem:[%s3 + $0x7c] sm:$0xf]
      %v6090 = vld [vmem:[%s3 + $0x80] sm:$0xf]
      %v6091 = vld [vmem:[%s3 + $0x84] sm:$0xf]
      %v6092 = vld [vmem:[%s3 + $0x88] sm:$0xf]
      %v6093 = vld [vmem:[%s3 + $0x8c] sm:$0xf]
      %v6094 = vld [vmem:[%s3 + $0x90] sm:$0xf]
      %v6095 = vld [vmem:[%s3 + $0x94] sm:$0xf]
      %v6096 = vld [vmem:[%s3 + $0x98] sm:$0xf]
      %v6097 = vld [vmem:[%s3 + $0x9c] sm:$0xf]
      %v6098 = vld [vmem:[%s3 + $0xa0] sm:$0xf]
      %v6099 = vld [vmem:[%s3 + $0xa4] sm:$0xf]
      %v6100 = vld [vmem:[%s3 + $0xa8] sm:$0xf]
      %v6101 = vld [vmem:[%s3 + $0xac] sm:$0xf]
      %v6102 = vld [vmem:[%s3 + $0xb0] sm:$0xf]
      %v6103 = vld [vmem:[%s3 + $0xb4] sm:$0xf]
      %v6104 = vld [vmem:[%s3 + $0xb8] sm:$0xf]
      %v6105 = vld [vmem:[%s3 + $0xbc] sm:$0xf]
      %v6106 = vld [vmem:[%s3 + $0xc0] sm:$0xf]
      %v6107 = vld [vmem:[%s3 + $0xc4] sm:$0xf]
      %v6108 = vld [vmem:[%s3 + $0xc8] sm:$0xf]
      %v6109 = vld [vmem:[%s3 + $0xcc] sm:$0xf]
      %v6110 = vld [vmem:[%s3 + $0xd0] sm:$0xf]
      %v6111 = vld [vmem:[%s3 + $0xd4] sm:$0xf]
      %v6112 = vld [vmem:[%s3 + $0xd8] sm:$0xf]
      %v6113 = vld [vmem:[%s3 + $0xdc] sm:$0xf]
      %v6114 = vld [vmem:[%s3 + $0xe0] sm:$0xf]
      %v6115 = vld [vmem:[%s3 + $0xe4] sm:$0xf]
      %v6116 = vld [vmem:[%s3 + $0xe8] sm:$0xf]
      %v6117 = vld [vmem:[%s3 + $0xec] sm:$0xf]
      %v6118 = vld [vmem:[%s3 + $0xf0] sm:$0xf]
      %v6119 = vld [vmem:[%s3 + $0xf4] sm:$0xf]
      %v6120 = vld [vmem:[%s3 + $0xf8] sm:$0xf]
      %v6121 = vld [vmem:[%s3 + $0xfc] sm:$0xf]
      %v6122 = vld [vmem:[%s3 + $0x100] sm:$0xf]
      %v6123 = vld [vmem:[%s3 + $0x104] sm:$0xf]
      %v6124 = vld [vmem:[%s3 + $0x108] sm:$0xf]
      %v6125 = vld [vmem:[%s3 + $0x10c] sm:$0xf]
      %v6126 = vld [vmem:[%s3 + $0x110] sm:$0xf]
      %v6127 = vld [vmem:[%s3 + $0x114] sm:$0xf]
      %v6128 = vld [vmem:[%s3 + $0x118] sm:$0xf]
      %v6129 = vld [vmem:[%s3 + $0x11c] sm:$0xf]
      %v6130 = vld [vmem:[%s3 + $0x120] sm:$0xf]
      %v6131 = vld [vmem:[%s3 + $0x124] sm:$0xf]
      %v6132 = vld [vmem:[%s3 + $0x128] sm:$0xf]
      %v6133 = vld [vmem:[%s3 + $0x12c] sm:$0xf]
      %v6134 = vld [vmem:[%s3 + $0x130] sm:$0xf]
      %v6135 = vld [vmem:[%s3 + $0x134] sm:$0xf]
      %v6136 = vld [vmem:[%s3 + $0x138] sm:$0xf]
      %v6137 = vld [vmem:[%s3 + $0x13c] sm:$0xf]
      %v6138 = vld [vmem:[%s3 + $0x140] sm:$0xf]
      %v6139 = vld [vmem:[%s3 + $0x144] sm:$0xf]
      %v6140 = vld [vmem:[%s3 + $0x148] sm:$0xf]
      %v6141 = vld [vmem:[%s3 + $0x14c] sm:$0xf]
      %v6142 = vld [vmem:[%s3 + $0x150] sm:$0xf]
      %v6143 = vld [vmem:[%s3 + $0x154] sm:$0xf]
      %v6144 = vld [vmem:[%s3 + $0x158] sm:$0xf]
      %v6145 = vld [vmem:[%s3 + $0x15c] sm:$0xf]
      %v6146 = vld [vmem:[%s3 + $0x160] sm:$0xf]
      %v6147 = vld [vmem:[%s3 + $0x164] sm:$0xf]
      %v6148 = vld [vmem:[%s3 + $0x168] sm:$0xf]
      %v6149 = vld [vmem:[%s3 + $0x16c] sm:$0xf]
      %v6150 = vld [vmem:[%s3 + $0x170] sm:$0xf]
      %v6151 = vld [vmem:[%s3 + $0x174] sm:$0xf]
      %v6152 = vld [vmem:[%s3 + $0x178] sm:$0xf]
      %v6153 = vld [vmem:[%s3 + $0x17c] sm:$0xf]
      %v6154 = vld [vmem:[%s3 + $0x180] sm:$0xf]
      %v6155 = vld [vmem:[%s3 + $0x184] sm:$0xf]
      %v6156 = vld [vmem:[%s3 + $0x188] sm:$0xf]
      %v6157 = vld [vmem:[%s3 + $0x18c] sm:$0xf]
      %v6158 = vld [vmem:[%s3 + $0x190] sm:$0xf]
      %v6159 = vld [vmem:[%s3 + $0x194] sm:$0xf]
      %v6160 = vld [vmem:[%s3 + $0x198] sm:$0xf]
      %v6161 = vld [vmem:[%s3 + $0x19c] sm:$0xf]
      %v6162 = vld [vmem:[%s3 + $0x1a0] sm:$0xf]
      %v6163 = vld [vmem:[%s3 + $0x1a4] sm:$0xf]
      %v6164 = vld [vmem:[%s3 + $0x1a8] sm:$0xf]
      %v6165 = vld [vmem:[%s3 + $0x1ac] sm:$0xf]
      %v6166 = vld [vmem:[%s3 + $0x1b0] sm:$0xf]
      %v6167 = vld [vmem:[%s3 + $0x1b4] sm:$0xf]
      %v6168 = vld [vmem:[%s3 + $0x1b8] sm:$0xf]
      %v6169 = vld [vmem:[%s3 + $0x1bc] sm:$0xf]
      %v6170 = vld [vmem:[%s3 + $0x1c0] sm:$0xf]
      %v6171 = vld [vmem:[%s3 + $0x1c4] sm:$0xf]
      %v6172 = vld [vmem:[%s3 + $0x1c8] sm:$0xf]
      %v6173 = vld [vmem:[%s3 + $0x1cc] sm:$0xf]
      %v6174 = vld [vmem:[%s3 + $0x1d0] sm:$0xf]
      %v6175 = vld [vmem:[%s3 + $0x1d4] sm:$0xf]
      %v6176 = vld [vmem:[%s3 + $0x1d8] sm:$0xf]
      %v6177 = vld [vmem:[%s3 + $0x1dc] sm:$0xf]
      %v6178 = vld [vmem:[%s3 + $0x1e0] sm:$0xf]
      %v6179 = vld [vmem:[%s3 + $0x1e4] sm:$0xf]
      %v6180 = vld [vmem:[%s3 + $0x1e8] sm:$0xf]
      %v6181 = vld [vmem:[%s3 + $0x1ec] sm:$0xf]
      %v6182 = vld [vmem:[%s3 + $0x1f0] sm:$0xf]
      %v6183 = vld [vmem:[%s3 + $0x1f4] sm:$0xf]
      %v6184 = vld [vmem:[%s3 + $0x1f8] sm:$0xf]
      %v6185 = vld [vmem:[%s3 + $0x1fc] sm:$0xf]
      %v6186 = vld [vmem:[%s3 + $0x200] sm:$0xf]
      %v6187 = vld [vmem:[%s3 + $0x204] sm:$0xf]
      %v6188 = vld [vmem:[%s3 + $0x208] sm:$0xf]
      %v6189 = vld [vmem:[%s3 + $0x20c] sm:$0xf]
      %v6190 = vld [vmem:[%s3 + $0x210] sm:$0xf]
      %v6191 = vld [vmem:[%s3 + $0x214] sm:$0xf]
      %v6192 = vld [vmem:[%s3 + $0x218] sm:$0xf]
      %v6193 = vld [vmem:[%s3 + $0x21c] sm:$0xf]
      %v6194 = vld [vmem:[%s3 + $0x220] sm:$0xf]
      %v6195 = vld [vmem:[%s3 + $0x224] sm:$0xf]
      %v6196 = vld [vmem:[%s3 + $0x228] sm:$0xf]
      %v6197 = vld [vmem:[%s3 + $0x22c] sm:$0xf]
      %v6198 = vld [vmem:[%s3 + $0x230] sm:$0xf]
      %v6199 = vld [vmem:[%s3 + $0x234] sm:$0xf]
      %v6200 = vld [vmem:[%s3 + $0x238] sm:$0xf]
      %v6201 = vld [vmem:[%s3 + $0x23c] sm:$0xf]
      %v6346 = vunpack.c.l.b16 %v6058
      %v6347 = vunpack.c.l.b16 %v6059
      %v6348 = vunpack.c.l.b16 %v6060
      %v6349 = vunpack.c.l.b16 %v6061
      %v6350 = vunpack.c.l.b16 %v6062
      %v6351 = vunpack.c.l.b16 %v6063
      %v6352 = vunpack.c.l.b16 %v6064
      %v6353 = vunpack.c.l.b16 %v6065
      %v6354 = vunpack.c.l.b16 %v6066
      %v6355 = vunpack.c.l.b16 %v6067
      %v6356 = vunpack.c.l.b16 %v6068
      %v6357 = vunpack.c.l.b16 %v6069
      %v6358 = vunpack.c.l.b16 %v6070
      %v6359 = vunpack.c.l.b16 %v6071
      %v6360 = vunpack.c.l.b16 %v6072
      %v6361 = vunpack.c.l.b16 %v6073
      %v6362 = vunpack.c.l.b16 %v6074
      %v6363 = vunpack.c.l.b16 %v6075
      %v6364 = vunpack.c.l.b16 %v6076
      %v6365 = vunpack.c.l.b16 %v6077
      %v6366 = vunpack.c.l.b16 %v6078
      %v6367 = vunpack.c.l.b16 %v6079
      %v6368 = vunpack.c.l.b16 %v6080
      %v6369 = vunpack.c.l.b16 %v6081
      %v6370 = vunpack.c.l.b16 %v6082
      %v6371 = vunpack.c.l.b16 %v6083
      %v6372 = vunpack.c.l.b16 %v6084
      %v6373 = vunpack.c.l.b16 %v6085
      %v6374 = vunpack.c.l.b16 %v6086
      %v6375 = vunpack.c.l.b16 %v6087
      %v6376 = vunpack.c.l.b16 %v6088
      %v6377 = vunpack.c.l.b16 %v6089
      %v6378 = vunpack.c.l.b16 %v6090
      %v6379 = vunpack.c.l.b16 %v6091
      %v6380 = vunpack.c.l.b16 %v6092
      %v6381 = vunpack.c.l.b16 %v6093
      %v6382 = vunpack.c.l.b16 %v6094
      %v6383 = vunpack.c.l.b16 %v6095
      %v6384 = vunpack.c.l.b16 %v6096
      %v6385 = vunpack.c.l.b16 %v6097
      %v6386 = vunpack.c.l.b16 %v6098
      %v6387 = vunpack.c.l.b16 %v6099
      %v6388 = vunpack.c.l.b16 %v6100
      %v6389 = vunpack.c.l.b16 %v6101
      %v6390 = vunpack.c.l.b16 %v6102
      %v6391 = vunpack.c.l.b16 %v6103
      %v6392 = vunpack.c.l.b16 %v6104
      %v6393 = vunpack.c.l.b16 %v6105
      %v6394 = vunpack.c.l.b16 %v6106
      %v6395 = vunpack.c.l.b16 %v6107
      %v6396 = vunpack.c.l.b16 %v6108
      %v6397 = vunpack.c.l.b16 %v6109
      %v6398 = vunpack.c.l.b16 %v6110
      %v6399 = vunpack.c.l.b16 %v6111
      %v6400 = vunpack.c.l.b16 %v6112
      %v6401 = vunpack.c.l.b16 %v6113
      %v6402 = vunpack.c.l.b16 %v6114
      %v6403 = vunpack.c.l.b16 %v6115
      %v6404 = vunpack.c.l.b16 %v6116
      %v6405 = vunpack.c.l.b16 %v6117
      %v6406 = vunpack.c.l.b16 %v6118
      %v6407 = vunpack.c.l.b16 %v6119
      %v6408 = vunpack.c.l.b16 %v6120
      %v6409 = vunpack.c.l.b16 %v6121
      %v6410 = vunpack.c.l.b16 %v6122
      %v6411 = vunpack.c.l.b16 %v6123
      %v6412 = vunpack.c.l.b16 %v6124
      %v6413 = vunpack.c.l.b16 %v6125
      %v6414 = vunpack.c.l.b16 %v6126
      %v6415 = vunpack.c.l.b16 %v6127
      %v6416 = vunpack.c.l.b16 %v6128
      %v6417 = vunpack.c.l.b16 %v6129
      %v6418 = vunpack.c.l.b16 %v6130
      %v6419 = vunpack.c.l.b16 %v6131
      %v6420 = vunpack.c.l.b16 %v6132
      %v6421 = vunpack.c.l.b16 %v6133
      %v6422 = vunpack.c.l.b16 %v6134
      %v6423 = vunpack.c.l.b16 %v6135
      %v6424 = vunpack.c.l.b16 %v6136
      %v6425 = vunpack.c.l.b16 %v6137
      %v6426 = vunpack.c.l.b16 %v6138
      %v6427 = vunpack.c.l.b16 %v6139
      %v6428 = vunpack.c.l.b16 %v6140
      %v6429 = vunpack.c.l.b16 %v6141
      %v6430 = vunpack.c.l.b16 %v6142
      %v6431 = vunpack.c.l.b16 %v6143
      %v6432 = vunpack.c.l.b16 %v6144
      %v6433 = vunpack.c.l.b16 %v6145
      %v6434 = vunpack.c.l.b16 %v6146
      %v6435 = vunpack.c.l.b16 %v6147
      %v6436 = vunpack.c.l.b16 %v6148
      %v6437 = vunpack.c.l.b16 %v6149
      %v6438 = vunpack.c.l.b16 %v6150
      %v6439 = vunpack.c.l.b16 %v6151
      %v6440 = vunpack.c.l.b16 %v6152
      %v6441 = vunpack.c.l.b16 %v6153
      %v6442 = vunpack.c.l.b16 %v6154
      %v6443 = vunpack.c.l.b16 %v6155
      %v6444 = vunpack.c.l.b16 %v6156
      %v6445 = vunpack.c.l.b16 %v6157
      %v6446 = vunpack.c.l.b16 %v6158
      %v6447 = vunpack.c.l.b16 %v6159
      %v6448 = vunpack.c.l.b16 %v6160
      %v6449 = vunpack.c.l.b16 %v6161
      %v6450 = vunpack.c.l.b16 %v6162
      %v6451 = vunpack.c.l.b16 %v6163
      %v6452 = vunpack.c.l.b16 %v6164
      %v6453 = vunpack.c.l.b16 %v6165
      %v6454 = vunpack.c.l.b16 %v6166
      %v6455 = vunpack.c.l.b16 %v6167
      %v6456 = vunpack.c.l.b16 %v6168
      %v6457 = vunpack.c.l.b16 %v6169
      %v6458 = vunpack.c.l.b16 %v6170
      %v6459 = vunpack.c.l.b16 %v6171
      %v6460 = vunpack.c.l.b16 %v6172
      %v6461 = vunpack.c.l.b16 %v6173
      %v6462 = vunpack.c.l.b16 %v6174
      %v6463 = vunpack.c.l.b16 %v6175
      %v6464 = vunpack.c.l.b16 %v6176
      %v6465 = vunpack.c.l.b16 %v6177
      %v6466 = vunpack.c.l.b16 %v6178
      %v6467 = vunpack.c.l.b16 %v6179
      %v6468 = vunpack.c.l.b16 %v6180
      %v6469 = vunpack.c.l.b16 %v6181
      %v6470 = vunpack.c.l.b16 %v6182
      %v6471 = vunpack.c.l.b16 %v6183
      %v6472 = vunpack.c.l.b16 %v6184
      %v6473 = vunpack.c.l.b16 %v6185
      %v6474 = vunpack.c.l.b16 %v6186
      %v6475 = vunpack.c.l.b16 %v6187
      %v6476 = vunpack.c.l.b16 %v6188
      %v6477 = vunpack.c.l.b16 %v6189
      %v6478 = vunpack.c.l.b16 %v6190
      %v6479 = vunpack.c.l.b16 %v6191
      %v6480 = vunpack.c.l.b16 %v6192
      %v6481 = vunpack.c.l.b16 %v6193
      %v6482 = vunpack.c.l.b16 %v6194
      %v6483 = vunpack.c.l.b16 %v6195
      %v6484 = vunpack.c.l.b16 %v6196
      %v6485 = vunpack.c.l.b16 %v6197
      %v6486 = vunpack.c.l.b16 %v6198
      %v6487 = vunpack.c.l.b16 %v6199
      %v6488 = vunpack.c.l.b16 %v6200
      %v6489 = vunpack.c.l.b16 %v6201
      %v6490 = vpack.c.b16 %v6347, %v6346
      %v6491 = vpack.c.b16 %v6349, %v6348
      %v6492 = vpack.c.b16 %v6351, %v6350
      %v6493 = vpack.c.b16 %v6353, %v6352
      %v6494 = vpack.c.b16 %v6355, %v6354
      %v6495 = vpack.c.b16 %v6357, %v6356
      %v6496 = vpack.c.b16 %v6359, %v6358
      %v6497 = vpack.c.b16 %v6361, %v6360
      %v6498 = vpack.c.b16 %v6363, %v6362
      %v6499 = vpack.c.b16 %v6365, %v6364
      %v6500 = vpack.c.b16 %v6367, %v6366
      %v6501 = vpack.c.b16 %v6369, %v6368
      %v6502 = vpack.c.b16 %v6371, %v6370
      %v6503 = vpack.c.b16 %v6373, %v6372
      %v6504 = vpack.c.b16 %v6375, %v6374
      %v6505 = vpack.c.b16 %v6377, %v6376
      %v6506 = vpack.c.b16 %v6379, %v6378
      %v6507 = vpack.c.b16 %v6381, %v6380
      %v6508 = vpack.c.b16 %v6383, %v6382
      %v6509 = vpack.c.b16 %v6385, %v6384
      %v6510 = vpack.c.b16 %v6387, %v6386
      %v6511 = vpack.c.b16 %v6389, %v6388
      %v6512 = vpack.c.b16 %v6391, %v6390
      %v6513 = vpack.c.b16 %v6393, %v6392
      %v6514 = vpack.c.b16 %v6395, %v6394
      %v6515 = vpack.c.b16 %v6397, %v6396
      %v6516 = vpack.c.b16 %v6399, %v6398
      %v6517 = vpack.c.b16 %v6401, %v6400
      %v6518 = vpack.c.b16 %v6403, %v6402
      %v6519 = vpack.c.b16 %v6405, %v6404
      %v6520 = vpack.c.b16 %v6407, %v6406
      %v6521 = vpack.c.b16 %v6409, %v6408
      %v6522 = vpack.c.b16 %v6411, %v6410
      %v6523 = vpack.c.b16 %v6413, %v6412
      %v6524 = vpack.c.b16 %v6415, %v6414
      %v6525 = vpack.c.b16 %v6417, %v6416
      %v6526 = vpack.c.b16 %v6419, %v6418
      %v6527 = vpack.c.b16 %v6421, %v6420
      %v6528 = vpack.c.b16 %v6423, %v6422
      %v6529 = vpack.c.b16 %v6425, %v6424
      %v6530 = vpack.c.b16 %v6427, %v6426
      %v6531 = vpack.c.b16 %v6429, %v6428
      %v6532 = vpack.c.b16 %v6431, %v6430
      %v6533 = vpack.c.b16 %v6433, %v6432
      %v6534 = vpack.c.b16 %v6435, %v6434
      %v6535 = vpack.c.b16 %v6437, %v6436
      %v6536 = vpack.c.b16 %v6439, %v6438
      %v6537 = vpack.c.b16 %v6441, %v6440
      %v6538 = vpack.c.b16 %v6443, %v6442
      %v6539 = vpack.c.b16 %v6445, %v6444
      %v6540 = vpack.c.b16 %v6447, %v6446
      %v6541 = vpack.c.b16 %v6449, %v6448
      %v6542 = vpack.c.b16 %v6451, %v6450
      %v6543 = vpack.c.b16 %v6453, %v6452
      %v6544 = vpack.c.b16 %v6455, %v6454
      %v6545 = vpack.c.b16 %v6457, %v6456
      %v6546 = vpack.c.b16 %v6459, %v6458
      %v6547 = vpack.c.b16 %v6461, %v6460
      %v6548 = vpack.c.b16 %v6463, %v6462
      %v6549 = vpack.c.b16 %v6465, %v6464
      %v6550 = vpack.c.b16 %v6467, %v6466
      %v6551 = vpack.c.b16 %v6469, %v6468
      %v6552 = vpack.c.b16 %v6471, %v6470
      %v6553 = vpack.c.b16 %v6473, %v6472
      %v6554 = vpack.c.b16 %v6475, %v6474
      %v6555 = vpack.c.b16 %v6477, %v6476
      %v6556 = vpack.c.b16 %v6479, %v6478
      %v6557 = vpack.c.b16 %v6481, %v6480
      %v6558 = vpack.c.b16 %v6483, %v6482
      %v6559 = vpack.c.b16 %v6485, %v6484
      %v6560 = vpack.c.b16 %v6487, %v6486
      %v6561 = vpack.c.b16 %v6489, %v6488
      %6634 = vmatprep.subr.bf16.mxu0 0
      %6635 = vmatpush1.bf16.msra.mxu0 %v6490
      %6636 = vmatprep.subr.bf16.mxu0 0
      %6637 = vmatpush1.bf16.msra.mxu0 %v6491
      %6638 = vmatprep.subr.bf16.mxu0 0
      %6639 = vmatpush1.bf16.msra.mxu0 %v6492
      %6640 = vmatprep.subr.bf16.mxu0 0
      %6641 = vmatpush1.bf16.msra.mxu0 %v6493
      %6642 = vmatprep.subr.bf16.mxu0 0
      %6643 = vmatpush1.bf16.msra.mxu0 %v6494
      %6644 = vmatprep.subr.bf16.mxu0 0
      %6645 = vmatpush1.bf16.msra.mxu0 %v6495
      %6646 = vmatprep.subr.bf16.mxu0 0
      %6647 = vmatpush1.bf16.msra.mxu0 %v6496
      %6648 = vmatprep.subr.bf16.mxu0 0
      %6649 = vmatpush1.bf16.msra.mxu0 %v6497
      %6650 = vmatprep.subr.bf16.mxu0 0
      %6651 = vmatpush1.bf16.msra.mxu0 %v6498
      %6652 = vmatprep.subr.bf16.mxu0 0
      %6653 = vmatpush1.bf16.msra.mxu0 %v6499
      %6654 = vmatprep.subr.bf16.mxu0 0
      %6655 = vmatpush1.bf16.msra.mxu0 %v6500
      %6656 = vmatprep.subr.bf16.mxu0 0
      %6657 = vmatpush1.bf16.msra.mxu0 %v6501
      %6658 = vmatprep.subr.bf16.mxu0 0
      %6659 = vmatpush1.bf16.msra.mxu0 %v6502
      %6660 = vmatprep.subr.bf16.mxu0 0
      %6661 = vmatpush1.bf16.msra.mxu0 %v6503
      %6662 = vmatprep.subr.bf16.mxu0 0
      %6663 = vmatpush1.bf16.msra.mxu0 %v6504
      %6664 = vmatprep.subr.bf16.mxu0 0
      %6665 = vmatpush1.bf16.msra.mxu0 %v6505
      %6666 = vmatprep.mubr.bf16.mxu0 %v5915
      %6667 = vmatmul.mubr.bf16.gmra.mrb[0].mxu0 %v5914
      %v6668 = vpop.f32.mrb[0].mxu0
      %v6669 = vadd.f32 0.0, %v6668
      %v6670 = vpop.f32.mrb[0].mxu0
      %v6671 = vpop.f32.mrb[0].mxu0
      %v6672 = vadd.f32 0.0, %v6671
      %v6673 = vpop.f32.mrb[0].mxu0
      %6674 = vmatprep.mubr.bf16.mxu0 %v5924
      %6675 = vmatmul.mubr.bf16.gmra.mrb[0].mxu0 %v5923
      %v6676 = vpop.f32.mrb[0].mxu0
      %v6677 = vadd.f32 0.0, %v6676
      %v6678 = vpop.f32.mrb[0].mxu0
      %v6679 = vpop.f32.mrb[0].mxu0
      %v6680 = vadd.f32 0.0, %v6679
      %v6681 = vpop.f32.mrb[0].mxu0
      %6682 = vmatprep.mubr.bf16.mxu0 %v5933
      %6683 = vmatmul.mubr.bf16.gmra.mrb[0].mxu0 %v5932
      %v6684 = vpop.f32.mrb[0].mxu0
      %v6685 = vadd.f32 0.0, %v6684
      %v6686 = vpop.f32.mrb[0].mxu0
      %v6687 = vpop.f32.mrb[0].mxu0
      %v6688 = vadd.f32 0.0, %v6687
      %v6689 = vpop.f32.mrb[0].mxu0
      %6690 = vmatprep.mubr.bf16.mxu0 %v5942
      %6691 = vmatmul.mubr.bf16.gmra.mrb[0].mxu0 %v5941
      %v6692 = vpop.f32.mrb[0].mxu0
      %v6693 = vadd.f32 0.0, %v6692
      %v6694 = vpop.f32.mrb[0].mxu0
      %v6695 = vpop.f32.mrb[0].mxu0
      %v6696 = vadd.f32 0.0, %v6695
      %v6697 = vpop.f32.mrb[0].mxu0
      %6698 = vmatprep.mubr.bf16.mxu0 %v5951
      %6699 = vmatmul.mubr.bf16.gmra.mrb[0].mxu0 %v5950
      %v6700 = vpop.f32.mrb[0].mxu0
      %v6701 = vadd.f32 0.0, %v6700
      %v6702 = vpop.f32.mrb[0].mxu0
      %v6703 = vpop.f32.mrb[0].mxu0
      %v6704 = vadd.f32 0.0, %v6703
      %v6705 = vpop.f32.mrb[0].mxu0
      %6706 = vmatprep.mubr.bf16.mxu0 %v5960
      %6707 = vmatmul.mubr.bf16.gmra.mrb[0].mxu0 %v5959
      %v6708 = vpop.f32.mrb[0].mxu0
      %v6709 = vadd.f32 0.0, %v6708
      %v6710 = vpop.f32.mrb[0].mxu0
      %v6711 = vpop.f32.mrb[0].mxu0
      %v6712 = vadd.f32 0.0, %v6711
      %v6713 = vpop.f32.mrb[0].mxu0
      %6714 = vmatprep.mubr.bf16.mxu0 %v5969
      %6715 = vmatmul.mubr.bf16.gmra.mrb[0].mxu0 %v5968
      %v6716 = vpop.f32.mrb[0].mxu0
      %v6717 = vadd.f32 0.0, %v6716
      %v6718 = vpop.f32.mrb[0].mxu0
      %v6719 = vpop.f32.mrb[0].mxu0
      %v6720 = vadd.f32 0.0, %v6719
      %v6721 = vpop.f32.mrb[0].mxu0
      %6722 = vmatprep.mubr.bf16.mxu0 %v5978
      %6723 = vmatmul.mubr.bf16.gmra.mrb[0].mxu0 %v5977
      %v6724 = vpop.f32.mrb[0].mxu0
      %v6725 = vadd.f32 0.0, %v6724
      %v6726 = vpop.f32.mrb[0].mxu0
      %v6727 = vpop.f32.mrb[0].mxu0
      %v6728 = vadd.f32 0.0, %v6727
      %v6729 = vpop.f32.mrb[0].mxu0
      %6730 = vmatprep.mubr.bf16.mxu0 %v5987
      %6731 = vmatmul.mubr.bf16.gmra.mrb[0].mxu0 %v5986
      %v6732 = vpop.f32.mrb[0].mxu0
      %v6733 = vadd.f32 0.0, %v6732
      %v6734 = vpop.f32.mrb[0].mxu0
      %v6735 = vpop.f32.mrb[0].mxu0
      %v6736 = vadd.f32 0.0, %v6735
      %v6737 = vpop.f32.mrb[0].mxu0
      %6738 = vmatprep.mubr.bf16.mxu0 %v5996
      %6739 = vmatmul.mubr.bf16.gmra.mrb[0].mxu0 %v5995
      %v6740 = vpop.f32.mrb[0].mxu0
      %v6741 = vadd.f32 0.0, %v6740
      %v6742 = vpop.f32.mrb[0].mxu0
      %v6743 = vpop.f32.mrb[0].mxu0
      %v6744 = vadd.f32 0.0, %v6743
      %v6745 = vpop.f32.mrb[0].mxu0
      %6746 = vmatprep.mubr.bf16.mxu0 %v6005
      %6747 = vmatmul.mubr.bf16.gmra.mrb[0].mxu0 %v6004
      %v6748 = vpop.f32.mrb[0].mxu0
      %v6749 = vadd.f32 0.0, %v6748
      %v6750 = vpop.f32.mrb[0].mxu0
      %v6751 = vpop.f32.mrb[0].mxu0
      %v6752 = vadd.f32 0.0, %v6751
      %v6753 = vpop.f32.mrb[0].mxu0
      %6754 = vmatprep.mubr.bf16.mxu0 %v6014
      %6755 = vmatmul.mubr.bf16.gmra.mrb[0].mxu0 %v6013
      %v6756 = vpop.f32.mrb[0].mxu0
      %v6757 = vadd.f32 0.0, %v6756
      %v6758 = vpop.f32.mrb[0].mxu0
      %v6759 = vpop.f32.mrb[0].mxu0
      %v6760 = vadd.f32 0.0, %v6759
      %v6761 = vpop.f32.mrb[0].mxu0
      %6762 = vmatprep.mubr.bf16.mxu0 %v6023
      %6763 = vmatmul.mubr.bf16.gmra.mrb[0].mxu0 %v6022
      %v6764 = vpop.f32.mrb[0].mxu0
      %v6765 = vadd.f32 0.0, %v6764
      %v6766 = vpop.f32.mrb[0].mxu0
      %v6767 = vpop.f32.mrb[0].mxu0
      %v6768 = vadd.f32 0.0, %v6767
      %v6769 = vpop.f32.mrb[0].mxu0
      %6770 = vmatprep.mubr.bf16.mxu0 %v6032
      %6771 = vmatmul.mubr.bf16.gmra.mrb[0].mxu0 %v6031
      %v6772 = vpop.f32.mrb[0].mxu0
      %v6773 = vadd.f32 0.0, %v6772
      %v6774 = vpop.f32.mrb[0].mxu0
      %v6775 = vpop.f32.mrb[0].mxu0
      %v6776 = vadd.f32 0.0, %v6775
      %v6777 = vpop.f32.mrb[0].mxu0
      %6778 = vmatprep.mubr.bf16.mxu0 %v6041
      %6779 = vmatmul.mubr.bf16.gmra.mrb[0].mxu0 %v6040
      %v6780 = vpop.f32.mrb[0].mxu0
      %v6781 = vadd.f32 0.0, %v6780
      %v6782 = vpop.f32.mrb[0].mxu0
      %v6783 = vpop.f32.mrb[0].mxu0
      %v6784 = vadd.f32 0.0, %v6783
      %v6785 = vpop.f32.mrb[0].mxu0
      %6786 = vmatprep.mubr.bf16.mxu0 %v6050
      %6787 = vmatmul.mubr.bf16.gmra.mrb[0].mxu0 %v6049
      %v6788 = vpop.f32.mrb[0].mxu0
      %v6789 = vadd.f32 0.0, %v6788
      %v6790 = vpop.f32.mrb[0].mxu0
      %v6791 = vpop.f32.mrb[0].mxu0
      %v6792 = vadd.f32 0.0, %v6791
      %v6793 = vpop.f32.mrb[0].mxu0
      %6794 = vdwg.mxu0
      %6795 = vmatprep.subr.bf16.mxu0 0
      %6796 = vmatpush1.bf16.msra.mxu0 %v6506
      %6797 = vmatprep.subr.bf16.mxu0 0
      %6798 = vmatpush1.bf16.msra.mxu0 %v6507
      %6799 = vmatprep.subr.bf16.mxu0 0
      %6800 = vmatpush1.bf16.msra.mxu0 %v6508
      %6801 = vmatprep.subr.bf16.mxu0 0
      %6802 = vmatpush1.bf16.msra.mxu0 %v6509
      %6803 = vmatprep.subr.bf16.mxu0 0
      %6804 = vmatpush1.bf16.msra.mxu0 %v6510
      %6805 = vmatprep.subr.bf16.mxu0 0
      %6806 = vmatpush1.bf16.msra.mxu0 %v6511
      %6807 = vmatprep.subr.bf16.mxu0 0
      %6808 = vmatpush1.bf16.msra.mxu0 %v6512
      %6809 = vmatprep.subr.bf16.mxu0 0
      %6810 = vmatpush1.bf16.msra.mxu0 %v6513
      %6811 = vmatprep.subr.bf16.mxu0 0
      %6812 = vmatpush1.bf16.msra.mxu0 %v6514
      %6813 = vmatprep.subr.bf16.mxu0 0
      %6814 = vmatpush1.bf16.msra.mxu0 %v6515
      %6815 = vmatprep.subr.bf16.mxu0 0
      %6816 = vmatpush1.bf16.msra.mxu0 %v6516
      %6817 = vmatprep.subr.bf16.mxu0 0
      %6818 = vmatpush1.bf16.msra.mxu0 %v6517
      %6819 = vmatprep.subr.bf16.mxu0 0
      %6820 = vmatpush1.bf16.msra.mxu0 %v6518
      %6821 = vmatprep.subr.bf16.mxu0 0
      %6822 = vmatpush1.bf16.msra.mxu0 %v6519
      %6823 = vmatprep.subr.bf16.mxu0 0
      %6824 = vmatpush1.bf16.msra.mxu0 %v6520
      %6825 = vmatprep.subr.bf16.mxu0 0
      %6826 = vmatpush1.bf16.msra.mxu0 %v6521
      %6827 = vmatprep.mubr.bf16.mxu0 %v5917
      %6828 = vmatmul.mubr.bf16.gmra.mrb[0].mxu0 %v5916
      %v6829 = vpop.f32.mrb[0].mxu0
      %v6830 = vadd.f32 %v6669, %v6829
      %v6831 = vpop.f32.mrb[0].mxu0
      %v6832 = vpop.f32.mrb[0].mxu0
      %v6833 = vadd.f32 %v6672, %v6832
      %v6834 = vpop.f32.mrb[0].mxu0
      %6835 = vmatprep.mubr.bf16.mxu0 %v5926
      %6836 = vmatmul.mubr.bf16.gmra.mrb[0].mxu0 %v5925
      %v6837 = vpop.f32.mrb[0].mxu0
      %v6838 = vadd.f32 %v6677, %v6837
      %v6839 = vpop.f32.mrb[0].mxu0
      %v6840 = vpop.f32.mrb[0].mxu0
      %v6841 = vadd.f32 %v6680, %v6840
      %v6842 = vpop.f32.mrb[0].mxu0
      %6843 = vmatprep.mubr.bf16.mxu0 %v5935
      %6844 = vmatmul.mubr.bf16.gmra.mrb[0].mxu0 %v5934
      %v6845 = vpop.f32.mrb[0].mxu0
      %v6846 = vadd.f32 %v6685, %v6845
      %v6847 = vpop.f32.mrb[0].mxu0
      %v6848 = vpop.f32.mrb[0].mxu0
      %v6849 = vadd.f32 %v6688, %v6848
      %v6850 = vpop.f32.mrb[0].mxu0
      %6851 = vmatprep.mubr.bf16.mxu0 %v5944
      %6852 = vmatmul.mubr.bf16.gmra.mrb[0].mxu0 %v5943
      %v6853 = vpop.f32.mrb[0].mxu0
      %v6854 = vadd.f32 %v6693, %v6853
      %v6855 = vpop.f32.mrb[0].mxu0
      %v6856 = vpop.f32.mrb[0].mxu0
      %v6857 = vadd.f32 %v6696, %v6856
      %v6858 = vpop.f32.mrb[0].mxu0
      %6859 = vmatprep.mubr.bf16.mxu0 %v5953
      %6860 = vmatmul.mubr.bf16.gmra.mrb[0].mxu0 %v5952
      %v6861 = vpop.f32.mrb[0].mxu0
      %v6862 = vadd.f32 %v6701, %v6861
      %v6863 = vpop.f32.mrb[0].mxu0
      %v6864 = vpop.f32.mrb[0].mxu0
      %v6865 = vadd.f32 %v6704, %v6864
      %v6866 = vpop.f32.mrb[0].mxu0
      %6867 = vmatprep.mubr.bf16.mxu0 %v5962
      %6868 = vmatmul.mubr.bf16.gmra.mrb[0].mxu0 %v5961
      %v6869 = vpop.f32.mrb[0].mxu0
      %v6870 = vadd.f32 %v6709, %v6869
      %v6871 = vpop.f32.mrb[0].mxu0
      %v6872 = vpop.f32.mrb[0].mxu0
      %v6873 = vadd.f32 %v6712, %v6872
      %v6874 = vpop.f32.mrb[0].mxu0
      %6875 = vmatprep.mubr.bf16.mxu0 %v5971
      %6876 = vmatmul.mubr.bf16.gmra.mrb[0].mxu0 %v5970
      %v6877 = vpop.f32.mrb[0].mxu0
      %v6878 = vadd.f32 %v6717, %v6877
      %v6879 = vpop.f32.mrb[0].mxu0
      %v6880 = vpop.f32.mrb[0].mxu0
      %v6881 = vadd.f32 %v6720, %v6880
      %v6882 = vpop.f32.mrb[0].mxu0
      %6883 = vmatprep.mubr.bf16.mxu0 %v5980
      %6884 = vmatmul.mubr.bf16.gmra.mrb[0].mxu0 %v5979
      %v6885 = vpop.f32.mrb[0].mxu0
      %v6886 = vadd.f32 %v6725, %v6885
      %v6887 = vpop.f32.mrb[0].mxu0
      %v6888 = vpop.f32.mrb[0].mxu0
      %v6889 = vadd.f32 %v6728, %v6888
      %v6890 = vpop.f32.mrb[0].mxu0
      %6891 = vmatprep.mubr.bf16.mxu0 %v5989
      %6892 = vmatmul.mubr.bf16.gmra.mrb[0].mxu0 %v5988
      %v6893 = vpop.f32.mrb[0].mxu0
      %v6894 = vadd.f32 %v6733, %v6893
      %v6895 = vpop.f32.mrb[0].mxu0
      %v6896 = vpop.f32.mrb[0].mxu0
      %v6897 = vadd.f32 %v6736, %v6896
      %v6898 = vpop.f32.mrb[0].mxu0
      %6899 = vmatprep.mubr.bf16.mxu0 %v5998
      %6900 = vmatmul.mubr.bf16.gmra.mrb[0].mxu0 %v5997
      %v6901 = vpop.f32.mrb[0].mxu0
      %v6902 = vadd.f32 %v6741, %v6901
      %v6903 = vpop.f32.mrb[0].mxu0
      %v6904 = vpop.f32.mrb[0].mxu0
      %v6905 = vadd.f32 %v6744, %v6904
      %v6906 = vpop.f32.mrb[0].mxu0
      %6907 = vmatprep.mubr.bf16.mxu0 %v6007
      %6908 = vmatmul.mubr.bf16.gmra.mrb[0].mxu0 %v6006
      %v6909 = vpop.f32.mrb[0].mxu0
      %v6910 = vadd.f32 %v6749, %v6909
      %v6911 = vpop.f32.mrb[0].mxu0
      %v6912 = vpop.f32.mrb[0].mxu0
      %v6913 = vadd.f32 %v6752, %v6912
      %v6914 = vpop.f32.mrb[0].mxu0
      %6915 = vmatprep.mubr.bf16.mxu0 %v6016
      %6916 = vmatmul.mubr.bf16.gmra.mrb[0].mxu0 %v6015
      %v6917 = vpop.f32.mrb[0].mxu0
      %v6918 = vadd.f32 %v6757, %v6917
      %v6919 = vpop.f32.mrb[0].mxu0
      %v6920 = vpop.f32.mrb[0].mxu0
      %v6921 = vadd.f32 %v6760, %v6920
      %v6922 = vpop.f32.mrb[0].mxu0
      %6923 = vmatprep.mubr.bf16.mxu0 %v6025
      %6924 = vmatmul.mubr.bf16.gmra.mrb[0].mxu0 %v6024
      %v6925 = vpop.f32.mrb[0].mxu0
      %v6926 = vadd.f32 %v6765, %v6925
      %v6927 = vpop.f32.mrb[0].mxu0
      %v6928 = vpop.f32.mrb[0].mxu0
      %v6929 = vadd.f32 %v6768, %v6928
      %v6930 = vpop.f32.mrb[0].mxu0
      %6931 = vmatprep.mubr.bf16.mxu0 %v6034
      %6932 = vmatmul.mubr.bf16.gmra.mrb[0].mxu0 %v6033
      %v6933 = vpop.f32.mrb[0].mxu0
      %v6934 = vadd.f32 %v6773, %v6933
      %v6935 = vpop.f32.mrb[0].mxu0
      %v6936 = vpop.f32.mrb[0].mxu0
      %v6937 = vadd.f32 %v6776, %v6936
      %v6938 = vpop.f32.mrb[0].mxu0
      %6939 = vmatprep.mubr.bf16.mxu0 %v6043
      %6940 = vmatmul.mubr.bf16.gmra.mrb[0].mxu0 %v6042
      %v6941 = vpop.f32.mrb[0].mxu0
      %v6942 = vadd.f32 %v6781, %v6941
      %v6943 = vpop.f32.mrb[0].mxu0
      %v6944 = vpop.f32.mrb[0].mxu0
      %v6945 = vadd.f32 %v6784, %v6944
      %v6946 = vpop.f32.mrb[0].mxu0
      %6947 = vmatprep.mubr.bf16.mxu0 %v6052
      %6948 = vmatmul.mubr.bf16.gmra.mrb[0].mxu0 %v6051
      %v6949 = vpop.f32.mrb[0].mxu0
      %v6950 = vadd.f32 %v6789, %v6949
      %v6951 = vpop.f32.mrb[0].mxu0
      %v6952 = vpop.f32.mrb[0].mxu0
      %v6953 = vadd.f32 %v6792, %v6952
      %v6954 = vpop.f32.mrb[0].mxu0
      %6955 = vdwg.mxu0
      %6956 = vmatprep.subr.bf16.mxu0 0
      %6957 = vmatpush1.bf16.msra.mxu0 %v6522
      %6958 = vmatprep.subr.bf16.mxu0 0
      %6959 = vmatpush1.bf16.msra.mxu0 %v6523
      %6960 = vmatprep.subr.bf16.mxu0 0
      %6961 = vmatpush1.bf16.msra.mxu0 %v6524
      %6962 = vmatprep.subr.bf16.mxu0 0
      %6963 = vmatpush1.bf16.msra.mxu0 %v6525
      %6964 = vmatprep.subr.bf16.mxu0 0
      %6965 = vmatpush1.bf16.msra.mxu0 %v6526
      %6966 = vmatprep.subr.bf16.mxu0 0
      %6967 = vmatpush1.bf16.msra.mxu0 %v6527
      %6968 = vmatprep.subr.bf16.mxu0 0
      %6969 = vmatpush1.bf16.msra.mxu0 %v6528
      %6970 = vmatprep.subr.bf16.mxu0 0
      %6971 = vmatpush1.bf16.msra.mxu0 %v6529
      %6972 = vmatprep.subr.bf16.mxu0 0
      %6973 = vmatpush1.bf16.msra.mxu0 %v6530
      %6974 = vmatprep.subr.bf16.mxu0 0
      %6975 = vmatpush1.bf16.msra.mxu0 %v6531
      %6976 = vmatprep.subr.bf16.mxu0 0
      %6977 = vmatpush1.bf16.msra.mxu0 %v6532
      %6978 = vmatprep.subr.bf16.mxu0 0
      %6979 = vmatpush1.bf16.msra.mxu0 %v6533
      %6980 = vmatprep.subr.bf16.mxu0 0
      %6981 = vmatpush1.bf16.msra.mxu0 %v6534
      %6982 = vmatprep.subr.bf16.mxu0 0
      %6983 = vmatpush1.bf16.msra.mxu0 %v6535
      %6984 = vmatprep.subr.bf16.mxu0 0
      %6985 = vmatpush1.bf16.msra.mxu0 %v6536
      %6986 = vmatprep.subr.bf16.mxu0 0
      %6987 = vmatpush1.bf16.msra.mxu0 %v6537
      %6988 = vmatprep.mubr.bf16.mxu0 %v5919
      %6989 = vmatmul.mubr.bf16.gmra.mrb[0].mxu0 %v5918
      %v6990 = vpop.f32.mrb[0].mxu0
      %v6991 = vadd.f32 %v6830, %v6990
      %v6992 = vpop.f32.mrb[0].mxu0
      %v6993 = vpop.f32.mrb[0].mxu0
      %v6994 = vadd.f32 %v6833, %v6993
      %v6995 = vpop.f32.mrb[0].mxu0
      %6996 = vmatprep.mubr.bf16.mxu0 %v5928
      %6997 = vmatmul.mubr.bf16.gmra.mrb[0].mxu0 %v5927
      %v6998 = vpop.f32.mrb[0].mxu0
      %v6999 = vadd.f32 %v6838, %v6998
      %v7000 = vpop.f32.mrb[0].mxu0
      %v7001 = vpop.f32.mrb[0].mxu0
      %v7002 = vadd.f32 %v6841, %v7001
      %v7003 = vpop.f32.mrb[0].mxu0
      %7004 = vmatprep.mubr.bf16.mxu0 %v5937
      %7005 = vmatmul.mubr.bf16.gmra.mrb[0].mxu0 %v5936
      %v7006 = vpop.f32.mrb[0].mxu0
      %v7007 = vadd.f32 %v6846, %v7006
      %v7008 = vpop.f32.mrb[0].mxu0
      %v7009 = vpop.f32.mrb[0].mxu0
      %v7010 = vadd.f32 %v6849, %v7009
      %v7011 = vpop.f32.mrb[0].mxu0
      %7012 = vmatprep.mubr.bf16.mxu0 %v5946
      %7013 = vmatmul.mubr.bf16.gmra.mrb[0].mxu0 %v5945
      %v7014 = vpop.f32.mrb[0].mxu0
      %v7015 = vadd.f32 %v6854, %v7014
      %v7016 = vpop.f32.mrb[0].mxu0
      %v7017 = vpop.f32.mrb[0].mxu0
      %v7018 = vadd.f32 %v6857, %v7017
      %v7019 = vpop.f32.mrb[0].mxu0
      %7020 = vmatprep.mubr.bf16.mxu0 %v5955
      %7021 = vmatmul.mubr.bf16.gmra.mrb[0].mxu0 %v5954
      %v7022 = vpop.f32.mrb[0].mxu0
      %v7023 = vadd.f32 %v6862, %v7022
      %v7024 = vpop.f32.mrb[0].mxu0
      %v7025 = vpop.f32.mrb[0].mxu0
      %v7026 = vadd.f32 %v6865, %v7025
      %v7027 = vpop.f32.mrb[0].mxu0
      %7028 = vmatprep.mubr.bf16.mxu0 %v5964
      %7029 = vmatmul.mubr.bf16.gmra.mrb[0].mxu0 %v5963
      %v7030 = vpop.f32.mrb[0].mxu0
      %v7031 = vadd.f32 %v6870, %v7030
      %v7032 = vpop.f32.mrb[0].mxu0
      %v7033 = vpop.f32.mrb[0].mxu0
      %v7034 = vadd.f32 %v6873, %v7033
      %v7035 = vpop.f32.mrb[0].mxu0
      %7036 = vmatprep.mubr.bf16.mxu0 %v5973
      %7037 = vmatmul.mubr.bf16.gmra.mrb[0].mxu0 %v5972
      %v7038 = vpop.f32.mrb[0].mxu0
      %v7039 = vadd.f32 %v6878, %v7038
      %v7040 = vpop.f32.mrb[0].mxu0
      %v7041 = vpop.f32.mrb[0].mxu0
      %v7042 = vadd.f32 %v6881, %v7041
      %v7043 = vpop.f32.mrb[0].mxu0
      %7044 = vmatprep.mubr.bf16.mxu0 %v5982
      %7045 = vmatmul.mubr.bf16.gmra.mrb[0].mxu0 %v5981
      %v7046 = vpop.f32.mrb[0].mxu0
      %v7047 = vadd.f32 %v6886, %v7046
      %v7048 = vpop.f32.mrb[0].mxu0
      %v7049 = vpop.f32.mrb[0].mxu0
      %v7050 = vadd.f32 %v6889, %v7049
      %v7051 = vpop.f32.mrb[0].mxu0
      %7052 = vmatprep.mubr.bf16.mxu0 %v5991
      %7053 = vmatmul.mubr.bf16.gmra.mrb[0].mxu0 %v5990
      %v7054 = vpop.f32.mrb[0].mxu0
      %v7055 = vadd.f32 %v6894, %v7054
      %v7056 = vpop.f32.mrb[0].mxu0
      %v7057 = vpop.f32.mrb[0].mxu0
      %v7058 = vadd.f32 %v6897, %v7057
      %v7059 = vpop.f32.mrb[0].mxu0
      %7060 = vmatprep.mubr.bf16.mxu0 %v6000
      %7061 = vmatmul.mubr.bf16.gmra.mrb[0].mxu0 %v5999
      %v7062 = vpop.f32.mrb[0].mxu0
      %v7063 = vadd.f32 %v6902, %v7062
      %v7064 = vpop.f32.mrb[0].mxu0
      %v7065 = vpop.f32.mrb[0].mxu0
      %v7066 = vadd.f32 %v6905, %v7065
      %v7067 = vpop.f32.mrb[0].mxu0
      %7068 = vmatprep.mubr.bf16.mxu0 %v6009
      %7069 = vmatmul.mubr.bf16.gmra.mrb[0].mxu0 %v6008
      %v7070 = vpop.f32.mrb[0].mxu0
      %v7071 = vadd.f32 %v6910, %v7070
      %v7072 = vpop.f32.mrb[0].mxu0
      %v7073 = vpop.f32.mrb[0].mxu0
      %v7074 = vadd.f32 %v6913, %v7073
      %v7075 = vpop.f32.mrb[0].mxu0
      %7076 = vmatprep.mubr.bf16.mxu0 %v6018
      %7077 = vmatmul.mubr.bf16.gmra.mrb[0].mxu0 %v6017
      %v7078 = vpop.f32.mrb[0].mxu0
      %v7079 = vadd.f32 %v6918, %v7078
      %v7080 = vpop.f32.mrb[0].mxu0
      %v7081 = vpop.f32.mrb[0].mxu0
      %v7082 = vadd.f32 %v6921, %v7081
      %v7083 = vpop.f32.mrb[0].mxu0
      %7084 = vmatprep.mubr.bf16.mxu0 %v6027
      %7085 = vmatmul.mubr.bf16.gmra.mrb[0].mxu0 %v6026
      %v7086 = vpop.f32.mrb[0].mxu0
      %v7087 = vadd.f32 %v6926, %v7086
      %v7088 = vpop.f32.mrb[0].mxu0
      %v7089 = vpop.f32.mrb[0].mxu0
      %v7090 = vadd.f32 %v6929, %v7089
      %v7091 = vpop.f32.mrb[0].mxu0
      %7092 = vmatprep.mubr.bf16.mxu0 %v6036
      %7093 = vmatmul.mubr.bf16.gmra.mrb[0].mxu0 %v6035
      %v7094 = vpop.f32.mrb[0].mxu0
      %v7095 = vadd.f32 %v6934, %v7094
      %v7096 = vpop.f32.mrb[0].mxu0
      %v7097 = vpop.f32.mrb[0].mxu0
      %v7098 = vadd.f32 %v6937, %v7097
      %v7099 = vpop.f32.mrb[0].mxu0
      %7100 = vmatprep.mubr.bf16.mxu0 %v6045
      %7101 = vmatmul.mubr.bf16.gmra.mrb[0].mxu0 %v6044
      %v7102 = vpop.f32.mrb[0].mxu0
      %v7103 = vadd.f32 %v6942, %v7102
      %v7104 = vpop.f32.mrb[0].mxu0
      %v7105 = vpop.f32.mrb[0].mxu0
      %v7106 = vadd.f32 %v6945, %v7105
      %v7107 = vpop.f32.mrb[0].mxu0
      %7108 = vmatprep.mubr.bf16.mxu0 %v6054
      %7109 = vmatmul.mubr.bf16.gmra.mrb[0].mxu0 %v6053
      %v7110 = vpop.f32.mrb[0].mxu0
      %v7111 = vadd.f32 %v6950, %v7110
      %v7112 = vpop.f32.mrb[0].mxu0
      %v7113 = vpop.f32.mrb[0].mxu0
      %v7114 = vadd.f32 %v6953, %v7113
      %v7115 = vpop.f32.mrb[0].mxu0
      %7116 = vdwg.mxu0
      %7117 = vmatprep.subr.bf16.mxu0 0
      %7118 = vmatpush1.bf16.msra.mxu0 %v6538
      %7119 = vmatprep.subr.bf16.mxu0 0
      %7120 = vmatpush1.bf16.msra.mxu0 %v6539
      %7121 = vmatprep.subr.bf16.mxu0 0
      %7122 = vmatpush1.bf16.msra.mxu0 %v6540
      %7123 = vmatprep.subr.bf16.mxu0 0
      %7124 = vmatpush1.bf16.msra.mxu0 %v6541
      %7125 = vmatprep.subr.bf16.mxu0 0
      %7126 = vmatpush1.bf16.msra.mxu0 %v6542
      %7127 = vmatprep.subr.bf16.mxu0 0
      %7128 = vmatpush1.bf16.msra.mxu0 %v6543
      %7129 = vmatprep.subr.bf16.mxu0 0
      %7130 = vmatpush1.bf16.msra.mxu0 %v6544
      %7131 = vmatprep.subr.bf16.mxu0 0
      %7132 = vmatpush1.bf16.msra.mxu0 %v6545
      %7133 = vmatprep.subr.bf16.mxu0 0
      %7134 = vmatpush1.bf16.msra.mxu0 %v6546
      %7135 = vmatprep.subr.bf16.mxu0 0
      %7136 = vmatpush1.bf16.msra.mxu0 %v6547
      %7137 = vmatprep.subr.bf16.mxu0 0
      %7138 = vmatpush1.bf16.msra.mxu0 %v6548
      %7139 = vmatprep.subr.bf16.mxu0 0
      %7140 = vmatpush1.bf16.msra.mxu0 %v6549
      %7141 = vmatprep.subr.bf16.mxu0 0
      %7142 = vmatpush1.bf16.msra.mxu0 %v6550
      %7143 = vmatprep.subr.bf16.mxu0 0
      %7144 = vmatpush1.bf16.msra.mxu0 %v6551
      %7145 = vmatprep.subr.bf16.mxu0 0
      %7146 = vmatpush1.bf16.msra.mxu0 %v6552
      %7147 = vmatprep.subr.bf16.mxu0 0
      %7148 = vmatpush1.bf16.msra.mxu0 %v6553
      %7149 = vmatprep.mubr.bf16.mxu0 %v5921
      %7150 = vmatmul.mubr.bf16.gmra.mrb[0].mxu0 %v5920
      %v7151 = vpop.f32.mrb[0].mxu0
      %v7152 = vadd.f32 %v6991, %v7151
      %v7153 = vpop.f32.mrb[0].mxu0
      %v7154 = vpop.f32.mrb[0].mxu0
      %v7155 = vadd.f32 %v6994, %v7154
      %v7156 = vpop.f32.mrb[0].mxu0
      %7157 = vmatprep.mubr.bf16.mxu0 %v5930
      %7158 = vmatmul.mubr.bf16.gmra.mrb[0].mxu0 %v5929
      %v7159 = vpop.f32.mrb[0].mxu0
      %v7160 = vadd.f32 %v6999, %v7159
      %v7161 = vpop.f32.mrb[0].mxu0
      %v7162 = vpop.f32.mrb[0].mxu0
      %v7163 = vadd.f32 %v7002, %v7162
      %v7164 = vpop.f32.mrb[0].mxu0
      %7165 = vmatprep.mubr.bf16.mxu0 %v5939
      %7166 = vmatmul.mubr.bf16.gmra.mrb[0].mxu0 %v5938
      %v7167 = vpop.f32.mrb[0].mxu0
      %v7168 = vadd.f32 %v7007, %v7167
      %v7169 = vpop.f32.mrb[0].mxu0
      %v7170 = vpop.f32.mrb[0].mxu0
      %v7171 = vadd.f32 %v7010, %v7170
      %v7172 = vpop.f32.mrb[0].mxu0
      %7173 = vmatprep.mubr.bf16.mxu0 %v5948
      %7174 = vmatmul.mubr.bf16.gmra.mrb[0].mxu0 %v5947
      %v7175 = vpop.f32.mrb[0].mxu0
      %v7176 = vadd.f32 %v7015, %v7175
      %v7177 = vpop.f32.mrb[0].mxu0
      %v7178 = vpop.f32.mrb[0].mxu0
      %v7179 = vadd.f32 %v7018, %v7178
      %v7180 = vpop.f32.mrb[0].mxu0
      %7181 = vmatprep.mubr.bf16.mxu0 %v5957
      %7182 = vmatmul.mubr.bf16.gmra.mrb[0].mxu0 %v5956
      %v7183 = vpop.f32.mrb[0].mxu0
      %v7184 = vadd.f32 %v7023, %v7183
      %v7185 = vpop.f32.mrb[0].mxu0
      %v7186 = vpop.f32.mrb[0].mxu0
      %v7187 = vadd.f32 %v7026, %v7186
      %v7188 = vpop.f32.mrb[0].mxu0
      %7189 = vmatprep.mubr.bf16.mxu0 %v5966
      %7190 = vmatmul.mubr.bf16.gmra.mrb[0].mxu0 %v5965
      %v7191 = vpop.f32.mrb[0].mxu0
      %v7192 = vadd.f32 %v7031, %v7191
      %v7193 = vpop.f32.mrb[0].mxu0
      %v7194 = vpop.f32.mrb[0].mxu0
      %v7195 = vadd.f32 %v7034, %v7194
      %v7196 = vpop.f32.mrb[0].mxu0
      %7197 = vmatprep.mubr.bf16.mxu0 %v5975
      %7198 = vmatmul.mubr.bf16.gmra.mrb[0].mxu0 %v5974
      %v7199 = vpop.f32.mrb[0].mxu0
      %v7200 = vadd.f32 %v7039, %v7199
      %v7201 = vpop.f32.mrb[0].mxu0
      %v7202 = vpop.f32.mrb[0].mxu0
      %v7203 = vadd.f32 %v7042, %v7202
      %v7204 = vpop.f32.mrb[0].mxu0
      %7205 = vmatprep.mubr.bf16.mxu0 %v5984
      %7206 = vmatmul.mubr.bf16.gmra.mrb[0].mxu0 %v5983
      %v7207 = vpop.f32.mrb[0].mxu0
      %v7208 = vadd.f32 %v7047, %v7207
      %v7209 = vpop.f32.mrb[0].mxu0
      %v7210 = vpop.f32.mrb[0].mxu0
      %v7211 = vadd.f32 %v7050, %v7210
      %v7212 = vpop.f32.mrb[0].mxu0
      %7213 = vmatprep.mubr.bf16.mxu0 %v5993
      %7214 = vmatmul.mubr.bf16.gmra.mrb[0].mxu0 %v5992
      %v7215 = vpop.f32.mrb[0].mxu0
      %v7216 = vadd.f32 %v7055, %v7215
      %v7217 = vpop.f32.mrb[0].mxu0
      %v7218 = vpop.f32.mrb[0].mxu0
      %v7219 = vadd.f32 %v7058, %v7218
      %v7220 = vpop.f32.mrb[0].mxu0
      %7221 = vmatprep.mubr.bf16.mxu0 %v6002
      %7222 = vmatmul.mubr.bf16.gmra.mrb[0].mxu0 %v6001
      %v7223 = vpop.f32.mrb[0].mxu0
      %v7224 = vadd.f32 %v7063, %v7223
      %v7225 = vpop.f32.mrb[0].mxu0
      %v7226 = vpop.f32.mrb[0].mxu0
      %v7227 = vadd.f32 %v7066, %v7226
      %v7228 = vpop.f32.mrb[0].mxu0
      %7229 = vmatprep.mubr.bf16.mxu0 %v6011
      %7230 = vmatmul.mubr.bf16.gmra.mrb[0].mxu0 %v6010
      %v7231 = vpop.f32.mrb[0].mxu0
      %v7232 = vadd.f32 %v7071, %v7231
      %v7233 = vpop.f32.mrb[0].mxu0
      %v7234 = vpop.f32.mrb[0].mxu0
      %v7235 = vadd.f32 %v7074, %v7234
      %v7236 = vpop.f32.mrb[0].mxu0
      %7237 = vmatprep.mubr.bf16.mxu0 %v6020
      %7238 = vmatmul.mubr.bf16.gmra.mrb[0].mxu0 %v6019
      %v7239 = vpop.f32.mrb[0].mxu0
      %v7240 = vadd.f32 %v7079, %v7239
      %v7241 = vpop.f32.mrb[0].mxu0
      %v7242 = vpop.f32.mrb[0].mxu0
      %v7243 = vadd.f32 %v7082, %v7242
      %v7244 = vpop.f32.mrb[0].mxu0
      %7245 = vmatprep.mubr.bf16.mxu0 %v6029
      %7246 = vmatmul.mubr.bf16.gmra.mrb[0].mxu0 %v6028
      %v7247 = vpop.f32.mrb[0].mxu0
      %v7248 = vadd.f32 %v7087, %v7247
      %v7249 = vpop.f32.mrb[0].mxu0
      %v7250 = vpop.f32.mrb[0].mxu0
      %v7251 = vadd.f32 %v7090, %v7250
      %v7252 = vpop.f32.mrb[0].mxu0
      %7253 = vmatprep.mubr.bf16.mxu0 %v6038
      %7254 = vmatmul.mubr.bf16.gmra.mrb[0].mxu0 %v6037
      %v7255 = vpop.f32.mrb[0].mxu0
      %v7256 = vadd.f32 %v7095, %v7255
      %v7257 = vpop.f32.mrb[0].mxu0
      %v7258 = vpop.f32.mrb[0].mxu0
      %v7259 = vadd.f32 %v7098, %v7258
      %v7260 = vpop.f32.mrb[0].mxu0
      %7261 = vmatprep.mubr.bf16.mxu0 %v6047
      %7262 = vmatmul.mubr.bf16.gmra.mrb[0].mxu0 %v6046
      %v7263 = vpop.f32.mrb[0].mxu0
      %v7264 = vadd.f32 %v7103, %v7263
      %v7265 = vpop.f32.mrb[0].mxu0
      %v7266 = vpop.f32.mrb[0].mxu0
      %v7267 = vadd.f32 %v7106, %v7266
      %v7268 = vpop.f32.mrb[0].mxu0
      %7269 = vmatprep.mubr.bf16.mxu0 %v6056
      %7270 = vmatmul.mubr.bf16.gmra.mrb[0].mxu0 %v6055
      %v7271 = vpop.f32.mrb[0].mxu0
      %v7272 = vadd.f32 %v7111, %v7271
      %v7273 = vpop.f32.mrb[0].mxu0
      %v7274 = vpop.f32.mrb[0].mxu0
      %v7275 = vadd.f32 %v7114, %v7274
      %v7276 = vpop.f32.mrb[0].mxu0
      %7277 = vdwg.mxu0
      %7278 = vmatprep.subr.bf16.mxu0 0
      %7279 = vmatpush1.bf16.msra.mxu0 %v6554
      %7280 = vmatprep.subr.bf16.mxu0 0
      %7281 = vmatpush1.bf16.msra.mxu0 %v6555
      %7282 = vmatprep.subr.bf16.mxu0 0
      %7283 = vmatpush1.bf16.msra.mxu0 %v6556
      %7284 = vmatprep.subr.bf16.mxu0 0
      %7285 = vmatpush1.bf16.msra.mxu0 %v6557
      %7286 = vmatprep.subr.bf16.mxu0 0
      %7287 = vmatpush1.bf16.msra.mxu0 %v6558
      %7288 = vmatprep.subr.bf16.mxu0 0
      %7289 = vmatpush1.bf16.msra.mxu0 %v6559
      %7290 = vmatprep.subr.bf16.mxu0 0
      %7291 = vmatpush1.bf16.msra.mxu0 %v6560
      %7292 = vmatprep.subr.bf16.mxu0 0
      %7293 = vmatpush1.bf16.msra.mxu0 %v6561
      %7294 = vmatprep.subr.bf16.mxu0 0
      %7295 = vmatpush1.bf16.msra.mxu0 0
      %7296 = vmatprep.subr.bf16.mxu0 0
      %7297 = vmatpush1.bf16.msra.mxu0 0
      %7298 = vmatprep.subr.bf16.mxu0 0
      %7299 = vmatpush1.bf16.msra.mxu0 0
      %7300 = vmatprep.subr.bf16.mxu0 0
      %7301 = vmatpush1.bf16.msra.mxu0 0
      %7302 = vmatprep.subr.bf16.mxu0 0
      %7303 = vmatpush1.bf16.msra.mxu0 0
      %7304 = vmatprep.subr.bf16.mxu0 0
      %7305 = vmatpush1.bf16.msra.mxu0 0
      %7306 = vmatprep.subr.bf16.mxu0 0
      %7307 = vmatpush1.bf16.msra.mxu0 0
      %7308 = vmatprep.subr.bf16.mxu0 0
      %7309 = vmatpush1.bf16.msra.mxu0 0
      %7310 = vmatprep.mubr.bf16.mxu0 0
      %7311 = vmatmul.mubr.bf16.gmra.mrb[0].mxu0 %v5922
      %v7312 = vpop.f32.mrb[0].mxu0
      %v7313 = vadd.f32 %v7152, %v7312
      %v7314 = vpop.f32.mrb[0].mxu0
      %v7315 = vpop.f32.mrb[0].mxu0
      %v7316 = vadd.f32 %v7155, %v7315
      %v7317 = vpop.f32.mrb[0].mxu0
      %7318 = vmatprep.mubr.bf16.mxu0 0
      %7319 = vmatmul.mubr.bf16.gmra.mrb[0].mxu0 %v5931
      %v7320 = vpop.f32.mrb[0].mxu0
      %v7321 = vadd.f32 %v7160, %v7320
      %v7322 = vpop.f32.mrb[0].mxu0
      %v7323 = vpop.f32.mrb[0].mxu0
      %v7324 = vadd.f32 %v7163, %v7323
      %v7325 = vpop.f32.mrb[0].mxu0
      %7326 = vmatprep.mubr.bf16.mxu0 0
      %7327 = vmatmul.mubr.bf16.gmra.mrb[0].mxu0 %v5940
      %v7328 = vpop.f32.mrb[0].mxu0
      %v7329 = vadd.f32 %v7168, %v7328
      %v7330 = vpop.f32.mrb[0].mxu0
      %v7331 = vpop.f32.mrb[0].mxu0
      %v7332 = vadd.f32 %v7171, %v7331
      %v7333 = vpop.f32.mrb[0].mxu0
      %7334 = vmatprep.mubr.bf16.mxu0 0
      %7335 = vmatmul.mubr.bf16.gmra.mrb[0].mxu0 %v5949
      %v7336 = vpop.f32.mrb[0].mxu0
      %v7337 = vadd.f32 %v7176, %v7336
      %v7338 = vpop.f32.mrb[0].mxu0
      %v7339 = vpop.f32.mrb[0].mxu0
      %v7340 = vadd.f32 %v7179, %v7339
      %v7341 = vpop.f32.mrb[0].mxu0
      %7342 = vmatprep.mubr.bf16.mxu0 0
      %7343 = vmatmul.mubr.bf16.gmra.mrb[0].mxu0 %v5958
      %v7344 = vpop.f32.mrb[0].mxu0
      %v7345 = vadd.f32 %v7184, %v7344
      %v7346 = vpop.f32.mrb[0].mxu0
      %v7347 = vpop.f32.mrb[0].mxu0
      %v7348 = vadd.f32 %v7187, %v7347
      %v7349 = vpop.f32.mrb[0].mxu0
      %7350 = vmatprep.mubr.bf16.mxu0 0
      %7351 = vmatmul.mubr.bf16.gmra.mrb[0].mxu0 %v5967
      %v7352 = vpop.f32.mrb[0].mxu0
      %v7353 = vadd.f32 %v7192, %v7352
      %v7354 = vpop.f32.mrb[0].mxu0
      %v7355 = vpop.f32.mrb[0].mxu0
      %v7356 = vadd.f32 %v7195, %v7355
      %v7357 = vpop.f32.mrb[0].mxu0
      %7358 = vmatprep.mubr.bf16.mxu0 0
      %7359 = vmatmul.mubr.bf16.gmra.mrb[0].mxu0 %v5976
      %v7360 = vpop.f32.mrb[0].mxu0
      %v7361 = vadd.f32 %v7200, %v7360
      %v7362 = vpop.f32.mrb[0].mxu0
      %v7363 = vpop.f32.mrb[0].mxu0
      %v7364 = vadd.f32 %v7203, %v7363
      %v7365 = vpop.f32.mrb[0].mxu0
      %7366 = vmatprep.mubr.bf16.mxu0 0
      %7367 = vmatmul.mubr.bf16.gmra.mrb[0].mxu0 %v5985
      %v7368 = vpop.f32.mrb[0].mxu0
      %v7369 = vadd.f32 %v7208, %v7368
      %v7370 = vpop.f32.mrb[0].mxu0
      %v7371 = vpop.f32.mrb[0].mxu0
      %v7372 = vadd.f32 %v7211, %v7371
      %v7373 = vpop.f32.mrb[0].mxu0
      %7374 = vmatprep.mubr.bf16.mxu0 0
      %7375 = vmatmul.mubr.bf16.gmra.mrb[0].mxu0 %v5994
      %v7376 = vpop.f32.mrb[0].mxu0
      %v7377 = vadd.f32 %v7216, %v7376
      %v7378 = vpop.f32.mrb[0].mxu0
      %v7379 = vpop.f32.mrb[0].mxu0
      %v7380 = vadd.f32 %v7219, %v7379
      %v7381 = vpop.f32.mrb[0].mxu0
      %7382 = vmatprep.mubr.bf16.mxu0 0
      %7383 = vmatmul.mubr.bf16.gmra.mrb[0].mxu0 %v6003
      %v7384 = vpop.f32.mrb[0].mxu0
      %v7385 = vadd.f32 %v7224, %v7384
      %v7386 = vpop.f32.mrb[0].mxu0
      %v7387 = vpop.f32.mrb[0].mxu0
      %v7388 = vadd.f32 %v7227, %v7387
      %v7389 = vpop.f32.mrb[0].mxu0
      %7390 = vmatprep.mubr.bf16.mxu0 0
      %7391 = vmatmul.mubr.bf16.gmra.mrb[0].mxu0 %v6012
      %v7392 = vpop.f32.mrb[0].mxu0
      %v7393 = vadd.f32 %v7232, %v7392
      %v7394 = vpop.f32.mrb[0].mxu0
      %v7395 = vpop.f32.mrb[0].mxu0
      %v7396 = vadd.f32 %v7235, %v7395
      %v7397 = vpop.f32.mrb[0].mxu0
      %7398 = vmatprep.mubr.bf16.mxu0 0
      %7399 = vmatmul.mubr.bf16.gmra.mrb[0].mxu0 %v6021
      %v7400 = vpop.f32.mrb[0].mxu0
      %v7401 = vadd.f32 %v7240, %v7400
      %v7402 = vpop.f32.mrb[0].mxu0
      %v7403 = vpop.f32.mrb[0].mxu0
      %v7404 = vadd.f32 %v7243, %v7403
      %v7405 = vpop.f32.mrb[0].mxu0
      %7406 = vmatprep.mubr.bf16.mxu0 0
      %7407 = vmatmul.mubr.bf16.gmra.mrb[0].mxu0 %v6030
      %v7408 = vpop.f32.mrb[0].mxu0
      %v7409 = vadd.f32 %v7248, %v7408
      %v7410 = vpop.f32.mrb[0].mxu0
      %v7411 = vpop.f32.mrb[0].mxu0
      %v7412 = vadd.f32 %v7251, %v7411
      %v7413 = vpop.f32.mrb[0].mxu0
      %7414 = vmatprep.mubr.bf16.mxu0 0
      %7415 = vmatmul.mubr.bf16.gmra.mrb[0].mxu0 %v6039
      %v7416 = vpop.f32.mrb[0].mxu0
      %v7417 = vadd.f32 %v7256, %v7416
      %v7418 = vpop.f32.mrb[0].mxu0
      %v7419 = vpop.f32.mrb[0].mxu0
      %v7420 = vadd.f32 %v7259, %v7419
      %v7421 = vpop.f32.mrb[0].mxu0
      %7422 = vmatprep.mubr.bf16.mxu0 0
      %7423 = vmatmul.mubr.bf16.gmra.mrb[0].mxu0 %v6048
      %v7424 = vpop.f32.mrb[0].mxu0
      %v7425 = vadd.f32 %v7264, %v7424
      %v7426 = vpop.f32.mrb[0].mxu0
      %v7427 = vpop.f32.mrb[0].mxu0
      %v7428 = vadd.f32 %v7267, %v7427
      %v7429 = vpop.f32.mrb[0].mxu0
      %7430 = vmatprep.mubr.bf16.mxu0 0
      %7431 = vmatmul.mubr.bf16.gmra.mrb[0].mxu0 %v6057
      %v7432 = vpop.f32.mrb[0].mxu0
      %v7433 = vadd.f32 %v7272, %v7432
      %v7434 = vpop.f32.mrb[0].mxu0
      %v7435 = vpop.f32.mrb[0].mxu0
      %v7436 = vadd.f32 %v7275, %v7435
      %v7437 = vpop.f32.mrb[0].mxu0
      %7438 = vdwg.mxu0
      %s7439 = scalar_lea.vmem %s219, 24
      %v7440 = vld [vmem:[%s7439 + $0x1] sm:$0xff]
      %v7441 = vld [vmem:[%s7439 + $0x9] sm:$0xff]
      %v7442 = vld [vmem:[%s7439 + $0x19] sm:$0xff]
      %v7443 = vld [vmem:[%s7439 + $0x21] sm:$0xff]
      %v7444 = vld [vmem:[%s7439 + $0x31] sm:$0xff]
      %v7445 = vld [vmem:[%s7439 + $0x39] sm:$0xff]
      %v7446 = vld [vmem:[%s7439 + $0x49] sm:$0xff]
      %v7447 = vld [vmem:[%s7439 + $0x51] sm:$0xff]
      %v7448 = vld [vmem:[%s7439 + $0x61] sm:$0xff]
      %v7449 = vld [vmem:[%s7439 + $0x69] sm:$0xff]
      %v7450 = vld [vmem:[%s7439 + $0x79] sm:$0xff]
      %v7451 = vld [vmem:[%s7439 + $0x81] sm:$0xff]
      %v7452 = vld [vmem:[%s7439 + $0x91] sm:$0xff]
      %v7453 = vld [vmem:[%s7439 + $0x99] sm:$0xff]
      %v7454 = vld [vmem:[%s7439 + $0xa9] sm:$0xff]
      %v7455 = vld [vmem:[%s7439 + $0xb1] sm:$0xff]
      %v7456 = vld [vmem:[%s7439 + $0xc1] sm:$0xff]
      %v7457 = vld [vmem:[%s7439 + $0xc9] sm:$0xff]
      %v7458 = vld [vmem:[%s7439 + $0xd9] sm:$0xff]
      %v7459 = vld [vmem:[%s7439 + $0xe1] sm:$0xff]
      %v7460 = vld [vmem:[%s7439 + $0xf1] sm:$0xff]
      %v7461 = vld [vmem:[%s7439 + $0xf9] sm:$0xff]
      %v7462 = vld [vmem:[%s7439 + $0x109] sm:$0xff]
      %v7463 = vld [vmem:[%s7439 + $0x111] sm:$0xff]
      %v7464 = vld [vmem:[%s7439 + $0x121] sm:$0xff]
      %v7465 = vld [vmem:[%s7439 + $0x129] sm:$0xff]
      %v7466 = vld [vmem:[%s7439 + $0x139] sm:$0xff]
      %v7467 = vld [vmem:[%s7439 + $0x141] sm:$0xff]
      %v7468 = vld [vmem:[%s7439 + $0x151] sm:$0xff]
      %v7469 = vld [vmem:[%s7439 + $0x159] sm:$0xff]
      %v7470 = vld [vmem:[%s7439 + $0x169] sm:$0xff]
      %v7471 = vld [vmem:[%s7439 + $0x171] sm:$0xff]
      %v7472 = vadd.f32 %v7440, %v7313
      %v7473 = vadd.f32 %v7441, %v7316
      %v7474 = vadd.f32 %v7442, %v7321
      %v7475 = vadd.f32 %v7443, %v7324
      %v7476 = vadd.f32 %v7444, %v7329
      %v7477 = vadd.f32 %v7445, %v7332
      %v7478 = vadd.f32 %v7446, %v7337
      %v7479 = vadd.f32 %v7447, %v7340
      %v7480 = vadd.f32 %v7448, %v7345
      %v7481 = vadd.f32 %v7449, %v7348
      %v7482 = vadd.f32 %v7450, %v7353
      %v7483 = vadd.f32 %v7451, %v7356
      %v7484 = vadd.f32 %v7452, %v7361
      %v7485 = vadd.f32 %v7453, %v7364
      %v7486 = vadd.f32 %v7454, %v7369
      %v7487 = vadd.f32 %v7455, %v7372
      %v7488 = vadd.f32 %v7456, %v7377
      %v7489 = vadd.f32 %v7457, %v7380
      %v7490 = vadd.f32 %v7458, %v7385
      %v7491 = vadd.f32 %v7459, %v7388
      %v7492 = vadd.f32 %v7460, %v7393
      %v7493 = vadd.f32 %v7461, %v7396
      %v7494 = vadd.f32 %v7462, %v7401
      %v7495 = vadd.f32 %v7463, %v7404
      %v7496 = vadd.f32 %v7464, %v7409
      %v7497 = vadd.f32 %v7465, %v7412
      %v7498 = vadd.f32 %v7466, %v7417
      %v7499 = vadd.f32 %v7467, %v7420
      %v7500 = vadd.f32 %v7468, %v7425
      %v7501 = vadd.f32 %v7469, %v7428
      %v7502 = vadd.f32 %v7470, %v7433
      %v7503 = vadd.f32 %v7471, %v7436
      %v7504 = vld [vmem:[%s4] sm:$0x1]
      %v7506 = vlaneseq
      %v7507 = vshrl.u32 %v7506, 7
      %v7508 = vsub.s32 0, %v7507
      %v7509 = vrot.slane %v7504, %v7508
      %v7511 = vadd.f32 %v7472, %v7509
      %v7512 = vadd.f32 %v7473, %v7509
      %v7513 = vadd.f32 %v7474, %v7509
      %v7514 = vadd.f32 %v7475, %v7509
      %v7515 = vadd.f32 %v7476, %v7509
      %v7516 = vadd.f32 %v7477, %v7509
      %v7517 = vadd.f32 %v7478, %v7509
      %v7518 = vadd.f32 %v7479, %v7509
      %v7519 = vadd.f32 %v7480, %v7509
      %v7520 = vadd.f32 %v7481, %v7509
      %v7521 = vadd.f32 %v7482, %v7509
      %v7522 = vadd.f32 %v7483, %v7509
      %v7523 = vadd.f32 %v7484, %v7509
      %v7524 = vadd.f32 %v7485, %v7509
      %v7525 = vadd.f32 %v7486, %v7509
      %v7526 = vadd.f32 %v7487, %v7509
      %v7527 = vadd.f32 %v7488, %v7509
      %v7528 = vadd.f32 %v7489, %v7509
      %v7529 = vadd.f32 %v7490, %v7509
      %v7530 = vadd.f32 %v7491, %v7509
      %v7531 = vadd.f32 %v7492, %v7509
      %v7532 = vadd.f32 %v7493, %v7509
      %v7533 = vadd.f32 %v7494, %v7509
      %v7534 = vadd.f32 %v7495, %v7509
      %v7535 = vadd.f32 %v7496, %v7509
      %v7536 = vadd.f32 %v7497, %v7509
      %v7537 = vadd.f32 %v7498, %v7509
      %v7538 = vadd.f32 %v7499, %v7509
      %v7539 = vadd.f32 %v7500, %v7509
      %v7540 = vadd.f32 %v7501, %v7509
      %v7541 = vadd.f32 %v7502, %v7509
      %v7542 = vadd.f32 %v7503, %v7509
      %7543 = vst [vmem:[%s224] sm:$0xff] %v7511
      %7544 = vst [vmem:[%s224 + $0x8] sm:$0xff] %v7512
      %7545 = vst [vmem:[%s224 + $0x10] sm:$0xff] %v7513
      %7546 = vst [vmem:[%s224 + $0x18] sm:$0xff] %v7514
      %7547 = vst [vmem:[%s224 + $0x20] sm:$0xff] %v7515
      %7548 = vst [vmem:[%s224 + $0x28] sm:$0xff] %v7516
      %7549 = vst [vmem:[%s224 + $0x30] sm:$0xff] %v7517
      %7550 = vst [vmem:[%s224 + $0x38] sm:$0xff] %v7518
      %7551 = vst [vmem:[%s224 + $0x40] sm:$0xff] %v7519
      %7552 = vst [vmem:[%s224 + $0x48] sm:$0xff] %v7520
      %7553 = vst [vmem:[%s224 + $0x50] sm:$0xff] %v7521
      %7554 = vst [vmem:[%s224 + $0x58] sm:$0xff] %v7522
      %7555 = vst [vmem:[%s224 + $0x60] sm:$0xff] %v7523
      %7556 = vst [vmem:[%s224 + $0x68] sm:$0xff] %v7524
      %7557 = vst [vmem:[%s224 + $0x70] sm:$0xff] %v7525
      %7558 = vst [vmem:[%s224 + $0x78] sm:$0xff] %v7526
      %7559 = vst [vmem:[%s224 + $0x80] sm:$0xff] %v7527
      %7560 = vst [vmem:[%s224 + $0x88] sm:$0xff] %v7528
      %7561 = vst [vmem:[%s224 + $0x90] sm:$0xff] %v7529
      %7562 = vst [vmem:[%s224 + $0x98] sm:$0xff] %v7530
      %7563 = vst [vmem:[%s224 + $0xa0] sm:$0xff] %v7531
      %7564 = vst [vmem:[%s224 + $0xa8] sm:$0xff] %v7532
      %7565 = vst [vmem:[%s224 + $0xb0] sm:$0xff] %v7533
      %7566 = vst [vmem:[%s224 + $0xb8] sm:$0xff] %v7534
      %7567 = vst [vmem:[%s224 + $0xc0] sm:$0xff] %v7535
      %7568 = vst [vmem:[%s224 + $0xc8] sm:$0xff] %v7536
      %7569 = vst [vmem:[%s224 + $0xd0] sm:$0xff] %v7537
      %7570 = vst [vmem:[%s224 + $0xd8] sm:$0xff] %v7538
      %7571 = vst [vmem:[%s224 + $0xe0] sm:$0xff] %v7539
      %7572 = vst [vmem:[%s224 + $0xe8] sm:$0xff] %v7540
      %7573 = vst [vmem:[%s224 + $0xf0] sm:$0xff] %v7541
      %7574 = vst [vmem:[%s224 + $0xf8] sm:$0xff] %v7542
      %p7575 = scmp.lt.s32.totalorder %s16, 1
      %s7576 = scalar_select %p7575, %s16, 1
      %s7577 = smul.addr %s7576, 32
      %s7578 = smul.addr %s7577, 8
      %s7579 = scalar_lea.vmem %s5, %s7578
      // Predicated region
      $region41: #{shake_shake_block.1} parent=39 // pred_check
        %p7580 = pneg %p144
      $region42: #{shake_shake_block.1} parent=39 // pred_check_branch
        %7582 = sbr.rel (%p7580) target = $region44
      $region43: #{shake_shake_block.1} parent=39 // pred_region
        _
      $region44: #{shake_shake_block.1} parent=39 // pred_fallthru
        _
    $region40: #{shake_shake_block.1} parent=5 // pred_fallthru
      _
    %p7583 = scmp.le.s32.totalorder 2, %s11
    // Predicated region
    $region45: #{shake_shake_block.1} parent=5 // pred_check
      %p7584 = pneg %p7583
    $region46: #{shake_shake_block.1} parent=5 // pred_check_branch
      %7586 = sbr.rel (%p7584) target = $region48
    $region47: #{shake_shake_block.1} parent=5 // pred_region
      %s7587 = ssub.s32 %s11, 2
      // Predicated region
      $region49: #{shake_shake_block.1} parent=47 // pred_check
        %p7588 = pneg %p150
      $region50: #{shake_shake_block.1} parent=47 // pred_check_branch
        %7590 = sbr.rel (%p7588) target = $region52
      $region51: #{shake_shake_block.1} parent=47 // pred_region
        %p7591 = scmp.lt.s32.totalorder %s17, 1
        %s7592 = scalar_select %p7591, %s17, 1
        %s7593 = smul.addr %s7592, 32
        %s7594 = smul.addr %s7593, 8
        %s7595 = scalar_lea.vmem %s5, %s7594
      $region52: #{shake_shake_block.1} parent=47 // pred_fallthru
        _
    $region48: #{shake_shake_block.1} parent=5 // pred_fallthru
      _
  $region6: #{shake_shake_block.1} parent=0 // loop_footer
    %s15 = sadd.s32 1, %s11
  $region7: #{shake_shake_block.1} parent=0 // loop_footer_branch
    %10 = sbr.rel target = $region3
  $region8: #{shake_shake_block.1} parent=0 // loop_exit
    _

</llo_original>
